<compile_context>
chip_gen: v5e
topology: v5e:2x2
jax: 0.10.0
libtpu: 0.0.40
codegen_flags: <defaults>
</compile_context>

<pallas_src>
import functools

import jax
import jax.numpy as jnp
from jax import lax
from jax.experimental import pallas as pl
from jax.experimental.pallas import tpu as pltpu

CPAD = 128   # lane-padded channel width for conv outputs / intermediate NHWC
YPAD = 128   # lane-padded fc12 output width (y_dim=10 -> 128)


# ----------------------------- Pallas kernels ------------------------------

def _conv_bn_relu_kernel(p_ref, w_ref, gamma_ref, beta_ref, o_ref):
    """Fused im2col-GEMM + BatchNorm2d (batch stats) + ReLU.

    p_ref     : (M, K)    bf16 im2col patches, M = B*Ho*Wo
    w_ref     : (K, Cp)   bf16 conv weight (Cp = 128 lane-padded out channels)
    gamma/beta: (1, Cp)   f32
    o_ref     : (M, Cp)   bf16 activations (channels-last rows)
    """
    acc = jnp.dot(p_ref[...], w_ref[...], preferred_element_type=jnp.float32)
    m = acc.shape[0]
    inv_m = 1.0 / m
    mean = jnp.sum(acc, axis=0, keepdims=True) * inv_m
    ex2 = jnp.sum(acc * acc, axis=0, keepdims=True) * inv_m
    var = ex2 - mean * mean                       # one-pass biased variance
    scale = lax.rsqrt(var + 1e-5) * gamma_ref[...]
    y = (acc - mean) * scale + beta_ref[...]
    o_ref[...] = jnp.maximum(y, 0.0).astype(o_ref.dtype)


def _fc_tail_kernel(hf_ref, z_ref, w11_ref, b11_ref, w12h_ref, w12z_ref,
                    b12_ref, h_ref, y_ref):
    """Fused fc11 (+ReLU) and fc12; concat(h, z) expressed as two dots."""
    h = jnp.dot(hf_ref[...], w11_ref[...], preferred_element_type=jnp.float32)
    h = jnp.maximum(h + b11_ref[...], 0.0)
    h_ref[...] = h
    y = (jnp.dot(h.astype(w12h_ref.dtype), w12h_ref[...],
                 preferred_element_type=jnp.float32)
         + jnp.dot(z_ref[...], w12z_ref[...],
                   preferred_element_type=jnp.float32)
         + b12_ref[...])
    y_ref[...] = y


# ---------------------------- pallas_call wrappers --------------------------

def _spec(shape):
    zeros = (0,) * len(shape)
    return pl.BlockSpec(shape, lambda i, z=zeros: z)


_CPARAMS = pltpu.CompilerParams(dimension_semantics=("arbitrary",))


def conv_bn_relu(patches, w, gamma, beta):
    M, K = patches.shape
    _, C = w.shape
    flops = int(2 * M * K * C + 10 * M * C)
    bytes_accessed = int(2 * (M * K + K * C + M * C) + 4 * 2 * C)
    return pl.pallas_call(
        _conv_bn_relu_kernel,
        out_shape=jax.ShapeDtypeStruct((M, C), jnp.bfloat16),
        grid=(1,),
        in_specs=[_spec((M, K)), _spec((K, C)), _spec((1, C)), _spec((1, C))],
        out_specs=_spec((M, C)),
        compiler_params=_CPARAMS,
        cost_estimate=pl.CostEstimate(flops=flops, transcendentals=int(C),
                                      bytes_accessed=bytes_accessed),
    )(patches, w, gamma, beta)


def fc_tail(h_flat, z, w11, b11, w12h, w12z, b12):
    B, K1 = h_flat.shape
    _, H = w11.shape
    _, Yp = w12h.shape
    Dz = z.shape[1]
    flops = int(2 * B * (K1 * H + H * Yp + Dz * Yp))
    bytes_accessed = int(2 * (B * K1 + K1 * H + H * Yp + Dz * Yp + B * Dz)
                         + 4 * (B * H + B * Yp + H + Yp))
    return pl.pallas_call(
        _fc_tail_kernel,
        out_shape=(jax.ShapeDtypeStruct((B, H), jnp.float32),
                   jax.ShapeDtypeStruct((B, Yp), jnp.float32)),
        grid=(1,),
        in_specs=[_spec((B, K1)), _spec((B, Dz)),
                  _spec((K1, H)), _spec((1, H)),
                  _spec((H, Yp)), _spec((Dz, Yp)), _spec((1, Yp))],
        out_specs=(_spec((B, H)), _spec((B, Yp))),
        compiler_params=_CPARAMS,
        cost_estimate=pl.CostEstimate(flops=flops, transcendentals=0,
                                      bytes_accessed=bytes_accessed),
    )(h_flat, z, w11, b11, w12h, w12z, b12)


# ------------------------------- JAX glue -----------------------------------
# im2col / maxpool stay channels-last: pure slices + concat on the lane axis,
# no transposes, no layout shuffles between kernels.
# TODO(synk): patch construction could be pulled inside the conv kernel via
#             per-tap dots to avoid the (small, bf16) im2col staging in HBM.

def im2col_nhwc(x, k):
    """x: (B, H, W, C) -> (B*Ho*Wo, k*k*C); column index = (di*k + dj)*C + c."""
    B, H, W, C = x.shape
    Ho, Wo = H - k + 1, W - k + 1
    cols = [x[:, di:di + Ho, dj:dj + Wo, :]
            for di in range(k) for dj in range(k)]
    p = jnp.concatenate(cols, axis=-1)            # (B, Ho, Wo, k*k*C)
    return p.reshape(B * Ho * Wo, k * k * C), (B, Ho, Wo)


def maxpool2x2_nhwc(x):
    """x: (B, H, W, C) -> (B, H//2, W//2, C), same as nn.MaxPool2d(2, 2)."""
    B, H, W, C = x.shape
    return jnp.max(x.reshape(B, H // 2, 2, W // 2, 2, C), axis=(2, 4))


def xavier_uniform(key, shape, fan_in, fan_out):
    bound = (6.0 / (fan_in + fan_out)) ** 0.5
    return jax.random.uniform(key, shape, jnp.float32, -bound, bound)


# ------------------------------ parameters ----------------------------------

def make_params(key, zd_dim, y_dim):
    k_c1, k_c2, k_f11, k_f12 = jax.random.split(key, 4)

    # conv1: PyTorch (32,1,5,5); stored as GEMM weight (5*5*1, 128) bf16,
    # output channels zero-padded 32 -> 128. Xavier fans match PyTorch.
    w1 = xavier_uniform(k_c1, (5, 5, 1, 32), 1 * 25, 32 * 25)
    w1 = jnp.pad(w1, ((0, 0), (0, 0), (0, 0), (0, CPAD - 32)))
    conv1_w = w1.reshape(25 * 1, CPAD).astype(jnp.bfloat16)
    bn1_gamma = jnp.pad(jnp.ones((1, 32), jnp.float32),
                        ((0, 0), (0, CPAD - 32)))
    bn1_beta = jnp.zeros((1, CPAD), jnp.float32)

    # conv2: PyTorch (64,32,5,5); Cin padded 32 -> 128 (zero rows, matching the
    # zero-padded activations) and Cout padded 64 -> 128.
    w2 = xavier_uniform(k_c2, (5, 5, 32, 64), 32 * 25, 64 * 25)
    w2 = jnp.pad(w2, ((0, 0), (0, 0), (0, CPAD - 32), (0, CPAD - 64)))
    conv2_w = w2.reshape(25 * CPAD, CPAD).astype(jnp.bfloat16)
    bn2_gamma = jnp.pad(jnp.ones((1, 64), jnp.float32),
                        ((0, 0), (0, CPAD - 64)))
    bn2_beta = jnp.zeros((1, CPAD), jnp.float32)

    # fc11: Linear(1024, 256); rows indexed (h, w, c) over (4,4,64) and
    # zero-padded over the 64 -> 128 channel axis to match the padded flatten.
    w11 = xavier_uniform(k_f11, (4, 4, 64, 256), 1024, 256)
    w11 = jnp.pad(w11, ((0, 0), (0, 0), (0, CPAD - 64), (0, 0)))
    fc11_w = w11.reshape(4 * 4 * CPAD, 256).astype(jnp.bfloat16)
    fc11_b = jnp.zeros((1, 256), jnp.float32)

    # fc12: Linear(256 + zd_dim, y_dim); split into h-part / z-part, N -> 128.
    w12 = xavier_uniform(k_f12, (256 + zd_dim, y_dim), 256 + zd_dim, y_dim)
    w12 = jnp.pad(w12, ((0, 0), (0, YPAD - y_dim)))
    fc12_wh = w12[:256].astype(jnp.bfloat16)
    fc12_wz = w12[256:].astype(jnp.bfloat16)
    fc12_b = jnp.zeros((1, YPAD), jnp.float32)

    return dict(conv1_w=conv1_w, bn1_gamma=bn1_gamma, bn1_beta=bn1_beta,
                conv2_w=conv2_w, bn2_gamma=bn2_gamma, bn2_beta=bn2_beta,
                fc11_w=fc11_w, fc11_b=fc11_b,
                fc12_wh=fc12_wh, fc12_wz=fc12_wz, fc12_b=fc12_b)


# ------------------------------ forward pass --------------------------------

def py_forward(params, x, z, *, y_dim):
    # NCHW -> NHWC once (C = 1, so this is effectively a reshape), cast bf16.
    xh = jnp.transpose(x, (0, 2, 3, 1)).astype(jnp.bfloat16)   # (B, 28, 28, 1)

    # encoder block 1: Conv(1->32, k5, no bias) + BN + ReLU (fused), pool.
    cols, (B, Ho, Wo) = im2col_nhwc(xh, 5)                     # (B*576, 25)
    h = conv_bn_relu(cols, params['conv1_w'],
                     params['bn1_gamma'], params['bn1_beta'])  # (B*576, 128)
    h = maxpool2x2_nhwc(h.reshape(B, Ho, Wo, CPAD))            # (B, 12, 12, 128)

    # encoder block 2: Conv(32->64, k5, no bias) + BN + ReLU (fused), pool.
    cols, (B, Ho, Wo) = im2col_nhwc(h, 5)                      # (B*64, 3200)
    h = conv_bn_relu(cols, params['conv2_w'],
                     params['bn2_gamma'], params['bn2_beta'])  # (B*64, 128)
    h = maxpool2x2_nhwc(h.reshape(B, Ho, Wo, CPAD))            # (B, 4, 4, 128)

    # flatten (padded channels carry exact zeros; fc11 weight rows match).
    h_flat = h.reshape(B, -1)                                  # (B, 2048) bf16

    # fused FC tail: fc11 + ReLU, then fc12 as two dots (== concat + linear).
    h, y_pad = fc_tail(h_flat, z.astype(jnp.bfloat16),
                       params['fc11_w'], params['fc11_b'],
                       params['fc12_wh'], params['fc12_wz'], params['fc12_b'])

    h_cat_z = jnp.concatenate([h, z], axis=-1)
    y_hat = y_pad[:, :y_dim]
    return h, h_cat_z, y_hat


# ---------------------------------- main -------------------------------------

if __name__ == "__main__":
    key = jax.random.PRNGKey(0)
    k_params, k_x, k_z = jax.random.split(key, 3)

    zd_dim, y_dim = 8, 10   # other ctor dims (d_dim, x_dim, zx_dim, zy_dim) unused

    params = make_params(k_params, zd_dim, y_dim)
    x = jax.random.normal(k_x, (2, 1, 28, 28), jnp.float32)
    z = jax.random.normal(k_z, (2, zd_dim), jnp.float32)

    fwd = jax.jit(functools.partial(py_forward, y_dim=y_dim))
    h, h_cat_z, y_hat = fwd(params, x, z)
    jax.block_until_ready((h, h_cat_z, y_hat))

    assert h.shape == (2, 256)
    assert h_cat_z.shape == (2, 256 + zd_dim)
    assert y_hat.shape == (2, y_dim)
    assert bool(jnp.all(jnp.isfinite(y_hat)))
    print("KERNEL_OK")
</pallas_src>

<mosaic_0001>
module attributes {stable_mosaic.version = 11 : i64} {
  func.func @_conv_bn_relu_kernel(%arg0: i32, %arg1: memref<1152x25xbf16, #tpu.memory_space<vmem>>, %arg2: memref<25x128xbf16, #tpu.memory_space<vmem>>, %arg3: memref<1x128xf32, #tpu.memory_space<vmem>>, %arg4: memref<1x128xf32, #tpu.memory_space<vmem>>, %arg5: memref<1152x128xbf16, #tpu.memory_space<vmem>>) attributes {dimension_semantics = [#tpu.dimension_semantics<arbitrary>], iteration_bounds = array<i64: 1>, scalar_prefetch = 0 : i64, scratch_operands = 0 : i64, tpu.core_type = #tpu.core_type<tc>, window_params = [{pipeline_mode = #tpu.pipeline_mode<synchronous>, transform_indices = @transform_0, window_bounds = array<i64: 1152, 25>}, {pipeline_mode = #tpu.pipeline_mode<synchronous>, transform_indices = @transform_1, window_bounds = array<i64: 25, 128>}, {pipeline_mode = #tpu.pipeline_mode<synchronous>, transform_indices = @transform_2, window_bounds = array<i64: 1, 128>}, {pipeline_mode = #tpu.pipeline_mode<synchronous>, transform_indices = @transform_3, window_bounds = array<i64: 1, 128>}, {pipeline_mode = #tpu.pipeline_mode<synchronous>, transform_indices = @transform_4, window_bounds = array<i64: 1152, 128>}]} {
    %c0 = arith.constant 0 : index
    %c0_0 = arith.constant 0 : index
    %0 = vector.load %arg1[%c0, %c0_0] : memref<1152x25xbf16, #tpu.memory_space<vmem>>, vector<1152x25xbf16>
    %c0_1 = arith.constant 0 : index
    %c0_2 = arith.constant 0 : index
    %1 = vector.load %arg2[%c0_1, %c0_2] : memref<25x128xbf16, #tpu.memory_space<vmem>>, vector<25x128xbf16>
    %cst = arith.constant dense<0.000000e+00> : vector<1152x128xf32>
    %2 = tpu.matmul %0, %1, %cst {dimension_numbers = #tpu.dot_dimension_numbers<[1], [0], [0], [1], [0, 0, 1, 1], [], []>} : vector<1152x25xbf16>, vector<25x128xbf16>, vector<1152x128xf32> -> vector<1152x128xf32>
    %cst_3 = arith.constant dense<0.000000e+00> : vector<128xf32>
    %3 = vector.multi_reduction <add>, %2, %cst_3 [0] : vector<1152x128xf32> to vector<128xf32>
    %4 = vector.shape_cast %3 : vector<128xf32> to vector<1x128xf32>
    %cst_4 = arith.constant 8.68055562E-4 : f32
    %5 = vector.broadcast %cst_4 : f32 to vector<1x128xf32>
    %6 = arith.mulf %4, %5 : vector<1x128xf32>
    %7 = arith.mulf %2, %2 : vector<1152x128xf32>
    %cst_5 = arith.constant dense<0.000000e+00> : vector<128xf32>
    %8 = vector.multi_reduction <add>, %7, %cst_5 [0] : vector<1152x128xf32> to vector<128xf32>
    %9 = vector.shape_cast %8 : vector<128xf32> to vector<1x128xf32>
    %cst_6 = arith.constant 8.68055562E-4 : f32
    %10 = vector.broadcast %cst_6 : f32 to vector<1x128xf32>
    %11 = arith.mulf %9, %10 : vector<1x128xf32>
    %12 = arith.mulf %6, %6 : vector<1x128xf32>
    %13 = arith.subf %11, %12 : vector<1x128xf32>
    %cst_7 = arith.constant 9.99999974E-6 : f32
    %14 = vector.broadcast %cst_7 : f32 to vector<1x128xf32>
    %15 = arith.addf %13, %14 : vector<1x128xf32>
    %16 = math.rsqrt %15 : vector<1x128xf32>
    %c0_8 = arith.constant 0 : index
    %c0_9 = arith.constant 0 : index
    %17 = vector.load %arg3[%c0_8, %c0_9] : memref<1x128xf32, #tpu.memory_space<vmem>>, vector<1x128xf32>
    %18 = arith.mulf %16, %17 : vector<1x128xf32>
    %19 = vector.broadcast %6 : vector<1x128xf32> to vector<1152x128xf32>
    %20 = arith.subf %2, %19 : vector<1152x128xf32>
    %21 = vector.broadcast %18 : vector<1x128xf32> to vector<1152x128xf32>
    %22 = arith.mulf %20, %21 : vector<1152x128xf32>
    %c0_10 = arith.constant 0 : index
    %c0_11 = arith.constant 0 : index
    %23 = vector.load %arg4[%c0_10, %c0_11] : memref<1x128xf32, #tpu.memory_space<vmem>>, vector<1x128xf32>
    %24 = vector.broadcast %23 : vector<1x128xf32> to vector<1152x128xf32>
    %25 = arith.addf %22, %24 : vector<1152x128xf32>
    %cst_12 = arith.constant 0.000000e+00 : f32
    %26 = vector.broadcast %cst_12 : f32 to vector<1152x128xf32>
    %27 = arith.maximumf %25, %26 : vector<1152x128xf32>
    %28 = arith.truncf %27 : vector<1152x128xf32> to vector<1152x128xbf16>
    %c0_13 = arith.constant 0 : index
    %c0_14 = arith.constant 0 : index
    %29 = vector.load %arg5[%c0_13, %c0_14] : memref<1152x128xbf16, #tpu.memory_space<vmem>>, vector<1152x128xbf16>
    tpu.vector_store %arg5[%c0_13, %c0_14], %28 {strides = array<i32>} : memref<1152x128xbf16, #tpu.memory_space<vmem>>, vector<1152x128xbf16>,
    return
  }
  func.func @transform_0(%arg0: i32) -> (i32, i32) {
    %c0_i32 = arith.constant 0 : i32
    %c0_i32_0 = arith.constant 0 : i32
    %c0_i32_1 = arith.constant 0 : i32
    return %c0_i32, %c0_i32_0 : i32, i32
  }
  func.func @transform_1(%arg0: i32) -> (i32, i32) {
    %c0_i32 = arith.constant 0 : i32
    %c0_i32_0 = arith.constant 0 : i32
    %c0_i32_1 = arith.constant 0 : i32
    return %c0_i32, %c0_i32_0 : i32, i32
  }
  func.func @transform_2(%arg0: i32) -> (i32, i32) {
    %c0_i32 = arith.constant 0 : i32
    %c0_i32_0 = arith.constant 0 : i32
    %c0_i32_1 = arith.constant 0 : i32
    return %c0_i32, %c0_i32_0 : i32, i32
  }
  func.func @transform_3(%arg0: i32) -> (i32, i32) {
    %c0_i32 = arith.constant 0 : i32
    %c0_i32_0 = arith.constant 0 : i32
    %c0_i32_1 = arith.constant 0 : i32
    return %c0_i32, %c0_i32_0 : i32, i32
  }
  func.func @transform_4(%arg0: i32) -> (i32, i32) {
    %c0_i32 = arith.constant 0 : i32
    %c0_i32_0 = arith.constant 0 : i32
    %c0_i32_1 = arith.constant 0 : i32
    return %c0_i32, %c0_i32_0 : i32, i32
  }
}

module attributes {stable_mosaic.version = 11 : i64} {
  func.func @_conv_bn_relu_kernel(%arg0: i32, %arg1: memref<128x3200xbf16, #tpu.memory_space<vmem>>, %arg2: memref<3200x128xbf16, #tpu.memory_space<vmem>>, %arg3: memref<1x128xf32, #tpu.memory_space<vmem>>, %arg4: memref<1x128xf32, #tpu.memory_space<vmem>>, %arg5: memref<128x128xbf16, #tpu.memory_space<vmem>>) attributes {dimension_semantics = [#tpu.dimension_semantics<arbitrary>], iteration_bounds = array<i64: 1>, scalar_prefetch = 0 : i64, scratch_operands = 0 : i64, tpu.core_type = #tpu.core_type<tc>, window_params = [{pipeline_mode = #tpu.pipeline_mode<synchronous>, transform_indices = @transform_0, window_bounds = array<i64: 128, 3200>}, {pipeline_mode = #tpu.pipeline_mode<synchronous>, transform_indices = @transform_1, window_bounds = array<i64: 3200, 128>}, {pipeline_mode = #tpu.pipeline_mode<synchronous>, transform_indices = @transform_2, window_bounds = array<i64: 1, 128>}, {pipeline_mode = #tpu.pipeline_mode<synchronous>, transform_indices = @transform_3, window_bounds = array<i64: 1, 128>}, {pipeline_mode = #tpu.pipeline_mode<synchronous>, transform_indices = @transform_4, window_bounds = array<i64: 128, 128>}]} {
    %c0 = arith.constant 0 : index
    %c0_0 = arith.constant 0 : index
    %0 = vector.load %arg1[%c0, %c0_0] : memref<128x3200xbf16, #tpu.memory_space<vmem>>, vector<128x3200xbf16>
    %c0_1 = arith.constant 0 : index
    %c0_2 = arith.constant 0 : index
    %1 = vector.load %arg2[%c0_1, %c0_2] : memref<3200x128xbf16, #tpu.memory_space<vmem>>, vector<3200x128xbf16>
    %cst = arith.constant dense<0.000000e+00> : vector<128x128xf32>
    %2 = tpu.matmul %0, %1, %cst {dimension_numbers = #tpu.dot_dimension_numbers<[1], [0], [0], [1], [0, 0, 1, 1], [], []>} : vector<128x3200xbf16>, vector<3200x128xbf16>, vector<128x128xf32> -> vector<128x128xf32>
    %cst_3 = arith.constant dense<0.000000e+00> : vector<128xf32>
    %3 = vector.multi_reduction <add>, %2, %cst_3 [0] : vector<128x128xf32> to vector<128xf32>
    %4 = vector.shape_cast %3 : vector<128xf32> to vector<1x128xf32>
    %cst_4 = arith.constant 7.812500e-03 : f32
    %5 = vector.broadcast %cst_4 : f32 to vector<1x128xf32>
    %6 = arith.mulf %4, %5 : vector<1x128xf32>
    %7 = arith.mulf %2, %2 : vector<128x128xf32>
    %cst_5 = arith.constant dense<0.000000e+00> : vector<128xf32>
    %8 = vector.multi_reduction <add>, %7, %cst_5 [0] : vector<128x128xf32> to vector<128xf32>
    %9 = vector.shape_cast %8 : vector<128xf32> to vector<1x128xf32>
    %cst_6 = arith.constant 7.812500e-03 : f32
    %10 = vector.broadcast %cst_6 : f32 to vector<1x128xf32>
    %11 = arith.mulf %9, %10 : vector<1x128xf32>
    %12 = arith.mulf %6, %6 : vector<1x128xf32>
    %13 = arith.subf %11, %12 : vector<1x128xf32>
    %cst_7 = arith.constant 9.99999974E-6 : f32
    %14 = vector.broadcast %cst_7 : f32 to vector<1x128xf32>
    %15 = arith.addf %13, %14 : vector<1x128xf32>
    %16 = math.rsqrt %15 : vector<1x128xf32>
    %c0_8 = arith.constant 0 : index
    %c0_9 = arith.constant 0 : index
    %17 = vector.load %arg3[%c0_8, %c0_9] : memref<1x128xf32, #tpu.memory_space<vmem>>, vector<1x128xf32>
    %18 = arith.mulf %16, %17 : vector<1x128xf32>
    %19 = vector.broadcast %6 : vector<1x128xf32> to vector<128x128xf32>
    %20 = arith.subf %2, %19 : vector<128x128xf32>
    %21 = vector.broadcast %18 : vector<1x128xf32> to vector<128x128xf32>
    %22 = arith.mulf %20, %21 : vector<128x128xf32>
    %c0_10 = arith.constant 0 : index
    %c0_11 = arith.constant 0 : index
    %23 = vector.load %arg4[%c0_10, %c0_11] : memref<1x128xf32, #tpu.memory_space<vmem>>, vector<1x128xf32>
    %24 = vector.broadcast %23 : vector<1x128xf32> to vector<128x128xf32>
    %25 = arith.addf %22, %24 : vector<128x128xf32>
    %cst_12 = arith.constant 0.000000e+00 : f32
    %26 = vector.broadcast %cst_12 : f32 to vector<128x128xf32>
    %27 = arith.maximumf %25, %26 : vector<128x128xf32>
    %28 = arith.truncf %27 : vector<128x128xf32> to vector<128x128xbf16>
    %c0_13 = arith.constant 0 : index
    %c0_14 = arith.constant 0 : index
    %29 = vector.load %arg5[%c0_13, %c0_14] : memref<128x128xbf16, #tpu.memory_space<vmem>>, vector<128x128xbf16>
    tpu.vector_store %arg5[%c0_13, %c0_14], %28 {strides = array<i32>} : memref<128x128xbf16, #tpu.memory_space<vmem>>, vector<128x128xbf16>,
    return
  }
  func.func @transform_0(%arg0: i32) -> (i32, i32) {
    %c0_i32 = arith.constant 0 : i32
    %c0_i32_0 = arith.constant 0 : i32
    %c0_i32_1 = arith.constant 0 : i32
    return %c0_i32, %c0_i32_0 : i32, i32
  }
  func.func @transform_1(%arg0: i32) -> (i32, i32) {
    %c0_i32 = arith.constant 0 : i32
    %c0_i32_0 = arith.constant 0 : i32
    %c0_i32_1 = arith.constant 0 : i32
    return %c0_i32, %c0_i32_0 : i32, i32
  }
  func.func @transform_2(%arg0: i32) -> (i32, i32) {
    %c0_i32 = arith.constant 0 : i32
    %c0_i32_0 = arith.constant 0 : i32
    %c0_i32_1 = arith.constant 0 : i32
    return %c0_i32, %c0_i32_0 : i32, i32
  }
  func.func @transform_3(%arg0: i32) -> (i32, i32) {
    %c0_i32 = arith.constant 0 : i32
    %c0_i32_0 = arith.constant 0 : i32
    %c0_i32_1 = arith.constant 0 : i32
    return %c0_i32, %c0_i32_0 : i32, i32
  }
  func.func @transform_4(%arg0: i32) -> (i32, i32) {
    %c0_i32 = arith.constant 0 : i32
    %c0_i32_0 = arith.constant 0 : i32
    %c0_i32_1 = arith.constant 0 : i32
    return %c0_i32, %c0_i32_0 : i32, i32
  }
}

module attributes {stable_mosaic.version = 11 : i64} {
  func.func @_fc_tail_kernel(%arg0: i32, %arg1: memref<2x2048xbf16, #tpu.memory_space<vmem>>, %arg2: memref<2x8xbf16, #tpu.memory_space<vmem>>, %arg3: memref<2048x256xbf16, #tpu.memory_space<vmem>>, %arg4: memref<1x256xf32, #tpu.memory_space<vmem>>, %arg5: memref<256x128xbf16, #tpu.memory_space<vmem>>, %arg6: memref<8x128xbf16, #tpu.memory_space<vmem>>, %arg7: memref<1x128xf32, #tpu.memory_space<vmem>>, %arg8: memref<2x256xf32, #tpu.memory_space<vmem>>, %arg9: memref<2x128xf32, #tpu.memory_space<vmem>>) attributes {dimension_semantics = [#tpu.dimension_semantics<arbitrary>], iteration_bounds = array<i64: 1>, scalar_prefetch = 0 : i64, scratch_operands = 0 : i64, tpu.core_type = #tpu.core_type<tc>, window_params = [{pipeline_mode = #tpu.pipeline_mode<synchronous>, transform_indices = @transform_0, window_bounds = array<i64: 2, 2048>}, {pipeline_mode = #tpu.pipeline_mode<synchronous>, transform_indices = @transform_1, window_bounds = array<i64: 2, 8>}, {pipeline_mode = #tpu.pipeline_mode<synchronous>, transform_indices = @transform_2, window_bounds = array<i64: 2048, 256>}, {pipeline_mode = #tpu.pipeline_mode<synchronous>, transform_indices = @transform_3, window_bounds = array<i64: 1, 256>}, {pipeline_mode = #tpu.pipeline_mode<synchronous>, transform_indices = @transform_4, window_bounds = array<i64: 256, 128>}, {pipeline_mode = #tpu.pipeline_mode<synchronous>, transform_indices = @transform_5, window_bounds = array<i64: 8, 128>}, {pipeline_mode = #tpu.pipeline_mode<synchronous>, transform_indices = @transform_6, window_bounds = array<i64: 1, 128>}, {pipeline_mode = #tpu.pipeline_mode<synchronous>, transform_indices = @transform_7, window_bounds = array<i64: 2, 256>}, {pipeline_mode = #tpu.pipeline_mode<synchronous>, transform_indices = @transform_8, window_bounds = array<i64: 2, 128>}]} {
    %c0 = arith.constant 0 : index
    %c0_0 = arith.constant 0 : index
    %0 = vector.load %arg1[%c0, %c0_0] : memref<2x2048xbf16, #tpu.memory_space<vmem>>, vector<2x2048xbf16>
    %c0_1 = arith.constant 0 : index
    %c0_2 = arith.constant 0 : index
    %1 = vector.load %arg3[%c0_1, %c0_2] : memref<2048x256xbf16, #tpu.memory_space<vmem>>, vector<2048x256xbf16>
    %cst = arith.constant dense<0.000000e+00> : vector<2x256xf32>
    %2 = tpu.matmul %0, %1, %cst {dimension_numbers = #tpu.dot_dimension_numbers<[1], [0], [0], [1], [0, 0, 1, 1], [], []>} : vector<2x2048xbf16>, vector<2048x256xbf16>, vector<2x256xf32> -> vector<2x256xf32>
    %c0_3 = arith.constant 0 : index
    %c0_4 = arith.constant 0 : index
    %3 = vector.load %arg4[%c0_3, %c0_4] : memref<1x256xf32, #tpu.memory_space<vmem>>, vector<1x256xf32>
    %4 = vector.broadcast %3 : vector<1x256xf32> to vector<2x256xf32>
    %5 = arith.addf %2, %4 : vector<2x256xf32>
    %cst_5 = arith.constant 0.000000e+00 : f32
    %6 = vector.broadcast %cst_5 : f32 to vector<2x256xf32>
    %7 = arith.maximumf %5, %6 : vector<2x256xf32>
    %c0_6 = arith.constant 0 : index
    %c0_7 = arith.constant 0 : index
    %8 = vector.load %arg8[%c0_6, %c0_7] : memref<2x256xf32, #tpu.memory_space<vmem>>, vector<2x256xf32>
    tpu.vector_store %arg8[%c0_6, %c0_7], %7 {strides = array<i32>} : memref<2x256xf32, #tpu.memory_space<vmem>>, vector<2x256xf32>,
    %9 = arith.truncf %7 : vector<2x256xf32> to vector<2x256xbf16>
    %c0_8 = arith.constant 0 : index
    %c0_9 = arith.constant 0 : index
    %10 = vector.load %arg5[%c0_8, %c0_9] : memref<256x128xbf16, #tpu.memory_space<vmem>>, vector<256x128xbf16>
    %cst_10 = arith.constant dense<0.000000e+00> : vector<2x128xf32>
    %11 = tpu.matmul %9, %10, %cst_10 {dimension_numbers = #tpu.dot_dimension_numbers<[1], [0], [0], [1], [0, 0, 1, 1], [], []>} : vector<2x256xbf16>, vector<256x128xbf16>, vector<2x128xf32> -> vector<2x128xf32>
    %c0_11 = arith.constant 0 : index
    %c0_12 = arith.constant 0 : index
    %12 = vector.load %arg2[%c0_11, %c0_12] : memref<2x8xbf16, #tpu.memory_space<vmem>>, vector<2x8xbf16>
    %c0_13 = arith.constant 0 : index
    %c0_14 = arith.constant 0 : index
    %13 = vector.load %arg6[%c0_13, %c0_14] : memref<8x128xbf16, #tpu.memory_space<vmem>>, vector<8x128xbf16>
    %cst_15 = arith.constant dense<0.000000e+00> : vector<2x128xf32>
    %14 = tpu.matmul %12, %13, %cst_15 {dimension_numbers = #tpu.dot_dimension_numbers<[1], [0], [0], [1], [0, 0, 1, 1], [], []>} : vector<2x8xbf16>, vector<8x128xbf16>, vector<2x128xf32> -> vector<2x128xf32>
    %15 = arith.addf %11, %14 : vector<2x128xf32>
    %c0_16 = arith.constant 0 : index
    %c0_17 = arith.constant 0 : index
    %16 = vector.load %arg7[%c0_16, %c0_17] : memref<1x128xf32, #tpu.memory_space<vmem>>, vector<1x128xf32>
    %17 = vector.broadcast %16 : vector<1x128xf32> to vector<2x128xf32>
    %18 = arith.addf %15, %17 : vector<2x128xf32>
    %c0_18 = arith.constant 0 : index
    %c0_19 = arith.constant 0 : index
    %19 = vector.load %arg9[%c0_18, %c0_19] : memref<2x128xf32, #tpu.memory_space<vmem>>, vector<2x128xf32>
    tpu.vector_store %arg9[%c0_18, %c0_19], %18 {strides = array<i32>} : memref<2x128xf32, #tpu.memory_space<vmem>>, vector<2x128xf32>,
    return
  }
  func.func @transform_0(%arg0: i32) -> (i32, i32) {
    %c0_i32 = arith.constant 0 : i32
    %c0_i32_0 = arith.constant 0 : i32
    %c0_i32_1 = arith.constant 0 : i32
    return %c0_i32, %c0_i32_0 : i32, i32
  }
  func.func @transform_1(%arg0: i32) -> (i32, i32) {
    %c0_i32 = arith.constant 0 : i32
    %c0_i32_0 = arith.constant 0 : i32
    %c0_i32_1 = arith.constant 0 : i32
    return %c0_i32, %c0_i32_0 : i32, i32
  }
  func.func @transform_2(%arg0: i32) -> (i32, i32) {
    %c0_i32 = arith.constant 0 : i32
    %c0_i32_0 = arith.constant 0 : i32
    %c0_i32_1 = arith.constant 0 : i32
    return %c0_i32, %c0_i32_0 : i32, i32
  }
  func.func @transform_3(%arg0: i32) -> (i32, i32) {
    %c0_i32 = arith.constant 0 : i32
    %c0_i32_0 = arith.constant 0 : i32
    %c0_i32_1 = arith.constant 0 : i32
    return %c0_i32, %c0_i32_0 : i32, i32
  }
  func.func @transform_4(%arg0: i32) -> (i32, i32) {
    %c0_i32 = arith.constant 0 : i32
    %c0_i32_0 = arith.constant 0 : i32
    %c0_i32_1 = arith.constant 0 : i32
    return %c0_i32, %c0_i32_0 : i32, i32
  }
  func.func @transform_5(%arg0: i32) -> (i32, i32) {
    %c0_i32 = arith.constant 0 : i32
    %c0_i32_0 = arith.constant 0 : i32
    %c0_i32_1 = arith.constant 0 : i32
    return %c0_i32, %c0_i32_0 : i32, i32
  }
  func.func @transform_6(%arg0: i32) -> (i32, i32) {
    %c0_i32 = arith.constant 0 : i32
    %c0_i32_0 = arith.constant 0 : i32
    %c0_i32_1 = arith.constant 0 : i32
    return %c0_i32, %c0_i32_0 : i32, i32
  }
  func.func @transform_7(%arg0: i32) -> (i32, i32) {
    %c0_i32 = arith.constant 0 : i32
    %c0_i32_0 = arith.constant 0 : i32
    %c0_i32_1 = arith.constant 0 : i32
    return %c0_i32, %c0_i32_0 : i32, i32
  }
  func.func @transform_8(%arg0: i32) -> (i32, i32) {
    %c0_i32 = arith.constant 0 : i32
    %c0_i32_0 = arith.constant 0 : i32
    %c0_i32_1 = arith.constant 0 : i32
    return %c0_i32, %c0_i32_0 : i32, i32
  }
}

</mosaic_0001>

<llo_original>
// kernel: py_forward.3
$region0: #{py_forward.3}
  #allocation0 [shape = 'u32[]', space=smem, size = 0x4, offset = 0x4, fixed_abs, tag = 'smem constant byte address 0x4 - core index']
  #allocation1 [shape = 'u32[72,128]{1,0:T(1,128)}', space=vmem, size = 0x9000, scoped, tag = 'internal scratch']
  %s0 = inlined_call_operand.vmem [shape: bf16[1152,25], index: 0, kind: input, shape index: {}]
  %s1 = inlined_call_operand.vmem [shape: bf16[25,128], index: 1, kind: input, shape index: {}]
  %s2 = inlined_call_operand.vmem [shape: f32[1,128], index: 2, kind: input, shape index: {}]
  %s3 = inlined_call_operand.vmem [shape: f32[1,128], index: 3, kind: input, shape index: {}]
  %s4 = inlined_call_operand.vmem [shape: bf16[1152,128], index: 4, kind: output, shape index: {}]
  %s5 = sld [smem:[#allocation0]]
  $region26: #{py_forward.3} parent=0
    _
  %s7 = ssub.s32 1, %s5
  %s8 = scalar_select 0, %s7, %s5
  // Predicated region
  $region2: #{py_forward.3} parent=0 // pred_check
    _
  $region3: #{py_forward.3} parent=0 // pred_check_branch
    %10 = sbr.rel (0) target = $region5
  $region4: #{py_forward.3} parent=0 // pred_region
    _
  $region5: #{py_forward.3} parent=0 // pred_fallthru
    _
  // Predicated region
  $region6: #{py_forward.3} parent=0 // pred_check
    _
  $region7: #{py_forward.3} parent=0 // pred_check_branch
    %12 = sbr.rel (0) target = $region9
  $region8: #{py_forward.3} parent=0 // pred_region
    _
  $region9: #{py_forward.3} parent=0 // pred_fallthru
    _
  // Predicated region
  $region10: #{py_forward.3} parent=0 // pred_check
    _
  $region11: #{py_forward.3} parent=0 // pred_check_branch
    %14 = sbr.rel (0) target = $region13
  $region12: #{py_forward.3} parent=0 // pred_region
    _
  $region13: #{py_forward.3} parent=0 // pred_fallthru
    _
  // Predicated region
  $region14: #{py_forward.3} parent=0 // pred_check
    _
  $region15: #{py_forward.3} parent=0 // pred_check_branch
    %16 = sbr.rel (0) target = $region17
  $region16: #{py_forward.3} parent=0 // pred_region
    _
  $region17: #{py_forward.3} parent=0 // pred_fallthru
    _
  %v18 = vld [vmem:[%s0] sm:$0xf]
  %v19 = vld [vmem:[%s0 + $0x4] sm:$0xf]
  %v20 = vld [vmem:[%s0 + $0x8] sm:$0xf]
  %v21 = vld [vmem:[%s0 + $0xc] sm:$0xf]
  %v22 = vld [vmem:[%s0 + $0x10] sm:$0xf]
  %v23 = vld [vmem:[%s0 + $0x14] sm:$0xf]
  %v24 = vld [vmem:[%s0 + $0x18] sm:$0xf]
  %v25 = vld [vmem:[%s0 + $0x1c] sm:$0xf]
  %v26 = vld [vmem:[%s0 + $0x20] sm:$0xf]
  %v27 = vld [vmem:[%s0 + $0x24] sm:$0xf]
  %v28 = vld [vmem:[%s0 + $0x28] sm:$0xf]
  %v29 = vld [vmem:[%s0 + $0x2c] sm:$0xf]
  %v30 = vld [vmem:[%s0 + $0x30] sm:$0xf]
  %v31 = vld [vmem:[%s0 + $0x34] sm:$0xf]
  %v32 = vld [vmem:[%s0 + $0x38] sm:$0xf]
  %v33 = vld [vmem:[%s0 + $0x3c] sm:$0xf]
  %v34 = vld [vmem:[%s0 + $0x40] sm:$0xf]
  %v35 = vld [vmem:[%s0 + $0x44] sm:$0xf]
  %v36 = vld [vmem:[%s0 + $0x48] sm:$0xf]
  %v37 = vld [vmem:[%s0 + $0x4c] sm:$0xf]
  %v38 = vld [vmem:[%s0 + $0x50] sm:$0xf]
  %v39 = vld [vmem:[%s0 + $0x54] sm:$0xf]
  %v40 = vld [vmem:[%s0 + $0x58] sm:$0xf]
  %v41 = vld [vmem:[%s0 + $0x5c] sm:$0xf]
  %v42 = vld [vmem:[%s0 + $0x60] sm:$0xf]
  %v43 = vld [vmem:[%s0 + $0x64] sm:$0xf]
  %v44 = vld [vmem:[%s0 + $0x68] sm:$0xf]
  %v45 = vld [vmem:[%s0 + $0x6c] sm:$0xf]
  %v46 = vld [vmem:[%s0 + $0x70] sm:$0xf]
  %v47 = vld [vmem:[%s0 + $0x74] sm:$0xf]
  %v48 = vld [vmem:[%s0 + $0x78] sm:$0xf]
  %v49 = vld [vmem:[%s0 + $0x7c] sm:$0xf]
  %v50 = vld [vmem:[%s0 + $0x80] sm:$0xf]
  %v51 = vld [vmem:[%s0 + $0x84] sm:$0xf]
  %v52 = vld [vmem:[%s0 + $0x88] sm:$0xf]
  %v53 = vld [vmem:[%s0 + $0x8c] sm:$0xf]
  %v54 = vld [vmem:[%s0 + $0x90] sm:$0xf]
  %v55 = vld [vmem:[%s0 + $0x94] sm:$0xf]
  %v56 = vld [vmem:[%s0 + $0x98] sm:$0xf]
  %v57 = vld [vmem:[%s0 + $0x9c] sm:$0xf]
  %v58 = vld [vmem:[%s0 + $0xa0] sm:$0xf]
  %v59 = vld [vmem:[%s0 + $0xa4] sm:$0xf]
  %v60 = vld [vmem:[%s0 + $0xa8] sm:$0xf]
  %v61 = vld [vmem:[%s0 + $0xac] sm:$0xf]
  %v62 = vld [vmem:[%s0 + $0xb0] sm:$0xf]
  %v63 = vld [vmem:[%s0 + $0xb4] sm:$0xf]
  %v64 = vld [vmem:[%s0 + $0xb8] sm:$0xf]
  %v65 = vld [vmem:[%s0 + $0xbc] sm:$0xf]
  %v66 = vld [vmem:[%s0 + $0xc0] sm:$0xf]
  %v67 = vld [vmem:[%s0 + $0xc4] sm:$0xf]
  %v68 = vld [vmem:[%s0 + $0xc8] sm:$0xf]
  %v69 = vld [vmem:[%s0 + $0xcc] sm:$0xf]
  %v70 = vld [vmem:[%s0 + $0xd0] sm:$0xf]
  %v71 = vld [vmem:[%s0 + $0xd4] sm:$0xf]
  %v72 = vld [vmem:[%s0 + $0xd8] sm:$0xf]
  %v73 = vld [vmem:[%s0 + $0xdc] sm:$0xf]
  %v74 = vld [vmem:[%s0 + $0xe0] sm:$0xf]
  %v75 = vld [vmem:[%s0 + $0xe4] sm:$0xf]
  %v76 = vld [vmem:[%s0 + $0xe8] sm:$0xf]
  %v77 = vld [vmem:[%s0 + $0xec] sm:$0xf]
  %v78 = vld [vmem:[%s0 + $0xf0] sm:$0xf]
  %v79 = vld [vmem:[%s0 + $0xf4] sm:$0xf]
  %v80 = vld [vmem:[%s0 + $0xf8] sm:$0xf]
  %v81 = vld [vmem:[%s0 + $0xfc] sm:$0xf]
  %v82 = vld [vmem:[%s0 + $0x100] sm:$0xf]
  %v83 = vld [vmem:[%s0 + $0x104] sm:$0xf]
  %v84 = vld [vmem:[%s0 + $0x108] sm:$0xf]
  %v85 = vld [vmem:[%s0 + $0x10c] sm:$0xf]
  %v86 = vld [vmem:[%s0 + $0x110] sm:$0xf]
  %v87 = vld [vmem:[%s0 + $0x114] sm:$0xf]
  %v88 = vld [vmem:[%s0 + $0x118] sm:$0xf]
  %v89 = vld [vmem:[%s0 + $0x11c] sm:$0xf]
  %v90 = vld [vmem:[%s0 + $0x120] sm:$0xf]
  %v91 = vld [vmem:[%s0 + $0x124] sm:$0xf]
  %v92 = vld [vmem:[%s0 + $0x128] sm:$0xf]
  %v93 = vld [vmem:[%s0 + $0x12c] sm:$0xf]
  %v94 = vld [vmem:[%s0 + $0x130] sm:$0xf]
  %v95 = vld [vmem:[%s0 + $0x134] sm:$0xf]
  %v96 = vld [vmem:[%s0 + $0x138] sm:$0xf]
  %v97 = vld [vmem:[%s0 + $0x13c] sm:$0xf]
  %v98 = vld [vmem:[%s0 + $0x140] sm:$0xf]
  %v99 = vld [vmem:[%s0 + $0x144] sm:$0xf]
  %v100 = vld [vmem:[%s0 + $0x148] sm:$0xf]
  %v101 = vld [vmem:[%s0 + $0x14c] sm:$0xf]
  %v102 = vld [vmem:[%s0 + $0x150] sm:$0xf]
  %v103 = vld [vmem:[%s0 + $0x154] sm:$0xf]
  %v104 = vld [vmem:[%s0 + $0x158] sm:$0xf]
  %v105 = vld [vmem:[%s0 + $0x15c] sm:$0xf]
  %v106 = vld [vmem:[%s0 + $0x160] sm:$0xf]
  %v107 = vld [vmem:[%s0 + $0x164] sm:$0xf]
  %v108 = vld [vmem:[%s0 + $0x168] sm:$0xf]
  %v109 = vld [vmem:[%s0 + $0x16c] sm:$0xf]
  %v110 = vld [vmem:[%s0 + $0x170] sm:$0xf]
  %v111 = vld [vmem:[%s0 + $0x174] sm:$0xf]
  %v112 = vld [vmem:[%s0 + $0x178] sm:$0xf]
  %v113 = vld [vmem:[%s0 + $0x17c] sm:$0xf]
  %v114 = vld [vmem:[%s0 + $0x180] sm:$0xf]
  %v115 = vld [vmem:[%s0 + $0x184] sm:$0xf]
  %v116 = vld [vmem:[%s0 + $0x188] sm:$0xf]
  %v117 = vld [vmem:[%s0 + $0x18c] sm:$0xf]
  %v118 = vld [vmem:[%s0 + $0x190] sm:$0xf]
  %v119 = vld [vmem:[%s0 + $0x194] sm:$0xf]
  %v120 = vld [vmem:[%s0 + $0x198] sm:$0xf]
  %v121 = vld [vmem:[%s0 + $0x19c] sm:$0xf]
  %v122 = vld [vmem:[%s0 + $0x1a0] sm:$0xf]
  %v123 = vld [vmem:[%s0 + $0x1a4] sm:$0xf]
  %v124 = vld [vmem:[%s0 + $0x1a8] sm:$0xf]
  %v125 = vld [vmem:[%s0 + $0x1ac] sm:$0xf]
  %v126 = vld [vmem:[%s0 + $0x1b0] sm:$0xf]
  %v127 = vld [vmem:[%s0 + $0x1b4] sm:$0xf]
  %v128 = vld [vmem:[%s0 + $0x1b8] sm:$0xf]
  %v129 = vld [vmem:[%s0 + $0x1bc] sm:$0xf]
  %v130 = vld [vmem:[%s0 + $0x1c0] sm:$0xf]
  %v131 = vld [vmem:[%s0 + $0x1c4] sm:$0xf]
  %v132 = vld [vmem:[%s0 + $0x1c8] sm:$0xf]
  %v133 = vld [vmem:[%s0 + $0x1cc] sm:$0xf]
  %v134 = vld [vmem:[%s0 + $0x1d0] sm:$0xf]
  %v135 = vld [vmem:[%s0 + $0x1d4] sm:$0xf]
  %v136 = vld [vmem:[%s0 + $0x1d8] sm:$0xf]
  %v137 = vld [vmem:[%s0 + $0x1dc] sm:$0xf]
  %v138 = vld [vmem:[%s0 + $0x1e0] sm:$0xf]
  %v139 = vld [vmem:[%s0 + $0x1e4] sm:$0xf]
  %v140 = vld [vmem:[%s0 + $0x1e8] sm:$0xf]
  %v141 = vld [vmem:[%s0 + $0x1ec] sm:$0xf]
  %v142 = vld [vmem:[%s0 + $0x1f0] sm:$0xf]
  %v143 = vld [vmem:[%s0 + $0x1f4] sm:$0xf]
  %v144 = vld [vmem:[%s0 + $0x1f8] sm:$0xf]
  %v145 = vld [vmem:[%s0 + $0x1fc] sm:$0xf]
  %v146 = vld [vmem:[%s0 + $0x200] sm:$0xf]
  %v147 = vld [vmem:[%s0 + $0x204] sm:$0xf]
  %v148 = vld [vmem:[%s0 + $0x208] sm:$0xf]
  %v149 = vld [vmem:[%s0 + $0x20c] sm:$0xf]
  %v150 = vld [vmem:[%s0 + $0x210] sm:$0xf]
  %v151 = vld [vmem:[%s0 + $0x214] sm:$0xf]
  %v152 = vld [vmem:[%s0 + $0x218] sm:$0xf]
  %v153 = vld [vmem:[%s0 + $0x21c] sm:$0xf]
  %v154 = vld [vmem:[%s0 + $0x220] sm:$0xf]
  %v155 = vld [vmem:[%s0 + $0x224] sm:$0xf]
  %v156 = vld [vmem:[%s0 + $0x228] sm:$0xf]
  %v157 = vld [vmem:[%s0 + $0x22c] sm:$0xf]
  %v158 = vld [vmem:[%s0 + $0x230] sm:$0xf]
  %v159 = vld [vmem:[%s0 + $0x234] sm:$0xf]
  %v160 = vld [vmem:[%s0 + $0x238] sm:$0xf]
  %v161 = vld [vmem:[%s0 + $0x23c] sm:$0xf]
  %v162 = vld [vmem:[%s1] sm:$0xf]
  %v163 = vld [vmem:[%s1 + $0x4] sm:$0xf]
  %v164 = vld [vmem:[%s1 + $0x8] sm:$0xf]
  %v165 = vld [vmem:[%s1 + $0xc] sm:$0x1]
  %v310 = vunpack.c.l.b16 %v18
  %v311 = vunpack.c.l.b16 %v19
  %v312 = vunpack.c.l.b16 %v20
  %v313 = vunpack.c.l.b16 %v21
  %v314 = vunpack.c.l.b16 %v22
  %v315 = vunpack.c.l.b16 %v23
  %v316 = vunpack.c.l.b16 %v24
  %v317 = vunpack.c.l.b16 %v25
  %v318 = vunpack.c.l.b16 %v26
  %v319 = vunpack.c.l.b16 %v27
  %v320 = vunpack.c.l.b16 %v28
  %v321 = vunpack.c.l.b16 %v29
  %v322 = vunpack.c.l.b16 %v30
  %v323 = vunpack.c.l.b16 %v31
  %v324 = vunpack.c.l.b16 %v32
  %v325 = vunpack.c.l.b16 %v33
  %v326 = vunpack.c.l.b16 %v34
  %v327 = vunpack.c.l.b16 %v35
  %v328 = vunpack.c.l.b16 %v36
  %v329 = vunpack.c.l.b16 %v37
  %v330 = vunpack.c.l.b16 %v38
  %v331 = vunpack.c.l.b16 %v39
  %v332 = vunpack.c.l.b16 %v40
  %v333 = vunpack.c.l.b16 %v41
  %v334 = vunpack.c.l.b16 %v42
  %v335 = vunpack.c.l.b16 %v43
  %v336 = vunpack.c.l.b16 %v44
  %v337 = vunpack.c.l.b16 %v45
  %v338 = vunpack.c.l.b16 %v46
  %v339 = vunpack.c.l.b16 %v47
  %v340 = vunpack.c.l.b16 %v48
  %v341 = vunpack.c.l.b16 %v49
  %v342 = vunpack.c.l.b16 %v50
  %v343 = vunpack.c.l.b16 %v51
  %v344 = vunpack.c.l.b16 %v52
  %v345 = vunpack.c.l.b16 %v53
  %v346 = vunpack.c.l.b16 %v54
  %v347 = vunpack.c.l.b16 %v55
  %v348 = vunpack.c.l.b16 %v56
  %v349 = vunpack.c.l.b16 %v57
  %v350 = vunpack.c.l.b16 %v58
  %v351 = vunpack.c.l.b16 %v59
  %v352 = vunpack.c.l.b16 %v60
  %v353 = vunpack.c.l.b16 %v61
  %v354 = vunpack.c.l.b16 %v62
  %v355 = vunpack.c.l.b16 %v63
  %v356 = vunpack.c.l.b16 %v64
  %v357 = vunpack.c.l.b16 %v65
  %v358 = vunpack.c.l.b16 %v66
  %v359 = vunpack.c.l.b16 %v67
  %v360 = vunpack.c.l.b16 %v68
  %v361 = vunpack.c.l.b16 %v69
  %v362 = vunpack.c.l.b16 %v70
  %v363 = vunpack.c.l.b16 %v71
  %v364 = vunpack.c.l.b16 %v72
  %v365 = vunpack.c.l.b16 %v73
  %v366 = vunpack.c.l.b16 %v74
  %v367 = vunpack.c.l.b16 %v75
  %v368 = vunpack.c.l.b16 %v76
  %v369 = vunpack.c.l.b16 %v77
  %v370 = vunpack.c.l.b16 %v78
  %v371 = vunpack.c.l.b16 %v79
  %v372 = vunpack.c.l.b16 %v80
  %v373 = vunpack.c.l.b16 %v81
  %v374 = vunpack.c.l.b16 %v82
  %v375 = vunpack.c.l.b16 %v83
  %v376 = vunpack.c.l.b16 %v84
  %v377 = vunpack.c.l.b16 %v85
  %v378 = vunpack.c.l.b16 %v86
  %v379 = vunpack.c.l.b16 %v87
  %v380 = vunpack.c.l.b16 %v88
  %v381 = vunpack.c.l.b16 %v89
  %v382 = vunpack.c.l.b16 %v90
  %v383 = vunpack.c.l.b16 %v91
  %v384 = vunpack.c.l.b16 %v92
  %v385 = vunpack.c.l.b16 %v93
  %v386 = vunpack.c.l.b16 %v94
  %v387 = vunpack.c.l.b16 %v95
  %v388 = vunpack.c.l.b16 %v96
  %v389 = vunpack.c.l.b16 %v97
  %v390 = vunpack.c.l.b16 %v98
  %v391 = vunpack.c.l.b16 %v99
  %v392 = vunpack.c.l.b16 %v100
  %v393 = vunpack.c.l.b16 %v101
  %v394 = vunpack.c.l.b16 %v102
  %v395 = vunpack.c.l.b16 %v103
  %v396 = vunpack.c.l.b16 %v104
  %v397 = vunpack.c.l.b16 %v105
  %v398 = vunpack.c.l.b16 %v106
  %v399 = vunpack.c.l.b16 %v107
  %v400 = vunpack.c.l.b16 %v108
  %v401 = vunpack.c.l.b16 %v109
  %v402 = vunpack.c.l.b16 %v110
  %v403 = vunpack.c.l.b16 %v111
  %v404 = vunpack.c.l.b16 %v112
  %v405 = vunpack.c.l.b16 %v113
  %v406 = vunpack.c.l.b16 %v114
  %v407 = vunpack.c.l.b16 %v115
  %v408 = vunpack.c.l.b16 %v116
  %v409 = vunpack.c.l.b16 %v117
  %v410 = vunpack.c.l.b16 %v118
  %v411 = vunpack.c.l.b16 %v119
  %v412 = vunpack.c.l.b16 %v120
  %v413 = vunpack.c.l.b16 %v121
  %v414 = vunpack.c.l.b16 %v122
  %v415 = vunpack.c.l.b16 %v123
  %v416 = vunpack.c.l.b16 %v124
  %v417 = vunpack.c.l.b16 %v125
  %v418 = vunpack.c.l.b16 %v126
  %v419 = vunpack.c.l.b16 %v127
  %v420 = vunpack.c.l.b16 %v128
  %v421 = vunpack.c.l.b16 %v129
  %v422 = vunpack.c.l.b16 %v130
  %v423 = vunpack.c.l.b16 %v131
  %v424 = vunpack.c.l.b16 %v132
  %v425 = vunpack.c.l.b16 %v133
  %v426 = vunpack.c.l.b16 %v134
  %v427 = vunpack.c.l.b16 %v135
  %v428 = vunpack.c.l.b16 %v136
  %v429 = vunpack.c.l.b16 %v137
  %v430 = vunpack.c.l.b16 %v138
  %v431 = vunpack.c.l.b16 %v139
  %v432 = vunpack.c.l.b16 %v140
  %v433 = vunpack.c.l.b16 %v141
  %v434 = vunpack.c.l.b16 %v142
  %v435 = vunpack.c.l.b16 %v143
  %v436 = vunpack.c.l.b16 %v144
  %v437 = vunpack.c.l.b16 %v145
  %v438 = vunpack.c.l.b16 %v146
  %v439 = vunpack.c.l.b16 %v147
  %v440 = vunpack.c.l.b16 %v148
  %v441 = vunpack.c.l.b16 %v149
  %v442 = vunpack.c.l.b16 %v150
  %v443 = vunpack.c.l.b16 %v151
  %v444 = vunpack.c.l.b16 %v152
  %v445 = vunpack.c.l.b16 %v153
  %v446 = vunpack.c.l.b16 %v154
  %v447 = vunpack.c.l.b16 %v155
  %v448 = vunpack.c.l.b16 %v156
  %v449 = vunpack.c.l.b16 %v157
  %v450 = vunpack.c.l.b16 %v158
  %v451 = vunpack.c.l.b16 %v159
  %v452 = vunpack.c.l.b16 %v160
  %v453 = vunpack.c.l.b16 %v161
  %v454 = vpack.c.b16 %v311, %v310
  %v455 = vpack.c.b16 %v313, %v312
  %v456 = vpack.c.b16 %v315, %v314
  %v457 = vpack.c.b16 %v317, %v316
  %v458 = vpack.c.b16 %v319, %v318
  %v459 = vpack.c.b16 %v321, %v320
  %v460 = vpack.c.b16 %v323, %v322
  %v461 = vpack.c.b16 %v325, %v324
  %v462 = vpack.c.b16 %v327, %v326
  %v463 = vpack.c.b16 %v329, %v328
  %v464 = vpack.c.b16 %v331, %v330
  %v465 = vpack.c.b16 %v333, %v332
  %v466 = vpack.c.b16 %v335, %v334
  %v467 = vpack.c.b16 %v337, %v336
  %v468 = vpack.c.b16 %v339, %v338
  %v469 = vpack.c.b16 %v341, %v340
  %v470 = vpack.c.b16 %v343, %v342
  %v471 = vpack.c.b16 %v345, %v344
  %v472 = vpack.c.b16 %v347, %v346
  %v473 = vpack.c.b16 %v349, %v348
  %v474 = vpack.c.b16 %v351, %v350
  %v475 = vpack.c.b16 %v353, %v352
  %v476 = vpack.c.b16 %v355, %v354
  %v477 = vpack.c.b16 %v357, %v356
  %v478 = vpack.c.b16 %v359, %v358
  %v479 = vpack.c.b16 %v361, %v360
  %v480 = vpack.c.b16 %v363, %v362
  %v481 = vpack.c.b16 %v365, %v364
  %v482 = vpack.c.b16 %v367, %v366
  %v483 = vpack.c.b16 %v369, %v368
  %v484 = vpack.c.b16 %v371, %v370
  %v485 = vpack.c.b16 %v373, %v372
  %v486 = vpack.c.b16 %v375, %v374
  %v487 = vpack.c.b16 %v377, %v376
  %v488 = vpack.c.b16 %v379, %v378
  %v489 = vpack.c.b16 %v381, %v380
  %v490 = vpack.c.b16 %v383, %v382
  %v491 = vpack.c.b16 %v385, %v384
  %v492 = vpack.c.b16 %v387, %v386
  %v493 = vpack.c.b16 %v389, %v388
  %v494 = vpack.c.b16 %v391, %v390
  %v495 = vpack.c.b16 %v393, %v392
  %v496 = vpack.c.b16 %v395, %v394
  %v497 = vpack.c.b16 %v397, %v396
  %v498 = vpack.c.b16 %v399, %v398
  %v499 = vpack.c.b16 %v401, %v400
  %v500 = vpack.c.b16 %v403, %v402
  %v501 = vpack.c.b16 %v405, %v404
  %v502 = vpack.c.b16 %v407, %v406
  %v503 = vpack.c.b16 %v409, %v408
  %v504 = vpack.c.b16 %v411, %v410
  %v505 = vpack.c.b16 %v413, %v412
  %v506 = vpack.c.b16 %v415, %v414
  %v507 = vpack.c.b16 %v417, %v416
  %v508 = vpack.c.b16 %v419, %v418
  %v509 = vpack.c.b16 %v421, %v420
  %v510 = vpack.c.b16 %v423, %v422
  %v511 = vpack.c.b16 %v425, %v424
  %v512 = vpack.c.b16 %v427, %v426
  %v513 = vpack.c.b16 %v429, %v428
  %v514 = vpack.c.b16 %v431, %v430
  %v515 = vpack.c.b16 %v433, %v432
  %v516 = vpack.c.b16 %v435, %v434
  %v517 = vpack.c.b16 %v437, %v436
  %v518 = vpack.c.b16 %v439, %v438
  %v519 = vpack.c.b16 %v441, %v440
  %v520 = vpack.c.b16 %v443, %v442
  %v521 = vpack.c.b16 %v445, %v444
  %v522 = vpack.c.b16 %v447, %v446
  %v523 = vpack.c.b16 %v449, %v448
  %v524 = vpack.c.b16 %v451, %v450
  %v525 = vpack.c.b16 %v453, %v452
  %v530 = vunpack.c.l.b16 %v162
  %v531 = vunpack.c.l.b16 %v163
  %v532 = vunpack.c.l.b16 %v164
  %v533 = vunpack.c.l.b16 %v165
  %v534 = vpack.c.b16 %v531, %v530
  %v535 = vpack.c.b16 %v533, %v532
  %vm537 = vcmask 203776
  %v539 = vsel %vm537, %v454, 0
  %v542 = vsel %vm537, %v455, 0
  %v545 = vsel %vm537, %v456, 0
  %v548 = vsel %vm537, %v457, 0
  %v551 = vsel %vm537, %v458, 0
  %v554 = vsel %vm537, %v459, 0
  %v557 = vsel %vm537, %v460, 0
  %v560 = vsel %vm537, %v461, 0
  %v563 = vsel %vm537, %v462, 0
  %v566 = vsel %vm537, %v463, 0
  %v569 = vsel %vm537, %v464, 0
  %v572 = vsel %vm537, %v465, 0
  %v575 = vsel %vm537, %v466, 0
  %v578 = vsel %vm537, %v467, 0
  %v581 = vsel %vm537, %v468, 0
  %v584 = vsel %vm537, %v469, 0
  %v587 = vsel %vm537, %v470, 0
  %v590 = vsel %vm537, %v471, 0
  %v593 = vsel %vm537, %v472, 0
  %v596 = vsel %vm537, %v473, 0
  %v599 = vsel %vm537, %v474, 0
  %v602 = vsel %vm537, %v475, 0
  %v605 = vsel %vm537, %v476, 0
  %v608 = vsel %vm537, %v477, 0
  %v611 = vsel %vm537, %v478, 0
  %v614 = vsel %vm537, %v479, 0
  %v617 = vsel %vm537, %v480, 0
  %v620 = vsel %vm537, %v481, 0
  %v623 = vsel %vm537, %v482, 0
  %v626 = vsel %vm537, %v483, 0
  %v629 = vsel %vm537, %v484, 0
  %v632 = vsel %vm537, %v485, 0
  %v635 = vsel %vm537, %v486, 0
  %v638 = vsel %vm537, %v487, 0
  %v641 = vsel %vm537, %v488, 0
  %v644 = vsel %vm537, %v489, 0
  %v647 = vsel %vm537, %v490, 0
  %v650 = vsel %vm537, %v491, 0
  %v653 = vsel %vm537, %v492, 0
  %v656 = vsel %vm537, %v493, 0
  %v659 = vsel %vm537, %v494, 0
  %v662 = vsel %vm537, %v495, 0
  %v665 = vsel %vm537, %v496, 0
  %v668 = vsel %vm537, %v497, 0
  %v671 = vsel %vm537, %v498, 0
  %v674 = vsel %vm537, %v499, 0
  %v677 = vsel %vm537, %v500, 0
  %v680 = vsel %vm537, %v501, 0
  %v683 = vsel %vm537, %v502, 0
  %v686 = vsel %vm537, %v503, 0
  %v689 = vsel %vm537, %v504, 0
  %v692 = vsel %vm537, %v505, 0
  %v695 = vsel %vm537, %v506, 0
  %v698 = vsel %vm537, %v507, 0
  %v701 = vsel %vm537, %v508, 0
  %v704 = vsel %vm537, %v509, 0
  %v707 = vsel %vm537, %v510, 0
  %v710 = vsel %vm537, %v511, 0
  %v713 = vsel %vm537, %v512, 0
  %v716 = vsel %vm537, %v513, 0
  %v719 = vsel %vm537, %v514, 0
  %v722 = vsel %vm537, %v515, 0
  %v725 = vsel %vm537, %v516, 0
  %v728 = vsel %vm537, %v517, 0
  %v731 = vsel %vm537, %v518, 0
  %v734 = vsel %vm537, %v519, 0
  %v737 = vsel %vm537, %v520, 0
  %v740 = vsel %vm537, %v521, 0
  %v743 = vsel %vm537, %v522, 0
  %v746 = vsel %vm537, %v523, 0
  %v749 = vsel %vm537, %v524, 0
  %v752 = vsel %vm537, %v525, 0
  %vm754 = vcmask 1043456
  %vm755 = vcmask 1044480
  %v756 = vsel %vm754, 4294967295, 65535
  %v757 = vsel %vm755, %v756, 0
  %v759 = vand.u32 %v535, %v757
  %761 = vmatpush.bf16.msra.mxu0 0
  %762 = vmatpush.bf16.msra.mxu0 0
  %763 = vmatpush.bf16.msra.mxu0 0
  %764 = vmatpush.bf16.msra.mxu0 0
  %765 = vmatpush.bf16.msra.mxu0 0
  %766 = vmatpush.bf16.msra.mxu0 0
  %767 = vmatpush.bf16.msra.mxu0 %v759
  %768 = vmatpush.bf16.msra.mxu0 %v534
  %769 = vmatmul.bf16.gmra.mxu0 %v539
  %v770 = vpop.f32.mrf.mxu0
  %v771 = vadd.f32 0.0, %v770
  %v772 = vpop.f32.mrf.mxu0
  %v773 = vadd.f32 0.0, %v772
  %774 = vmatmul.bf16.gmra.mxu0 %v542
  %v775 = vpop.f32.mrf.mxu0
  %v776 = vadd.f32 0.0, %v775
  %v777 = vpop.f32.mrf.mxu0
  %v778 = vadd.f32 0.0, %v777
  %779 = vmatmul.bf16.gmra.mxu0 %v545
  %v780 = vpop.f32.mrf.mxu0
  %v781 = vadd.f32 0.0, %v780
  %v782 = vpop.f32.mrf.mxu0
  %v783 = vadd.f32 0.0, %v782
  %784 = vmatmul.bf16.gmra.mxu0 %v548
  %v785 = vpop.f32.mrf.mxu0
  %v786 = vadd.f32 0.0, %v785
  %v787 = vpop.f32.mrf.mxu0
  %v788 = vadd.f32 0.0, %v787
  %789 = vmatmul.bf16.gmra.mxu0 %v551
  %v790 = vpop.f32.mrf.mxu0
  %v791 = vadd.f32 0.0, %v790
  %v792 = vpop.f32.mrf.mxu0
  %v793 = vadd.f32 0.0, %v792
  %794 = vmatmul.bf16.gmra.mxu0 %v554
  %v795 = vpop.f32.mrf.mxu0
  %v796 = vadd.f32 0.0, %v795
  %v797 = vpop.f32.mrf.mxu0
  %v798 = vadd.f32 0.0, %v797
  %799 = vmatmul.bf16.gmra.mxu0 %v557
  %v800 = vpop.f32.mrf.mxu0
  %v801 = vadd.f32 0.0, %v800
  %v802 = vpop.f32.mrf.mxu0
  %v803 = vadd.f32 0.0, %v802
  %804 = vmatmul.bf16.gmra.mxu0 %v560
  %v805 = vpop.f32.mrf.mxu0
  %v806 = vadd.f32 0.0, %v805
  %v807 = vpop.f32.mrf.mxu0
  %v808 = vadd.f32 0.0, %v807
  %809 = vmatmul.bf16.gmra.mxu0 %v563
  %v810 = vpop.f32.mrf.mxu0
  %v811 = vadd.f32 0.0, %v810
  %v812 = vpop.f32.mrf.mxu0
  %v813 = vadd.f32 0.0, %v812
  %814 = vmatmul.bf16.gmra.mxu0 %v566
  %v815 = vpop.f32.mrf.mxu0
  %v816 = vadd.f32 0.0, %v815
  %v817 = vpop.f32.mrf.mxu0
  %v818 = vadd.f32 0.0, %v817
  %819 = vmatmul.bf16.gmra.mxu0 %v569
  %v820 = vpop.f32.mrf.mxu0
  %v821 = vadd.f32 0.0, %v820
  %v822 = vpop.f32.mrf.mxu0
  %v823 = vadd.f32 0.0, %v822
  %824 = vmatmul.bf16.gmra.mxu0 %v572
  %v825 = vpop.f32.mrf.mxu0
  %v826 = vadd.f32 0.0, %v825
  %v827 = vpop.f32.mrf.mxu0
  %v828 = vadd.f32 0.0, %v827
  %829 = vmatmul.bf16.gmra.mxu0 %v575
  %v830 = vpop.f32.mrf.mxu0
  %v831 = vadd.f32 0.0, %v830
  %v832 = vpop.f32.mrf.mxu0
  %v833 = vadd.f32 0.0, %v832
  %834 = vmatmul.bf16.gmra.mxu0 %v578
  %v835 = vpop.f32.mrf.mxu0
  %v836 = vadd.f32 0.0, %v835
  %v837 = vpop.f32.mrf.mxu0
  %v838 = vadd.f32 0.0, %v837
  %839 = vmatmul.bf16.gmra.mxu0 %v581
  %v840 = vpop.f32.mrf.mxu0
  %v841 = vadd.f32 0.0, %v840
  %v842 = vpop.f32.mrf.mxu0
  %v843 = vadd.f32 0.0, %v842
  %844 = vmatmul.bf16.gmra.mxu0 %v584
  %v845 = vpop.f32.mrf.mxu0
  %v846 = vadd.f32 0.0, %v845
  %v847 = vpop.f32.mrf.mxu0
  %v848 = vadd.f32 0.0, %v847
  %849 = vmatmul.bf16.gmra.mxu0 %v587
  %v850 = vpop.f32.mrf.mxu0
  %v851 = vadd.f32 0.0, %v850
  %v852 = vpop.f32.mrf.mxu0
  %v853 = vadd.f32 0.0, %v852
  %854 = vmatmul.bf16.gmra.mxu0 %v590
  %v855 = vpop.f32.mrf.mxu0
  %v856 = vadd.f32 0.0, %v855
  %v857 = vpop.f32.mrf.mxu0
  %v858 = vadd.f32 0.0, %v857
  %859 = vmatmul.bf16.gmra.mxu0 %v593
  %v860 = vpop.f32.mrf.mxu0
  %v861 = vadd.f32 0.0, %v860
  %v862 = vpop.f32.mrf.mxu0
  %v863 = vadd.f32 0.0, %v862
  %864 = vmatmul.bf16.gmra.mxu0 %v596
  %v865 = vpop.f32.mrf.mxu0
  %v866 = vadd.f32 0.0, %v865
  %v867 = vpop.f32.mrf.mxu0
  %v868 = vadd.f32 0.0, %v867
  %869 = vmatmul.bf16.gmra.mxu0 %v599
  %v870 = vpop.f32.mrf.mxu0
  %v871 = vadd.f32 0.0, %v870
  %v872 = vpop.f32.mrf.mxu0
  %v873 = vadd.f32 0.0, %v872
  %874 = vmatmul.bf16.gmra.mxu0 %v602
  %v875 = vpop.f32.mrf.mxu0
  %v876 = vadd.f32 0.0, %v875
  %v877 = vpop.f32.mrf.mxu0
  %v878 = vadd.f32 0.0, %v877
  %879 = vmatmul.bf16.gmra.mxu0 %v605
  %v880 = vpop.f32.mrf.mxu0
  %v881 = vadd.f32 0.0, %v880
  %v882 = vpop.f32.mrf.mxu0
  %v883 = vadd.f32 0.0, %v882
  %884 = vmatmul.bf16.gmra.mxu0 %v608
  %v885 = vpop.f32.mrf.mxu0
  %v886 = vadd.f32 0.0, %v885
  %v887 = vpop.f32.mrf.mxu0
  %v888 = vadd.f32 0.0, %v887
  %889 = vmatmul.bf16.gmra.mxu0 %v611
  %v890 = vpop.f32.mrf.mxu0
  %v891 = vadd.f32 0.0, %v890
  %v892 = vpop.f32.mrf.mxu0
  %v893 = vadd.f32 0.0, %v892
  %894 = vmatmul.bf16.gmra.mxu0 %v614
  %v895 = vpop.f32.mrf.mxu0
  %v896 = vadd.f32 0.0, %v895
  %v897 = vpop.f32.mrf.mxu0
  %v898 = vadd.f32 0.0, %v897
  %899 = vmatmul.bf16.gmra.mxu0 %v617
  %v900 = vpop.f32.mrf.mxu0
  %v901 = vadd.f32 0.0, %v900
  %v902 = vpop.f32.mrf.mxu0
  %v903 = vadd.f32 0.0, %v902
  %904 = vmatmul.bf16.gmra.mxu0 %v620
  %v905 = vpop.f32.mrf.mxu0
  %v906 = vadd.f32 0.0, %v905
  %v907 = vpop.f32.mrf.mxu0
  %v908 = vadd.f32 0.0, %v907
  %909 = vmatmul.bf16.gmra.mxu0 %v623
  %v910 = vpop.f32.mrf.mxu0
  %v911 = vadd.f32 0.0, %v910
  %v912 = vpop.f32.mrf.mxu0
  %v913 = vadd.f32 0.0, %v912
  %914 = vmatmul.bf16.gmra.mxu0 %v626
  %v915 = vpop.f32.mrf.mxu0
  %v916 = vadd.f32 0.0, %v915
  %v917 = vpop.f32.mrf.mxu0
  %v918 = vadd.f32 0.0, %v917
  %919 = vmatmul.bf16.gmra.mxu0 %v629
  %v920 = vpop.f32.mrf.mxu0
  %v921 = vadd.f32 0.0, %v920
  %v922 = vpop.f32.mrf.mxu0
  %v923 = vadd.f32 0.0, %v922
  %924 = vmatmul.bf16.gmra.mxu0 %v632
  %v925 = vpop.f32.mrf.mxu0
  %v926 = vadd.f32 0.0, %v925
  %v927 = vpop.f32.mrf.mxu0
  %v928 = vadd.f32 0.0, %v927
  %929 = vmatmul.bf16.gmra.mxu0 %v635
  %v930 = vpop.f32.mrf.mxu0
  %v931 = vadd.f32 0.0, %v930
  %v932 = vpop.f32.mrf.mxu0
  %v933 = vadd.f32 0.0, %v932
  %934 = vmatmul.bf16.gmra.mxu0 %v638
  %v935 = vpop.f32.mrf.mxu0
  %v936 = vadd.f32 0.0, %v935
  %v937 = vpop.f32.mrf.mxu0
  %v938 = vadd.f32 0.0, %v937
  %939 = vmatmul.bf16.gmra.mxu0 %v641
  %v940 = vpop.f32.mrf.mxu0
  %v941 = vadd.f32 0.0, %v940
  %v942 = vpop.f32.mrf.mxu0
  %v943 = vadd.f32 0.0, %v942
  %944 = vmatmul.bf16.gmra.mxu0 %v644
  %v945 = vpop.f32.mrf.mxu0
  %v946 = vadd.f32 0.0, %v945
  %v947 = vpop.f32.mrf.mxu0
  %v948 = vadd.f32 0.0, %v947
  %949 = vmatmul.bf16.gmra.mxu0 %v647
  %v950 = vpop.f32.mrf.mxu0
  %v951 = vadd.f32 0.0, %v950
  %v952 = vpop.f32.mrf.mxu0
  %v953 = vadd.f32 0.0, %v952
  %954 = vmatmul.bf16.gmra.mxu0 %v650
  %v955 = vpop.f32.mrf.mxu0
  %v956 = vadd.f32 0.0, %v955
  %v957 = vpop.f32.mrf.mxu0
  %v958 = vadd.f32 0.0, %v957
  %959 = vmatmul.bf16.gmra.mxu0 %v653
  %v960 = vpop.f32.mrf.mxu0
  %v961 = vadd.f32 0.0, %v960
  %v962 = vpop.f32.mrf.mxu0
  %v963 = vadd.f32 0.0, %v962
  %964 = vmatmul.bf16.gmra.mxu0 %v656
  %v965 = vpop.f32.mrf.mxu0
  %v966 = vadd.f32 0.0, %v965
  %v967 = vpop.f32.mrf.mxu0
  %v968 = vadd.f32 0.0, %v967
  %969 = vmatmul.bf16.gmra.mxu0 %v659
  %v970 = vpop.f32.mrf.mxu0
  %v971 = vadd.f32 0.0, %v970
  %v972 = vpop.f32.mrf.mxu0
  %v973 = vadd.f32 0.0, %v972
  %974 = vmatmul.bf16.gmra.mxu0 %v662
  %v975 = vpop.f32.mrf.mxu0
  %v976 = vadd.f32 0.0, %v975
  %v977 = vpop.f32.mrf.mxu0
  %v978 = vadd.f32 0.0, %v977
  %979 = vmatmul.bf16.gmra.mxu0 %v665
  %v980 = vpop.f32.mrf.mxu0
  %v981 = vadd.f32 0.0, %v980
  %v982 = vpop.f32.mrf.mxu0
  %v983 = vadd.f32 0.0, %v982
  %984 = vmatmul.bf16.gmra.mxu0 %v668
  %v985 = vpop.f32.mrf.mxu0
  %v986 = vadd.f32 0.0, %v985
  %v987 = vpop.f32.mrf.mxu0
  %v988 = vadd.f32 0.0, %v987
  %989 = vmatmul.bf16.gmra.mxu0 %v671
  %v990 = vpop.f32.mrf.mxu0
  %v991 = vadd.f32 0.0, %v990
  %v992 = vpop.f32.mrf.mxu0
  %v993 = vadd.f32 0.0, %v992
  %994 = vmatmul.bf16.gmra.mxu0 %v674
  %v995 = vpop.f32.mrf.mxu0
  %v996 = vadd.f32 0.0, %v995
  %v997 = vpop.f32.mrf.mxu0
  %v998 = vadd.f32 0.0, %v997
  %999 = vmatmul.bf16.gmra.mxu0 %v677
  %v1000 = vpop.f32.mrf.mxu0
  %v1001 = vadd.f32 0.0, %v1000
  %v1002 = vpop.f32.mrf.mxu0
  %v1003 = vadd.f32 0.0, %v1002
  %1004 = vmatmul.bf16.gmra.mxu0 %v680
  %v1005 = vpop.f32.mrf.mxu0
  %v1006 = vadd.f32 0.0, %v1005
  %v1007 = vpop.f32.mrf.mxu0
  %v1008 = vadd.f32 0.0, %v1007
  %1009 = vmatmul.bf16.gmra.mxu0 %v683
  %v1010 = vpop.f32.mrf.mxu0
  %v1011 = vadd.f32 0.0, %v1010
  %v1012 = vpop.f32.mrf.mxu0
  %v1013 = vadd.f32 0.0, %v1012
  %1014 = vmatmul.bf16.gmra.mxu0 %v686
  %v1015 = vpop.f32.mrf.mxu0
  %v1016 = vadd.f32 0.0, %v1015
  %v1017 = vpop.f32.mrf.mxu0
  %v1018 = vadd.f32 0.0, %v1017
  %1019 = vmatmul.bf16.gmra.mxu0 %v689
  %v1020 = vpop.f32.mrf.mxu0
  %v1021 = vadd.f32 0.0, %v1020
  %v1022 = vpop.f32.mrf.mxu0
  %v1023 = vadd.f32 0.0, %v1022
  %1024 = vmatmul.bf16.gmra.mxu0 %v692
  %v1025 = vpop.f32.mrf.mxu0
  %v1026 = vadd.f32 0.0, %v1025
  %v1027 = vpop.f32.mrf.mxu0
  %v1028 = vadd.f32 0.0, %v1027
  %1029 = vmatmul.bf16.gmra.mxu0 %v695
  %v1030 = vpop.f32.mrf.mxu0
  %v1031 = vadd.f32 0.0, %v1030
  %v1032 = vpop.f32.mrf.mxu0
  %v1033 = vadd.f32 0.0, %v1032
  %1034 = vmatmul.bf16.gmra.mxu0 %v698
  %v1035 = vpop.f32.mrf.mxu0
  %v1036 = vadd.f32 0.0, %v1035
  %v1037 = vpop.f32.mrf.mxu0
  %v1038 = vadd.f32 0.0, %v1037
  %1039 = vmatmul.bf16.gmra.mxu0 %v701
  %v1040 = vpop.f32.mrf.mxu0
  %v1041 = vadd.f32 0.0, %v1040
  %v1042 = vpop.f32.mrf.mxu0
  %v1043 = vadd.f32 0.0, %v1042
  %1044 = vmatmul.bf16.gmra.mxu0 %v704
  %v1045 = vpop.f32.mrf.mxu0
  %v1046 = vadd.f32 0.0, %v1045
  %v1047 = vpop.f32.mrf.mxu0
  %v1048 = vadd.f32 0.0, %v1047
  %1049 = vmatmul.bf16.gmra.mxu0 %v707
  %v1050 = vpop.f32.mrf.mxu0
  %v1051 = vadd.f32 0.0, %v1050
  %v1052 = vpop.f32.mrf.mxu0
  %v1053 = vadd.f32 0.0, %v1052
  %1054 = vmatmul.bf16.gmra.mxu0 %v710
  %v1055 = vpop.f32.mrf.mxu0
  %v1056 = vadd.f32 0.0, %v1055
  %v1057 = vpop.f32.mrf.mxu0
  %v1058 = vadd.f32 0.0, %v1057
  %1059 = vmatmul.bf16.gmra.mxu0 %v713
  %v1060 = vpop.f32.mrf.mxu0
  %v1061 = vadd.f32 0.0, %v1060
  %v1062 = vpop.f32.mrf.mxu0
  %v1063 = vadd.f32 0.0, %v1062
  %1064 = vmatmul.bf16.gmra.mxu0 %v716
  %v1065 = vpop.f32.mrf.mxu0
  %v1066 = vadd.f32 0.0, %v1065
  %v1067 = vpop.f32.mrf.mxu0
  %v1068 = vadd.f32 0.0, %v1067
  %1069 = vmatmul.bf16.gmra.mxu0 %v719
  %v1070 = vpop.f32.mrf.mxu0
  %v1071 = vadd.f32 0.0, %v1070
  %v1072 = vpop.f32.mrf.mxu0
  %v1073 = vadd.f32 0.0, %v1072
  %1074 = vmatmul.bf16.gmra.mxu0 %v722
  %v1075 = vpop.f32.mrf.mxu0
  %v1076 = vadd.f32 0.0, %v1075
  %v1077 = vpop.f32.mrf.mxu0
  %v1078 = vadd.f32 0.0, %v1077
  %1079 = vmatmul.bf16.gmra.mxu0 %v725
  %v1080 = vpop.f32.mrf.mxu0
  %v1081 = vadd.f32 0.0, %v1080
  %v1082 = vpop.f32.mrf.mxu0
  %v1083 = vadd.f32 0.0, %v1082
  %1084 = vmatmul.bf16.gmra.mxu0 %v728
  %v1085 = vpop.f32.mrf.mxu0
  %v1086 = vadd.f32 0.0, %v1085
  %v1087 = vpop.f32.mrf.mxu0
  %v1088 = vadd.f32 0.0, %v1087
  %1089 = vmatmul.bf16.gmra.mxu0 %v731
  %v1090 = vpop.f32.mrf.mxu0
  %v1091 = vadd.f32 0.0, %v1090
  %v1092 = vpop.f32.mrf.mxu0
  %v1093 = vadd.f32 0.0, %v1092
  %1094 = vmatmul.bf16.gmra.mxu0 %v734
  %v1095 = vpop.f32.mrf.mxu0
  %v1096 = vadd.f32 0.0, %v1095
  %v1097 = vpop.f32.mrf.mxu0
  %v1098 = vadd.f32 0.0, %v1097
  %1099 = vmatmul.bf16.gmra.mxu0 %v737
  %v1100 = vpop.f32.mrf.mxu0
  %v1101 = vadd.f32 0.0, %v1100
  %v1102 = vpop.f32.mrf.mxu0
  %v1103 = vadd.f32 0.0, %v1102
  %1104 = vmatmul.bf16.gmra.mxu0 %v740
  %v1105 = vpop.f32.mrf.mxu0
  %v1106 = vadd.f32 0.0, %v1105
  %v1107 = vpop.f32.mrf.mxu0
  %v1108 = vadd.f32 0.0, %v1107
  %1109 = vmatmul.bf16.gmra.mxu0 %v743
  %v1110 = vpop.f32.mrf.mxu0
  %v1111 = vadd.f32 0.0, %v1110
  %v1112 = vpop.f32.mrf.mxu0
  %v1113 = vadd.f32 0.0, %v1112
  %1114 = vmatmul.bf16.gmra.mxu0 %v746
  %v1115 = vpop.f32.mrf.mxu0
  %v1116 = vadd.f32 0.0, %v1115
  %v1117 = vpop.f32.mrf.mxu0
  %v1118 = vadd.f32 0.0, %v1117
  %1119 = vmatmul.bf16.gmra.mxu0 %v749
  %v1120 = vpop.f32.mrf.mxu0
  %v1121 = vadd.f32 0.0, %v1120
  %v1122 = vpop.f32.mrf.mxu0
  %v1123 = vadd.f32 0.0, %v1122
  %1124 = vmatmul.bf16.gmra.mxu0 %v752
  %v1125 = vpop.f32.mrf.mxu0
  %v1126 = vadd.f32 0.0, %v1125
  %v1127 = vpop.f32.mrf.mxu0
  %v1128 = vadd.f32 0.0, %v1127
  %1129 = vdwg.mxu0
  %v1130 = vadd.f32 %v771, %v773
  %v1131 = vadd.f32 %v1130, %v776
  %v1132 = vadd.f32 %v1131, %v778
  %v1133 = vadd.f32 %v1132, %v781
  %v1134 = vadd.f32 %v1133, %v783
  %v1135 = vadd.f32 %v1134, %v786
  %v1136 = vadd.f32 %v1135, %v788
  %v1137 = vadd.f32 %v1136, %v791
  %v1138 = vadd.f32 %v1137, %v793
  %v1139 = vadd.f32 %v1138, %v796
  %v1140 = vadd.f32 %v1139, %v798
  %v1141 = vadd.f32 %v1140, %v801
  %v1142 = vadd.f32 %v1141, %v803
  %v1143 = vadd.f32 %v1142, %v806
  %v1144 = vadd.f32 %v1143, %v808
  %v1145 = vadd.f32 %v1144, %v811
  %v1146 = vadd.f32 %v1145, %v813
  %v1147 = vadd.f32 %v1146, %v816
  %v1148 = vadd.f32 %v1147, %v818
  %v1149 = vadd.f32 %v1148, %v821
  %v1150 = vadd.f32 %v1149, %v823
  %v1151 = vadd.f32 %v1150, %v826
  %v1152 = vadd.f32 %v1151, %v828
  %v1153 = vadd.f32 %v1152, %v831
  %v1154 = vadd.f32 %v1153, %v833
  %v1155 = vadd.f32 %v1154, %v836
  %v1156 = vadd.f32 %v1155, %v838
  %v1157 = vadd.f32 %v1156, %v841
  %v1158 = vadd.f32 %v1157, %v843
  %v1159 = vadd.f32 %v1158, %v846
  %v1160 = vadd.f32 %v1159, %v848
  %v1161 = vadd.f32 %v1160, %v851
  %v1162 = vadd.f32 %v1161, %v853
  %v1163 = vadd.f32 %v1162, %v856
  %v1164 = vadd.f32 %v1163, %v858
  %v1165 = vadd.f32 %v1164, %v861
  %v1166 = vadd.f32 %v1165, %v863
  %v1167 = vadd.f32 %v1166, %v866
  %v1168 = vadd.f32 %v1167, %v868
  %v1169 = vadd.f32 %v1168, %v871
  %v1170 = vadd.f32 %v1169, %v873
  %v1171 = vadd.f32 %v1170, %v876
  %v1172 = vadd.f32 %v1171, %v878
  %v1173 = vadd.f32 %v1172, %v881
  %v1174 = vadd.f32 %v1173, %v883
  %v1175 = vadd.f32 %v1174, %v886
  %v1176 = vadd.f32 %v1175, %v888
  %v1177 = vadd.f32 %v1176, %v891
  %v1178 = vadd.f32 %v1177, %v893
  %v1179 = vadd.f32 %v1178, %v896
  %v1180 = vadd.f32 %v1179, %v898
  %v1181 = vadd.f32 %v1180, %v901
  %v1182 = vadd.f32 %v1181, %v903
  %v1183 = vadd.f32 %v1182, %v906
  %v1184 = vadd.f32 %v1183, %v908
  %v1185 = vadd.f32 %v1184, %v911
  %v1186 = vadd.f32 %v1185, %v913
  %v1187 = vadd.f32 %v1186, %v916
  %v1188 = vadd.f32 %v1187, %v918
  %v1189 = vadd.f32 %v1188, %v921
  %v1190 = vadd.f32 %v1189, %v923
  %v1191 = vadd.f32 %v1190, %v926
  %v1192 = vadd.f32 %v1191, %v928
  %v1193 = vadd.f32 %v1192, %v931
  %v1194 = vadd.f32 %v1193, %v933
  %v1195 = vadd.f32 %v1194, %v936
  %v1196 = vadd.f32 %v1195, %v938
  %v1197 = vadd.f32 %v1196, %v941
  %v1198 = vadd.f32 %v1197, %v943
  %v1199 = vadd.f32 %v1198, %v946
  %v1200 = vadd.f32 %v1199, %v948
  %v1201 = vadd.f32 %v1200, %v951
  %v1202 = vadd.f32 %v1201, %v953
  %v1203 = vadd.f32 %v1202, %v956
  %v1204 = vadd.f32 %v1203, %v958
  %v1205 = vadd.f32 %v1204, %v961
  %v1206 = vadd.f32 %v1205, %v963
  %v1207 = vadd.f32 %v1206, %v966
  %v1208 = vadd.f32 %v1207, %v968
  %v1209 = vadd.f32 %v1208, %v971
  %v1210 = vadd.f32 %v1209, %v973
  %v1211 = vadd.f32 %v1210, %v976
  %v1212 = vadd.f32 %v1211, %v978
  %v1213 = vadd.f32 %v1212, %v981
  %v1214 = vadd.f32 %v1213, %v983
  %v1215 = vadd.f32 %v1214, %v986
  %v1216 = vadd.f32 %v1215, %v988
  %v1217 = vadd.f32 %v1216, %v991
  %v1218 = vadd.f32 %v1217, %v993
  %v1219 = vadd.f32 %v1218, %v996
  %v1220 = vadd.f32 %v1219, %v998
  %v1221 = vadd.f32 %v1220, %v1001
  %v1222 = vadd.f32 %v1221, %v1003
  %v1223 = vadd.f32 %v1222, %v1006
  %v1224 = vadd.f32 %v1223, %v1008
  %v1225 = vadd.f32 %v1224, %v1011
  %v1226 = vadd.f32 %v1225, %v1013
  %v1227 = vadd.f32 %v1226, %v1016
  %v1228 = vadd.f32 %v1227, %v1018
  %v1229 = vadd.f32 %v1228, %v1021
  %v1230 = vadd.f32 %v1229, %v1023
  %v1231 = vadd.f32 %v1230, %v1026
  %v1232 = vadd.f32 %v1231, %v1028
  %v1233 = vadd.f32 %v1232, %v1031
  %v1234 = vadd.f32 %v1233, %v1033
  %v1235 = vadd.f32 %v1234, %v1036
  %v1236 = vadd.f32 %v1235, %v1038
  %v1237 = vadd.f32 %v1236, %v1041
  %v1238 = vadd.f32 %v1237, %v1043
  %v1239 = vadd.f32 %v1238, %v1046
  %v1240 = vadd.f32 %v1239, %v1048
  %v1241 = vadd.f32 %v1240, %v1051
  %v1242 = vadd.f32 %v1241, %v1053
  %v1243 = vadd.f32 %v1242, %v1056
  %v1244 = vadd.f32 %v1243, %v1058
  %v1245 = vadd.f32 %v1244, %v1061
  %v1246 = vadd.f32 %v1245, %v1063
  %v1247 = vadd.f32 %v1246, %v1066
  %v1248 = vadd.f32 %v1247, %v1068
  %v1249 = vadd.f32 %v1248, %v1071
  %v1250 = vadd.f32 %v1249, %v1073
  %v1251 = vadd.f32 %v1250, %v1076
  %v1252 = vadd.f32 %v1251, %v1078
  %v1253 = vadd.f32 %v1252, %v1081
  %v1254 = vadd.f32 %v1253, %v1083
  %v1255 = vadd.f32 %v1254, %v1086
  %v1256 = vadd.f32 %v1255, %v1088
  %v1257 = vadd.f32 %v1256, %v1091
  %v1258 = vadd.f32 %v1257, %v1093
  %v1259 = vadd.f32 %v1258, %v1096
  %v1260 = vadd.f32 %v1259, %v1098
  %v1261 = vadd.f32 %v1260, %v1101
  %v1262 = vadd.f32 %v1261, %v1103
  %v1263 = vadd.f32 %v1262, %v1106
  %v1264 = vadd.f32 %v1263, %v1108
  %v1265 = vadd.f32 %v1264, %v1111
  %v1266 = vadd.f32 %v1265, %v1113
  %v1267 = vadd.f32 %v1266, %v1116
  %v1268 = vadd.f32 %v1267, %v1118
  %v1269 = vadd.f32 %v1268, %v1121
  %v1270 = vadd.f32 %v1269, %v1123
  %v1271 = vadd.f32 %v1270, %v1126
  %v1272 = vadd.f32 %v1271, %v1128
  %v1273 = vrot.slane %v1272, 4
  %v1274 = vadd.f32 %v1272, %v1273
  %v1275 = vrot.slane %v1274, 2
  %v1276 = vadd.f32 %v1274, %v1275
  %v1277 = vrot.slane %v1276, 1
  %v1278 = vadd.f32 %v1276, %v1277
  %v1279 = vmul.f32 %v1278, 0.00086805556
  %v1280 = vmul.f32 %v771, %v771
  %v1281 = vmul.f32 %v773, %v773
  %v1282 = vmul.f32 %v776, %v776
  %v1283 = vmul.f32 %v778, %v778
  %v1284 = vmul.f32 %v781, %v781
  %v1285 = vmul.f32 %v783, %v783
  %v1286 = vmul.f32 %v786, %v786
  %v1287 = vmul.f32 %v788, %v788
  %v1288 = vmul.f32 %v791, %v791
  %v1289 = vmul.f32 %v793, %v793
  %v1290 = vmul.f32 %v796, %v796
  %v1291 = vmul.f32 %v798, %v798
  %v1292 = vmul.f32 %v801, %v801
  %v1293 = vmul.f32 %v803, %v803
  %v1294 = vmul.f32 %v806, %v806
  %v1295 = vmul.f32 %v808, %v808
  %v1296 = vmul.f32 %v811, %v811
  %v1297 = vmul.f32 %v813, %v813
  %v1298 = vmul.f32 %v816, %v816
  %v1299 = vmul.f32 %v818, %v818
  %v1300 = vmul.f32 %v821, %v821
  %v1301 = vmul.f32 %v823, %v823
  %v1302 = vmul.f32 %v826, %v826
  %v1303 = vmul.f32 %v828, %v828
  %v1304 = vmul.f32 %v831, %v831
  %v1305 = vmul.f32 %v833, %v833
  %v1306 = vmul.f32 %v836, %v836
  %v1307 = vmul.f32 %v838, %v838
  %v1308 = vmul.f32 %v841, %v841
  %v1309 = vmul.f32 %v843, %v843
  %v1310 = vmul.f32 %v846, %v846
  %v1311 = vmul.f32 %v848, %v848
  %v1312 = vmul.f32 %v851, %v851
  %v1313 = vmul.f32 %v853, %v853
  %v1314 = vmul.f32 %v856, %v856
  %v1315 = vmul.f32 %v858, %v858
  %v1316 = vmul.f32 %v861, %v861
  %v1317 = vmul.f32 %v863, %v863
  %v1318 = vmul.f32 %v866, %v866
  %v1319 = vmul.f32 %v868, %v868
  %v1320 = vmul.f32 %v871, %v871
  %v1321 = vmul.f32 %v873, %v873
  %v1322 = vmul.f32 %v876, %v876
  %v1323 = vmul.f32 %v878, %v878
  %v1324 = vmul.f32 %v881, %v881
  %v1325 = vmul.f32 %v883, %v883
  %v1326 = vmul.f32 %v886, %v886
  %v1327 = vmul.f32 %v888, %v888
  %v1328 = vmul.f32 %v891, %v891
  %v1329 = vmul.f32 %v893, %v893
  %v1330 = vmul.f32 %v896, %v896
  %v1331 = vmul.f32 %v898, %v898
  %v1332 = vmul.f32 %v901, %v901
  %v1333 = vmul.f32 %v903, %v903
  %v1334 = vmul.f32 %v906, %v906
  %v1335 = vmul.f32 %v908, %v908
  %v1336 = vmul.f32 %v911, %v911
  %v1337 = vmul.f32 %v913, %v913
  %v1338 = vmul.f32 %v916, %v916
  %v1339 = vmul.f32 %v918, %v918
  %v1340 = vmul.f32 %v921, %v921
  %v1341 = vmul.f32 %v923, %v923
  %v1342 = vmul.f32 %v926, %v926
  %v1343 = vmul.f32 %v928, %v928
  %v1344 = vmul.f32 %v931, %v931
  %v1345 = vmul.f32 %v933, %v933
  %v1346 = vmul.f32 %v936, %v936
  %v1347 = vmul.f32 %v938, %v938
  %v1348 = vmul.f32 %v941, %v941
  %v1349 = vmul.f32 %v943, %v943
  %v1350 = vmul.f32 %v946, %v946
  %v1351 = vmul.f32 %v948, %v948
  %v1352 = vmul.f32 %v951, %v951
  %v1353 = vmul.f32 %v953, %v953
  %v1354 = vmul.f32 %v956, %v956
  %v1355 = vmul.f32 %v958, %v958
  %v1356 = vmul.f32 %v961, %v961
  %v1357 = vmul.f32 %v963, %v963
  %v1358 = vmul.f32 %v966, %v966
  %v1359 = vmul.f32 %v968, %v968
  %v1360 = vmul.f32 %v971, %v971
  %v1361 = vmul.f32 %v973, %v973
  %v1362 = vmul.f32 %v976, %v976
  %v1363 = vmul.f32 %v978, %v978
  %v1364 = vmul.f32 %v981, %v981
  %v1365 = vmul.f32 %v983, %v983
  %v1366 = vmul.f32 %v986, %v986
  %v1367 = vmul.f32 %v988, %v988
  %v1368 = vmul.f32 %v991, %v991
  %v1369 = vmul.f32 %v993, %v993
  %v1370 = vmul.f32 %v996, %v996
  %v1371 = vmul.f32 %v998, %v998
  %v1372 = vmul.f32 %v1001, %v1001
  %v1373 = vmul.f32 %v1003, %v1003
  %v1374 = vmul.f32 %v1006, %v1006
  %v1375 = vmul.f32 %v1008, %v1008
  %v1376 = vmul.f32 %v1011, %v1011
  %v1377 = vmul.f32 %v1013, %v1013
  %v1378 = vmul.f32 %v1016, %v1016
  %v1379 = vmul.f32 %v1018, %v1018
  %v1380 = vmul.f32 %v1021, %v1021
  %v1381 = vmul.f32 %v1023, %v1023
  %v1382 = vmul.f32 %v1026, %v1026
  %v1383 = vmul.f32 %v1028, %v1028
  %v1384 = vmul.f32 %v1031, %v1031
  %v1385 = vmul.f32 %v1033, %v1033
  %v1386 = vmul.f32 %v1036, %v1036
  %v1387 = vmul.f32 %v1038, %v1038
  %v1388 = vmul.f32 %v1041, %v1041
  %v1389 = vmul.f32 %v1043, %v1043
  %v1390 = vmul.f32 %v1046, %v1046
  %v1391 = vmul.f32 %v1048, %v1048
  %v1392 = vmul.f32 %v1051, %v1051
  %v1393 = vmul.f32 %v1053, %v1053
  %v1394 = vmul.f32 %v1056, %v1056
  %v1395 = vmul.f32 %v1058, %v1058
  %v1396 = vmul.f32 %v1061, %v1061
  %v1397 = vmul.f32 %v1063, %v1063
  %v1398 = vmul.f32 %v1066, %v1066
  %v1399 = vmul.f32 %v1068, %v1068
  %v1400 = vmul.f32 %v1071, %v1071
  %v1401 = vmul.f32 %v1073, %v1073
  %v1402 = vmul.f32 %v1076, %v1076
  %v1403 = vmul.f32 %v1078, %v1078
  %v1404 = vmul.f32 %v1081, %v1081
  %v1405 = vmul.f32 %v1083, %v1083
  %v1406 = vmul.f32 %v1086, %v1086
  %v1407 = vmul.f32 %v1088, %v1088
  %v1408 = vmul.f32 %v1091, %v1091
  %v1409 = vmul.f32 %v1093, %v1093
  %v1410 = vmul.f32 %v1096, %v1096
  %v1411 = vmul.f32 %v1098, %v1098
  %v1412 = vmul.f32 %v1101, %v1101
  %v1413 = vmul.f32 %v1103, %v1103
  %v1414 = vmul.f32 %v1106, %v1106
  %v1415 = vmul.f32 %v1108, %v1108
  %v1416 = vmul.f32 %v1111, %v1111
  %v1417 = vmul.f32 %v1113, %v1113
  %v1418 = vmul.f32 %v1116, %v1116
  %v1419 = vmul.f32 %v1118, %v1118
  %v1420 = vmul.f32 %v1121, %v1121
  %v1421 = vmul.f32 %v1123, %v1123
  %v1422 = vmul.f32 %v1126, %v1126
  %v1423 = vmul.f32 %v1128, %v1128
  %v1424 = vadd.f32 %v1280, %v1281
  %v1425 = vadd.f32 %v1424, %v1282
  %v1426 = vadd.f32 %v1425, %v1283
  %v1427 = vadd.f32 %v1426, %v1284
  %v1428 = vadd.f32 %v1427, %v1285
  %v1429 = vadd.f32 %v1428, %v1286
  %v1430 = vadd.f32 %v1429, %v1287
  %v1431 = vadd.f32 %v1430, %v1288
  %v1432 = vadd.f32 %v1431, %v1289
  %v1433 = vadd.f32 %v1432, %v1290
  %v1434 = vadd.f32 %v1433, %v1291
  %v1435 = vadd.f32 %v1434, %v1292
  %v1436 = vadd.f32 %v1435, %v1293
  %v1437 = vadd.f32 %v1436, %v1294
  %v1438 = vadd.f32 %v1437, %v1295
  %v1439 = vadd.f32 %v1438, %v1296
  %v1440 = vadd.f32 %v1439, %v1297
  %v1441 = vadd.f32 %v1440, %v1298
  %v1442 = vadd.f32 %v1441, %v1299
  %v1443 = vadd.f32 %v1442, %v1300
  %v1444 = vadd.f32 %v1443, %v1301
  %v1445 = vadd.f32 %v1444, %v1302
  %v1446 = vadd.f32 %v1445, %v1303
  %v1447 = vadd.f32 %v1446, %v1304
  %v1448 = vadd.f32 %v1447, %v1305
  %v1449 = vadd.f32 %v1448, %v1306
  %v1450 = vadd.f32 %v1449, %v1307
  %v1451 = vadd.f32 %v1450, %v1308
  %v1452 = vadd.f32 %v1451, %v1309
  %v1453 = vadd.f32 %v1452, %v1310
  %v1454 = vadd.f32 %v1453, %v1311
  %v1455 = vadd.f32 %v1454, %v1312
  %v1456 = vadd.f32 %v1455, %v1313
  %v1457 = vadd.f32 %v1456, %v1314
  %v1458 = vadd.f32 %v1457, %v1315
  %v1459 = vadd.f32 %v1458, %v1316
  %v1460 = vadd.f32 %v1459, %v1317
  %v1461 = vadd.f32 %v1460, %v1318
  %v1462 = vadd.f32 %v1461, %v1319
  %v1463 = vadd.f32 %v1462, %v1320
  %v1464 = vadd.f32 %v1463, %v1321
  %v1465 = vadd.f32 %v1464, %v1322
  %v1466 = vadd.f32 %v1465, %v1323
  %v1467 = vadd.f32 %v1466, %v1324
  %v1468 = vadd.f32 %v1467, %v1325
  %v1469 = vadd.f32 %v1468, %v1326
  %v1470 = vadd.f32 %v1469, %v1327
  %v1471 = vadd.f32 %v1470, %v1328
  %v1472 = vadd.f32 %v1471, %v1329
  %v1473 = vadd.f32 %v1472, %v1330
  %v1474 = vadd.f32 %v1473, %v1331
  %v1475 = vadd.f32 %v1474, %v1332
  %v1476 = vadd.f32 %v1475, %v1333
  %v1477 = vadd.f32 %v1476, %v1334
  %v1478 = vadd.f32 %v1477, %v1335
  %v1479 = vadd.f32 %v1478, %v1336
  %v1480 = vadd.f32 %v1479, %v1337
  %v1481 = vadd.f32 %v1480, %v1338
  %v1482 = vadd.f32 %v1481, %v1339
  %v1483 = vadd.f32 %v1482, %v1340
  %v1484 = vadd.f32 %v1483, %v1341
  %v1485 = vadd.f32 %v1484, %v1342
  %v1486 = vadd.f32 %v1485, %v1343
  %v1487 = vadd.f32 %v1486, %v1344
  %v1488 = vadd.f32 %v1487, %v1345
  %v1489 = vadd.f32 %v1488, %v1346
  %v1490 = vadd.f32 %v1489, %v1347
  %v1491 = vadd.f32 %v1490, %v1348
  %v1492 = vadd.f32 %v1491, %v1349
  %v1493 = vadd.f32 %v1492, %v1350
  %v1494 = vadd.f32 %v1493, %v1351
  %v1495 = vadd.f32 %v1494, %v1352
  %v1496 = vadd.f32 %v1495, %v1353
  %v1497 = vadd.f32 %v1496, %v1354
  %v1498 = vadd.f32 %v1497, %v1355
  %v1499 = vadd.f32 %v1498, %v1356
  %v1500 = vadd.f32 %v1499, %v1357
  %v1501 = vadd.f32 %v1500, %v1358
  %v1502 = vadd.f32 %v1501, %v1359
  %v1503 = vadd.f32 %v1502, %v1360
  %v1504 = vadd.f32 %v1503, %v1361
  %v1505 = vadd.f32 %v1504, %v1362
  %v1506 = vadd.f32 %v1505, %v1363
  %v1507 = vadd.f32 %v1506, %v1364
  %v1508 = vadd.f32 %v1507, %v1365
  %v1509 = vadd.f32 %v1508, %v1366
  %v1510 = vadd.f32 %v1509, %v1367
  %v1511 = vadd.f32 %v1510, %v1368
  %v1512 = vadd.f32 %v1511, %v1369
  %v1513 = vadd.f32 %v1512, %v1370
  %v1514 = vadd.f32 %v1513, %v1371
  %v1515 = vadd.f32 %v1514, %v1372
  %v1516 = vadd.f32 %v1515, %v1373
  %v1517 = vadd.f32 %v1516, %v1374
  %v1518 = vadd.f32 %v1517, %v1375
  %v1519 = vadd.f32 %v1518, %v1376
  %v1520 = vadd.f32 %v1519, %v1377
  %v1521 = vadd.f32 %v1520, %v1378
  %v1522 = vadd.f32 %v1521, %v1379
  %v1523 = vadd.f32 %v1522, %v1380
  %v1524 = vadd.f32 %v1523, %v1381
  %v1525 = vadd.f32 %v1524, %v1382
  %v1526 = vadd.f32 %v1525, %v1383
  %v1527 = vadd.f32 %v1526, %v1384
  %v1528 = vadd.f32 %v1527, %v1385
  %v1529 = vadd.f32 %v1528, %v1386
  %v1530 = vadd.f32 %v1529, %v1387
  %v1531 = vadd.f32 %v1530, %v1388
  %v1532 = vadd.f32 %v1531, %v1389
  %v1533 = vadd.f32 %v1532, %v1390
  %v1534 = vadd.f32 %v1533, %v1391
  %v1535 = vadd.f32 %v1534, %v1392
  %v1536 = vadd.f32 %v1535, %v1393
  %v1537 = vadd.f32 %v1536, %v1394
  %v1538 = vadd.f32 %v1537, %v1395
  %v1539 = vadd.f32 %v1538, %v1396
  %v1540 = vadd.f32 %v1539, %v1397
  %v1541 = vadd.f32 %v1540, %v1398
  %v1542 = vadd.f32 %v1541, %v1399
  %v1543 = vadd.f32 %v1542, %v1400
  %v1544 = vadd.f32 %v1543, %v1401
  %v1545 = vadd.f32 %v1544, %v1402
  %v1546 = vadd.f32 %v1545, %v1403
  %v1547 = vadd.f32 %v1546, %v1404
  %v1548 = vadd.f32 %v1547, %v1405
  %v1549 = vadd.f32 %v1548, %v1406
  %v1550 = vadd.f32 %v1549, %v1407
  %v1551 = vadd.f32 %v1550, %v1408
  %v1552 = vadd.f32 %v1551, %v1409
  %v1553 = vadd.f32 %v1552, %v1410
  %v1554 = vadd.f32 %v1553, %v1411
  %v1555 = vadd.f32 %v1554, %v1412
  %v1556 = vadd.f32 %v1555, %v1413
  %v1557 = vadd.f32 %v1556, %v1414
  %v1558 = vadd.f32 %v1557, %v1415
  %v1559 = vadd.f32 %v1558, %v1416
  %v1560 = vadd.f32 %v1559, %v1417
  %v1561 = vadd.f32 %v1560, %v1418
  %v1562 = vadd.f32 %v1561, %v1419
  %v1563 = vadd.f32 %v1562, %v1420
  %v1564 = vadd.f32 %v1563, %v1421
  %v1565 = vadd.f32 %v1564, %v1422
  %v1566 = vadd.f32 %v1565, %v1423
  %v1567 = vrot.slane %v1566, 4
  %v1568 = vadd.f32 %v1566, %v1567
  %v1569 = vrot.slane %v1568, 2
  %v1570 = vadd.f32 %v1568, %v1569
  %v1571 = vrot.slane %v1570, 1
  %v1572 = vadd.f32 %v1570, %v1571
  %v1573 = vmul.f32 %v1572, 0.00086805556
  %v1574 = vmul.f32 %v1279, %v1279
  %v1575 = vsub.f32 %v1573, %v1574
  %v1576 = vadd.f32 %v1575, 1e-05
  %v1577 = vrsqrt.pop %v1576
  %v1578 = vmul.f32 %v1577, %v1576
  %v1579 = vmul.f32 %v1578, %v1577
  %v1580 = vmul.f32 0.5, %v1579
  %v1581 = vsub.f32 1.5, %v1580
  %v1582 = vmul.f32 %v1577, %v1581
  %vm1583 = vweird.f32 %v1576
  %vm1584 = vweird.f32 %v1577
  %vm1585 = vmor %vm1583, %vm1584
  %v1586 = vsel %vm1585, %v1577, %v1582
  %v1587 = vld [vmem:[%s2] sm:$0x1]
  %v1588 = vmul.f32 %v1586, %v1587
  %v1589 = vsub.f32 %v771, %v1279
  %v1590 = vsub.f32 %v773, %v1279
  %v1591 = vsub.f32 %v776, %v1279
  %v1592 = vsub.f32 %v778, %v1279
  %v1593 = vsub.f32 %v781, %v1279
  %v1594 = vsub.f32 %v783, %v1279
  %v1595 = vsub.f32 %v786, %v1279
  %v1596 = vsub.f32 %v788, %v1279
  %v1597 = vsub.f32 %v791, %v1279
  %v1598 = vsub.f32 %v793, %v1279
  %v1599 = vsub.f32 %v796, %v1279
  %v1600 = vsub.f32 %v798, %v1279
  %v1601 = vsub.f32 %v801, %v1279
  %v1602 = vsub.f32 %v803, %v1279
  %v1603 = vsub.f32 %v806, %v1279
  %v1604 = vsub.f32 %v808, %v1279
  %v1605 = vsub.f32 %v811, %v1279
  %v1606 = vsub.f32 %v813, %v1279
  %v1607 = vsub.f32 %v816, %v1279
  %v1608 = vsub.f32 %v818, %v1279
  %v1609 = vsub.f32 %v821, %v1279
  %v1610 = vsub.f32 %v823, %v1279
  %v1611 = vsub.f32 %v826, %v1279
  %v1612 = vsub.f32 %v828, %v1279
  %v1613 = vsub.f32 %v831, %v1279
  %v1614 = vsub.f32 %v833, %v1279
  %v1615 = vsub.f32 %v836, %v1279
  %v1616 = vsub.f32 %v838, %v1279
  %v1617 = vsub.f32 %v841, %v1279
  %v1618 = vsub.f32 %v843, %v1279
  %v1619 = vsub.f32 %v846, %v1279
  %v1620 = vsub.f32 %v848, %v1279
  %v1621 = vsub.f32 %v851, %v1279
  %v1622 = vsub.f32 %v853, %v1279
  %v1623 = vsub.f32 %v856, %v1279
  %v1624 = vsub.f32 %v858, %v1279
  %v1625 = vsub.f32 %v861, %v1279
  %v1626 = vsub.f32 %v863, %v1279
  %v1627 = vsub.f32 %v866, %v1279
  %v1628 = vsub.f32 %v868, %v1279
  %v1629 = vsub.f32 %v871, %v1279
  %v1630 = vsub.f32 %v873, %v1279
  %v1631 = vsub.f32 %v876, %v1279
  %v1632 = vsub.f32 %v878, %v1279
  %v1633 = vsub.f32 %v881, %v1279
  %v1634 = vsub.f32 %v883, %v1279
  %v1635 = vsub.f32 %v886, %v1279
  %v1636 = vsub.f32 %v888, %v1279
  %v1637 = vsub.f32 %v891, %v1279
  %v1638 = vsub.f32 %v893, %v1279
  %v1639 = vsub.f32 %v896, %v1279
  %v1640 = vsub.f32 %v898, %v1279
  %v1641 = vsub.f32 %v901, %v1279
  %v1642 = vsub.f32 %v903, %v1279
  %v1643 = vsub.f32 %v906, %v1279
  %v1644 = vsub.f32 %v908, %v1279
  %v1645 = vsub.f32 %v911, %v1279
  %v1646 = vsub.f32 %v913, %v1279
  %v1647 = vsub.f32 %v916, %v1279
  %v1648 = vsub.f32 %v918, %v1279
  %v1649 = vsub.f32 %v921, %v1279
  %v1650 = vsub.f32 %v923, %v1279
  %v1651 = vsub.f32 %v926, %v1279
  %v1652 = vsub.f32 %v928, %v1279
  %v1653 = vsub.f32 %v931, %v1279
  %v1654 = vsub.f32 %v933, %v1279
  %v1655 = vsub.f32 %v936, %v1279
  %v1656 = vsub.f32 %v938, %v1279
  %v1657 = vsub.f32 %v941, %v1279
  %v1658 = vsub.f32 %v943, %v1279
  %v1659 = vsub.f32 %v946, %v1279
  %v1660 = vsub.f32 %v948, %v1279
  %v1661 = vsub.f32 %v951, %v1279
  %v1662 = vsub.f32 %v953, %v1279
  %v1663 = vsub.f32 %v956, %v1279
  %v1664 = vsub.f32 %v958, %v1279
  %v1665 = vsub.f32 %v961, %v1279
  %v1666 = vsub.f32 %v963, %v1279
  %v1667 = vsub.f32 %v966, %v1279
  %v1668 = vsub.f32 %v968, %v1279
  %v1669 = vsub.f32 %v971, %v1279
  %v1670 = vsub.f32 %v973, %v1279
  %v1671 = vsub.f32 %v976, %v1279
  %v1672 = vsub.f32 %v978, %v1279
  %v1673 = vsub.f32 %v981, %v1279
  %v1674 = vsub.f32 %v983, %v1279
  %v1675 = vsub.f32 %v986, %v1279
  %v1676 = vsub.f32 %v988, %v1279
  %v1677 = vsub.f32 %v991, %v1279
  %v1678 = vsub.f32 %v993, %v1279
  %v1679 = vsub.f32 %v996, %v1279
  %v1680 = vsub.f32 %v998, %v1279
  %v1681 = vsub.f32 %v1001, %v1279
  %v1682 = vsub.f32 %v1003, %v1279
  %v1683 = vsub.f32 %v1006, %v1279
  %v1684 = vsub.f32 %v1008, %v1279
  %v1685 = vsub.f32 %v1011, %v1279
  %v1686 = vsub.f32 %v1013, %v1279
  %v1687 = vsub.f32 %v1016, %v1279
  %v1688 = vsub.f32 %v1018, %v1279
  %v1689 = vsub.f32 %v1021, %v1279
  %v1690 = vsub.f32 %v1023, %v1279
  %v1691 = vsub.f32 %v1026, %v1279
  %v1692 = vsub.f32 %v1028, %v1279
  %v1693 = vsub.f32 %v1031, %v1279
  %v1694 = vsub.f32 %v1033, %v1279
  %v1695 = vsub.f32 %v1036, %v1279
  %v1696 = vsub.f32 %v1038, %v1279
  %v1697 = vsub.f32 %v1041, %v1279
  %v1698 = vsub.f32 %v1043, %v1279
  %v1699 = vsub.f32 %v1046, %v1279
  %v1700 = vsub.f32 %v1048, %v1279
  %v1701 = vsub.f32 %v1051, %v1279
  %v1702 = vsub.f32 %v1053, %v1279
  %v1703 = vsub.f32 %v1056, %v1279
  %v1704 = vsub.f32 %v1058, %v1279
  %v1705 = vsub.f32 %v1061, %v1279
  %v1706 = vsub.f32 %v1063, %v1279
  %v1707 = vsub.f32 %v1066, %v1279
  %v1708 = vsub.f32 %v1068, %v1279
  %v1709 = vsub.f32 %v1071, %v1279
  %v1710 = vsub.f32 %v1073, %v1279
  %v1711 = vsub.f32 %v1076, %v1279
  %v1712 = vsub.f32 %v1078, %v1279
  %v1713 = vsub.f32 %v1081, %v1279
  %v1714 = vsub.f32 %v1083, %v1279
  %v1715 = vsub.f32 %v1086, %v1279
  %v1716 = vsub.f32 %v1088, %v1279
  %v1717 = vsub.f32 %v1091, %v1279
  %v1718 = vsub.f32 %v1093, %v1279
  %v1719 = vsub.f32 %v1096, %v1279
  %v1720 = vsub.f32 %v1098, %v1279
  %v1721 = vsub.f32 %v1101, %v1279
  %v1722 = vsub.f32 %v1103, %v1279
  %v1723 = vsub.f32 %v1106, %v1279
  %v1724 = vsub.f32 %v1108, %v1279
  %v1725 = vsub.f32 %v1111, %v1279
  %v1726 = vsub.f32 %v1113, %v1279
  %v1727 = vsub.f32 %v1116, %v1279
  %v1728 = vsub.f32 %v1118, %v1279
  %v1729 = vsub.f32 %v1121, %v1279
  %v1730 = vsub.f32 %v1123, %v1279
  %v1731 = vsub.f32 %v1126, %v1279
  %v1732 = vsub.f32 %v1128, %v1279
  %v1733 = vperm.slane %v1588, 0
  %v1734 = vmul.f32 %v1589, %v1733
  %v1735 = vmul.f32 %v1590, %v1733
  %v1736 = vmul.f32 %v1591, %v1733
  %v1737 = vmul.f32 %v1592, %v1733
  %v1738 = vmul.f32 %v1593, %v1733
  %v1739 = vmul.f32 %v1594, %v1733
  %v1740 = vmul.f32 %v1595, %v1733
  %v1741 = vmul.f32 %v1596, %v1733
  %v1742 = vmul.f32 %v1597, %v1733
  %v1743 = vmul.f32 %v1598, %v1733
  %v1744 = vmul.f32 %v1599, %v1733
  %v1745 = vmul.f32 %v1600, %v1733
  %v1746 = vmul.f32 %v1601, %v1733
  %v1747 = vmul.f32 %v1602, %v1733
  %v1748 = vmul.f32 %v1603, %v1733
  %v1749 = vmul.f32 %v1604, %v1733
  %v1750 = vmul.f32 %v1605, %v1733
  %v1751 = vmul.f32 %v1606, %v1733
  %v1752 = vmul.f32 %v1607, %v1733
  %v1753 = vmul.f32 %v1608, %v1733
  %v1754 = vmul.f32 %v1609, %v1733
  %v1755 = vmul.f32 %v1610, %v1733
  %v1756 = vmul.f32 %v1611, %v1733
  %v1757 = vmul.f32 %v1612, %v1733
  %v1758 = vmul.f32 %v1613, %v1733
  %v1759 = vmul.f32 %v1614, %v1733
  %v1760 = vmul.f32 %v1615, %v1733
  %v1761 = vmul.f32 %v1616, %v1733
  %v1762 = vmul.f32 %v1617, %v1733
  %v1763 = vmul.f32 %v1618, %v1733
  %v1764 = vmul.f32 %v1619, %v1733
  %v1765 = vmul.f32 %v1620, %v1733
  %v1766 = vmul.f32 %v1621, %v1733
  %v1767 = vmul.f32 %v1622, %v1733
  %v1768 = vmul.f32 %v1623, %v1733
  %v1769 = vmul.f32 %v1624, %v1733
  %v1770 = vmul.f32 %v1625, %v1733
  %v1771 = vmul.f32 %v1626, %v1733
  %v1772 = vmul.f32 %v1627, %v1733
  %v1773 = vmul.f32 %v1628, %v1733
  %v1774 = vmul.f32 %v1629, %v1733
  %v1775 = vmul.f32 %v1630, %v1733
  %v1776 = vmul.f32 %v1631, %v1733
  %v1777 = vmul.f32 %v1632, %v1733
  %v1778 = vmul.f32 %v1633, %v1733
  %v1779 = vmul.f32 %v1634, %v1733
  %v1780 = vmul.f32 %v1635, %v1733
  %v1781 = vmul.f32 %v1636, %v1733
  %v1782 = vmul.f32 %v1637, %v1733
  %v1783 = vmul.f32 %v1638, %v1733
  %v1784 = vmul.f32 %v1639, %v1733
  %v1785 = vmul.f32 %v1640, %v1733
  %v1786 = vmul.f32 %v1641, %v1733
  %v1787 = vmul.f32 %v1642, %v1733
  %v1788 = vmul.f32 %v1643, %v1733
  %v1789 = vmul.f32 %v1644, %v1733
  %v1790 = vmul.f32 %v1645, %v1733
  %v1791 = vmul.f32 %v1646, %v1733
  %v1792 = vmul.f32 %v1647, %v1733
  %v1793 = vmul.f32 %v1648, %v1733
  %v1794 = vmul.f32 %v1649, %v1733
  %v1795 = vmul.f32 %v1650, %v1733
  %v1796 = vmul.f32 %v1651, %v1733
  %v1797 = vmul.f32 %v1652, %v1733
  %v1798 = vmul.f32 %v1653, %v1733
  %v1799 = vmul.f32 %v1654, %v1733
  %v1800 = vmul.f32 %v1655, %v1733
  %v1801 = vmul.f32 %v1656, %v1733
  %v1802 = vmul.f32 %v1657, %v1733
  %v1803 = vmul.f32 %v1658, %v1733
  %v1804 = vmul.f32 %v1659, %v1733
  %v1805 = vmul.f32 %v1660, %v1733
  %v1806 = vmul.f32 %v1661, %v1733
  %v1807 = vmul.f32 %v1662, %v1733
  %v1808 = vmul.f32 %v1663, %v1733
  %v1809 = vmul.f32 %v1664, %v1733
  %v1810 = vmul.f32 %v1665, %v1733
  %v1811 = vmul.f32 %v1666, %v1733
  %v1812 = vmul.f32 %v1667, %v1733
  %v1813 = vmul.f32 %v1668, %v1733
  %v1814 = vmul.f32 %v1669, %v1733
  %v1815 = vmul.f32 %v1670, %v1733
  %v1816 = vmul.f32 %v1671, %v1733
  %v1817 = vmul.f32 %v1672, %v1733
  %v1818 = vmul.f32 %v1673, %v1733
  %v1819 = vmul.f32 %v1674, %v1733
  %v1820 = vmul.f32 %v1675, %v1733
  %v1821 = vmul.f32 %v1676, %v1733
  %v1822 = vmul.f32 %v1677, %v1733
  %v1823 = vmul.f32 %v1678, %v1733
  %v1824 = vmul.f32 %v1679, %v1733
  %v1825 = vmul.f32 %v1680, %v1733
  %v1826 = vmul.f32 %v1681, %v1733
  %v1827 = vmul.f32 %v1682, %v1733
  %v1828 = vmul.f32 %v1683, %v1733
  %v1829 = vmul.f32 %v1684, %v1733
  %v1830 = vmul.f32 %v1685, %v1733
  %v1831 = vmul.f32 %v1686, %v1733
  %v1832 = vmul.f32 %v1687, %v1733
  %v1833 = vmul.f32 %v1688, %v1733
  %v1834 = vmul.f32 %v1689, %v1733
  %v1835 = vmul.f32 %v1690, %v1733
  %v1836 = vmul.f32 %v1691, %v1733
  %v1837 = vmul.f32 %v1692, %v1733
  %v1838 = vmul.f32 %v1693, %v1733
  %v1839 = vmul.f32 %v1694, %v1733
  %v1840 = vmul.f32 %v1695, %v1733
  %v1841 = vmul.f32 %v1696, %v1733
  %v1842 = vmul.f32 %v1697, %v1733
  %v1843 = vmul.f32 %v1698, %v1733
  %v1844 = vmul.f32 %v1699, %v1733
  %v1845 = vmul.f32 %v1700, %v1733
  %v1846 = vmul.f32 %v1701, %v1733
  %v1847 = vmul.f32 %v1702, %v1733
  %v1848 = vmul.f32 %v1703, %v1733
  %v1849 = vmul.f32 %v1704, %v1733
  %v1850 = vmul.f32 %v1705, %v1733
  %v1851 = vmul.f32 %v1706, %v1733
  %v1852 = vmul.f32 %v1707, %v1733
  %v1853 = vmul.f32 %v1708, %v1733
  %v1854 = vmul.f32 %v1709, %v1733
  %v1855 = vmul.f32 %v1710, %v1733
  %v1856 = vmul.f32 %v1711, %v1733
  %v1857 = vmul.f32 %v1712, %v1733
  %v1858 = vmul.f32 %v1713, %v1733
  %v1859 = vmul.f32 %v1714, %v1733
  %v1860 = vmul.f32 %v1715, %v1733
  %v1861 = vmul.f32 %v1716, %v1733
  %v1862 = vmul.f32 %v1717, %v1733
  %v1863 = vmul.f32 %v1718, %v1733
  %v1864 = vmul.f32 %v1719, %v1733
  %v1865 = vmul.f32 %v1720, %v1733
  %v1866 = vmul.f32 %v1721, %v1733
  %v1867 = vmul.f32 %v1722, %v1733
  %v1868 = vmul.f32 %v1723, %v1733
  %v1869 = vmul.f32 %v1724, %v1733
  %v1870 = vmul.f32 %v1725, %v1733
  %v1871 = vmul.f32 %v1726, %v1733
  %v1872 = vmul.f32 %v1727, %v1733
  %v1873 = vmul.f32 %v1728, %v1733
  %v1874 = vmul.f32 %v1729, %v1733
  %v1875 = vmul.f32 %v1730, %v1733
  %v1876 = vmul.f32 %v1731, %v1733
  %v1877 = vmul.f32 %v1732, %v1733
  %v1878 = vld [vmem:[%s3] sm:$0x1]
  %v1880 = vperm.slane %v1878, 0
  %v1882 = vadd.f32 %v1734, %v1880
  %v1883 = vadd.f32 %v1735, %v1880
  %v1884 = vadd.f32 %v1736, %v1880
  %v1885 = vadd.f32 %v1737, %v1880
  %v1886 = vadd.f32 %v1738, %v1880
  %v1887 = vadd.f32 %v1739, %v1880
  %v1888 = vadd.f32 %v1740, %v1880
  %v1889 = vadd.f32 %v1741, %v1880
  %v1890 = vadd.f32 %v1742, %v1880
  %v1891 = vadd.f32 %v1743, %v1880
  %v1892 = vadd.f32 %v1744, %v1880
  %v1893 = vadd.f32 %v1745, %v1880
  %v1894 = vadd.f32 %v1746, %v1880
  %v1895 = vadd.f32 %v1747, %v1880
  %v1896 = vadd.f32 %v1748, %v1880
  %v1897 = vadd.f32 %v1749, %v1880
  %v1898 = vadd.f32 %v1750, %v1880
  %v1899 = vadd.f32 %v1751, %v1880
  %v1900 = vadd.f32 %v1752, %v1880
  %v1901 = vadd.f32 %v1753, %v1880
  %v1902 = vadd.f32 %v1754, %v1880
  %v1903 = vadd.f32 %v1755, %v1880
  %v1904 = vadd.f32 %v1756, %v1880
  %v1905 = vadd.f32 %v1757, %v1880
  %v1906 = vadd.f32 %v1758, %v1880
  %v1907 = vadd.f32 %v1759, %v1880
  %v1908 = vadd.f32 %v1760, %v1880
  %v1909 = vadd.f32 %v1761, %v1880
  %v1910 = vadd.f32 %v1762, %v1880
  %v1911 = vadd.f32 %v1763, %v1880
  %v1912 = vadd.f32 %v1764, %v1880
  %v1913 = vadd.f32 %v1765, %v1880
  %v1914 = vadd.f32 %v1766, %v1880
  %v1915 = vadd.f32 %v1767, %v1880
  %v1916 = vadd.f32 %v1768, %v1880
  %v1917 = vadd.f32 %v1769, %v1880
  %v1918 = vadd.f32 %v1770, %v1880
  %v1919 = vadd.f32 %v1771, %v1880
  %v1920 = vadd.f32 %v1772, %v1880
  %v1921 = vadd.f32 %v1773, %v1880
  %v1922 = vadd.f32 %v1774, %v1880
  %v1923 = vadd.f32 %v1775, %v1880
  %v1924 = vadd.f32 %v1776, %v1880
  %v1925 = vadd.f32 %v1777, %v1880
  %v1926 = vadd.f32 %v1778, %v1880
  %v1927 = vadd.f32 %v1779, %v1880
  %v1928 = vadd.f32 %v1780, %v1880
  %v1929 = vadd.f32 %v1781, %v1880
  %v1930 = vadd.f32 %v1782, %v1880
  %v1931 = vadd.f32 %v1783, %v1880
  %v1932 = vadd.f32 %v1784, %v1880
  %v1933 = vadd.f32 %v1785, %v1880
  %v1934 = vadd.f32 %v1786, %v1880
  %v1935 = vadd.f32 %v1787, %v1880
  %v1936 = vadd.f32 %v1788, %v1880
  %v1937 = vadd.f32 %v1789, %v1880
  %v1938 = vadd.f32 %v1790, %v1880
  %v1939 = vadd.f32 %v1791, %v1880
  %v1940 = vadd.f32 %v1792, %v1880
  %v1941 = vadd.f32 %v1793, %v1880
  %v1942 = vadd.f32 %v1794, %v1880
  %v1943 = vadd.f32 %v1795, %v1880
  %v1944 = vadd.f32 %v1796, %v1880
  %v1945 = vadd.f32 %v1797, %v1880
  %v1946 = vadd.f32 %v1798, %v1880
  %v1947 = vadd.f32 %v1799, %v1880
  %v1948 = vadd.f32 %v1800, %v1880
  %v1949 = vadd.f32 %v1801, %v1880
  %v1950 = vadd.f32 %v1802, %v1880
  %v1951 = vadd.f32 %v1803, %v1880
  %v1952 = vadd.f32 %v1804, %v1880
  %v1953 = vadd.f32 %v1805, %v1880
  %v1954 = vadd.f32 %v1806, %v1880
  %v1955 = vadd.f32 %v1807, %v1880
  %v1956 = vadd.f32 %v1808, %v1880
  %v1957 = vadd.f32 %v1809, %v1880
  %v1958 = vadd.f32 %v1810, %v1880
  %v1959 = vadd.f32 %v1811, %v1880
  %v1960 = vadd.f32 %v1812, %v1880
  %v1961 = vadd.f32 %v1813, %v1880
  %v1962 = vadd.f32 %v1814, %v1880
  %v1963 = vadd.f32 %v1815, %v1880
  %v1964 = vadd.f32 %v1816, %v1880
  %v1965 = vadd.f32 %v1817, %v1880
  %v1966 = vadd.f32 %v1818, %v1880
  %v1967 = vadd.f32 %v1819, %v1880
  %v1968 = vadd.f32 %v1820, %v1880
  %v1969 = vadd.f32 %v1821, %v1880
  %v1970 = vadd.f32 %v1822, %v1880
  %v1971 = vadd.f32 %v1823, %v1880
  %v1972 = vadd.f32 %v1824, %v1880
  %v1973 = vadd.f32 %v1825, %v1880
  %v1974 = vadd.f32 %v1826, %v1880
  %v1975 = vadd.f32 %v1827, %v1880
  %v1976 = vadd.f32 %v1828, %v1880
  %v1977 = vadd.f32 %v1829, %v1880
  %v1978 = vadd.f32 %v1830, %v1880
  %v1979 = vadd.f32 %v1831, %v1880
  %v1980 = vadd.f32 %v1832, %v1880
  %v1981 = vadd.f32 %v1833, %v1880
  %v1982 = vadd.f32 %v1834, %v1880
  %v1983 = vadd.f32 %v1835, %v1880
  %v1984 = vadd.f32 %v1836, %v1880
  %v1985 = vadd.f32 %v1837, %v1880
  %v1986 = vadd.f32 %v1838, %v1880
  %v1987 = vadd.f32 %v1839, %v1880
  %v1988 = vadd.f32 %v1840, %v1880
  %v1989 = vadd.f32 %v1841, %v1880
  %v1990 = vadd.f32 %v1842, %v1880
  %v1991 = vadd.f32 %v1843, %v1880
  %v1992 = vadd.f32 %v1844, %v1880
  %v1993 = vadd.f32 %v1845, %v1880
  %v1994 = vadd.f32 %v1846, %v1880
  %v1995 = vadd.f32 %v1847, %v1880
  %v1996 = vadd.f32 %v1848, %v1880
  %v1997 = vadd.f32 %v1849, %v1880
  %v1998 = vadd.f32 %v1850, %v1880
  %v1999 = vadd.f32 %v1851, %v1880
  %v2000 = vadd.f32 %v1852, %v1880
  %v2001 = vadd.f32 %v1853, %v1880
  %v2002 = vadd.f32 %v1854, %v1880
  %v2003 = vadd.f32 %v1855, %v1880
  %v2004 = vadd.f32 %v1856, %v1880
  %v2005 = vadd.f32 %v1857, %v1880
  %v2006 = vadd.f32 %v1858, %v1880
  %v2007 = vadd.f32 %v1859, %v1880
  %v2008 = vadd.f32 %v1860, %v1880
  %v2009 = vadd.f32 %v1861, %v1880
  %v2010 = vadd.f32 %v1862, %v1880
  %v2011 = vadd.f32 %v1863, %v1880
  %v2012 = vadd.f32 %v1864, %v1880
  %v2013 = vadd.f32 %v1865, %v1880
  %v2014 = vadd.f32 %v1866, %v1880
  %v2015 = vadd.f32 %v1867, %v1880
  %v2016 = vadd.f32 %v1868, %v1880
  %v2017 = vadd.f32 %v1869, %v1880
  %v2018 = vadd.f32 %v1870, %v1880
  %v2019 = vadd.f32 %v1871, %v1880
  %v2020 = vadd.f32 %v1872, %v1880
  %v2021 = vadd.f32 %v1873, %v1880
  %v2022 = vadd.f32 %v1874, %v1880
  %v2023 = vadd.f32 %v1875, %v1880
  %v2024 = vadd.f32 %v1876, %v1880
  %v2025 = vadd.f32 %v1877, %v1880
  %v2026 = vmax.f32 %v1882, 0.0
  %v2027 = vmax.f32 %v1883, 0.0
  %v2028 = vmax.f32 %v1884, 0.0
  %v2029 = vmax.f32 %v1885, 0.0
  %v2030 = vmax.f32 %v1886, 0.0
  %v2031 = vmax.f32 %v1887, 0.0
  %v2032 = vmax.f32 %v1888, 0.0
  %v2033 = vmax.f32 %v1889, 0.0
  %v2034 = vmax.f32 %v1890, 0.0
  %v2035 = vmax.f32 %v1891, 0.0
  %v2036 = vmax.f32 %v1892, 0.0
  %v2037 = vmax.f32 %v1893, 0.0
  %v2038 = vmax.f32 %v1894, 0.0
  %v2039 = vmax.f32 %v1895, 0.0
  %v2040 = vmax.f32 %v1896, 0.0
  %v2041 = vmax.f32 %v1897, 0.0
  %v2042 = vmax.f32 %v1898, 0.0
  %v2043 = vmax.f32 %v1899, 0.0
  %v2044 = vmax.f32 %v1900, 0.0
  %v2045 = vmax.f32 %v1901, 0.0
  %v2046 = vmax.f32 %v1902, 0.0
  %v2047 = vmax.f32 %v1903, 0.0
  %v2048 = vmax.f32 %v1904, 0.0
  %v2049 = vmax.f32 %v1905, 0.0
  %v2050 = vmax.f32 %v1906, 0.0
  %v2051 = vmax.f32 %v1907, 0.0
  %v2052 = vmax.f32 %v1908, 0.0
  %v2053 = vmax.f32 %v1909, 0.0
  %v2054 = vmax.f32 %v1910, 0.0
  %v2055 = vmax.f32 %v1911, 0.0
  %v2056 = vmax.f32 %v1912, 0.0
  %v2057 = vmax.f32 %v1913, 0.0
  %v2058 = vmax.f32 %v1914, 0.0
  %v2059 = vmax.f32 %v1915, 0.0
  %v2060 = vmax.f32 %v1916, 0.0
  %v2061 = vmax.f32 %v1917, 0.0
  %v2062 = vmax.f32 %v1918, 0.0
  %v2063 = vmax.f32 %v1919, 0.0
  %v2064 = vmax.f32 %v1920, 0.0
  %v2065 = vmax.f32 %v1921, 0.0
  %v2066 = vmax.f32 %v1922, 0.0
  %v2067 = vmax.f32 %v1923, 0.0
  %v2068 = vmax.f32 %v1924, 0.0
  %v2069 = vmax.f32 %v1925, 0.0
  %v2070 = vmax.f32 %v1926, 0.0
  %v2071 = vmax.f32 %v1927, 0.0
  %v2072 = vmax.f32 %v1928, 0.0
  %v2073 = vmax.f32 %v1929, 0.0
  %v2074 = vmax.f32 %v1930, 0.0
  %v2075 = vmax.f32 %v1931, 0.0
  %v2076 = vmax.f32 %v1932, 0.0
  %v2077 = vmax.f32 %v1933, 0.0
  %v2078 = vmax.f32 %v1934, 0.0
  %v2079 = vmax.f32 %v1935, 0.0
  %v2080 = vmax.f32 %v1936, 0.0
  %v2081 = vmax.f32 %v1937, 0.0
  %v2082 = vmax.f32 %v1938, 0.0
  %v2083 = vmax.f32 %v1939, 0.0
  %v2084 = vmax.f32 %v1940, 0.0
  %v2085 = vmax.f32 %v1941, 0.0
  %v2086 = vmax.f32 %v1942, 0.0
  %v2087 = vmax.f32 %v1943, 0.0
  %v2088 = vmax.f32 %v1944, 0.0
  %v2089 = vmax.f32 %v1945, 0.0
  %v2090 = vmax.f32 %v1946, 0.0
  %v2091 = vmax.f32 %v1947, 0.0
  %v2092 = vmax.f32 %v1948, 0.0
  %v2093 = vmax.f32 %v1949, 0.0
  %v2094 = vmax.f32 %v1950, 0.0
  %v2095 = vmax.f32 %v1951, 0.0
  %v2096 = vmax.f32 %v1952, 0.0
  %v2097 = vmax.f32 %v1953, 0.0
  %v2098 = vmax.f32 %v1954, 0.0
  %v2099 = vmax.f32 %v1955, 0.0
  %v2100 = vmax.f32 %v1956, 0.0
  %v2101 = vmax.f32 %v1957, 0.0
  %v2102 = vmax.f32 %v1958, 0.0
  %v2103 = vmax.f32 %v1959, 0.0
  %v2104 = vmax.f32 %v1960, 0.0
  %v2105 = vmax.f32 %v1961, 0.0
  %v2106 = vmax.f32 %v1962, 0.0
  %v2107 = vmax.f32 %v1963, 0.0
  %v2108 = vmax.f32 %v1964, 0.0
  %v2109 = vmax.f32 %v1965, 0.0
  %v2110 = vmax.f32 %v1966, 0.0
  %v2111 = vmax.f32 %v1967, 0.0
  %v2112 = vmax.f32 %v1968, 0.0
  %v2113 = vmax.f32 %v1969, 0.0
  %v2114 = vmax.f32 %v1970, 0.0
  %v2115 = vmax.f32 %v1971, 0.0
  %v2116 = vmax.f32 %v1972, 0.0
  %v2117 = vmax.f32 %v1973, 0.0
  %v2118 = vmax.f32 %v1974, 0.0
  %v2119 = vmax.f32 %v1975, 0.0
  %v2120 = vmax.f32 %v1976, 0.0
  %v2121 = vmax.f32 %v1977, 0.0
  %v2122 = vmax.f32 %v1978, 0.0
  %v2123 = vmax.f32 %v1979, 0.0
  %v2124 = vmax.f32 %v1980, 0.0
  %v2125 = vmax.f32 %v1981, 0.0
  %v2126 = vmax.f32 %v1982, 0.0
  %v2127 = vmax.f32 %v1983, 0.0
  %v2128 = vmax.f32 %v1984, 0.0
  %v2129 = vmax.f32 %v1985, 0.0
  %v2130 = vmax.f32 %v1986, 0.0
  %v2131 = vmax.f32 %v1987, 0.0
  %v2132 = vmax.f32 %v1988, 0.0
  %v2133 = vmax.f32 %v1989, 0.0
  %v2134 = vmax.f32 %v1990, 0.0
  %v2135 = vmax.f32 %v1991, 0.0
  %v2136 = vmax.f32 %v1992, 0.0
  %v2137 = vmax.f32 %v1993, 0.0
  %v2138 = vmax.f32 %v1994, 0.0
  %v2139 = vmax.f32 %v1995, 0.0
  %v2140 = vmax.f32 %v1996, 0.0
  %v2141 = vmax.f32 %v1997, 0.0
  %v2142 = vmax.f32 %v1998, 0.0
  %v2143 = vmax.f32 %v1999, 0.0
  %v2144 = vmax.f32 %v2000, 0.0
  %v2145 = vmax.f32 %v2001, 0.0
  %v2146 = vmax.f32 %v2002, 0.0
  %v2147 = vmax.f32 %v2003, 0.0
  %v2148 = vmax.f32 %v2004, 0.0
  %v2149 = vmax.f32 %v2005, 0.0
  %v2150 = vmax.f32 %v2006, 0.0
  %v2151 = vmax.f32 %v2007, 0.0
  %v2152 = vmax.f32 %v2008, 0.0
  %v2153 = vmax.f32 %v2009, 0.0
  %v2154 = vmax.f32 %v2010, 0.0
  %v2155 = vmax.f32 %v2011, 0.0
  %v2156 = vmax.f32 %v2012, 0.0
  %v2157 = vmax.f32 %v2013, 0.0
  %v2158 = vmax.f32 %v2014, 0.0
  %v2159 = vmax.f32 %v2015, 0.0
  %v2160 = vmax.f32 %v2016, 0.0
  %v2161 = vmax.f32 %v2017, 0.0
  %v2162 = vmax.f32 %v2018, 0.0
  %v2163 = vmax.f32 %v2019, 0.0
  %v2164 = vmax.f32 %v2020, 0.0
  %v2165 = vmax.f32 %v2021, 0.0
  %v2166 = vmax.f32 %v2022, 0.0
  %v2167 = vmax.f32 %v2023, 0.0
  %v2168 = vmax.f32 %v2024, 0.0
  %v2169 = vmax.f32 %v2025, 0.0
  %v2170 = vpack.c.bf16 %v2026, %v2026
  %v2171 = vpack.c.bf16 %v2027, %v2027
  %v2172 = vpack.c.bf16 %v2028, %v2028
  %v2173 = vpack.c.bf16 %v2029, %v2029
  %v2174 = vpack.c.bf16 %v2030, %v2030
  %v2175 = vpack.c.bf16 %v2031, %v2031
  %v2176 = vpack.c.bf16 %v2032, %v2032
  %v2177 = vpack.c.bf16 %v2033, %v2033
  %v2178 = vpack.c.bf16 %v2034, %v2034
  %v2179 = vpack.c.bf16 %v2035, %v2035
  %v2180 = vpack.c.bf16 %v2036, %v2036
  %v2181 = vpack.c.bf16 %v2037, %v2037
  %v2182 = vpack.c.bf16 %v2038, %v2038
  %v2183 = vpack.c.bf16 %v2039, %v2039
  %v2184 = vpack.c.bf16 %v2040, %v2040
  %v2185 = vpack.c.bf16 %v2041, %v2041
  %v2186 = vpack.c.bf16 %v2042, %v2042
  %v2187 = vpack.c.bf16 %v2043, %v2043
  %v2188 = vpack.c.bf16 %v2044, %v2044
  %v2189 = vpack.c.bf16 %v2045, %v2045
  %v2190 = vpack.c.bf16 %v2046, %v2046
  %v2191 = vpack.c.bf16 %v2047, %v2047
  %v2192 = vpack.c.bf16 %v2048, %v2048
  %v2193 = vpack.c.bf16 %v2049, %v2049
  %v2194 = vpack.c.bf16 %v2050, %v2050
  %v2195 = vpack.c.bf16 %v2051, %v2051
  %v2196 = vpack.c.bf16 %v2052, %v2052
  %v2197 = vpack.c.bf16 %v2053, %v2053
  %v2198 = vpack.c.bf16 %v2054, %v2054
  %v2199 = vpack.c.bf16 %v2055, %v2055
  %v2200 = vpack.c.bf16 %v2056, %v2056
  %v2201 = vpack.c.bf16 %v2057, %v2057
  %v2202 = vpack.c.bf16 %v2058, %v2058
  %v2203 = vpack.c.bf16 %v2059, %v2059
  %v2204 = vpack.c.bf16 %v2060, %v2060
  %v2205 = vpack.c.bf16 %v2061, %v2061
  %v2206 = vpack.c.bf16 %v2062, %v2062
  %v2207 = vpack.c.bf16 %v2063, %v2063
  %v2208 = vpack.c.bf16 %v2064, %v2064
  %v2209 = vpack.c.bf16 %v2065, %v2065
  %v2210 = vpack.c.bf16 %v2066, %v2066
  %v2211 = vpack.c.bf16 %v2067, %v2067
  %v2212 = vpack.c.bf16 %v2068, %v2068
  %v2213 = vpack.c.bf16 %v2069, %v2069
  %v2214 = vpack.c.bf16 %v2070, %v2070
  %v2215 = vpack.c.bf16 %v2071, %v2071
  %v2216 = vpack.c.bf16 %v2072, %v2072
  %v2217 = vpack.c.bf16 %v2073, %v2073
  %v2218 = vpack.c.bf16 %v2074, %v2074
  %v2219 = vpack.c.bf16 %v2075, %v2075
  %v2220 = vpack.c.bf16 %v2076, %v2076
  %v2221 = vpack.c.bf16 %v2077, %v2077
  %v2222 = vpack.c.bf16 %v2078, %v2078
  %v2223 = vpack.c.bf16 %v2079, %v2079
  %v2224 = vpack.c.bf16 %v2080, %v2080
  %v2225 = vpack.c.bf16 %v2081, %v2081
  %v2226 = vpack.c.bf16 %v2082, %v2082
  %v2227 = vpack.c.bf16 %v2083, %v2083
  %v2228 = vpack.c.bf16 %v2084, %v2084
  %v2229 = vpack.c.bf16 %v2085, %v2085
  %v2230 = vpack.c.bf16 %v2086, %v2086
  %v2231 = vpack.c.bf16 %v2087, %v2087
  %v2232 = vpack.c.bf16 %v2088, %v2088
  %v2233 = vpack.c.bf16 %v2089, %v2089
  %v2234 = vpack.c.bf16 %v2090, %v2090
  %v2235 = vpack.c.bf16 %v2091, %v2091
  %v2236 = vpack.c.bf16 %v2092, %v2092
  %v2237 = vpack.c.bf16 %v2093, %v2093
  %v2238 = vpack.c.bf16 %v2094, %v2094
  %v2239 = vpack.c.bf16 %v2095, %v2095
  %v2240 = vpack.c.bf16 %v2096, %v2096
  %v2241 = vpack.c.bf16 %v2097, %v2097
  %v2242 = vpack.c.bf16 %v2098, %v2098
  %v2243 = vpack.c.bf16 %v2099, %v2099
  %v2244 = vpack.c.bf16 %v2100, %v2100
  %v2245 = vpack.c.bf16 %v2101, %v2101
  %v2246 = vpack.c.bf16 %v2102, %v2102
  %v2247 = vpack.c.bf16 %v2103, %v2103
  %v2248 = vpack.c.bf16 %v2104, %v2104
  %v2249 = vpack.c.bf16 %v2105, %v2105
  %v2250 = vpack.c.bf16 %v2106, %v2106
  %v2251 = vpack.c.bf16 %v2107, %v2107
  %v2252 = vpack.c.bf16 %v2108, %v2108
  %v2253 = vpack.c.bf16 %v2109, %v2109
  %v2254 = vpack.c.bf16 %v2110, %v2110
  %v2255 = vpack.c.bf16 %v2111, %v2111
  %v2256 = vpack.c.bf16 %v2112, %v2112
  %v2257 = vpack.c.bf16 %v2113, %v2113
  %v2258 = vpack.c.bf16 %v2114, %v2114
  %v2259 = vpack.c.bf16 %v2115, %v2115
  %v2260 = vpack.c.bf16 %v2116, %v2116
  %v2261 = vpack.c.bf16 %v2117, %v2117
  %v2262 = vpack.c.bf16 %v2118, %v2118
  %v2263 = vpack.c.bf16 %v2119, %v2119
  %v2264 = vpack.c.bf16 %v2120, %v2120
  %v2265 = vpack.c.bf16 %v2121, %v2121
  %v2266 = vpack.c.bf16 %v2122, %v2122
  %v2267 = vpack.c.bf16 %v2123, %v2123
  %v2268 = vpack.c.bf16 %v2124, %v2124
  %v2269 = vpack.c.bf16 %v2125, %v2125
  %v2270 = vpack.c.bf16 %v2126, %v2126
  %v2271 = vpack.c.bf16 %v2127, %v2127
  %v2272 = vpack.c.bf16 %v2128, %v2128
  %v2273 = vpack.c.bf16 %v2129, %v2129
  %v2274 = vpack.c.bf16 %v2130, %v2130
  %v2275 = vpack.c.bf16 %v2131, %v2131
  %v2276 = vpack.c.bf16 %v2132, %v2132
  %v2277 = vpack.c.bf16 %v2133, %v2133
  %v2278 = vpack.c.bf16 %v2134, %v2134
  %v2279 = vpack.c.bf16 %v2135, %v2135
  %v2280 = vpack.c.bf16 %v2136, %v2136
  %v2281 = vpack.c.bf16 %v2137, %v2137
  %v2282 = vpack.c.bf16 %v2138, %v2138
  %v2283 = vpack.c.bf16 %v2139, %v2139
  %v2284 = vpack.c.bf16 %v2140, %v2140
  %v2285 = vpack.c.bf16 %v2141, %v2141
  %v2286 = vpack.c.bf16 %v2142, %v2142
  %v2287 = vpack.c.bf16 %v2143, %v2143
  %v2288 = vpack.c.bf16 %v2144, %v2144
  %v2289 = vpack.c.bf16 %v2145, %v2145
  %v2290 = vpack.c.bf16 %v2146, %v2146
  %v2291 = vpack.c.bf16 %v2147, %v2147
  %v2292 = vpack.c.bf16 %v2148, %v2148
  %v2293 = vpack.c.bf16 %v2149, %v2149
  %v2294 = vpack.c.bf16 %v2150, %v2150
  %v2295 = vpack.c.bf16 %v2151, %v2151
  %v2296 = vpack.c.bf16 %v2152, %v2152
  %v2297 = vpack.c.bf16 %v2153, %v2153
  %v2298 = vpack.c.bf16 %v2154, %v2154
  %v2299 = vpack.c.bf16 %v2155, %v2155
  %v2300 = vpack.c.bf16 %v2156, %v2156
  %v2301 = vpack.c.bf16 %v2157, %v2157
  %v2302 = vpack.c.bf16 %v2158, %v2158
  %v2303 = vpack.c.bf16 %v2159, %v2159
  %v2304 = vpack.c.bf16 %v2160, %v2160
  %v2305 = vpack.c.bf16 %v2161, %v2161
  %v2306 = vpack.c.bf16 %v2162, %v2162
  %v2307 = vpack.c.bf16 %v2163, %v2163
  %v2308 = vpack.c.bf16 %v2164, %v2164
  %v2309 = vpack.c.bf16 %v2165, %v2165
  %v2310 = vpack.c.bf16 %v2166, %v2166
  %v2311 = vpack.c.bf16 %v2167, %v2167
  %v2312 = vpack.c.bf16 %v2168, %v2168
  %v2313 = vpack.c.bf16 %v2169, %v2169
  %2314 = vst [vmem:[%s4] sm:$0xf] %v2170
  %2315 = vst [vmem:[%s4 + $0x4] sm:$0xf] %v2171
  %2316 = vst [vmem:[%s4 + $0x8] sm:$0xf] %v2172
  %2317 = vst [vmem:[%s4 + $0xc] sm:$0xf] %v2173
  %2318 = vst [vmem:[%s4 + $0x10] sm:$0xf] %v2174
  %2319 = vst [vmem:[%s4 + $0x14] sm:$0xf] %v2175
  %2320 = vst [vmem:[%s4 + $0x18] sm:$0xf] %v2176
  %2321 = vst [vmem:[%s4 + $0x1c] sm:$0xf] %v2177
  %2322 = vst [vmem:[%s4 + $0x20] sm:$0xf] %v2178
  %2323 = vst [vmem:[%s4 + $0x24] sm:$0xf] %v2179
  %2324 = vst [vmem:[%s4 + $0x28] sm:$0xf] %v2180
  %2325 = vst [vmem:[%s4 + $0x2c] sm:$0xf] %v2181
  %2326 = vst [vmem:[%s4 + $0x30] sm:$0xf] %v2182
  %2327 = vst [vmem:[%s4 + $0x34] sm:$0xf] %v2183
  %2328 = vst [vmem:[%s4 + $0x38] sm:$0xf] %v2184
  %2329 = vst [vmem:[%s4 + $0x3c] sm:$0xf] %v2185
  %2330 = vst [vmem:[%s4 + $0x40] sm:$0xf] %v2186
  %2331 = vst [vmem:[%s4 + $0x44] sm:$0xf] %v2187
  %2332 = vst [vmem:[%s4 + $0x48] sm:$0xf] %v2188
  %2333 = vst [vmem:[%s4 + $0x4c] sm:$0xf] %v2189
  %2334 = vst [vmem:[%s4 + $0x50] sm:$0xf] %v2190
  %2335 = vst [vmem:[%s4 + $0x54] sm:$0xf] %v2191
  %2336 = vst [vmem:[%s4 + $0x58] sm:$0xf] %v2192
  %2337 = vst [vmem:[%s4 + $0x5c] sm:$0xf] %v2193
  %2338 = vst [vmem:[%s4 + $0x60] sm:$0xf] %v2194
  %2339 = vst [vmem:[%s4 + $0x64] sm:$0xf] %v2195
  %2340 = vst [vmem:[%s4 + $0x68] sm:$0xf] %v2196
  %2341 = vst [vmem:[%s4 + $0x6c] sm:$0xf] %v2197
  %2342 = vst [vmem:[%s4 + $0x70] sm:$0xf] %v2198
  %2343 = vst [vmem:[%s4 + $0x74] sm:$0xf] %v2199
  %2344 = vst [vmem:[%s4 + $0x78] sm:$0xf] %v2200
  %2345 = vst [vmem:[%s4 + $0x7c] sm:$0xf] %v2201
  %2346 = vst [vmem:[%s4 + $0x80] sm:$0xf] %v2202
  %2347 = vst [vmem:[%s4 + $0x84] sm:$0xf] %v2203
  %2348 = vst [vmem:[%s4 + $0x88] sm:$0xf] %v2204
  %2349 = vst [vmem:[%s4 + $0x8c] sm:$0xf] %v2205
  %2350 = vst [vmem:[%s4 + $0x90] sm:$0xf] %v2206
  %2351 = vst [vmem:[%s4 + $0x94] sm:$0xf] %v2207
  %2352 = vst [vmem:[%s4 + $0x98] sm:$0xf] %v2208
  %2353 = vst [vmem:[%s4 + $0x9c] sm:$0xf] %v2209
  %2354 = vst [vmem:[%s4 + $0xa0] sm:$0xf] %v2210
  %2355 = vst [vmem:[%s4 + $0xa4] sm:$0xf] %v2211
  %2356 = vst [vmem:[%s4 + $0xa8] sm:$0xf] %v2212
  %2357 = vst [vmem:[%s4 + $0xac] sm:$0xf] %v2213
  %2358 = vst [vmem:[%s4 + $0xb0] sm:$0xf] %v2214
  %2359 = vst [vmem:[%s4 + $0xb4] sm:$0xf] %v2215
  %2360 = vst [vmem:[%s4 + $0xb8] sm:$0xf] %v2216
  %2361 = vst [vmem:[%s4 + $0xbc] sm:$0xf] %v2217
  %2362 = vst [vmem:[%s4 + $0xc0] sm:$0xf] %v2218
  %2363 = vst [vmem:[%s4 + $0xc4] sm:$0xf] %v2219
  %2364 = vst [vmem:[%s4 + $0xc8] sm:$0xf] %v2220
  %2365 = vst [vmem:[%s4 + $0xcc] sm:$0xf] %v2221
  %2366 = vst [vmem:[%s4 + $0xd0] sm:$0xf] %v2222
  %2367 = vst [vmem:[%s4 + $0xd4] sm:$0xf] %v2223
  %2368 = vst [vmem:[%s4 + $0xd8] sm:$0xf] %v2224
  %2369 = vst [vmem:[%s4 + $0xdc] sm:$0xf] %v2225
  %2370 = vst [vmem:[%s4 + $0xe0] sm:$0xf] %v2226
  %2371 = vst [vmem:[%s4 + $0xe4] sm:$0xf] %v2227
  %2372 = vst [vmem:[%s4 + $0xe8] sm:$0xf] %v2228
  %2373 = vst [vmem:[%s4 + $0xec] sm:$0xf] %v2229
  %2374 = vst [vmem:[%s4 + $0xf0] sm:$0xf] %v2230
  %2375 = vst [vmem:[%s4 + $0xf4] sm:$0xf] %v2231
  %2376 = vst [vmem:[%s4 + $0xf8] sm:$0xf] %v2232
  %2377 = vst [vmem:[%s4 + $0xfc] sm:$0xf] %v2233
  %2378 = vst [vmem:[%s4 + $0x100] sm:$0xf] %v2234
  %2379 = vst [vmem:[%s4 + $0x104] sm:$0xf] %v2235
  %2380 = vst [vmem:[%s4 + $0x108] sm:$0xf] %v2236
  %2381 = vst [vmem:[%s4 + $0x10c] sm:$0xf] %v2237
  %2382 = vst [vmem:[%s4 + $0x110] sm:$0xf] %v2238
  %2383 = vst [vmem:[%s4 + $0x114] sm:$0xf] %v2239
  %2384 = vst [vmem:[%s4 + $0x118] sm:$0xf] %v2240
  %2385 = vst [vmem:[%s4 + $0x11c] sm:$0xf] %v2241
  %2386 = vst [vmem:[%s4 + $0x120] sm:$0xf] %v2242
  %2387 = vst [vmem:[%s4 + $0x124] sm:$0xf] %v2243
  %2388 = vst [vmem:[%s4 + $0x128] sm:$0xf] %v2244
  %2389 = vst [vmem:[%s4 + $0x12c] sm:$0xf] %v2245
  %2390 = vst [vmem:[%s4 + $0x130] sm:$0xf] %v2246
  %2391 = vst [vmem:[%s4 + $0x134] sm:$0xf] %v2247
  %2392 = vst [vmem:[%s4 + $0x138] sm:$0xf] %v2248
  %2393 = vst [vmem:[%s4 + $0x13c] sm:$0xf] %v2249
  %2394 = vst [vmem:[%s4 + $0x140] sm:$0xf] %v2250
  %2395 = vst [vmem:[%s4 + $0x144] sm:$0xf] %v2251
  %2396 = vst [vmem:[%s4 + $0x148] sm:$0xf] %v2252
  %2397 = vst [vmem:[%s4 + $0x14c] sm:$0xf] %v2253
  %2398 = vst [vmem:[%s4 + $0x150] sm:$0xf] %v2254
  %2399 = vst [vmem:[%s4 + $0x154] sm:$0xf] %v2255
  %2400 = vst [vmem:[%s4 + $0x158] sm:$0xf] %v2256
  %2401 = vst [vmem:[%s4 + $0x15c] sm:$0xf] %v2257
  %2402 = vst [vmem:[%s4 + $0x160] sm:$0xf] %v2258
  %2403 = vst [vmem:[%s4 + $0x164] sm:$0xf] %v2259
  %2404 = vst [vmem:[%s4 + $0x168] sm:$0xf] %v2260
  %2405 = vst [vmem:[%s4 + $0x16c] sm:$0xf] %v2261
  %2406 = vst [vmem:[%s4 + $0x170] sm:$0xf] %v2262
  %2407 = vst [vmem:[%s4 + $0x174] sm:$0xf] %v2263
  %2408 = vst [vmem:[%s4 + $0x178] sm:$0xf] %v2264
  %2409 = vst [vmem:[%s4 + $0x17c] sm:$0xf] %v2265
  %2410 = vst [vmem:[%s4 + $0x180] sm:$0xf] %v2266
  %2411 = vst [vmem:[%s4 + $0x184] sm:$0xf] %v2267
  %2412 = vst [vmem:[%s4 + $0x188] sm:$0xf] %v2268
  %2413 = vst [vmem:[%s4 + $0x18c] sm:$0xf] %v2269
  %2414 = vst [vmem:[%s4 + $0x190] sm:$0xf] %v2270
  %2415 = vst [vmem:[%s4 + $0x194] sm:$0xf] %v2271
  %2416 = vst [vmem:[%s4 + $0x198] sm:$0xf] %v2272
  %2417 = vst [vmem:[%s4 + $0x19c] sm:$0xf] %v2273
  %2418 = vst [vmem:[%s4 + $0x1a0] sm:$0xf] %v2274
  %2419 = vst [vmem:[%s4 + $0x1a4] sm:$0xf] %v2275
  %2420 = vst [vmem:[%s4 + $0x1a8] sm:$0xf] %v2276
  %2421 = vst [vmem:[%s4 + $0x1ac] sm:$0xf] %v2277
  %2422 = vst [vmem:[%s4 + $0x1b0] sm:$0xf] %v2278
  %2423 = vst [vmem:[%s4 + $0x1b4] sm:$0xf] %v2279
  %2424 = vst [vmem:[%s4 + $0x1b8] sm:$0xf] %v2280
  %2425 = vst [vmem:[%s4 + $0x1bc] sm:$0xf] %v2281
  %2426 = vst [vmem:[%s4 + $0x1c0] sm:$0xf] %v2282
  %2427 = vst [vmem:[%s4 + $0x1c4] sm:$0xf] %v2283
  %2428 = vst [vmem:[%s4 + $0x1c8] sm:$0xf] %v2284
  %2429 = vst [vmem:[%s4 + $0x1cc] sm:$0xf] %v2285
  %2430 = vst [vmem:[%s4 + $0x1d0] sm:$0xf] %v2286
  %2431 = vst [vmem:[%s4 + $0x1d4] sm:$0xf] %v2287
  %2432 = vst [vmem:[%s4 + $0x1d8] sm:$0xf] %v2288
  %2433 = vst [vmem:[%s4 + $0x1dc] sm:$0xf] %v2289
  %2434 = vst [vmem:[%s4 + $0x1e0] sm:$0xf] %v2290
  %2435 = vst [vmem:[%s4 + $0x1e4] sm:$0xf] %v2291
  %2436 = vst [vmem:[%s4 + $0x1e8] sm:$0xf] %v2292
  %2437 = vst [vmem:[%s4 + $0x1ec] sm:$0xf] %v2293
  %2438 = vst [vmem:[%s4 + $0x1f0] sm:$0xf] %v2294
  %2439 = vst [vmem:[%s4 + $0x1f4] sm:$0xf] %v2295
  %2440 = vst [vmem:[%s4 + $0x1f8] sm:$0xf] %v2296
  %2441 = vst [vmem:[%s4 + $0x1fc] sm:$0xf] %v2297
  %2442 = vst [vmem:[%s4 + $0x200] sm:$0xf] %v2298
  %2443 = vst [vmem:[%s4 + $0x204] sm:$0xf] %v2299
  %2444 = vst [vmem:[%s4 + $0x208] sm:$0xf] %v2300
  %2445 = vst [vmem:[%s4 + $0x20c] sm:$0xf] %v2301
  %2446 = vst [vmem:[%s4 + $0x210] sm:$0xf] %v2302
  %2447 = vst [vmem:[%s4 + $0x214] sm:$0xf] %v2303
  %2448 = vst [vmem:[%s4 + $0x218] sm:$0xf] %v2304
  %2449 = vst [vmem:[%s4 + $0x21c] sm:$0xf] %v2305
  %2450 = vst [vmem:[%s4 + $0x220] sm:$0xf] %v2306
  %2451 = vst [vmem:[%s4 + $0x224] sm:$0xf] %v2307
  %2452 = vst [vmem:[%s4 + $0x228] sm:$0xf] %v2308
  %2453 = vst [vmem:[%s4 + $0x22c] sm:$0xf] %v2309
  %2454 = vst [vmem:[%s4 + $0x230] sm:$0xf] %v2310
  %2455 = vst [vmem:[%s4 + $0x234] sm:$0xf] %v2311
  %2456 = vst [vmem:[%s4 + $0x238] sm:$0xf] %v2312
  %2457 = vst [vmem:[%s4 + $0x23c] sm:$0xf] %v2313
  // Predicated region
  $region18: #{py_forward.3} parent=0 // pred_check
    _
  $region19: #{py_forward.3} parent=0 // pred_check_branch
    %2459 = sbr.rel (0) target = $region21
  $region20: #{py_forward.3} parent=0 // pred_region
    _
  $region21: #{py_forward.3} parent=0 // pred_fallthru
    _
  // Predicated region
  $region22: #{py_forward.3} parent=0 // pred_check
    _
  $region23: #{py_forward.3} parent=0 // pred_check_branch
    %2461 = sbr.rel (0) target = $region25
  $region24: #{py_forward.3} parent=0 // pred_region
    _
  $region25: #{py_forward.3} parent=0 // pred_fallthru
    _

// kernel: py_forward.5
$region0: #{py_forward.5}
  #allocation0 [shape = 'u32[]', space=smem, size = 0x4, offset = 0x4, fixed_abs, tag = 'smem constant byte address 0x4 - core index']
  #allocation1 [shape = 'u32[72,128]{1,0:T(1,128)}', space=vmem, size = 0x9000, scoped, tag = 'internal scratch']
  %s0 = inlined_call_operand.vmem [shape: bf16[2,2048], index: 0, kind: input, shape index: {}]
  %s1 = inlined_call_operand.vmem [shape: bf16[2,8], index: 1, kind: input, shape index: {}]
  %s2 = inlined_call_operand.vmem [shape: bf16[2048,256], index: 2, kind: input, shape index: {}]
  %s3 = inlined_call_operand.vmem [shape: f32[1,256], index: 3, kind: input, shape index: {}]
  %s4 = inlined_call_operand.vmem [shape: bf16[256,128], index: 4, kind: input, shape index: {}]
  %s5 = inlined_call_operand.vmem [shape: bf16[8,128], index: 5, kind: input, shape index: {}]
  %s6 = inlined_call_operand.vmem [shape: f32[1,128], index: 6, kind: input, shape index: {}]
  %s7 = inlined_call_operand.vmem [shape: f32[2,256], index: 7, kind: output, shape index: {0}]
  %s8 = inlined_call_operand.hbm [shape: f32[2,128], index: 8, kind: output, shape index: {1}]
  %9 = xla_tuple %s7, %s8
  %s10 = sld [smem:[#allocation0]]
  $region46: #{py_forward.5} parent=0
    _
  %s12 = ssub.s32 1, %s10
  %s13 = scalar_select 0, %s12, %s10
  $region1: #{py_forward.5} parent=0
    #allocation2 [shape = 'u8[1024]{0}', space=vmem, size = 0x400, scoped, tag = 'output window, operand 1, single buffered']
    #allocation3 [shape = 's32[1]{0}', space=sflag, size = 0x4, scoped, tag = 'scoped memory for py_forward.5']
    %14 = vsyncpa [#allocation3], 0
    // Predicated region
    $region2: #{py_forward.5} parent=1 // pred_check
      _
    $region3: #{py_forward.5} parent=1 // pred_check_branch
      %16 = sbr.rel (0) target = $region5
    $region4: #{py_forward.5} parent=1 // pred_region
      _
    $region5: #{py_forward.5} parent=1 // pred_fallthru
      _
    // Predicated region
    $region6: #{py_forward.5} parent=1 // pred_check
      _
    $region7: #{py_forward.5} parent=1 // pred_check_branch
      %18 = sbr.rel (0) target = $region9
    $region8: #{py_forward.5} parent=1 // pred_region
      _
    $region9: #{py_forward.5} parent=1 // pred_fallthru
      _
    // Predicated region
    $region10: #{py_forward.5} parent=1 // pred_check
      _
    $region11: #{py_forward.5} parent=1 // pred_check_branch
      %20 = sbr.rel (0) target = $region13
    $region12: #{py_forward.5} parent=1 // pred_region
      _
    $region13: #{py_forward.5} parent=1 // pred_fallthru
      _
    // Predicated region
    $region14: #{py_forward.5} parent=1 // pred_check
      _
    $region15: #{py_forward.5} parent=1 // pred_check_branch
      %22 = sbr.rel (0) target = $region17
    $region16: #{py_forward.5} parent=1 // pred_region
      _
    $region17: #{py_forward.5} parent=1 // pred_fallthru
      _
    // Predicated region
    $region18: #{py_forward.5} parent=1 // pred_check
      _
    $region19: #{py_forward.5} parent=1 // pred_check_branch
      %24 = sbr.rel (0) target = $region21
    $region20: #{py_forward.5} parent=1 // pred_region
      _
    $region21: #{py_forward.5} parent=1 // pred_fallthru
      _
    // Predicated region
    $region22: #{py_forward.5} parent=1 // pred_check
      _
    $region23: #{py_forward.5} parent=1 // pred_check_branch
      %26 = sbr.rel (0) target = $region25
    $region24: #{py_forward.5} parent=1 // pred_region
      _
    $region25: #{py_forward.5} parent=1 // pred_fallthru
      _
    // Predicated region
    $region26: #{py_forward.5} parent=1 // pred_check
      _
    $region27: #{py_forward.5} parent=1 // pred_check_branch
      %28 = sbr.rel (0) target = $region29
    $region28: #{py_forward.5} parent=1 // pred_region
      _
    $region29: #{py_forward.5} parent=1 // pred_fallthru
      _
    %v30 = vld [vmem:[%s0] sm:$0xff]
    %v31 = vld [vmem:[%s0 + $0x8] sm:$0xff]
    %v32 = vld [vmem:[%s2] sm:$0xff]
    %v33 = vld [vmem:[%s2 + $0x8] sm:$0xff]
    %v34 = vld [vmem:[%s2 + $0x10] sm:$0xff]
    %v35 = vld [vmem:[%s2 + $0x18] sm:$0xff]
    %v36 = vld [vmem:[%s2 + $0x20] sm:$0xff]
    %v37 = vld [vmem:[%s2 + $0x28] sm:$0xff]
    %v38 = vld [vmem:[%s2 + $0x30] sm:$0xff]
    %v39 = vld [vmem:[%s2 + $0x38] sm:$0xff]
    %v40 = vld [vmem:[%s2 + $0x40] sm:$0xff]
    %v41 = vld [vmem:[%s2 + $0x48] sm:$0xff]
    %v42 = vld [vmem:[%s2 + $0x50] sm:$0xff]
    %v43 = vld [vmem:[%s2 + $0x58] sm:$0xff]
    %v44 = vld [vmem:[%s2 + $0x60] sm:$0xff]
    %v45 = vld [vmem:[%s2 + $0x68] sm:$0xff]
    %v46 = vld [vmem:[%s2 + $0x70] sm:$0xff]
    %v47 = vld [vmem:[%s2 + $0x78] sm:$0xff]
    %v48 = vld [vmem:[%s2 + $0x80] sm:$0xff]
    %v49 = vld [vmem:[%s2 + $0x88] sm:$0xff]
    %v50 = vld [vmem:[%s2 + $0x90] sm:$0xff]
    %v51 = vld [vmem:[%s2 + $0x98] sm:$0xff]
    %v52 = vld [vmem:[%s2 + $0xa0] sm:$0xff]
    %v53 = vld [vmem:[%s2 + $0xa8] sm:$0xff]
    %v54 = vld [vmem:[%s2 + $0xb0] sm:$0xff]
    %v55 = vld [vmem:[%s2 + $0xb8] sm:$0xff]
    %v56 = vld [vmem:[%s2 + $0xc0] sm:$0xff]
    %v57 = vld [vmem:[%s2 + $0xc8] sm:$0xff]
    %v58 = vld [vmem:[%s2 + $0xd0] sm:$0xff]
    %v59 = vld [vmem:[%s2 + $0xd8] sm:$0xff]
    %v60 = vld [vmem:[%s2 + $0xe0] sm:$0xff]
    %v61 = vld [vmem:[%s2 + $0xe8] sm:$0xff]
    %v62 = vld [vmem:[%s2 + $0xf0] sm:$0xff]
    %v63 = vld [vmem:[%s2 + $0xf8] sm:$0xff]
    %v64 = vld [vmem:[%s2 + $0x100] sm:$0xff]
    %v65 = vld [vmem:[%s2 + $0x108] sm:$0xff]
    %v66 = vld [vmem:[%s2 + $0x110] sm:$0xff]
    %v67 = vld [vmem:[%s2 + $0x118] sm:$0xff]
    %v68 = vld [vmem:[%s2 + $0x120] sm:$0xff]
    %v69 = vld [vmem:[%s2 + $0x128] sm:$0xff]
    %v70 = vld [vmem:[%s2 + $0x130] sm:$0xff]
    %v71 = vld [vmem:[%s2 + $0x138] sm:$0xff]
    %v72 = vld [vmem:[%s2 + $0x140] sm:$0xff]
    %v73 = vld [vmem:[%s2 + $0x148] sm:$0xff]
    %v74 = vld [vmem:[%s2 + $0x150] sm:$0xff]
    %v75 = vld [vmem:[%s2 + $0x158] sm:$0xff]
    %v76 = vld [vmem:[%s2 + $0x160] sm:$0xff]
    %v77 = vld [vmem:[%s2 + $0x168] sm:$0xff]
    %v78 = vld [vmem:[%s2 + $0x170] sm:$0xff]
    %v79 = vld [vmem:[%s2 + $0x178] sm:$0xff]
    %v80 = vld [vmem:[%s2 + $0x180] sm:$0xff]
    %v81 = vld [vmem:[%s2 + $0x188] sm:$0xff]
    %v82 = vld [vmem:[%s2 + $0x190] sm:$0xff]
    %v83 = vld [vmem:[%s2 + $0x198] sm:$0xff]
    %v84 = vld [vmem:[%s2 + $0x1a0] sm:$0xff]
    %v85 = vld [vmem:[%s2 + $0x1a8] sm:$0xff]
    %v86 = vld [vmem:[%s2 + $0x1b0] sm:$0xff]
    %v87 = vld [vmem:[%s2 + $0x1b8] sm:$0xff]
    %v88 = vld [vmem:[%s2 + $0x1c0] sm:$0xff]
    %v89 = vld [vmem:[%s2 + $0x1c8] sm:$0xff]
    %v90 = vld [vmem:[%s2 + $0x1d0] sm:$0xff]
    %v91 = vld [vmem:[%s2 + $0x1d8] sm:$0xff]
    %v92 = vld [vmem:[%s2 + $0x1e0] sm:$0xff]
    %v93 = vld [vmem:[%s2 + $0x1e8] sm:$0xff]
    %v94 = vld [vmem:[%s2 + $0x1f0] sm:$0xff]
    %v95 = vld [vmem:[%s2 + $0x1f8] sm:$0xff]
    %v96 = vld [vmem:[%s2 + $0x200] sm:$0xff]
    %v97 = vld [vmem:[%s2 + $0x208] sm:$0xff]
    %v98 = vld [vmem:[%s2 + $0x210] sm:$0xff]
    %v99 = vld [vmem:[%s2 + $0x218] sm:$0xff]
    %v100 = vld [vmem:[%s2 + $0x220] sm:$0xff]
    %v101 = vld [vmem:[%s2 + $0x228] sm:$0xff]
    %v102 = vld [vmem:[%s2 + $0x230] sm:$0xff]
    %v103 = vld [vmem:[%s2 + $0x238] sm:$0xff]
    %v104 = vld [vmem:[%s2 + $0x240] sm:$0xff]
    %v105 = vld [vmem:[%s2 + $0x248] sm:$0xff]
    %v106 = vld [vmem:[%s2 + $0x250] sm:$0xff]
    %v107 = vld [vmem:[%s2 + $0x258] sm:$0xff]
    %v108 = vld [vmem:[%s2 + $0x260] sm:$0xff]
    %v109 = vld [vmem:[%s2 + $0x268] sm:$0xff]
    %v110 = vld [vmem:[%s2 + $0x270] sm:$0xff]
    %v111 = vld [vmem:[%s2 + $0x278] sm:$0xff]
    %v112 = vld [vmem:[%s2 + $0x280] sm:$0xff]
    %v113 = vld [vmem:[%s2 + $0x288] sm:$0xff]
    %v114 = vld [vmem:[%s2 + $0x290] sm:$0xff]
    %v115 = vld [vmem:[%s2 + $0x298] sm:$0xff]
    %v116 = vld [vmem:[%s2 + $0x2a0] sm:$0xff]
    %v117 = vld [vmem:[%s2 + $0x2a8] sm:$0xff]
    %v118 = vld [vmem:[%s2 + $0x2b0] sm:$0xff]
    %v119 = vld [vmem:[%s2 + $0x2b8] sm:$0xff]
    %v120 = vld [vmem:[%s2 + $0x2c0] sm:$0xff]
    %v121 = vld [vmem:[%s2 + $0x2c8] sm:$0xff]
    %v122 = vld [vmem:[%s2 + $0x2d0] sm:$0xff]
    %v123 = vld [vmem:[%s2 + $0x2d8] sm:$0xff]
    %v124 = vld [vmem:[%s2 + $0x2e0] sm:$0xff]
    %v125 = vld [vmem:[%s2 + $0x2e8] sm:$0xff]
    %v126 = vld [vmem:[%s2 + $0x2f0] sm:$0xff]
    %v127 = vld [vmem:[%s2 + $0x2f8] sm:$0xff]
    %v128 = vld [vmem:[%s2 + $0x300] sm:$0xff]
    %v129 = vld [vmem:[%s2 + $0x308] sm:$0xff]
    %v130 = vld [vmem:[%s2 + $0x310] sm:$0xff]
    %v131 = vld [vmem:[%s2 + $0x318] sm:$0xff]
    %v132 = vld [vmem:[%s2 + $0x320] sm:$0xff]
    %v133 = vld [vmem:[%s2 + $0x328] sm:$0xff]
    %v134 = vld [vmem:[%s2 + $0x330] sm:$0xff]
    %v135 = vld [vmem:[%s2 + $0x338] sm:$0xff]
    %v136 = vld [vmem:[%s2 + $0x340] sm:$0xff]
    %v137 = vld [vmem:[%s2 + $0x348] sm:$0xff]
    %v138 = vld [vmem:[%s2 + $0x350] sm:$0xff]
    %v139 = vld [vmem:[%s2 + $0x358] sm:$0xff]
    %v140 = vld [vmem:[%s2 + $0x360] sm:$0xff]
    %v141 = vld [vmem:[%s2 + $0x368] sm:$0xff]
    %v142 = vld [vmem:[%s2 + $0x370] sm:$0xff]
    %v143 = vld [vmem:[%s2 + $0x378] sm:$0xff]
    %v144 = vld [vmem:[%s2 + $0x380] sm:$0xff]
    %v145 = vld [vmem:[%s2 + $0x388] sm:$0xff]
    %v146 = vld [vmem:[%s2 + $0x390] sm:$0xff]
    %v147 = vld [vmem:[%s2 + $0x398] sm:$0xff]
    %v148 = vld [vmem:[%s2 + $0x3a0] sm:$0xff]
    %v149 = vld [vmem:[%s2 + $0x3a8] sm:$0xff]
    %v150 = vld [vmem:[%s2 + $0x3b0] sm:$0xff]
    %v151 = vld [vmem:[%s2 + $0x3b8] sm:$0xff]
    %v152 = vld [vmem:[%s2 + $0x3c0] sm:$0xff]
    %v153 = vld [vmem:[%s2 + $0x3c8] sm:$0xff]
    %v154 = vld [vmem:[%s2 + $0x3d0] sm:$0xff]
    %v155 = vld [vmem:[%s2 + $0x3d8] sm:$0xff]
    %v156 = vld [vmem:[%s2 + $0x3e0] sm:$0xff]
    %v157 = vld [vmem:[%s2 + $0x3e8] sm:$0xff]
    %v158 = vld [vmem:[%s2 + $0x3f0] sm:$0xff]
    %v159 = vld [vmem:[%s2 + $0x3f8] sm:$0xff]
    %v160 = vld [vmem:[%s2 + $0x400] sm:$0xff]
    %v161 = vld [vmem:[%s2 + $0x408] sm:$0xff]
    %v162 = vld [vmem:[%s2 + $0x410] sm:$0xff]
    %v163 = vld [vmem:[%s2 + $0x418] sm:$0xff]
    %v164 = vld [vmem:[%s2 + $0x420] sm:$0xff]
    %v165 = vld [vmem:[%s2 + $0x428] sm:$0xff]
    %v166 = vld [vmem:[%s2 + $0x430] sm:$0xff]
    %v167 = vld [vmem:[%s2 + $0x438] sm:$0xff]
    %v168 = vld [vmem:[%s2 + $0x440] sm:$0xff]
    %v169 = vld [vmem:[%s2 + $0x448] sm:$0xff]
    %v170 = vld [vmem:[%s2 + $0x450] sm:$0xff]
    %v171 = vld [vmem:[%s2 + $0x458] sm:$0xff]
    %v172 = vld [vmem:[%s2 + $0x460] sm:$0xff]
    %v173 = vld [vmem:[%s2 + $0x468] sm:$0xff]
    %v174 = vld [vmem:[%s2 + $0x470] sm:$0xff]
    %v175 = vld [vmem:[%s2 + $0x478] sm:$0xff]
    %v176 = vld [vmem:[%s2 + $0x480] sm:$0xff]
    %v177 = vld [vmem:[%s2 + $0x488] sm:$0xff]
    %v178 = vld [vmem:[%s2 + $0x490] sm:$0xff]
    %v179 = vld [vmem:[%s2 + $0x498] sm:$0xff]
    %v180 = vld [vmem:[%s2 + $0x4a0] sm:$0xff]
    %v181 = vld [vmem:[%s2 + $0x4a8] sm:$0xff]
    %v182 = vld [vmem:[%s2 + $0x4b0] sm:$0xff]
    %v183 = vld [vmem:[%s2 + $0x4b8] sm:$0xff]
    %v184 = vld [vmem:[%s2 + $0x4c0] sm:$0xff]
    %v185 = vld [vmem:[%s2 + $0x4c8] sm:$0xff]
    %v186 = vld [vmem:[%s2 + $0x4d0] sm:$0xff]
    %v187 = vld [vmem:[%s2 + $0x4d8] sm:$0xff]
    %v188 = vld [vmem:[%s2 + $0x4e0] sm:$0xff]
    %v189 = vld [vmem:[%s2 + $0x4e8] sm:$0xff]
    %v190 = vld [vmem:[%s2 + $0x4f0] sm:$0xff]
    %v191 = vld [vmem:[%s2 + $0x4f8] sm:$0xff]
    %v192 = vld [vmem:[%s2 + $0x500] sm:$0xff]
    %v193 = vld [vmem:[%s2 + $0x508] sm:$0xff]
    %v194 = vld [vmem:[%s2 + $0x510] sm:$0xff]
    %v195 = vld [vmem:[%s2 + $0x518] sm:$0xff]
    %v196 = vld [vmem:[%s2 + $0x520] sm:$0xff]
    %v197 = vld [vmem:[%s2 + $0x528] sm:$0xff]
    %v198 = vld [vmem:[%s2 + $0x530] sm:$0xff]
    %v199 = vld [vmem:[%s2 + $0x538] sm:$0xff]
    %v200 = vld [vmem:[%s2 + $0x540] sm:$0xff]
    %v201 = vld [vmem:[%s2 + $0x548] sm:$0xff]
    %v202 = vld [vmem:[%s2 + $0x550] sm:$0xff]
    %v203 = vld [vmem:[%s2 + $0x558] sm:$0xff]
    %v204 = vld [vmem:[%s2 + $0x560] sm:$0xff]
    %v205 = vld [vmem:[%s2 + $0x568] sm:$0xff]
    %v206 = vld [vmem:[%s2 + $0x570] sm:$0xff]
    %v207 = vld [vmem:[%s2 + $0x578] sm:$0xff]
    %v208 = vld [vmem:[%s2 + $0x580] sm:$0xff]
    %v209 = vld [vmem:[%s2 + $0x588] sm:$0xff]
    %v210 = vld [vmem:[%s2 + $0x590] sm:$0xff]
    %v211 = vld [vmem:[%s2 + $0x598] sm:$0xff]
    %v212 = vld [vmem:[%s2 + $0x5a0] sm:$0xff]
    %v213 = vld [vmem:[%s2 + $0x5a8] sm:$0xff]
    %v214 = vld [vmem:[%s2 + $0x5b0] sm:$0xff]
    %v215 = vld [vmem:[%s2 + $0x5b8] sm:$0xff]
    %v216 = vld [vmem:[%s2 + $0x5c0] sm:$0xff]
    %v217 = vld [vmem:[%s2 + $0x5c8] sm:$0xff]
    %v218 = vld [vmem:[%s2 + $0x5d0] sm:$0xff]
    %v219 = vld [vmem:[%s2 + $0x5d8] sm:$0xff]
    %v220 = vld [vmem:[%s2 + $0x5e0] sm:$0xff]
    %v221 = vld [vmem:[%s2 + $0x5e8] sm:$0xff]
    %v222 = vld [vmem:[%s2 + $0x5f0] sm:$0xff]
    %v223 = vld [vmem:[%s2 + $0x5f8] sm:$0xff]
    %v224 = vld [vmem:[%s2 + $0x600] sm:$0xff]
    %v225 = vld [vmem:[%s2 + $0x608] sm:$0xff]
    %v226 = vld [vmem:[%s2 + $0x610] sm:$0xff]
    %v227 = vld [vmem:[%s2 + $0x618] sm:$0xff]
    %v228 = vld [vmem:[%s2 + $0x620] sm:$0xff]
    %v229 = vld [vmem:[%s2 + $0x628] sm:$0xff]
    %v230 = vld [vmem:[%s2 + $0x630] sm:$0xff]
    %v231 = vld [vmem:[%s2 + $0x638] sm:$0xff]
    %v232 = vld [vmem:[%s2 + $0x640] sm:$0xff]
    %v233 = vld [vmem:[%s2 + $0x648] sm:$0xff]
    %v234 = vld [vmem:[%s2 + $0x650] sm:$0xff]
    %v235 = vld [vmem:[%s2 + $0x658] sm:$0xff]
    %v236 = vld [vmem:[%s2 + $0x660] sm:$0xff]
    %v237 = vld [vmem:[%s2 + $0x668] sm:$0xff]
    %v238 = vld [vmem:[%s2 + $0x670] sm:$0xff]
    %v239 = vld [vmem:[%s2 + $0x678] sm:$0xff]
    %v240 = vld [vmem:[%s2 + $0x680] sm:$0xff]
    %v241 = vld [vmem:[%s2 + $0x688] sm:$0xff]
    %v242 = vld [vmem:[%s2 + $0x690] sm:$0xff]
    %v243 = vld [vmem:[%s2 + $0x698] sm:$0xff]
    %v244 = vld [vmem:[%s2 + $0x6a0] sm:$0xff]
    %v245 = vld [vmem:[%s2 + $0x6a8] sm:$0xff]
    %v246 = vld [vmem:[%s2 + $0x6b0] sm:$0xff]
    %v247 = vld [vmem:[%s2 + $0x6b8] sm:$0xff]
    %v248 = vld [vmem:[%s2 + $0x6c0] sm:$0xff]
    %v249 = vld [vmem:[%s2 + $0x6c8] sm:$0xff]
    %v250 = vld [vmem:[%s2 + $0x6d0] sm:$0xff]
    %v251 = vld [vmem:[%s2 + $0x6d8] sm:$0xff]
    %v252 = vld [vmem:[%s2 + $0x6e0] sm:$0xff]
    %v253 = vld [vmem:[%s2 + $0x6e8] sm:$0xff]
    %v254 = vld [vmem:[%s2 + $0x6f0] sm:$0xff]
    %v255 = vld [vmem:[%s2 + $0x6f8] sm:$0xff]
    %v256 = vld [vmem:[%s2 + $0x700] sm:$0xff]
    %v257 = vld [vmem:[%s2 + $0x708] sm:$0xff]
    %v258 = vld [vmem:[%s2 + $0x710] sm:$0xff]
    %v259 = vld [vmem:[%s2 + $0x718] sm:$0xff]
    %v260 = vld [vmem:[%s2 + $0x720] sm:$0xff]
    %v261 = vld [vmem:[%s2 + $0x728] sm:$0xff]
    %v262 = vld [vmem:[%s2 + $0x730] sm:$0xff]
    %v263 = vld [vmem:[%s2 + $0x738] sm:$0xff]
    %v264 = vld [vmem:[%s2 + $0x740] sm:$0xff]
    %v265 = vld [vmem:[%s2 + $0x748] sm:$0xff]
    %v266 = vld [vmem:[%s2 + $0x750] sm:$0xff]
    %v267 = vld [vmem:[%s2 + $0x758] sm:$0xff]
    %v268 = vld [vmem:[%s2 + $0x760] sm:$0xff]
    %v269 = vld [vmem:[%s2 + $0x768] sm:$0xff]
    %v270 = vld [vmem:[%s2 + $0x770] sm:$0xff]
    %v271 = vld [vmem:[%s2 + $0x778] sm:$0xff]
    %v272 = vld [vmem:[%s2 + $0x780] sm:$0xff]
    %v273 = vld [vmem:[%s2 + $0x788] sm:$0xff]
    %v274 = vld [vmem:[%s2 + $0x790] sm:$0xff]
    %v275 = vld [vmem:[%s2 + $0x798] sm:$0xff]
    %v276 = vld [vmem:[%s2 + $0x7a0] sm:$0xff]
    %v277 = vld [vmem:[%s2 + $0x7a8] sm:$0xff]
    %v278 = vld [vmem:[%s2 + $0x7b0] sm:$0xff]
    %v279 = vld [vmem:[%s2 + $0x7b8] sm:$0xff]
    %v280 = vld [vmem:[%s2 + $0x7c0] sm:$0xff]
    %v281 = vld [vmem:[%s2 + $0x7c8] sm:$0xff]
    %v282 = vld [vmem:[%s2 + $0x7d0] sm:$0xff]
    %v283 = vld [vmem:[%s2 + $0x7d8] sm:$0xff]
    %v284 = vld [vmem:[%s2 + $0x7e0] sm:$0xff]
    %v285 = vld [vmem:[%s2 + $0x7e8] sm:$0xff]
    %v286 = vld [vmem:[%s2 + $0x7f0] sm:$0xff]
    %v287 = vld [vmem:[%s2 + $0x7f8] sm:$0xff]
    %v288 = vld [vmem:[%s3] sm:$0x3]
    %v290 = vperm.slane %v288, 0
    %v291 = vperm.slane %v288, 1
    %295 = vst [vmem:[#allocation1] ss:$9 sm:$0xff] %v30
    %v296 = vld [vmem:[#allocation1] sm:$0xff]
    %v297 = vld [vmem:[#allocation1 + $0x9] sm:$0xff]
    %v298 = vld [vmem:[#allocation1 + $0x12] sm:$0xff]
    %v299 = vld [vmem:[#allocation1 + $0x1b] sm:$0xff]
    %v300 = vld [vmem:[#allocation1 + $0x24] sm:$0xff]
    %v301 = vld [vmem:[#allocation1 + $0x2d] sm:$0xff]
    %v302 = vld [vmem:[#allocation1 + $0x36] sm:$0xff]
    %v303 = vld [vmem:[#allocation1 + $0x3f] sm:$0xff]
    %305 = vst [vmem:[#allocation1] ss:$9 sm:$0xff] %v31
    %v306 = vld [vmem:[#allocation1] sm:$0xff]
    %v307 = vld [vmem:[#allocation1 + $0x9] sm:$0xff]
    %v308 = vld [vmem:[#allocation1 + $0x12] sm:$0xff]
    %v309 = vld [vmem:[#allocation1 + $0x1b] sm:$0xff]
    %v310 = vld [vmem:[#allocation1 + $0x24] sm:$0xff]
    %v311 = vld [vmem:[#allocation1 + $0x2d] sm:$0xff]
    %v312 = vld [vmem:[#allocation1 + $0x36] sm:$0xff]
    %v313 = vld [vmem:[#allocation1 + $0x3f] sm:$0xff]
    %v586 = vunpack.c.l.b16 %v32
    %v587 = vunpack.c.h.b16 %v32
    %v588 = vunpack.c.l.b16 %v33
    %v589 = vunpack.c.h.b16 %v33
    %v590 = vunpack.c.l.b16 %v34
    %v591 = vunpack.c.h.b16 %v34
    %v592 = vunpack.c.l.b16 %v35
    %v593 = vunpack.c.h.b16 %v35
    %v594 = vunpack.c.l.b16 %v36
    %v595 = vunpack.c.h.b16 %v36
    %v596 = vunpack.c.l.b16 %v37
    %v597 = vunpack.c.h.b16 %v37
    %v598 = vunpack.c.l.b16 %v38
    %v599 = vunpack.c.h.b16 %v38
    %v600 = vunpack.c.l.b16 %v39
    %v601 = vunpack.c.h.b16 %v39
    %v602 = vunpack.c.l.b16 %v40
    %v603 = vunpack.c.h.b16 %v40
    %v604 = vunpack.c.l.b16 %v41
    %v605 = vunpack.c.h.b16 %v41
    %v606 = vunpack.c.l.b16 %v42
    %v607 = vunpack.c.h.b16 %v42
    %v608 = vunpack.c.l.b16 %v43
    %v609 = vunpack.c.h.b16 %v43
    %v610 = vunpack.c.l.b16 %v44
    %v611 = vunpack.c.h.b16 %v44
    %v612 = vunpack.c.l.b16 %v45
    %v613 = vunpack.c.h.b16 %v45
    %v614 = vunpack.c.l.b16 %v46
    %v615 = vunpack.c.h.b16 %v46
    %v616 = vunpack.c.l.b16 %v47
    %v617 = vunpack.c.h.b16 %v47
    %v618 = vunpack.c.l.b16 %v48
    %v619 = vunpack.c.h.b16 %v48
    %v620 = vunpack.c.l.b16 %v49
    %v621 = vunpack.c.h.b16 %v49
    %v622 = vunpack.c.l.b16 %v50
    %v623 = vunpack.c.h.b16 %v50
    %v624 = vunpack.c.l.b16 %v51
    %v625 = vunpack.c.h.b16 %v51
    %v626 = vunpack.c.l.b16 %v52
    %v627 = vunpack.c.h.b16 %v52
    %v628 = vunpack.c.l.b16 %v53
    %v629 = vunpack.c.h.b16 %v53
    %v630 = vunpack.c.l.b16 %v54
    %v631 = vunpack.c.h.b16 %v54
    %v632 = vunpack.c.l.b16 %v55
    %v633 = vunpack.c.h.b16 %v55
    %v634 = vunpack.c.l.b16 %v56
    %v635 = vunpack.c.h.b16 %v56
    %v636 = vunpack.c.l.b16 %v57
    %v637 = vunpack.c.h.b16 %v57
    %v638 = vunpack.c.l.b16 %v58
    %v639 = vunpack.c.h.b16 %v58
    %v640 = vunpack.c.l.b16 %v59
    %v641 = vunpack.c.h.b16 %v59
    %v642 = vunpack.c.l.b16 %v60
    %v643 = vunpack.c.h.b16 %v60
    %v644 = vunpack.c.l.b16 %v61
    %v645 = vunpack.c.h.b16 %v61
    %v646 = vunpack.c.l.b16 %v62
    %v647 = vunpack.c.h.b16 %v62
    %v648 = vunpack.c.l.b16 %v63
    %v649 = vunpack.c.h.b16 %v63
    %v650 = vunpack.c.l.b16 %v64
    %v651 = vunpack.c.h.b16 %v64
    %v652 = vunpack.c.l.b16 %v65
    %v653 = vunpack.c.h.b16 %v65
    %v654 = vunpack.c.l.b16 %v66
    %v655 = vunpack.c.h.b16 %v66
    %v656 = vunpack.c.l.b16 %v67
    %v657 = vunpack.c.h.b16 %v67
    %v658 = vunpack.c.l.b16 %v68
    %v659 = vunpack.c.h.b16 %v68
    %v660 = vunpack.c.l.b16 %v69
    %v661 = vunpack.c.h.b16 %v69
    %v662 = vunpack.c.l.b16 %v70
    %v663 = vunpack.c.h.b16 %v70
    %v664 = vunpack.c.l.b16 %v71
    %v665 = vunpack.c.h.b16 %v71
    %v666 = vunpack.c.l.b16 %v72
    %v667 = vunpack.c.h.b16 %v72
    %v668 = vunpack.c.l.b16 %v73
    %v669 = vunpack.c.h.b16 %v73
    %v670 = vunpack.c.l.b16 %v74
    %v671 = vunpack.c.h.b16 %v74
    %v672 = vunpack.c.l.b16 %v75
    %v673 = vunpack.c.h.b16 %v75
    %v674 = vunpack.c.l.b16 %v76
    %v675 = vunpack.c.h.b16 %v76
    %v676 = vunpack.c.l.b16 %v77
    %v677 = vunpack.c.h.b16 %v77
    %v678 = vunpack.c.l.b16 %v78
    %v679 = vunpack.c.h.b16 %v78
    %v680 = vunpack.c.l.b16 %v79
    %v681 = vunpack.c.h.b16 %v79
    %v682 = vunpack.c.l.b16 %v80
    %v683 = vunpack.c.h.b16 %v80
    %v684 = vunpack.c.l.b16 %v81
    %v685 = vunpack.c.h.b16 %v81
    %v686 = vunpack.c.l.b16 %v82
    %v687 = vunpack.c.h.b16 %v82
    %v688 = vunpack.c.l.b16 %v83
    %v689 = vunpack.c.h.b16 %v83
    %v690 = vunpack.c.l.b16 %v84
    %v691 = vunpack.c.h.b16 %v84
    %v692 = vunpack.c.l.b16 %v85
    %v693 = vunpack.c.h.b16 %v85
    %v694 = vunpack.c.l.b16 %v86
    %v695 = vunpack.c.h.b16 %v86
    %v696 = vunpack.c.l.b16 %v87
    %v697 = vunpack.c.h.b16 %v87
    %v698 = vunpack.c.l.b16 %v88
    %v699 = vunpack.c.h.b16 %v88
    %v700 = vunpack.c.l.b16 %v89
    %v701 = vunpack.c.h.b16 %v89
    %v702 = vunpack.c.l.b16 %v90
    %v703 = vunpack.c.h.b16 %v90
    %v704 = vunpack.c.l.b16 %v91
    %v705 = vunpack.c.h.b16 %v91
    %v706 = vunpack.c.l.b16 %v92
    %v707 = vunpack.c.h.b16 %v92
    %v708 = vunpack.c.l.b16 %v93
    %v709 = vunpack.c.h.b16 %v93
    %v710 = vunpack.c.l.b16 %v94
    %v711 = vunpack.c.h.b16 %v94
    %v712 = vunpack.c.l.b16 %v95
    %v713 = vunpack.c.h.b16 %v95
    %v714 = vunpack.c.l.b16 %v96
    %v715 = vunpack.c.h.b16 %v96
    %v716 = vunpack.c.l.b16 %v97
    %v717 = vunpack.c.h.b16 %v97
    %v718 = vunpack.c.l.b16 %v98
    %v719 = vunpack.c.h.b16 %v98
    %v720 = vunpack.c.l.b16 %v99
    %v721 = vunpack.c.h.b16 %v99
    %v722 = vunpack.c.l.b16 %v100
    %v723 = vunpack.c.h.b16 %v100
    %v724 = vunpack.c.l.b16 %v101
    %v725 = vunpack.c.h.b16 %v101
    %v726 = vunpack.c.l.b16 %v102
    %v727 = vunpack.c.h.b16 %v102
    %v728 = vunpack.c.l.b16 %v103
    %v729 = vunpack.c.h.b16 %v103
    %v730 = vunpack.c.l.b16 %v104
    %v731 = vunpack.c.h.b16 %v104
    %v732 = vunpack.c.l.b16 %v105
    %v733 = vunpack.c.h.b16 %v105
    %v734 = vunpack.c.l.b16 %v106
    %v735 = vunpack.c.h.b16 %v106
    %v736 = vunpack.c.l.b16 %v107
    %v737 = vunpack.c.h.b16 %v107
    %v738 = vunpack.c.l.b16 %v108
    %v739 = vunpack.c.h.b16 %v108
    %v740 = vunpack.c.l.b16 %v109
    %v741 = vunpack.c.h.b16 %v109
    %v742 = vunpack.c.l.b16 %v110
    %v743 = vunpack.c.h.b16 %v110
    %v744 = vunpack.c.l.b16 %v111
    %v745 = vunpack.c.h.b16 %v111
    %v746 = vunpack.c.l.b16 %v112
    %v747 = vunpack.c.h.b16 %v112
    %v748 = vunpack.c.l.b16 %v113
    %v749 = vunpack.c.h.b16 %v113
    %v750 = vunpack.c.l.b16 %v114
    %v751 = vunpack.c.h.b16 %v114
    %v752 = vunpack.c.l.b16 %v115
    %v753 = vunpack.c.h.b16 %v115
    %v754 = vunpack.c.l.b16 %v116
    %v755 = vunpack.c.h.b16 %v116
    %v756 = vunpack.c.l.b16 %v117
    %v757 = vunpack.c.h.b16 %v117
    %v758 = vunpack.c.l.b16 %v118
    %v759 = vunpack.c.h.b16 %v118
    %v760 = vunpack.c.l.b16 %v119
    %v761 = vunpack.c.h.b16 %v119
    %v762 = vunpack.c.l.b16 %v120
    %v763 = vunpack.c.h.b16 %v120
    %v764 = vunpack.c.l.b16 %v121
    %v765 = vunpack.c.h.b16 %v121
    %v766 = vunpack.c.l.b16 %v122
    %v767 = vunpack.c.h.b16 %v122
    %v768 = vunpack.c.l.b16 %v123
    %v769 = vunpack.c.h.b16 %v123
    %v770 = vunpack.c.l.b16 %v124
    %v771 = vunpack.c.h.b16 %v124
    %v772 = vunpack.c.l.b16 %v125
    %v773 = vunpack.c.h.b16 %v125
    %v774 = vunpack.c.l.b16 %v126
    %v775 = vunpack.c.h.b16 %v126
    %v776 = vunpack.c.l.b16 %v127
    %v777 = vunpack.c.h.b16 %v127
    %v778 = vunpack.c.l.b16 %v128
    %v779 = vunpack.c.h.b16 %v128
    %v780 = vunpack.c.l.b16 %v129
    %v781 = vunpack.c.h.b16 %v129
    %v782 = vunpack.c.l.b16 %v130
    %v783 = vunpack.c.h.b16 %v130
    %v784 = vunpack.c.l.b16 %v131
    %v785 = vunpack.c.h.b16 %v131
    %v786 = vunpack.c.l.b16 %v132
    %v787 = vunpack.c.h.b16 %v132
    %v788 = vunpack.c.l.b16 %v133
    %v789 = vunpack.c.h.b16 %v133
    %v790 = vunpack.c.l.b16 %v134
    %v791 = vunpack.c.h.b16 %v134
    %v792 = vunpack.c.l.b16 %v135
    %v793 = vunpack.c.h.b16 %v135
    %v794 = vunpack.c.l.b16 %v136
    %v795 = vunpack.c.h.b16 %v136
    %v796 = vunpack.c.l.b16 %v137
    %v797 = vunpack.c.h.b16 %v137
    %v798 = vunpack.c.l.b16 %v138
    %v799 = vunpack.c.h.b16 %v138
    %v800 = vunpack.c.l.b16 %v139
    %v801 = vunpack.c.h.b16 %v139
    %v802 = vunpack.c.l.b16 %v140
    %v803 = vunpack.c.h.b16 %v140
    %v804 = vunpack.c.l.b16 %v141
    %v805 = vunpack.c.h.b16 %v141
    %v806 = vunpack.c.l.b16 %v142
    %v807 = vunpack.c.h.b16 %v142
    %v808 = vunpack.c.l.b16 %v143
    %v809 = vunpack.c.h.b16 %v143
    %v810 = vunpack.c.l.b16 %v144
    %v811 = vunpack.c.h.b16 %v144
    %v812 = vunpack.c.l.b16 %v145
    %v813 = vunpack.c.h.b16 %v145
    %v814 = vunpack.c.l.b16 %v146
    %v815 = vunpack.c.h.b16 %v146
    %v816 = vunpack.c.l.b16 %v147
    %v817 = vunpack.c.h.b16 %v147
    %v818 = vunpack.c.l.b16 %v148
    %v819 = vunpack.c.h.b16 %v148
    %v820 = vunpack.c.l.b16 %v149
    %v821 = vunpack.c.h.b16 %v149
    %v822 = vunpack.c.l.b16 %v150
    %v823 = vunpack.c.h.b16 %v150
    %v824 = vunpack.c.l.b16 %v151
    %v825 = vunpack.c.h.b16 %v151
    %v826 = vunpack.c.l.b16 %v152
    %v827 = vunpack.c.h.b16 %v152
    %v828 = vunpack.c.l.b16 %v153
    %v829 = vunpack.c.h.b16 %v153
    %v830 = vunpack.c.l.b16 %v154
    %v831 = vunpack.c.h.b16 %v154
    %v832 = vunpack.c.l.b16 %v155
    %v833 = vunpack.c.h.b16 %v155
    %v834 = vunpack.c.l.b16 %v156
    %v835 = vunpack.c.h.b16 %v156
    %v836 = vunpack.c.l.b16 %v157
    %v837 = vunpack.c.h.b16 %v157
    %v838 = vunpack.c.l.b16 %v158
    %v839 = vunpack.c.h.b16 %v158
    %v840 = vunpack.c.l.b16 %v159
    %v841 = vunpack.c.h.b16 %v159
    %v842 = vunpack.c.l.b16 %v160
    %v843 = vunpack.c.h.b16 %v160
    %v844 = vunpack.c.l.b16 %v161
    %v845 = vunpack.c.h.b16 %v161
    %v846 = vunpack.c.l.b16 %v162
    %v847 = vunpack.c.h.b16 %v162
    %v848 = vunpack.c.l.b16 %v163
    %v849 = vunpack.c.h.b16 %v163
    %v850 = vunpack.c.l.b16 %v164
    %v851 = vunpack.c.h.b16 %v164
    %v852 = vunpack.c.l.b16 %v165
    %v853 = vunpack.c.h.b16 %v165
    %v854 = vunpack.c.l.b16 %v166
    %v855 = vunpack.c.h.b16 %v166
    %v856 = vunpack.c.l.b16 %v167
    %v857 = vunpack.c.h.b16 %v167
    %v858 = vunpack.c.l.b16 %v168
    %v859 = vunpack.c.h.b16 %v168
    %v860 = vunpack.c.l.b16 %v169
    %v861 = vunpack.c.h.b16 %v169
    %v862 = vunpack.c.l.b16 %v170
    %v863 = vunpack.c.h.b16 %v170
    %v864 = vunpack.c.l.b16 %v171
    %v865 = vunpack.c.h.b16 %v171
    %v866 = vunpack.c.l.b16 %v172
    %v867 = vunpack.c.h.b16 %v172
    %v868 = vunpack.c.l.b16 %v173
    %v869 = vunpack.c.h.b16 %v173
    %v870 = vunpack.c.l.b16 %v174
    %v871 = vunpack.c.h.b16 %v174
    %v872 = vunpack.c.l.b16 %v175
    %v873 = vunpack.c.h.b16 %v175
    %v874 = vunpack.c.l.b16 %v176
    %v875 = vunpack.c.h.b16 %v176
    %v876 = vunpack.c.l.b16 %v177
    %v877 = vunpack.c.h.b16 %v177
    %v878 = vunpack.c.l.b16 %v178
    %v879 = vunpack.c.h.b16 %v178
    %v880 = vunpack.c.l.b16 %v179
    %v881 = vunpack.c.h.b16 %v179
    %v882 = vunpack.c.l.b16 %v180
    %v883 = vunpack.c.h.b16 %v180
    %v884 = vunpack.c.l.b16 %v181
    %v885 = vunpack.c.h.b16 %v181
    %v886 = vunpack.c.l.b16 %v182
    %v887 = vunpack.c.h.b16 %v182
    %v888 = vunpack.c.l.b16 %v183
    %v889 = vunpack.c.h.b16 %v183
    %v890 = vunpack.c.l.b16 %v184
    %v891 = vunpack.c.h.b16 %v184
    %v892 = vunpack.c.l.b16 %v185
    %v893 = vunpack.c.h.b16 %v185
    %v894 = vunpack.c.l.b16 %v186
    %v895 = vunpack.c.h.b16 %v186
    %v896 = vunpack.c.l.b16 %v187
    %v897 = vunpack.c.h.b16 %v187
    %v898 = vunpack.c.l.b16 %v188
    %v899 = vunpack.c.h.b16 %v188
    %v900 = vunpack.c.l.b16 %v189
    %v901 = vunpack.c.h.b16 %v189
    %v902 = vunpack.c.l.b16 %v190
    %v903 = vunpack.c.h.b16 %v190
    %v904 = vunpack.c.l.b16 %v191
    %v905 = vunpack.c.h.b16 %v191
    %v906 = vunpack.c.l.b16 %v192
    %v907 = vunpack.c.h.b16 %v192
    %v908 = vunpack.c.l.b16 %v193
    %v909 = vunpack.c.h.b16 %v193
    %v910 = vunpack.c.l.b16 %v194
    %v911 = vunpack.c.h.b16 %v194
    %v912 = vunpack.c.l.b16 %v195
    %v913 = vunpack.c.h.b16 %v195
    %v914 = vunpack.c.l.b16 %v196
    %v915 = vunpack.c.h.b16 %v196
    %v916 = vunpack.c.l.b16 %v197
    %v917 = vunpack.c.h.b16 %v197
    %v918 = vunpack.c.l.b16 %v198
    %v919 = vunpack.c.h.b16 %v198
    %v920 = vunpack.c.l.b16 %v199
    %v921 = vunpack.c.h.b16 %v199
    %v922 = vunpack.c.l.b16 %v200
    %v923 = vunpack.c.h.b16 %v200
    %v924 = vunpack.c.l.b16 %v201
    %v925 = vunpack.c.h.b16 %v201
    %v926 = vunpack.c.l.b16 %v202
    %v927 = vunpack.c.h.b16 %v202
    %v928 = vunpack.c.l.b16 %v203
    %v929 = vunpack.c.h.b16 %v203
    %v930 = vunpack.c.l.b16 %v204
    %v931 = vunpack.c.h.b16 %v204
    %v932 = vunpack.c.l.b16 %v205
    %v933 = vunpack.c.h.b16 %v205
    %v934 = vunpack.c.l.b16 %v206
    %v935 = vunpack.c.h.b16 %v206
    %v936 = vunpack.c.l.b16 %v207
    %v937 = vunpack.c.h.b16 %v207
    %v938 = vunpack.c.l.b16 %v208
    %v939 = vunpack.c.h.b16 %v208
    %v940 = vunpack.c.l.b16 %v209
    %v941 = vunpack.c.h.b16 %v209
    %v942 = vunpack.c.l.b16 %v210
    %v943 = vunpack.c.h.b16 %v210
    %v944 = vunpack.c.l.b16 %v211
    %v945 = vunpack.c.h.b16 %v211
    %v946 = vunpack.c.l.b16 %v212
    %v947 = vunpack.c.h.b16 %v212
    %v948 = vunpack.c.l.b16 %v213
    %v949 = vunpack.c.h.b16 %v213
    %v950 = vunpack.c.l.b16 %v214
    %v951 = vunpack.c.h.b16 %v214
    %v952 = vunpack.c.l.b16 %v215
    %v953 = vunpack.c.h.b16 %v215
    %v954 = vunpack.c.l.b16 %v216
    %v955 = vunpack.c.h.b16 %v216
    %v956 = vunpack.c.l.b16 %v217
    %v957 = vunpack.c.h.b16 %v217
    %v958 = vunpack.c.l.b16 %v218
    %v959 = vunpack.c.h.b16 %v218
    %v960 = vunpack.c.l.b16 %v219
    %v961 = vunpack.c.h.b16 %v219
    %v962 = vunpack.c.l.b16 %v220
    %v963 = vunpack.c.h.b16 %v220
    %v964 = vunpack.c.l.b16 %v221
    %v965 = vunpack.c.h.b16 %v221
    %v966 = vunpack.c.l.b16 %v222
    %v967 = vunpack.c.h.b16 %v222
    %v968 = vunpack.c.l.b16 %v223
    %v969 = vunpack.c.h.b16 %v223
    %v970 = vunpack.c.l.b16 %v224
    %v971 = vunpack.c.h.b16 %v224
    %v972 = vunpack.c.l.b16 %v225
    %v973 = vunpack.c.h.b16 %v225
    %v974 = vunpack.c.l.b16 %v226
    %v975 = vunpack.c.h.b16 %v226
    %v976 = vunpack.c.l.b16 %v227
    %v977 = vunpack.c.h.b16 %v227
    %v978 = vunpack.c.l.b16 %v228
    %v979 = vunpack.c.h.b16 %v228
    %v980 = vunpack.c.l.b16 %v229
    %v981 = vunpack.c.h.b16 %v229
    %v982 = vunpack.c.l.b16 %v230
    %v983 = vunpack.c.h.b16 %v230
    %v984 = vunpack.c.l.b16 %v231
    %v985 = vunpack.c.h.b16 %v231
    %v986 = vunpack.c.l.b16 %v232
    %v987 = vunpack.c.h.b16 %v232
    %v988 = vunpack.c.l.b16 %v233
    %v989 = vunpack.c.h.b16 %v233
    %v990 = vunpack.c.l.b16 %v234
    %v991 = vunpack.c.h.b16 %v234
    %v992 = vunpack.c.l.b16 %v235
    %v993 = vunpack.c.h.b16 %v235
    %v994 = vunpack.c.l.b16 %v236
    %v995 = vunpack.c.h.b16 %v236
    %v996 = vunpack.c.l.b16 %v237
    %v997 = vunpack.c.h.b16 %v237
    %v998 = vunpack.c.l.b16 %v238
    %v999 = vunpack.c.h.b16 %v238
    %v1000 = vunpack.c.l.b16 %v239
    %v1001 = vunpack.c.h.b16 %v239
    %v1002 = vunpack.c.l.b16 %v240
    %v1003 = vunpack.c.h.b16 %v240
    %v1004 = vunpack.c.l.b16 %v241
    %v1005 = vunpack.c.h.b16 %v241
    %v1006 = vunpack.c.l.b16 %v242
    %v1007 = vunpack.c.h.b16 %v242
    %v1008 = vunpack.c.l.b16 %v243
    %v1009 = vunpack.c.h.b16 %v243
    %v1010 = vunpack.c.l.b16 %v244
    %v1011 = vunpack.c.h.b16 %v244
    %v1012 = vunpack.c.l.b16 %v245
    %v1013 = vunpack.c.h.b16 %v245
    %v1014 = vunpack.c.l.b16 %v246
    %v1015 = vunpack.c.h.b16 %v246
    %v1016 = vunpack.c.l.b16 %v247
    %v1017 = vunpack.c.h.b16 %v247
    %v1018 = vunpack.c.l.b16 %v248
    %v1019 = vunpack.c.h.b16 %v248
    %v1020 = vunpack.c.l.b16 %v249
    %v1021 = vunpack.c.h.b16 %v249
    %v1022 = vunpack.c.l.b16 %v250
    %v1023 = vunpack.c.h.b16 %v250
    %v1024 = vunpack.c.l.b16 %v251
    %v1025 = vunpack.c.h.b16 %v251
    %v1026 = vunpack.c.l.b16 %v252
    %v1027 = vunpack.c.h.b16 %v252
    %v1028 = vunpack.c.l.b16 %v253
    %v1029 = vunpack.c.h.b16 %v253
    %v1030 = vunpack.c.l.b16 %v254
    %v1031 = vunpack.c.h.b16 %v254
    %v1032 = vunpack.c.l.b16 %v255
    %v1033 = vunpack.c.h.b16 %v255
    %v1034 = vunpack.c.l.b16 %v256
    %v1035 = vunpack.c.h.b16 %v256
    %v1036 = vunpack.c.l.b16 %v257
    %v1037 = vunpack.c.h.b16 %v257
    %v1038 = vunpack.c.l.b16 %v258
    %v1039 = vunpack.c.h.b16 %v258
    %v1040 = vunpack.c.l.b16 %v259
    %v1041 = vunpack.c.h.b16 %v259
    %v1042 = vunpack.c.l.b16 %v260
    %v1043 = vunpack.c.h.b16 %v260
    %v1044 = vunpack.c.l.b16 %v261
    %v1045 = vunpack.c.h.b16 %v261
    %v1046 = vunpack.c.l.b16 %v262
    %v1047 = vunpack.c.h.b16 %v262
    %v1048 = vunpack.c.l.b16 %v263
    %v1049 = vunpack.c.h.b16 %v263
    %v1050 = vunpack.c.l.b16 %v264
    %v1051 = vunpack.c.h.b16 %v264
    %v1052 = vunpack.c.l.b16 %v265
    %v1053 = vunpack.c.h.b16 %v265
    %v1054 = vunpack.c.l.b16 %v266
    %v1055 = vunpack.c.h.b16 %v266
    %v1056 = vunpack.c.l.b16 %v267
    %v1057 = vunpack.c.h.b16 %v267
    %v1058 = vunpack.c.l.b16 %v268
    %v1059 = vunpack.c.h.b16 %v268
    %v1060 = vunpack.c.l.b16 %v269
    %v1061 = vunpack.c.h.b16 %v269
    %v1062 = vunpack.c.l.b16 %v270
    %v1063 = vunpack.c.h.b16 %v270
    %v1064 = vunpack.c.l.b16 %v271
    %v1065 = vunpack.c.h.b16 %v271
    %v1066 = vunpack.c.l.b16 %v272
    %v1067 = vunpack.c.h.b16 %v272
    %v1068 = vunpack.c.l.b16 %v273
    %v1069 = vunpack.c.h.b16 %v273
    %v1070 = vunpack.c.l.b16 %v274
    %v1071 = vunpack.c.h.b16 %v274
    %v1072 = vunpack.c.l.b16 %v275
    %v1073 = vunpack.c.h.b16 %v275
    %v1074 = vunpack.c.l.b16 %v276
    %v1075 = vunpack.c.h.b16 %v276
    %v1076 = vunpack.c.l.b16 %v277
    %v1077 = vunpack.c.h.b16 %v277
    %v1078 = vunpack.c.l.b16 %v278
    %v1079 = vunpack.c.h.b16 %v278
    %v1080 = vunpack.c.l.b16 %v279
    %v1081 = vunpack.c.h.b16 %v279
    %v1082 = vunpack.c.l.b16 %v280
    %v1083 = vunpack.c.h.b16 %v280
    %v1084 = vunpack.c.l.b16 %v281
    %v1085 = vunpack.c.h.b16 %v281
    %v1086 = vunpack.c.l.b16 %v282
    %v1087 = vunpack.c.h.b16 %v282
    %v1088 = vunpack.c.l.b16 %v283
    %v1089 = vunpack.c.h.b16 %v283
    %v1090 = vunpack.c.l.b16 %v284
    %v1091 = vunpack.c.h.b16 %v284
    %v1092 = vunpack.c.l.b16 %v285
    %v1093 = vunpack.c.h.b16 %v285
    %v1094 = vunpack.c.l.b16 %v286
    %v1095 = vunpack.c.h.b16 %v286
    %v1096 = vunpack.c.l.b16 %v287
    %v1097 = vunpack.c.h.b16 %v287
    %v1098 = vpack.c.b16 %v588, %v586
    %v1099 = vpack.c.b16 %v589, %v587
    %v1100 = vpack.c.b16 %v592, %v590
    %v1101 = vpack.c.b16 %v593, %v591
    %v1102 = vpack.c.b16 %v596, %v594
    %v1103 = vpack.c.b16 %v597, %v595
    %v1104 = vpack.c.b16 %v600, %v598
    %v1105 = vpack.c.b16 %v601, %v599
    %v1106 = vpack.c.b16 %v604, %v602
    %v1107 = vpack.c.b16 %v605, %v603
    %v1108 = vpack.c.b16 %v608, %v606
    %v1109 = vpack.c.b16 %v609, %v607
    %v1110 = vpack.c.b16 %v612, %v610
    %v1111 = vpack.c.b16 %v613, %v611
    %v1112 = vpack.c.b16 %v616, %v614
    %v1113 = vpack.c.b16 %v617, %v615
    %v1114 = vpack.c.b16 %v620, %v618
    %v1115 = vpack.c.b16 %v621, %v619
    %v1116 = vpack.c.b16 %v624, %v622
    %v1117 = vpack.c.b16 %v625, %v623
    %v1118 = vpack.c.b16 %v628, %v626
    %v1119 = vpack.c.b16 %v629, %v627
    %v1120 = vpack.c.b16 %v632, %v630
    %v1121 = vpack.c.b16 %v633, %v631
    %v1122 = vpack.c.b16 %v636, %v634
    %v1123 = vpack.c.b16 %v637, %v635
    %v1124 = vpack.c.b16 %v640, %v638
    %v1125 = vpack.c.b16 %v641, %v639
    %v1126 = vpack.c.b16 %v644, %v642
    %v1127 = vpack.c.b16 %v645, %v643
    %v1128 = vpack.c.b16 %v648, %v646
    %v1129 = vpack.c.b16 %v649, %v647
    %v1130 = vpack.c.b16 %v652, %v650
    %v1131 = vpack.c.b16 %v653, %v651
    %v1132 = vpack.c.b16 %v656, %v654
    %v1133 = vpack.c.b16 %v657, %v655
    %v1134 = vpack.c.b16 %v660, %v658
    %v1135 = vpack.c.b16 %v661, %v659
    %v1136 = vpack.c.b16 %v664, %v662
    %v1137 = vpack.c.b16 %v665, %v663
    %v1138 = vpack.c.b16 %v668, %v666
    %v1139 = vpack.c.b16 %v669, %v667
    %v1140 = vpack.c.b16 %v672, %v670
    %v1141 = vpack.c.b16 %v673, %v671
    %v1142 = vpack.c.b16 %v676, %v674
    %v1143 = vpack.c.b16 %v677, %v675
    %v1144 = vpack.c.b16 %v680, %v678
    %v1145 = vpack.c.b16 %v681, %v679
    %v1146 = vpack.c.b16 %v684, %v682
    %v1147 = vpack.c.b16 %v685, %v683
    %v1148 = vpack.c.b16 %v688, %v686
    %v1149 = vpack.c.b16 %v689, %v687
    %v1150 = vpack.c.b16 %v692, %v690
    %v1151 = vpack.c.b16 %v693, %v691
    %v1152 = vpack.c.b16 %v696, %v694
    %v1153 = vpack.c.b16 %v697, %v695
    %v1154 = vpack.c.b16 %v700, %v698
    %v1155 = vpack.c.b16 %v701, %v699
    %v1156 = vpack.c.b16 %v704, %v702
    %v1157 = vpack.c.b16 %v705, %v703
    %v1158 = vpack.c.b16 %v708, %v706
    %v1159 = vpack.c.b16 %v709, %v707
    %v1160 = vpack.c.b16 %v712, %v710
    %v1161 = vpack.c.b16 %v713, %v711
    %v1162 = vpack.c.b16 %v716, %v714
    %v1163 = vpack.c.b16 %v717, %v715
    %v1164 = vpack.c.b16 %v720, %v718
    %v1165 = vpack.c.b16 %v721, %v719
    %v1166 = vpack.c.b16 %v724, %v722
    %v1167 = vpack.c.b16 %v725, %v723
    %v1168 = vpack.c.b16 %v728, %v726
    %v1169 = vpack.c.b16 %v729, %v727
    %v1170 = vpack.c.b16 %v732, %v730
    %v1171 = vpack.c.b16 %v733, %v731
    %v1172 = vpack.c.b16 %v736, %v734
    %v1173 = vpack.c.b16 %v737, %v735
    %v1174 = vpack.c.b16 %v740, %v738
    %v1175 = vpack.c.b16 %v741, %v739
    %v1176 = vpack.c.b16 %v744, %v742
    %v1177 = vpack.c.b16 %v745, %v743
    %v1178 = vpack.c.b16 %v748, %v746
    %v1179 = vpack.c.b16 %v749, %v747
    %v1180 = vpack.c.b16 %v752, %v750
    %v1181 = vpack.c.b16 %v753, %v751
    %v1182 = vpack.c.b16 %v756, %v754
    %v1183 = vpack.c.b16 %v757, %v755
    %v1184 = vpack.c.b16 %v760, %v758
    %v1185 = vpack.c.b16 %v761, %v759
    %v1186 = vpack.c.b16 %v764, %v762
    %v1187 = vpack.c.b16 %v765, %v763
    %v1188 = vpack.c.b16 %v768, %v766
    %v1189 = vpack.c.b16 %v769, %v767
    %v1190 = vpack.c.b16 %v772, %v770
    %v1191 = vpack.c.b16 %v773, %v771
    %v1192 = vpack.c.b16 %v776, %v774
    %v1193 = vpack.c.b16 %v777, %v775
    %v1194 = vpack.c.b16 %v780, %v778
    %v1195 = vpack.c.b16 %v781, %v779
    %v1196 = vpack.c.b16 %v784, %v782
    %v1197 = vpack.c.b16 %v785, %v783
    %v1198 = vpack.c.b16 %v788, %v786
    %v1199 = vpack.c.b16 %v789, %v787
    %v1200 = vpack.c.b16 %v792, %v790
    %v1201 = vpack.c.b16 %v793, %v791
    %v1202 = vpack.c.b16 %v796, %v794
    %v1203 = vpack.c.b16 %v797, %v795
    %v1204 = vpack.c.b16 %v800, %v798
    %v1205 = vpack.c.b16 %v801, %v799
    %v1206 = vpack.c.b16 %v804, %v802
    %v1207 = vpack.c.b16 %v805, %v803
    %v1208 = vpack.c.b16 %v808, %v806
    %v1209 = vpack.c.b16 %v809, %v807
    %v1210 = vpack.c.b16 %v812, %v810
    %v1211 = vpack.c.b16 %v813, %v811
    %v1212 = vpack.c.b16 %v816, %v814
    %v1213 = vpack.c.b16 %v817, %v815
    %v1214 = vpack.c.b16 %v820, %v818
    %v1215 = vpack.c.b16 %v821, %v819
    %v1216 = vpack.c.b16 %v824, %v822
    %v1217 = vpack.c.b16 %v825, %v823
    %v1218 = vpack.c.b16 %v828, %v826
    %v1219 = vpack.c.b16 %v829, %v827
    %v1220 = vpack.c.b16 %v832, %v830
    %v1221 = vpack.c.b16 %v833, %v831
    %v1222 = vpack.c.b16 %v836, %v834
    %v1223 = vpack.c.b16 %v837, %v835
    %v1224 = vpack.c.b16 %v840, %v838
    %v1225 = vpack.c.b16 %v841, %v839
    %v1226 = vpack.c.b16 %v844, %v842
    %v1227 = vpack.c.b16 %v845, %v843
    %v1228 = vpack.c.b16 %v848, %v846
    %v1229 = vpack.c.b16 %v849, %v847
    %v1230 = vpack.c.b16 %v852, %v850
    %v1231 = vpack.c.b16 %v853, %v851
    %v1232 = vpack.c.b16 %v856, %v854
    %v1233 = vpack.c.b16 %v857, %v855
    %v1234 = vpack.c.b16 %v860, %v858
    %v1235 = vpack.c.b16 %v861, %v859
    %v1236 = vpack.c.b16 %v864, %v862
    %v1237 = vpack.c.b16 %v865, %v863
    %v1238 = vpack.c.b16 %v868, %v866
    %v1239 = vpack.c.b16 %v869, %v867
    %v1240 = vpack.c.b16 %v872, %v870
    %v1241 = vpack.c.b16 %v873, %v871
    %v1242 = vpack.c.b16 %v876, %v874
    %v1243 = vpack.c.b16 %v877, %v875
    %v1244 = vpack.c.b16 %v880, %v878
    %v1245 = vpack.c.b16 %v881, %v879
    %v1246 = vpack.c.b16 %v884, %v882
    %v1247 = vpack.c.b16 %v885, %v883
    %v1248 = vpack.c.b16 %v888, %v886
    %v1249 = vpack.c.b16 %v889, %v887
    %v1250 = vpack.c.b16 %v892, %v890
    %v1251 = vpack.c.b16 %v893, %v891
    %v1252 = vpack.c.b16 %v896, %v894
    %v1253 = vpack.c.b16 %v897, %v895
    %v1254 = vpack.c.b16 %v900, %v898
    %v1255 = vpack.c.b16 %v901, %v899
    %v1256 = vpack.c.b16 %v904, %v902
    %v1257 = vpack.c.b16 %v905, %v903
    %v1258 = vpack.c.b16 %v908, %v906
    %v1259 = vpack.c.b16 %v909, %v907
    %v1260 = vpack.c.b16 %v912, %v910
    %v1261 = vpack.c.b16 %v913, %v911
    %v1262 = vpack.c.b16 %v916, %v914
    %v1263 = vpack.c.b16 %v917, %v915
    %v1264 = vpack.c.b16 %v920, %v918
    %v1265 = vpack.c.b16 %v921, %v919
    %v1266 = vpack.c.b16 %v924, %v922
    %v1267 = vpack.c.b16 %v925, %v923
    %v1268 = vpack.c.b16 %v928, %v926
    %v1269 = vpack.c.b16 %v929, %v927
    %v1270 = vpack.c.b16 %v932, %v930
    %v1271 = vpack.c.b16 %v933, %v931
    %v1272 = vpack.c.b16 %v936, %v934
    %v1273 = vpack.c.b16 %v937, %v935
    %v1274 = vpack.c.b16 %v940, %v938
    %v1275 = vpack.c.b16 %v941, %v939
    %v1276 = vpack.c.b16 %v944, %v942
    %v1277 = vpack.c.b16 %v945, %v943
    %v1278 = vpack.c.b16 %v948, %v946
    %v1279 = vpack.c.b16 %v949, %v947
    %v1280 = vpack.c.b16 %v952, %v950
    %v1281 = vpack.c.b16 %v953, %v951
    %v1282 = vpack.c.b16 %v956, %v954
    %v1283 = vpack.c.b16 %v957, %v955
    %v1284 = vpack.c.b16 %v960, %v958
    %v1285 = vpack.c.b16 %v961, %v959
    %v1286 = vpack.c.b16 %v964, %v962
    %v1287 = vpack.c.b16 %v965, %v963
    %v1288 = vpack.c.b16 %v968, %v966
    %v1289 = vpack.c.b16 %v969, %v967
    %v1290 = vpack.c.b16 %v972, %v970
    %v1291 = vpack.c.b16 %v973, %v971
    %v1292 = vpack.c.b16 %v976, %v974
    %v1293 = vpack.c.b16 %v977, %v975
    %v1294 = vpack.c.b16 %v980, %v978
    %v1295 = vpack.c.b16 %v981, %v979
    %v1296 = vpack.c.b16 %v984, %v982
    %v1297 = vpack.c.b16 %v985, %v983
    %v1298 = vpack.c.b16 %v988, %v986
    %v1299 = vpack.c.b16 %v989, %v987
    %v1300 = vpack.c.b16 %v992, %v990
    %v1301 = vpack.c.b16 %v993, %v991
    %v1302 = vpack.c.b16 %v996, %v994
    %v1303 = vpack.c.b16 %v997, %v995
    %v1304 = vpack.c.b16 %v1000, %v998
    %v1305 = vpack.c.b16 %v1001, %v999
    %v1306 = vpack.c.b16 %v1004, %v1002
    %v1307 = vpack.c.b16 %v1005, %v1003
    %v1308 = vpack.c.b16 %v1008, %v1006
    %v1309 = vpack.c.b16 %v1009, %v1007
    %v1310 = vpack.c.b16 %v1012, %v1010
    %v1311 = vpack.c.b16 %v1013, %v1011
    %v1312 = vpack.c.b16 %v1016, %v1014
    %v1313 = vpack.c.b16 %v1017, %v1015
    %v1314 = vpack.c.b16 %v1020, %v1018
    %v1315 = vpack.c.b16 %v1021, %v1019
    %v1316 = vpack.c.b16 %v1024, %v1022
    %v1317 = vpack.c.b16 %v1025, %v1023
    %v1318 = vpack.c.b16 %v1028, %v1026
    %v1319 = vpack.c.b16 %v1029, %v1027
    %v1320 = vpack.c.b16 %v1032, %v1030
    %v1321 = vpack.c.b16 %v1033, %v1031
    %v1322 = vpack.c.b16 %v1036, %v1034
    %v1323 = vpack.c.b16 %v1037, %v1035
    %v1324 = vpack.c.b16 %v1040, %v1038
    %v1325 = vpack.c.b16 %v1041, %v1039
    %v1326 = vpack.c.b16 %v1044, %v1042
    %v1327 = vpack.c.b16 %v1045, %v1043
    %v1328 = vpack.c.b16 %v1048, %v1046
    %v1329 = vpack.c.b16 %v1049, %v1047
    %v1330 = vpack.c.b16 %v1052, %v1050
    %v1331 = vpack.c.b16 %v1053, %v1051
    %v1332 = vpack.c.b16 %v1056, %v1054
    %v1333 = vpack.c.b16 %v1057, %v1055
    %v1334 = vpack.c.b16 %v1060, %v1058
    %v1335 = vpack.c.b16 %v1061, %v1059
    %v1336 = vpack.c.b16 %v1064, %v1062
    %v1337 = vpack.c.b16 %v1065, %v1063
    %v1338 = vpack.c.b16 %v1068, %v1066
    %v1339 = vpack.c.b16 %v1069, %v1067
    %v1340 = vpack.c.b16 %v1072, %v1070
    %v1341 = vpack.c.b16 %v1073, %v1071
    %v1342 = vpack.c.b16 %v1076, %v1074
    %v1343 = vpack.c.b16 %v1077, %v1075
    %v1344 = vpack.c.b16 %v1080, %v1078
    %v1345 = vpack.c.b16 %v1081, %v1079
    %v1346 = vpack.c.b16 %v1084, %v1082
    %v1347 = vpack.c.b16 %v1085, %v1083
    %v1348 = vpack.c.b16 %v1088, %v1086
    %v1349 = vpack.c.b16 %v1089, %v1087
    %v1350 = vpack.c.b16 %v1092, %v1090
    %v1351 = vpack.c.b16 %v1093, %v1091
    %v1352 = vpack.c.b16 %v1096, %v1094
    %v1353 = vpack.c.b16 %v1097, %v1095
    %1610 = vmatpush.bf16.msra.mxu0 %v1112
    %1611 = vmatpush.bf16.msra.mxu0 %v1110
    %1612 = vmatpush.bf16.msra.mxu0 %v1108
    %1613 = vmatpush.bf16.msra.mxu0 %v1106
    %1614 = vmatpush.bf16.msra.mxu0 %v1104
    %1615 = vmatpush.bf16.msra.mxu0 %v1102
    %1616 = vmatpush.bf16.msra.mxu0 %v1100
    %1617 = vmatpush.bf16.msra.mxu0 %v1098
    %1618 = vmatmul.bf16.gmra.mxu0 %v296
    %v1619 = vpop.f32.mrf.mxu0
    %v1620 = vadd.f32 %v290, %v1619
    %v1621 = vpop.f32.mrf.mxu0
    %1622 = vdwg.mxu0
    %1623 = vmatpush.bf16.msra.mxu0 %v1128
    %1624 = vmatpush.bf16.msra.mxu0 %v1126
    %1625 = vmatpush.bf16.msra.mxu0 %v1124
    %1626 = vmatpush.bf16.msra.mxu0 %v1122
    %1627 = vmatpush.bf16.msra.mxu0 %v1120
    %1628 = vmatpush.bf16.msra.mxu0 %v1118
    %1629 = vmatpush.bf16.msra.mxu0 %v1116
    %1630 = vmatpush.bf16.msra.mxu0 %v1114
    %1631 = vmatmul.bf16.gmra.mxu0 %v297
    %v1632 = vpop.f32.mrf.mxu0
    %v1633 = vadd.f32 %v1620, %v1632
    %v1634 = vpop.f32.mrf.mxu0
    %1635 = vdwg.mxu0
    %1636 = vmatpush.bf16.msra.mxu0 %v1144
    %1637 = vmatpush.bf16.msra.mxu0 %v1142
    %1638 = vmatpush.bf16.msra.mxu0 %v1140
    %1639 = vmatpush.bf16.msra.mxu0 %v1138
    %1640 = vmatpush.bf16.msra.mxu0 %v1136
    %1641 = vmatpush.bf16.msra.mxu0 %v1134
    %1642 = vmatpush.bf16.msra.mxu0 %v1132
    %1643 = vmatpush.bf16.msra.mxu0 %v1130
    %1644 = vmatmul.bf16.gmra.mxu0 %v298
    %v1645 = vpop.f32.mrf.mxu0
    %v1646 = vadd.f32 %v1633, %v1645
    %v1647 = vpop.f32.mrf.mxu0
    %1648 = vdwg.mxu0
    %1649 = vmatpush.bf16.msra.mxu0 %v1160
    %1650 = vmatpush.bf16.msra.mxu0 %v1158
    %1651 = vmatpush.bf16.msra.mxu0 %v1156
    %1652 = vmatpush.bf16.msra.mxu0 %v1154
    %1653 = vmatpush.bf16.msra.mxu0 %v1152
    %1654 = vmatpush.bf16.msra.mxu0 %v1150
    %1655 = vmatpush.bf16.msra.mxu0 %v1148
    %1656 = vmatpush.bf16.msra.mxu0 %v1146
    %1657 = vmatmul.bf16.gmra.mxu0 %v299
    %v1658 = vpop.f32.mrf.mxu0
    %v1659 = vadd.f32 %v1646, %v1658
    %v1660 = vpop.f32.mrf.mxu0
    %1661 = vdwg.mxu0
    %1662 = vmatpush.bf16.msra.mxu0 %v1176
    %1663 = vmatpush.bf16.msra.mxu0 %v1174
    %1664 = vmatpush.bf16.msra.mxu0 %v1172
    %1665 = vmatpush.bf16.msra.mxu0 %v1170
    %1666 = vmatpush.bf16.msra.mxu0 %v1168
    %1667 = vmatpush.bf16.msra.mxu0 %v1166
    %1668 = vmatpush.bf16.msra.mxu0 %v1164
    %1669 = vmatpush.bf16.msra.mxu0 %v1162
    %1670 = vmatmul.bf16.gmra.mxu0 %v300
    %v1671 = vpop.f32.mrf.mxu0
    %v1672 = vadd.f32 %v1659, %v1671
    %v1673 = vpop.f32.mrf.mxu0
    %1674 = vdwg.mxu0
    %1675 = vmatpush.bf16.msra.mxu0 %v1192
    %1676 = vmatpush.bf16.msra.mxu0 %v1190
    %1677 = vmatpush.bf16.msra.mxu0 %v1188
    %1678 = vmatpush.bf16.msra.mxu0 %v1186
    %1679 = vmatpush.bf16.msra.mxu0 %v1184
    %1680 = vmatpush.bf16.msra.mxu0 %v1182
    %1681 = vmatpush.bf16.msra.mxu0 %v1180
    %1682 = vmatpush.bf16.msra.mxu0 %v1178
    %1683 = vmatmul.bf16.gmra.mxu0 %v301
    %v1684 = vpop.f32.mrf.mxu0
    %v1685 = vadd.f32 %v1672, %v1684
    %v1686 = vpop.f32.mrf.mxu0
    %1687 = vdwg.mxu0
    %1688 = vmatpush.bf16.msra.mxu0 %v1208
    %1689 = vmatpush.bf16.msra.mxu0 %v1206
    %1690 = vmatpush.bf16.msra.mxu0 %v1204
    %1691 = vmatpush.bf16.msra.mxu0 %v1202
    %1692 = vmatpush.bf16.msra.mxu0 %v1200
    %1693 = vmatpush.bf16.msra.mxu0 %v1198
    %1694 = vmatpush.bf16.msra.mxu0 %v1196
    %1695 = vmatpush.bf16.msra.mxu0 %v1194
    %1696 = vmatmul.bf16.gmra.mxu0 %v302
    %v1697 = vpop.f32.mrf.mxu0
    %v1698 = vadd.f32 %v1685, %v1697
    %v1699 = vpop.f32.mrf.mxu0
    %1700 = vdwg.mxu0
    %1701 = vmatpush.bf16.msra.mxu0 %v1224
    %1702 = vmatpush.bf16.msra.mxu0 %v1222
    %1703 = vmatpush.bf16.msra.mxu0 %v1220
    %1704 = vmatpush.bf16.msra.mxu0 %v1218
    %1705 = vmatpush.bf16.msra.mxu0 %v1216
    %1706 = vmatpush.bf16.msra.mxu0 %v1214
    %1707 = vmatpush.bf16.msra.mxu0 %v1212
    %1708 = vmatpush.bf16.msra.mxu0 %v1210
    %1709 = vmatmul.bf16.gmra.mxu0 %v303
    %v1710 = vpop.f32.mrf.mxu0
    %v1711 = vadd.f32 %v1698, %v1710
    %v1712 = vpop.f32.mrf.mxu0
    %1713 = vdwg.mxu0
    %1714 = vmatpush.bf16.msra.mxu0 %v1240
    %1715 = vmatpush.bf16.msra.mxu0 %v1238
    %1716 = vmatpush.bf16.msra.mxu0 %v1236
    %1717 = vmatpush.bf16.msra.mxu0 %v1234
    %1718 = vmatpush.bf16.msra.mxu0 %v1232
    %1719 = vmatpush.bf16.msra.mxu0 %v1230
    %1720 = vmatpush.bf16.msra.mxu0 %v1228
    %1721 = vmatpush.bf16.msra.mxu0 %v1226
    %1722 = vmatmul.bf16.gmra.mxu0 %v306
    %v1723 = vpop.f32.mrf.mxu0
    %v1724 = vadd.f32 %v1711, %v1723
    %v1725 = vpop.f32.mrf.mxu0
    %1726 = vdwg.mxu0
    %1727 = vmatpush.bf16.msra.mxu0 %v1256
    %1728 = vmatpush.bf16.msra.mxu0 %v1254
    %1729 = vmatpush.bf16.msra.mxu0 %v1252
    %1730 = vmatpush.bf16.msra.mxu0 %v1250
    %1731 = vmatpush.bf16.msra.mxu0 %v1248
    %1732 = vmatpush.bf16.msra.mxu0 %v1246
    %1733 = vmatpush.bf16.msra.mxu0 %v1244
    %1734 = vmatpush.bf16.msra.mxu0 %v1242
    %1735 = vmatmul.bf16.gmra.mxu0 %v307
    %v1736 = vpop.f32.mrf.mxu0
    %v1737 = vadd.f32 %v1724, %v1736
    %v1738 = vpop.f32.mrf.mxu0
    %1739 = vdwg.mxu0
    %1740 = vmatpush.bf16.msra.mxu0 %v1272
    %1741 = vmatpush.bf16.msra.mxu0 %v1270
    %1742 = vmatpush.bf16.msra.mxu0 %v1268
    %1743 = vmatpush.bf16.msra.mxu0 %v1266
    %1744 = vmatpush.bf16.msra.mxu0 %v1264
    %1745 = vmatpush.bf16.msra.mxu0 %v1262
    %1746 = vmatpush.bf16.msra.mxu0 %v1260
    %1747 = vmatpush.bf16.msra.mxu0 %v1258
    %1748 = vmatmul.bf16.gmra.mxu0 %v308
    %v1749 = vpop.f32.mrf.mxu0
    %v1750 = vadd.f32 %v1737, %v1749
    %v1751 = vpop.f32.mrf.mxu0
    %1752 = vdwg.mxu0
    %1753 = vmatpush.bf16.msra.mxu0 %v1288
    %1754 = vmatpush.bf16.msra.mxu0 %v1286
    %1755 = vmatpush.bf16.msra.mxu0 %v1284
    %1756 = vmatpush.bf16.msra.mxu0 %v1282
    %1757 = vmatpush.bf16.msra.mxu0 %v1280
    %1758 = vmatpush.bf16.msra.mxu0 %v1278
    %1759 = vmatpush.bf16.msra.mxu0 %v1276
    %1760 = vmatpush.bf16.msra.mxu0 %v1274
    %1761 = vmatmul.bf16.gmra.mxu0 %v309
    %v1762 = vpop.f32.mrf.mxu0
    %v1763 = vadd.f32 %v1750, %v1762
    %v1764 = vpop.f32.mrf.mxu0
    %1765 = vdwg.mxu0
    %1766 = vmatpush.bf16.msra.mxu0 %v1304
    %1767 = vmatpush.bf16.msra.mxu0 %v1302
    %1768 = vmatpush.bf16.msra.mxu0 %v1300
    %1769 = vmatpush.bf16.msra.mxu0 %v1298
    %1770 = vmatpush.bf16.msra.mxu0 %v1296
    %1771 = vmatpush.bf16.msra.mxu0 %v1294
    %1772 = vmatpush.bf16.msra.mxu0 %v1292
    %1773 = vmatpush.bf16.msra.mxu0 %v1290
    %1774 = vmatmul.bf16.gmra.mxu0 %v310
    %v1775 = vpop.f32.mrf.mxu0
    %v1776 = vadd.f32 %v1763, %v1775
    %v1777 = vpop.f32.mrf.mxu0
    %1778 = vdwg.mxu0
    %1779 = vmatpush.bf16.msra.mxu0 %v1320
    %1780 = vmatpush.bf16.msra.mxu0 %v1318
    %1781 = vmatpush.bf16.msra.mxu0 %v1316
    %1782 = vmatpush.bf16.msra.mxu0 %v1314
    %1783 = vmatpush.bf16.msra.mxu0 %v1312
    %1784 = vmatpush.bf16.msra.mxu0 %v1310
    %1785 = vmatpush.bf16.msra.mxu0 %v1308
    %1786 = vmatpush.bf16.msra.mxu0 %v1306
    %1787 = vmatmul.bf16.gmra.mxu0 %v311
    %v1788 = vpop.f32.mrf.mxu0
    %v1789 = vadd.f32 %v1776, %v1788
    %v1790 = vpop.f32.mrf.mxu0
    %1791 = vdwg.mxu0
    %1792 = vmatpush.bf16.msra.mxu0 %v1336
    %1793 = vmatpush.bf16.msra.mxu0 %v1334
    %1794 = vmatpush.bf16.msra.mxu0 %v1332
    %1795 = vmatpush.bf16.msra.mxu0 %v1330
    %1796 = vmatpush.bf16.msra.mxu0 %v1328
    %1797 = vmatpush.bf16.msra.mxu0 %v1326
    %1798 = vmatpush.bf16.msra.mxu0 %v1324
    %1799 = vmatpush.bf16.msra.mxu0 %v1322
    %1800 = vmatmul.bf16.gmra.mxu0 %v312
    %v1801 = vpop.f32.mrf.mxu0
    %v1802 = vadd.f32 %v1789, %v1801
    %v1803 = vpop.f32.mrf.mxu0
    %1804 = vdwg.mxu0
    %1805 = vmatpush.bf16.msra.mxu0 %v1352
    %1806 = vmatpush.bf16.msra.mxu0 %v1350
    %1807 = vmatpush.bf16.msra.mxu0 %v1348
    %1808 = vmatpush.bf16.msra.mxu0 %v1346
    %1809 = vmatpush.bf16.msra.mxu0 %v1344
    %1810 = vmatpush.bf16.msra.mxu0 %v1342
    %1811 = vmatpush.bf16.msra.mxu0 %v1340
    %1812 = vmatpush.bf16.msra.mxu0 %v1338
    %1813 = vmatmul.bf16.gmra.mxu0 %v313
    %v1814 = vpop.f32.mrf.mxu0
    %v1815 = vadd.f32 %v1802, %v1814
    %v1816 = vpop.f32.mrf.mxu0
    %1817 = vdwg.mxu0
    %1818 = vmatpush.bf16.msra.mxu0 %v1113
    %1819 = vmatpush.bf16.msra.mxu0 %v1111
    %1820 = vmatpush.bf16.msra.mxu0 %v1109
    %1821 = vmatpush.bf16.msra.mxu0 %v1107
    %1822 = vmatpush.bf16.msra.mxu0 %v1105
    %1823 = vmatpush.bf16.msra.mxu0 %v1103
    %1824 = vmatpush.bf16.msra.mxu0 %v1101
    %1825 = vmatpush.bf16.msra.mxu0 %v1099
    %1826 = vmatmul.bf16.gmra.mxu0 %v296
    %v1827 = vpop.f32.mrf.mxu0
    %v1828 = vadd.f32 %v291, %v1827
    %v1829 = vpop.f32.mrf.mxu0
    %1830 = vdwg.mxu0
    %1831 = vmatpush.bf16.msra.mxu0 %v1129
    %1832 = vmatpush.bf16.msra.mxu0 %v1127
    %1833 = vmatpush.bf16.msra.mxu0 %v1125
    %1834 = vmatpush.bf16.msra.mxu0 %v1123
    %1835 = vmatpush.bf16.msra.mxu0 %v1121
    %1836 = vmatpush.bf16.msra.mxu0 %v1119
    %1837 = vmatpush.bf16.msra.mxu0 %v1117
    %1838 = vmatpush.bf16.msra.mxu0 %v1115
    %1839 = vmatmul.bf16.gmra.mxu0 %v297
    %v1840 = vpop.f32.mrf.mxu0
    %v1841 = vadd.f32 %v1828, %v1840
    %v1842 = vpop.f32.mrf.mxu0
    %1843 = vdwg.mxu0
    %1844 = vmatpush.bf16.msra.mxu0 %v1145
    %1845 = vmatpush.bf16.msra.mxu0 %v1143
    %1846 = vmatpush.bf16.msra.mxu0 %v1141
    %1847 = vmatpush.bf16.msra.mxu0 %v1139
    %1848 = vmatpush.bf16.msra.mxu0 %v1137
    %1849 = vmatpush.bf16.msra.mxu0 %v1135
    %1850 = vmatpush.bf16.msra.mxu0 %v1133
    %1851 = vmatpush.bf16.msra.mxu0 %v1131
    %1852 = vmatmul.bf16.gmra.mxu0 %v298
    %v1853 = vpop.f32.mrf.mxu0
    %v1854 = vadd.f32 %v1841, %v1853
    %v1855 = vpop.f32.mrf.mxu0
    %1856 = vdwg.mxu0
    %1857 = vmatpush.bf16.msra.mxu0 %v1161
    %1858 = vmatpush.bf16.msra.mxu0 %v1159
    %1859 = vmatpush.bf16.msra.mxu0 %v1157
    %1860 = vmatpush.bf16.msra.mxu0 %v1155
    %1861 = vmatpush.bf16.msra.mxu0 %v1153
    %1862 = vmatpush.bf16.msra.mxu0 %v1151
    %1863 = vmatpush.bf16.msra.mxu0 %v1149
    %1864 = vmatpush.bf16.msra.mxu0 %v1147
    %1865 = vmatmul.bf16.gmra.mxu0 %v299
    %v1866 = vpop.f32.mrf.mxu0
    %v1867 = vadd.f32 %v1854, %v1866
    %v1868 = vpop.f32.mrf.mxu0
    %1869 = vdwg.mxu0
    %1870 = vmatpush.bf16.msra.mxu0 %v1177
    %1871 = vmatpush.bf16.msra.mxu0 %v1175
    %1872 = vmatpush.bf16.msra.mxu0 %v1173
    %1873 = vmatpush.bf16.msra.mxu0 %v1171
    %1874 = vmatpush.bf16.msra.mxu0 %v1169
    %1875 = vmatpush.bf16.msra.mxu0 %v1167
    %1876 = vmatpush.bf16.msra.mxu0 %v1165
    %1877 = vmatpush.bf16.msra.mxu0 %v1163
    %1878 = vmatmul.bf16.gmra.mxu0 %v300
    %v1879 = vpop.f32.mrf.mxu0
    %v1880 = vadd.f32 %v1867, %v1879
    %v1881 = vpop.f32.mrf.mxu0
    %1882 = vdwg.mxu0
    %1883 = vmatpush.bf16.msra.mxu0 %v1193
    %1884 = vmatpush.bf16.msra.mxu0 %v1191
    %1885 = vmatpush.bf16.msra.mxu0 %v1189
    %1886 = vmatpush.bf16.msra.mxu0 %v1187
    %1887 = vmatpush.bf16.msra.mxu0 %v1185
    %1888 = vmatpush.bf16.msra.mxu0 %v1183
    %1889 = vmatpush.bf16.msra.mxu0 %v1181
    %1890 = vmatpush.bf16.msra.mxu0 %v1179
    %1891 = vmatmul.bf16.gmra.mxu0 %v301
    %v1892 = vpop.f32.mrf.mxu0
    %v1893 = vadd.f32 %v1880, %v1892
    %v1894 = vpop.f32.mrf.mxu0
    %1895 = vdwg.mxu0
    %1896 = vmatpush.bf16.msra.mxu0 %v1209
    %1897 = vmatpush.bf16.msra.mxu0 %v1207
    %1898 = vmatpush.bf16.msra.mxu0 %v1205
    %1899 = vmatpush.bf16.msra.mxu0 %v1203
    %1900 = vmatpush.bf16.msra.mxu0 %v1201
    %1901 = vmatpush.bf16.msra.mxu0 %v1199
    %1902 = vmatpush.bf16.msra.mxu0 %v1197
    %1903 = vmatpush.bf16.msra.mxu0 %v1195
    %1904 = vmatmul.bf16.gmra.mxu0 %v302
    %v1905 = vpop.f32.mrf.mxu0
    %v1906 = vadd.f32 %v1893, %v1905
    %v1907 = vpop.f32.mrf.mxu0
    %1908 = vdwg.mxu0
    %1909 = vmatpush.bf16.msra.mxu0 %v1225
    %1910 = vmatpush.bf16.msra.mxu0 %v1223
    %1911 = vmatpush.bf16.msra.mxu0 %v1221
    %1912 = vmatpush.bf16.msra.mxu0 %v1219
    %1913 = vmatpush.bf16.msra.mxu0 %v1217
    %1914 = vmatpush.bf16.msra.mxu0 %v1215
    %1915 = vmatpush.bf16.msra.mxu0 %v1213
    %1916 = vmatpush.bf16.msra.mxu0 %v1211
    %1917 = vmatmul.bf16.gmra.mxu0 %v303
    %v1918 = vpop.f32.mrf.mxu0
    %v1919 = vadd.f32 %v1906, %v1918
    %v1920 = vpop.f32.mrf.mxu0
    %1921 = vdwg.mxu0
    %1922 = vmatpush.bf16.msra.mxu0 %v1241
    %1923 = vmatpush.bf16.msra.mxu0 %v1239
    %1924 = vmatpush.bf16.msra.mxu0 %v1237
    %1925 = vmatpush.bf16.msra.mxu0 %v1235
    %1926 = vmatpush.bf16.msra.mxu0 %v1233
    %1927 = vmatpush.bf16.msra.mxu0 %v1231
    %1928 = vmatpush.bf16.msra.mxu0 %v1229
    %1929 = vmatpush.bf16.msra.mxu0 %v1227
    %1930 = vmatmul.bf16.gmra.mxu0 %v306
    %v1931 = vpop.f32.mrf.mxu0
    %v1932 = vadd.f32 %v1919, %v1931
    %v1933 = vpop.f32.mrf.mxu0
    %1934 = vdwg.mxu0
    %1935 = vmatpush.bf16.msra.mxu0 %v1257
    %1936 = vmatpush.bf16.msra.mxu0 %v1255
    %1937 = vmatpush.bf16.msra.mxu0 %v1253
    %1938 = vmatpush.bf16.msra.mxu0 %v1251
    %1939 = vmatpush.bf16.msra.mxu0 %v1249
    %1940 = vmatpush.bf16.msra.mxu0 %v1247
    %1941 = vmatpush.bf16.msra.mxu0 %v1245
    %1942 = vmatpush.bf16.msra.mxu0 %v1243
    %1943 = vmatmul.bf16.gmra.mxu0 %v307
    %v1944 = vpop.f32.mrf.mxu0
    %v1945 = vadd.f32 %v1932, %v1944
    %v1946 = vpop.f32.mrf.mxu0
    %1947 = vdwg.mxu0
    %1948 = vmatpush.bf16.msra.mxu0 %v1273
    %1949 = vmatpush.bf16.msra.mxu0 %v1271
    %1950 = vmatpush.bf16.msra.mxu0 %v1269
    %1951 = vmatpush.bf16.msra.mxu0 %v1267
    %1952 = vmatpush.bf16.msra.mxu0 %v1265
    %1953 = vmatpush.bf16.msra.mxu0 %v1263
    %1954 = vmatpush.bf16.msra.mxu0 %v1261
    %1955 = vmatpush.bf16.msra.mxu0 %v1259
    %1956 = vmatmul.bf16.gmra.mxu0 %v308
    %v1957 = vpop.f32.mrf.mxu0
    %v1958 = vadd.f32 %v1945, %v1957
    %v1959 = vpop.f32.mrf.mxu0
    %1960 = vdwg.mxu0
    %1961 = vmatpush.bf16.msra.mxu0 %v1289
    %1962 = vmatpush.bf16.msra.mxu0 %v1287
    %1963 = vmatpush.bf16.msra.mxu0 %v1285
    %1964 = vmatpush.bf16.msra.mxu0 %v1283
    %1965 = vmatpush.bf16.msra.mxu0 %v1281
    %1966 = vmatpush.bf16.msra.mxu0 %v1279
    %1967 = vmatpush.bf16.msra.mxu0 %v1277
    %1968 = vmatpush.bf16.msra.mxu0 %v1275
    %1969 = vmatmul.bf16.gmra.mxu0 %v309
    %v1970 = vpop.f32.mrf.mxu0
    %v1971 = vadd.f32 %v1958, %v1970
    %v1972 = vpop.f32.mrf.mxu0
    %1973 = vdwg.mxu0
    %1974 = vmatpush.bf16.msra.mxu0 %v1305
    %1975 = vmatpush.bf16.msra.mxu0 %v1303
    %1976 = vmatpush.bf16.msra.mxu0 %v1301
    %1977 = vmatpush.bf16.msra.mxu0 %v1299
    %1978 = vmatpush.bf16.msra.mxu0 %v1297
    %1979 = vmatpush.bf16.msra.mxu0 %v1295
    %1980 = vmatpush.bf16.msra.mxu0 %v1293
    %1981 = vmatpush.bf16.msra.mxu0 %v1291
    %1982 = vmatmul.bf16.gmra.mxu0 %v310
    %v1983 = vpop.f32.mrf.mxu0
    %v1984 = vadd.f32 %v1971, %v1983
    %v1985 = vpop.f32.mrf.mxu0
    %1986 = vdwg.mxu0
    %1987 = vmatpush.bf16.msra.mxu0 %v1321
    %1988 = vmatpush.bf16.msra.mxu0 %v1319
    %1989 = vmatpush.bf16.msra.mxu0 %v1317
    %1990 = vmatpush.bf16.msra.mxu0 %v1315
    %1991 = vmatpush.bf16.msra.mxu0 %v1313
    %1992 = vmatpush.bf16.msra.mxu0 %v1311
    %1993 = vmatpush.bf16.msra.mxu0 %v1309
    %1994 = vmatpush.bf16.msra.mxu0 %v1307
    %1995 = vmatmul.bf16.gmra.mxu0 %v311
    %v1996 = vpop.f32.mrf.mxu0
    %v1997 = vadd.f32 %v1984, %v1996
    %v1998 = vpop.f32.mrf.mxu0
    %1999 = vdwg.mxu0
    %2000 = vmatpush.bf16.msra.mxu0 %v1337
    %2001 = vmatpush.bf16.msra.mxu0 %v1335
    %2002 = vmatpush.bf16.msra.mxu0 %v1333
    %2003 = vmatpush.bf16.msra.mxu0 %v1331
    %2004 = vmatpush.bf16.msra.mxu0 %v1329
    %2005 = vmatpush.bf16.msra.mxu0 %v1327
    %2006 = vmatpush.bf16.msra.mxu0 %v1325
    %2007 = vmatpush.bf16.msra.mxu0 %v1323
    %2008 = vmatmul.bf16.gmra.mxu0 %v312
    %v2009 = vpop.f32.mrf.mxu0
    %v2010 = vadd.f32 %v1997, %v2009
    %v2011 = vpop.f32.mrf.mxu0
    %2012 = vdwg.mxu0
    %2013 = vmatpush.bf16.msra.mxu0 %v1353
    %2014 = vmatpush.bf16.msra.mxu0 %v1351
    %2015 = vmatpush.bf16.msra.mxu0 %v1349
    %2016 = vmatpush.bf16.msra.mxu0 %v1347
    %2017 = vmatpush.bf16.msra.mxu0 %v1345
    %2018 = vmatpush.bf16.msra.mxu0 %v1343
    %2019 = vmatpush.bf16.msra.mxu0 %v1341
    %2020 = vmatpush.bf16.msra.mxu0 %v1339
    %2021 = vmatmul.bf16.gmra.mxu0 %v313
    %v2022 = vpop.f32.mrf.mxu0
    %v2023 = vadd.f32 %v2010, %v2022
    %v2024 = vpop.f32.mrf.mxu0
    %2025 = vdwg.mxu0
    %v2026 = vmax.f32 %v1815, 0.0
    %v2027 = vmax.f32 %v2023, 0.0
    %v2030 = vrot.slane %v2027, 6
    %vm2031 = vcmask 1041408
    %v2032 = vsel %vm2031, %v2026, %v2030
    %2034 = vst [vmem:[%s7] sm:$0xf] %v2032
    %v2035 = vpack.c.bf16 %v2026, %v2026
    %v2036 = vpack.c.bf16 %v2027, %v2027
    %v2037 = vld [vmem:[%s4] sm:$0xf]
    %v2038 = vld [vmem:[%s4 + $0x4] sm:$0xf]
    %v2039 = vld [vmem:[%s4 + $0x8] sm:$0xf]
    %v2040 = vld [vmem:[%s4 + $0xc] sm:$0xf]
    %v2041 = vld [vmem:[%s4 + $0x10] sm:$0xf]
    %v2042 = vld [vmem:[%s4 + $0x14] sm:$0xf]
    %v2043 = vld [vmem:[%s4 + $0x18] sm:$0xf]
    %v2044 = vld [vmem:[%s4 + $0x1c] sm:$0xf]
    %v2045 = vld [vmem:[%s4 + $0x20] sm:$0xf]
    %v2046 = vld [vmem:[%s4 + $0x24] sm:$0xf]
    %v2047 = vld [vmem:[%s4 + $0x28] sm:$0xf]
    %v2048 = vld [vmem:[%s4 + $0x2c] sm:$0xf]
    %v2049 = vld [vmem:[%s4 + $0x30] sm:$0xf]
    %v2050 = vld [vmem:[%s4 + $0x34] sm:$0xf]
    %v2051 = vld [vmem:[%s4 + $0x38] sm:$0xf]
    %v2052 = vld [vmem:[%s4 + $0x3c] sm:$0xf]
    %v2053 = vld [vmem:[%s4 + $0x40] sm:$0xf]
    %v2054 = vld [vmem:[%s4 + $0x44] sm:$0xf]
    %v2055 = vld [vmem:[%s4 + $0x48] sm:$0xf]
    %v2056 = vld [vmem:[%s4 + $0x4c] sm:$0xf]
    %v2057 = vld [vmem:[%s4 + $0x50] sm:$0xf]
    %v2058 = vld [vmem:[%s4 + $0x54] sm:$0xf]
    %v2059 = vld [vmem:[%s4 + $0x58] sm:$0xf]
    %v2060 = vld [vmem:[%s4 + $0x5c] sm:$0xf]
    %v2061 = vld [vmem:[%s4 + $0x60] sm:$0xf]
    %v2062 = vld [vmem:[%s4 + $0x64] sm:$0xf]
    %v2063 = vld [vmem:[%s4 + $0x68] sm:$0xf]
    %v2064 = vld [vmem:[%s4 + $0x6c] sm:$0xf]
    %v2065 = vld [vmem:[%s4 + $0x70] sm:$0xf]
    %v2066 = vld [vmem:[%s4 + $0x74] sm:$0xf]
    %v2067 = vld [vmem:[%s4 + $0x78] sm:$0xf]
    %v2068 = vld [vmem:[%s4 + $0x7c] sm:$0xf]
    %v2069 = vld [vmem:[%s1] sm:$0x1]
    %v2070 = vld [vmem:[%s5] sm:$0xf]
    %vm2071 = vcmask 64512
    %v2073 = vsel %vm2071, %v2069, 0
    %vm2075 = vcmask 1043456
    %v2077 = vsel %vm2075, %v2070, 0
    %2079 = vmatpush.bf16.msra.mxu0 0
    %2080 = vmatpush.bf16.msra.mxu0 0
    %2081 = vmatpush.bf16.msra.mxu0 0
    %2082 = vmatpush.bf16.msra.mxu0 0
    %2083 = vmatpush.bf16.msra.mxu0 0
    %2084 = vmatpush.bf16.msra.mxu0 0
    %2085 = vmatpush.bf16.msra.mxu0 0
    %2086 = vmatpush.bf16.msra.mxu0 %v2077
    %2087 = vmatmul.bf16.gmra.mxu0 %v2073
    %v2088 = vpop.f32.mrf.mxu0
    %v2089 = vadd.f32 0.0, %v2088
    %v2090 = vpop.f32.mrf.mxu0
    %2091 = vdwg.mxu0
    %v2124 = vunpack.c.l.b16 %v2037
    %v2125 = vunpack.c.l.b16 %v2038
    %v2126 = vunpack.c.l.b16 %v2039
    %v2127 = vunpack.c.l.b16 %v2040
    %v2128 = vunpack.c.l.b16 %v2041
    %v2129 = vunpack.c.l.b16 %v2042
    %v2130 = vunpack.c.l.b16 %v2043
    %v2131 = vunpack.c.l.b16 %v2044
    %v2132 = vunpack.c.l.b16 %v2045
    %v2133 = vunpack.c.l.b16 %v2046
    %v2134 = vunpack.c.l.b16 %v2047
    %v2135 = vunpack.c.l.b16 %v2048
    %v2136 = vunpack.c.l.b16 %v2049
    %v2137 = vunpack.c.l.b16 %v2050
    %v2138 = vunpack.c.l.b16 %v2051
    %v2139 = vunpack.c.l.b16 %v2052
    %v2140 = vunpack.c.l.b16 %v2053
    %v2141 = vunpack.c.l.b16 %v2054
    %v2142 = vunpack.c.l.b16 %v2055
    %v2143 = vunpack.c.l.b16 %v2056
    %v2144 = vunpack.c.l.b16 %v2057
    %v2145 = vunpack.c.l.b16 %v2058
    %v2146 = vunpack.c.l.b16 %v2059
    %v2147 = vunpack.c.l.b16 %v2060
    %v2148 = vunpack.c.l.b16 %v2061
    %v2149 = vunpack.c.l.b16 %v2062
    %v2150 = vunpack.c.l.b16 %v2063
    %v2151 = vunpack.c.l.b16 %v2064
    %v2152 = vunpack.c.l.b16 %v2065
    %v2153 = vunpack.c.l.b16 %v2066
    %v2154 = vunpack.c.l.b16 %v2067
    %v2155 = vunpack.c.l.b16 %v2068
    %v2156 = vpack.c.b16 %v2125, %v2124
    %v2157 = vpack.c.b16 %v2127, %v2126
    %v2158 = vpack.c.b16 %v2129, %v2128
    %v2159 = vpack.c.b16 %v2131, %v2130
    %v2160 = vpack.c.b16 %v2133, %v2132
    %v2161 = vpack.c.b16 %v2135, %v2134
    %v2162 = vpack.c.b16 %v2137, %v2136
    %v2163 = vpack.c.b16 %v2139, %v2138
    %v2164 = vpack.c.b16 %v2141, %v2140
    %v2165 = vpack.c.b16 %v2143, %v2142
    %v2166 = vpack.c.b16 %v2145, %v2144
    %v2167 = vpack.c.b16 %v2147, %v2146
    %v2168 = vpack.c.b16 %v2149, %v2148
    %v2169 = vpack.c.b16 %v2151, %v2150
    %v2170 = vpack.c.b16 %v2153, %v2152
    %v2171 = vpack.c.b16 %v2155, %v2154
    %2188 = vmatpush.bf16.msra.mxu0 %v2163
    %2189 = vmatpush.bf16.msra.mxu0 %v2162
    %2190 = vmatpush.bf16.msra.mxu0 %v2161
    %2191 = vmatpush.bf16.msra.mxu0 %v2160
    %2192 = vmatpush.bf16.msra.mxu0 %v2159
    %2193 = vmatpush.bf16.msra.mxu0 %v2158
    %2194 = vmatpush.bf16.msra.mxu0 %v2157
    %2195 = vmatpush.bf16.msra.mxu0 %v2156
    %2196 = vmatmul.bf16.gmra.mxu0 %v2035
    %v2197 = vpop.f32.mrf.mxu0
    %v2198 = vadd.f32 %v2089, %v2197
    %v2199 = vpop.f32.mrf.mxu0
    %2200 = vdwg.mxu0
    %2201 = vmatpush.bf16.msra.mxu0 %v2171
    %2202 = vmatpush.bf16.msra.mxu0 %v2170
    %2203 = vmatpush.bf16.msra.mxu0 %v2169
    %2204 = vmatpush.bf16.msra.mxu0 %v2168
    %2205 = vmatpush.bf16.msra.mxu0 %v2167
    %2206 = vmatpush.bf16.msra.mxu0 %v2166
    %2207 = vmatpush.bf16.msra.mxu0 %v2165
    %2208 = vmatpush.bf16.msra.mxu0 %v2164
    %2209 = vmatmul.bf16.gmra.mxu0 %v2036
    %v2210 = vpop.f32.mrf.mxu0
    %v2211 = vadd.f32 %v2198, %v2210
    %v2212 = vpop.f32.mrf.mxu0
    %2213 = vdwg.mxu0
    %v2214 = vld [vmem:[%s6] sm:$0x1]
    %v2216 = vperm.slane %v2214, 0
    %v2218 = vadd.f32 %v2211, %v2216
    %2219 = vst [vmem:[#allocation2] sm:$0x3] %v2218
    // Predicated region
    $region30: #{py_forward.5} parent=1 // pred_check
      _
    $region31: #{py_forward.5} parent=1 // pred_check_branch
      %2221 = sbr.rel (0) target = $region33
    $region32: #{py_forward.5} parent=1 // pred_region
      _
    $region33: #{py_forward.5} parent=1 // pred_fallthru
      _
    // Predicated region
    $region34: #{py_forward.5} parent=1 // pred_check
      _
    $region35: #{py_forward.5} parent=1 // pred_check_branch
      %2223 = sbr.rel (0) target = $region37
    $region36: #{py_forward.5} parent=1 // pred_region
      %2225 = vsyncadd [#allocation3], 0
      %s2227 = sshll.u32 [#allocation2], 4
      %s2228 = int_to_ptr.vmem [resolvable:$true] %s2227
      %s2229 = sshll.u32 %s8, 4
      %s2230 = int_to_ptr.hbm [resolvable:$true] %s2229
      %2232 = dma.vmem_to_hbm [thread:$0]  %s2228, 32, %s2230, [#allocation3]
    $region37: #{py_forward.5} parent=1 // pred_fallthru
      _
    // Predicated region
    $region38: #{py_forward.5} parent=1 // pred_check
      _
    $region39: #{py_forward.5} parent=1 // pred_check_branch
      %2234 = sbr.rel (0) target = $region41
    $region40: #{py_forward.5} parent=1 // pred_region
      _
    $region41: #{py_forward.5} parent=1 // pred_fallthru
      _
    // Predicated region
    $region42: #{py_forward.5} parent=1 // pred_check
      _
    $region43: #{py_forward.5} parent=1 // pred_check_branch
      %2236 = sbr.rel (0) target = $region45
    $region44: #{py_forward.5} parent=1 // pred_region
      %2238 = dma.done [#allocation3], 32
    $region45: #{py_forward.5} parent=1 // pred_fallthru
      _
    %2239 = vsyncpa [#allocation3], 1

// kernel: py_forward.4
$region0: #{py_forward.4}
  #allocation0 [shape = 'u32[]', space=smem, size = 0x4, offset = 0x4, fixed_abs, tag = 'smem constant byte address 0x4 - core index']
  #allocation1 [shape = 'u32[72,128]{1,0:T(1,128)}', space=vmem, size = 0x9000, scoped, tag = 'internal scratch']
  %s0 = inlined_call_operand.vmem [shape: bf16[128,3200], index: 0, kind: input, shape index: {}]
  %s1 = inlined_call_operand.vmem [shape: bf16[3200,128], index: 1, kind: input, shape index: {}]
  %s2 = inlined_call_operand.vmem [shape: f32[1,128], index: 2, kind: input, shape index: {}]
  %s3 = inlined_call_operand.vmem [shape: f32[1,128], index: 3, kind: input, shape index: {}]
  %s4 = inlined_call_operand.vmem [shape: bf16[128,128], index: 4, kind: output, shape index: {}]
  %s5 = sld [smem:[#allocation0]]
  $region26: #{py_forward.4} parent=0
    _
  %s7 = ssub.s32 1, %s5
  %s8 = scalar_select 0, %s7, %s5
  // Predicated region
  $region2: #{py_forward.4} parent=0 // pred_check
    _
  $region3: #{py_forward.4} parent=0 // pred_check_branch
    %10 = sbr.rel (0) target = $region5
  $region4: #{py_forward.4} parent=0 // pred_region
    _
  $region5: #{py_forward.4} parent=0 // pred_fallthru
    _
  // Predicated region
  $region6: #{py_forward.4} parent=0 // pred_check
    _
  $region7: #{py_forward.4} parent=0 // pred_check_branch
    %12 = sbr.rel (0) target = $region9
  $region8: #{py_forward.4} parent=0 // pred_region
    _
  $region9: #{py_forward.4} parent=0 // pred_fallthru
    _
  // Predicated region
  $region10: #{py_forward.4} parent=0 // pred_check
    _
  $region11: #{py_forward.4} parent=0 // pred_check_branch
    %14 = sbr.rel (0) target = $region13
  $region12: #{py_forward.4} parent=0 // pred_region
    _
  $region13: #{py_forward.4} parent=0 // pred_fallthru
    _
  // Predicated region
  $region14: #{py_forward.4} parent=0 // pred_check
    _
  $region15: #{py_forward.4} parent=0 // pred_check_branch
    %16 = sbr.rel (0) target = $region17
  $region16: #{py_forward.4} parent=0 // pred_region
    _
  $region17: #{py_forward.4} parent=0 // pred_fallthru
    _
  %v17 = vld [vmem:[%s0] sm:$0xff]
  %v18 = vld [vmem:[%s0 + $0x8] sm:$0xff]
  %v19 = vld [vmem:[%s0 + $0x10] sm:$0xff]
  %v20 = vld [vmem:[%s0 + $0x18] sm:$0xff]
  %v21 = vld [vmem:[%s0 + $0x20] sm:$0xff]
  %v22 = vld [vmem:[%s0 + $0x28] sm:$0xff]
  %v23 = vld [vmem:[%s0 + $0x30] sm:$0xff]
  %v24 = vld [vmem:[%s0 + $0x38] sm:$0xff]
  %v25 = vld [vmem:[%s0 + $0x40] sm:$0xff]
  %v26 = vld [vmem:[%s0 + $0x48] sm:$0xff]
  %v27 = vld [vmem:[%s0 + $0x50] sm:$0xff]
  %v28 = vld [vmem:[%s0 + $0x58] sm:$0xff]
  %v29 = vld [vmem:[%s0 + $0x60] sm:$0xf]
  %v30 = vld [vmem:[%s0 + $0x64] sm:$0xff]
  %v31 = vld [vmem:[%s0 + $0x6c] sm:$0xff]
  %v32 = vld [vmem:[%s0 + $0x74] sm:$0xff]
  %v33 = vld [vmem:[%s0 + $0x7c] sm:$0xff]
  %v34 = vld [vmem:[%s0 + $0x84] sm:$0xff]
  %v35 = vld [vmem:[%s0 + $0x8c] sm:$0xff]
  %v36 = vld [vmem:[%s0 + $0x94] sm:$0xff]
  %v37 = vld [vmem:[%s0 + $0x9c] sm:$0xff]
  %v38 = vld [vmem:[%s0 + $0xa4] sm:$0xff]
  %v39 = vld [vmem:[%s0 + $0xac] sm:$0xff]
  %v40 = vld [vmem:[%s0 + $0xb4] sm:$0xff]
  %v41 = vld [vmem:[%s0 + $0xbc] sm:$0xff]
  %v42 = vld [vmem:[%s0 + $0xc4] sm:$0xf]
  %v43 = vld [vmem:[%s0 + $0xc8] sm:$0xff]
  %v44 = vld [vmem:[%s0 + $0xd0] sm:$0xff]
  %v45 = vld [vmem:[%s0 + $0xd8] sm:$0xff]
  %v46 = vld [vmem:[%s0 + $0xe0] sm:$0xff]
  %v47 = vld [vmem:[%s0 + $0xe8] sm:$0xff]
  %v48 = vld [vmem:[%s0 + $0xf0] sm:$0xff]
  %v49 = vld [vmem:[%s0 + $0xf8] sm:$0xff]
  %v50 = vld [vmem:[%s0 + $0x100] sm:$0xff]
  %v51 = vld [vmem:[%s0 + $0x108] sm:$0xff]
  %v52 = vld [vmem:[%s0 + $0x110] sm:$0xff]
  %v53 = vld [vmem:[%s0 + $0x118] sm:$0xff]
  %v54 = vld [vmem:[%s0 + $0x120] sm:$0xff]
  %v55 = vld [vmem:[%s0 + $0x128] sm:$0xf]
  %v56 = vld [vmem:[%s0 + $0x12c] sm:$0xff]
  %v57 = vld [vmem:[%s0 + $0x134] sm:$0xff]
  %v58 = vld [vmem:[%s0 + $0x13c] sm:$0xff]
  %v59 = vld [vmem:[%s0 + $0x144] sm:$0xff]
  %v60 = vld [vmem:[%s0 + $0x14c] sm:$0xff]
  %v61 = vld [vmem:[%s0 + $0x154] sm:$0xff]
  %v62 = vld [vmem:[%s0 + $0x15c] sm:$0xff]
  %v63 = vld [vmem:[%s0 + $0x164] sm:$0xff]
  %v64 = vld [vmem:[%s0 + $0x16c] sm:$0xff]
  %v65 = vld [vmem:[%s0 + $0x174] sm:$0xff]
  %v66 = vld [vmem:[%s0 + $0x17c] sm:$0xff]
  %v67 = vld [vmem:[%s0 + $0x184] sm:$0xff]
  %v68 = vld [vmem:[%s0 + $0x18c] sm:$0xf]
  %v69 = vld [vmem:[%s0 + $0x190] sm:$0xff]
  %v70 = vld [vmem:[%s0 + $0x198] sm:$0xff]
  %v71 = vld [vmem:[%s0 + $0x1a0] sm:$0xff]
  %v72 = vld [vmem:[%s0 + $0x1a8] sm:$0xff]
  %v73 = vld [vmem:[%s0 + $0x1b0] sm:$0xff]
  %v74 = vld [vmem:[%s0 + $0x1b8] sm:$0xff]
  %v75 = vld [vmem:[%s0 + $0x1c0] sm:$0xff]
  %v76 = vld [vmem:[%s0 + $0x1c8] sm:$0xff]
  %v77 = vld [vmem:[%s0 + $0x1d0] sm:$0xff]
  %v78 = vld [vmem:[%s0 + $0x1d8] sm:$0xff]
  %v79 = vld [vmem:[%s0 + $0x1e0] sm:$0xff]
  %v80 = vld [vmem:[%s0 + $0x1e8] sm:$0xff]
  %v81 = vld [vmem:[%s0 + $0x1f0] sm:$0xf]
  %v82 = vld [vmem:[%s0 + $0x1f4] sm:$0xff]
  %v83 = vld [vmem:[%s0 + $0x1fc] sm:$0xff]
  %v84 = vld [vmem:[%s0 + $0x204] sm:$0xff]
  %v85 = vld [vmem:[%s0 + $0x20c] sm:$0xff]
  %v86 = vld [vmem:[%s0 + $0x214] sm:$0xff]
  %v87 = vld [vmem:[%s0 + $0x21c] sm:$0xff]
  %v88 = vld [vmem:[%s0 + $0x224] sm:$0xff]
  %v89 = vld [vmem:[%s0 + $0x22c] sm:$0xff]
  %v90 = vld [vmem:[%s0 + $0x234] sm:$0xff]
  %v91 = vld [vmem:[%s0 + $0x23c] sm:$0xff]
  %v92 = vld [vmem:[%s0 + $0x244] sm:$0xff]
  %v93 = vld [vmem:[%s0 + $0x24c] sm:$0xff]
  %v94 = vld [vmem:[%s0 + $0x254] sm:$0xf]
  %v95 = vld [vmem:[%s0 + $0x258] sm:$0xff]
  %v96 = vld [vmem:[%s0 + $0x260] sm:$0xff]
  %v97 = vld [vmem:[%s0 + $0x268] sm:$0xff]
  %v98 = vld [vmem:[%s0 + $0x270] sm:$0xff]
  %v99 = vld [vmem:[%s0 + $0x278] sm:$0xff]
  %v100 = vld [vmem:[%s0 + $0x280] sm:$0xff]
  %v101 = vld [vmem:[%s0 + $0x288] sm:$0xff]
  %v102 = vld [vmem:[%s0 + $0x290] sm:$0xff]
  %v103 = vld [vmem:[%s0 + $0x298] sm:$0xff]
  %v104 = vld [vmem:[%s0 + $0x2a0] sm:$0xff]
  %v105 = vld [vmem:[%s0 + $0x2a8] sm:$0xff]
  %v106 = vld [vmem:[%s0 + $0x2b0] sm:$0xff]
  %v107 = vld [vmem:[%s0 + $0x2b8] sm:$0xf]
  %v108 = vld [vmem:[%s0 + $0x2bc] sm:$0xff]
  %v109 = vld [vmem:[%s0 + $0x2c4] sm:$0xff]
  %v110 = vld [vmem:[%s0 + $0x2cc] sm:$0xff]
  %v111 = vld [vmem:[%s0 + $0x2d4] sm:$0xff]
  %v112 = vld [vmem:[%s0 + $0x2dc] sm:$0xff]
  %v113 = vld [vmem:[%s0 + $0x2e4] sm:$0xff]
  %v114 = vld [vmem:[%s0 + $0x2ec] sm:$0xff]
  %v115 = vld [vmem:[%s0 + $0x2f4] sm:$0xff]
  %v116 = vld [vmem:[%s0 + $0x2fc] sm:$0xff]
  %v117 = vld [vmem:[%s0 + $0x304] sm:$0xff]
  %v118 = vld [vmem:[%s0 + $0x30c] sm:$0xff]
  %v119 = vld [vmem:[%s0 + $0x314] sm:$0xff]
  %v120 = vld [vmem:[%s0 + $0x31c] sm:$0xf]
  %v121 = vld [vmem:[%s0 + $0x320] sm:$0xff]
  %v122 = vld [vmem:[%s0 + $0x328] sm:$0xff]
  %v123 = vld [vmem:[%s0 + $0x330] sm:$0xff]
  %v124 = vld [vmem:[%s0 + $0x338] sm:$0xff]
  %v125 = vld [vmem:[%s0 + $0x340] sm:$0xff]
  %v126 = vld [vmem:[%s0 + $0x348] sm:$0xff]
  %v127 = vld [vmem:[%s0 + $0x350] sm:$0xff]
  %v128 = vld [vmem:[%s0 + $0x358] sm:$0xff]
  %v129 = vld [vmem:[%s0 + $0x360] sm:$0xff]
  %v130 = vld [vmem:[%s0 + $0x368] sm:$0xff]
  %v131 = vld [vmem:[%s0 + $0x370] sm:$0xff]
  %v132 = vld [vmem:[%s0 + $0x378] sm:$0xff]
  %v133 = vld [vmem:[%s0 + $0x380] sm:$0xf]
  %v134 = vld [vmem:[%s0 + $0x384] sm:$0xff]
  %v135 = vld [vmem:[%s0 + $0x38c] sm:$0xff]
  %v136 = vld [vmem:[%s0 + $0x394] sm:$0xff]
  %v137 = vld [vmem:[%s0 + $0x39c] sm:$0xff]
  %v138 = vld [vmem:[%s0 + $0x3a4] sm:$0xff]
  %v139 = vld [vmem:[%s0 + $0x3ac] sm:$0xff]
  %v140 = vld [vmem:[%s0 + $0x3b4] sm:$0xff]
  %v141 = vld [vmem:[%s0 + $0x3bc] sm:$0xff]
  %v142 = vld [vmem:[%s0 + $0x3c4] sm:$0xff]
  %v143 = vld [vmem:[%s0 + $0x3cc] sm:$0xff]
  %v144 = vld [vmem:[%s0 + $0x3d4] sm:$0xff]
  %v145 = vld [vmem:[%s0 + $0x3dc] sm:$0xff]
  %v146 = vld [vmem:[%s0 + $0x3e4] sm:$0xf]
  %v147 = vld [vmem:[%s0 + $0x3e8] sm:$0xff]
  %v148 = vld [vmem:[%s0 + $0x3f0] sm:$0xff]
  %v149 = vld [vmem:[%s0 + $0x3f8] sm:$0xff]
  %v150 = vld [vmem:[%s0 + $0x400] sm:$0xff]
  %v151 = vld [vmem:[%s0 + $0x408] sm:$0xff]
  %v152 = vld [vmem:[%s0 + $0x410] sm:$0xff]
  %v153 = vld [vmem:[%s0 + $0x418] sm:$0xff]
  %v154 = vld [vmem:[%s0 + $0x420] sm:$0xff]
  %v155 = vld [vmem:[%s0 + $0x428] sm:$0xff]
  %v156 = vld [vmem:[%s0 + $0x430] sm:$0xff]
  %v157 = vld [vmem:[%s0 + $0x438] sm:$0xff]
  %v158 = vld [vmem:[%s0 + $0x440] sm:$0xff]
  %v159 = vld [vmem:[%s0 + $0x448] sm:$0xf]
  %v160 = vld [vmem:[%s0 + $0x44c] sm:$0xff]
  %v161 = vld [vmem:[%s0 + $0x454] sm:$0xff]
  %v162 = vld [vmem:[%s0 + $0x45c] sm:$0xff]
  %v163 = vld [vmem:[%s0 + $0x464] sm:$0xff]
  %v164 = vld [vmem:[%s0 + $0x46c] sm:$0xff]
  %v165 = vld [vmem:[%s0 + $0x474] sm:$0xff]
  %v166 = vld [vmem:[%s0 + $0x47c] sm:$0xff]
  %v167 = vld [vmem:[%s0 + $0x484] sm:$0xff]
  %v168 = vld [vmem:[%s0 + $0x48c] sm:$0xff]
  %v169 = vld [vmem:[%s0 + $0x494] sm:$0xff]
  %v170 = vld [vmem:[%s0 + $0x49c] sm:$0xff]
  %v171 = vld [vmem:[%s0 + $0x4a4] sm:$0xff]
  %v172 = vld [vmem:[%s0 + $0x4ac] sm:$0xf]
  %v173 = vld [vmem:[%s0 + $0x4b0] sm:$0xff]
  %v174 = vld [vmem:[%s0 + $0x4b8] sm:$0xff]
  %v175 = vld [vmem:[%s0 + $0x4c0] sm:$0xff]
  %v176 = vld [vmem:[%s0 + $0x4c8] sm:$0xff]
  %v177 = vld [vmem:[%s0 + $0x4d0] sm:$0xff]
  %v178 = vld [vmem:[%s0 + $0x4d8] sm:$0xff]
  %v179 = vld [vmem:[%s0 + $0x4e0] sm:$0xff]
  %v180 = vld [vmem:[%s0 + $0x4e8] sm:$0xff]
  %v181 = vld [vmem:[%s0 + $0x4f0] sm:$0xff]
  %v182 = vld [vmem:[%s0 + $0x4f8] sm:$0xff]
  %v183 = vld [vmem:[%s0 + $0x500] sm:$0xff]
  %v184 = vld [vmem:[%s0 + $0x508] sm:$0xff]
  %v185 = vld [vmem:[%s0 + $0x510] sm:$0xf]
  %v186 = vld [vmem:[%s0 + $0x514] sm:$0xff]
  %v187 = vld [vmem:[%s0 + $0x51c] sm:$0xff]
  %v188 = vld [vmem:[%s0 + $0x524] sm:$0xff]
  %v189 = vld [vmem:[%s0 + $0x52c] sm:$0xff]
  %v190 = vld [vmem:[%s0 + $0x534] sm:$0xff]
  %v191 = vld [vmem:[%s0 + $0x53c] sm:$0xff]
  %v192 = vld [vmem:[%s0 + $0x544] sm:$0xff]
  %v193 = vld [vmem:[%s0 + $0x54c] sm:$0xff]
  %v194 = vld [vmem:[%s0 + $0x554] sm:$0xff]
  %v195 = vld [vmem:[%s0 + $0x55c] sm:$0xff]
  %v196 = vld [vmem:[%s0 + $0x564] sm:$0xff]
  %v197 = vld [vmem:[%s0 + $0x56c] sm:$0xff]
  %v198 = vld [vmem:[%s0 + $0x574] sm:$0xf]
  %v199 = vld [vmem:[%s0 + $0x578] sm:$0xff]
  %v200 = vld [vmem:[%s0 + $0x580] sm:$0xff]
  %v201 = vld [vmem:[%s0 + $0x588] sm:$0xff]
  %v202 = vld [vmem:[%s0 + $0x590] sm:$0xff]
  %v203 = vld [vmem:[%s0 + $0x598] sm:$0xff]
  %v204 = vld [vmem:[%s0 + $0x5a0] sm:$0xff]
  %v205 = vld [vmem:[%s0 + $0x5a8] sm:$0xff]
  %v206 = vld [vmem:[%s0 + $0x5b0] sm:$0xff]
  %v207 = vld [vmem:[%s0 + $0x5b8] sm:$0xff]
  %v208 = vld [vmem:[%s0 + $0x5c0] sm:$0xff]
  %v209 = vld [vmem:[%s0 + $0x5c8] sm:$0xff]
  %v210 = vld [vmem:[%s0 + $0x5d0] sm:$0xff]
  %v211 = vld [vmem:[%s0 + $0x5d8] sm:$0xf]
  %v212 = vld [vmem:[%s0 + $0x5dc] sm:$0xff]
  %v213 = vld [vmem:[%s0 + $0x5e4] sm:$0xff]
  %v214 = vld [vmem:[%s0 + $0x5ec] sm:$0xff]
  %v215 = vld [vmem:[%s0 + $0x5f4] sm:$0xff]
  %v216 = vld [vmem:[%s0 + $0x5fc] sm:$0xff]
  %v217 = vld [vmem:[%s0 + $0x604] sm:$0xff]
  %v218 = vld [vmem:[%s0 + $0x60c] sm:$0xff]
  %v219 = vld [vmem:[%s0 + $0x614] sm:$0xff]
  %v220 = vld [vmem:[%s0 + $0x61c] sm:$0xff]
  %v221 = vld [vmem:[%s0 + $0x624] sm:$0xff]
  %v222 = vld [vmem:[%s0 + $0x62c] sm:$0xff]
  %v223 = vld [vmem:[%s0 + $0x634] sm:$0xff]
  %v224 = vld [vmem:[%s0 + $0x63c] sm:$0xf]
  %v225 = vld [vmem:[%s1] sm:$0xf]
  %v226 = vld [vmem:[%s1 + $0x4] sm:$0xf]
  %v227 = vld [vmem:[%s1 + $0x8] sm:$0xf]
  %v228 = vld [vmem:[%s1 + $0xc] sm:$0xf]
  %v229 = vld [vmem:[%s1 + $0x10] sm:$0xf]
  %v230 = vld [vmem:[%s1 + $0x14] sm:$0xf]
  %v231 = vld [vmem:[%s1 + $0x18] sm:$0xf]
  %v232 = vld [vmem:[%s1 + $0x1c] sm:$0xf]
  %v233 = vld [vmem:[%s1 + $0x20] sm:$0xf]
  %v234 = vld [vmem:[%s1 + $0x24] sm:$0xf]
  %v235 = vld [vmem:[%s1 + $0x28] sm:$0xf]
  %v236 = vld [vmem:[%s1 + $0x2c] sm:$0xf]
  %v237 = vld [vmem:[%s1 + $0x30] sm:$0xf]
  %v238 = vld [vmem:[%s1 + $0x34] sm:$0xf]
  %v239 = vld [vmem:[%s1 + $0x38] sm:$0xf]
  %v240 = vld [vmem:[%s1 + $0x3c] sm:$0xf]
  %v241 = vld [vmem:[%s1 + $0x40] sm:$0xf]
  %v242 = vld [vmem:[%s1 + $0x44] sm:$0xf]
  %v243 = vld [vmem:[%s1 + $0x48] sm:$0xf]
  %v244 = vld [vmem:[%s1 + $0x4c] sm:$0xf]
  %v245 = vld [vmem:[%s1 + $0x50] sm:$0xf]
  %v246 = vld [vmem:[%s1 + $0x54] sm:$0xf]
  %v247 = vld [vmem:[%s1 + $0x58] sm:$0xf]
  %v248 = vld [vmem:[%s1 + $0x5c] sm:$0xf]
  %v249 = vld [vmem:[%s1 + $0x60] sm:$0xf]
  %v250 = vld [vmem:[%s1 + $0x64] sm:$0xf]
  %v251 = vld [vmem:[%s1 + $0x68] sm:$0xf]
  %v252 = vld [vmem:[%s1 + $0x6c] sm:$0xf]
  %v253 = vld [vmem:[%s1 + $0x70] sm:$0xf]
  %v254 = vld [vmem:[%s1 + $0x74] sm:$0xf]
  %v255 = vld [vmem:[%s1 + $0x78] sm:$0xf]
  %v256 = vld [vmem:[%s1 + $0x7c] sm:$0xf]
  %v257 = vld [vmem:[%s1 + $0x80] sm:$0xf]
  %v258 = vld [vmem:[%s1 + $0x84] sm:$0xf]
  %v259 = vld [vmem:[%s1 + $0x88] sm:$0xf]
  %v260 = vld [vmem:[%s1 + $0x8c] sm:$0xf]
  %v261 = vld [vmem:[%s1 + $0x90] sm:$0xf]
  %v262 = vld [vmem:[%s1 + $0x94] sm:$0xf]
  %v263 = vld [vmem:[%s1 + $0x98] sm:$0xf]
  %v264 = vld [vmem:[%s1 + $0x9c] sm:$0xf]
  %v265 = vld [vmem:[%s1 + $0xa0] sm:$0xf]
  %v266 = vld [vmem:[%s1 + $0xa4] sm:$0xf]
  %v267 = vld [vmem:[%s1 + $0xa8] sm:$0xf]
  %v268 = vld [vmem:[%s1 + $0xac] sm:$0xf]
  %v269 = vld [vmem:[%s1 + $0xb0] sm:$0xf]
  %v270 = vld [vmem:[%s1 + $0xb4] sm:$0xf]
  %v271 = vld [vmem:[%s1 + $0xb8] sm:$0xf]
  %v272 = vld [vmem:[%s1 + $0xbc] sm:$0xf]
  %v273 = vld [vmem:[%s1 + $0xc0] sm:$0xf]
  %v274 = vld [vmem:[%s1 + $0xc4] sm:$0xf]
  %v275 = vld [vmem:[%s1 + $0xc8] sm:$0xf]
  %v276 = vld [vmem:[%s1 + $0xcc] sm:$0xf]
  %v277 = vld [vmem:[%s1 + $0xd0] sm:$0xf]
  %v278 = vld [vmem:[%s1 + $0xd4] sm:$0xf]
  %v279 = vld [vmem:[%s1 + $0xd8] sm:$0xf]
  %v280 = vld [vmem:[%s1 + $0xdc] sm:$0xf]
  %v281 = vld [vmem:[%s1 + $0xe0] sm:$0xf]
  %v282 = vld [vmem:[%s1 + $0xe4] sm:$0xf]
  %v283 = vld [vmem:[%s1 + $0xe8] sm:$0xf]
  %v284 = vld [vmem:[%s1 + $0xec] sm:$0xf]
  %v285 = vld [vmem:[%s1 + $0xf0] sm:$0xf]
  %v286 = vld [vmem:[%s1 + $0xf4] sm:$0xf]
  %v287 = vld [vmem:[%s1 + $0xf8] sm:$0xf]
  %v288 = vld [vmem:[%s1 + $0xfc] sm:$0xf]
  %v289 = vld [vmem:[%s1 + $0x100] sm:$0xf]
  %v290 = vld [vmem:[%s1 + $0x104] sm:$0xf]
  %v291 = vld [vmem:[%s1 + $0x108] sm:$0xf]
  %v292 = vld [vmem:[%s1 + $0x10c] sm:$0xf]
  %v293 = vld [vmem:[%s1 + $0x110] sm:$0xf]
  %v294 = vld [vmem:[%s1 + $0x114] sm:$0xf]
  %v295 = vld [vmem:[%s1 + $0x118] sm:$0xf]
  %v296 = vld [vmem:[%s1 + $0x11c] sm:$0xf]
  %v297 = vld [vmem:[%s1 + $0x120] sm:$0xf]
  %v298 = vld [vmem:[%s1 + $0x124] sm:$0xf]
  %v299 = vld [vmem:[%s1 + $0x128] sm:$0xf]
  %v300 = vld [vmem:[%s1 + $0x12c] sm:$0xf]
  %v301 = vld [vmem:[%s1 + $0x130] sm:$0xf]
  %v302 = vld [vmem:[%s1 + $0x134] sm:$0xf]
  %v303 = vld [vmem:[%s1 + $0x138] sm:$0xf]
  %v304 = vld [vmem:[%s1 + $0x13c] sm:$0xf]
  %v305 = vld [vmem:[%s1 + $0x140] sm:$0xf]
  %v306 = vld [vmem:[%s1 + $0x144] sm:$0xf]
  %v307 = vld [vmem:[%s1 + $0x148] sm:$0xf]
  %v308 = vld [vmem:[%s1 + $0x14c] sm:$0xf]
  %v309 = vld [vmem:[%s1 + $0x150] sm:$0xf]
  %v310 = vld [vmem:[%s1 + $0x154] sm:$0xf]
  %v311 = vld [vmem:[%s1 + $0x158] sm:$0xf]
  %v312 = vld [vmem:[%s1 + $0x15c] sm:$0xf]
  %v313 = vld [vmem:[%s1 + $0x160] sm:$0xf]
  %v314 = vld [vmem:[%s1 + $0x164] sm:$0xf]
  %v315 = vld [vmem:[%s1 + $0x168] sm:$0xf]
  %v316 = vld [vmem:[%s1 + $0x16c] sm:$0xf]
  %v317 = vld [vmem:[%s1 + $0x170] sm:$0xf]
  %v318 = vld [vmem:[%s1 + $0x174] sm:$0xf]
  %v319 = vld [vmem:[%s1 + $0x178] sm:$0xf]
  %v320 = vld [vmem:[%s1 + $0x17c] sm:$0xf]
  %v321 = vld [vmem:[%s1 + $0x180] sm:$0xf]
  %v322 = vld [vmem:[%s1 + $0x184] sm:$0xf]
  %v323 = vld [vmem:[%s1 + $0x188] sm:$0xf]
  %v324 = vld [vmem:[%s1 + $0x18c] sm:$0xf]
  %v325 = vld [vmem:[%s1 + $0x190] sm:$0xf]
  %v326 = vld [vmem:[%s1 + $0x194] sm:$0xf]
  %v327 = vld [vmem:[%s1 + $0x198] sm:$0xf]
  %v328 = vld [vmem:[%s1 + $0x19c] sm:$0xf]
  %v329 = vld [vmem:[%s1 + $0x1a0] sm:$0xf]
  %v330 = vld [vmem:[%s1 + $0x1a4] sm:$0xf]
  %v331 = vld [vmem:[%s1 + $0x1a8] sm:$0xf]
  %v332 = vld [vmem:[%s1 + $0x1ac] sm:$0xf]
  %v333 = vld [vmem:[%s1 + $0x1b0] sm:$0xf]
  %v334 = vld [vmem:[%s1 + $0x1b4] sm:$0xf]
  %v335 = vld [vmem:[%s1 + $0x1b8] sm:$0xf]
  %v336 = vld [vmem:[%s1 + $0x1bc] sm:$0xf]
  %v337 = vld [vmem:[%s1 + $0x1c0] sm:$0xf]
  %v338 = vld [vmem:[%s1 + $0x1c4] sm:$0xf]
  %v339 = vld [vmem:[%s1 + $0x1c8] sm:$0xf]
  %v340 = vld [vmem:[%s1 + $0x1cc] sm:$0xf]
  %v341 = vld [vmem:[%s1 + $0x1d0] sm:$0xf]
  %v342 = vld [vmem:[%s1 + $0x1d4] sm:$0xf]
  %v343 = vld [vmem:[%s1 + $0x1d8] sm:$0xf]
  %v344 = vld [vmem:[%s1 + $0x1dc] sm:$0xf]
  %v345 = vld [vmem:[%s1 + $0x1e0] sm:$0xf]
  %v346 = vld [vmem:[%s1 + $0x1e4] sm:$0xf]
  %v347 = vld [vmem:[%s1 + $0x1e8] sm:$0xf]
  %v348 = vld [vmem:[%s1 + $0x1ec] sm:$0xf]
  %v349 = vld [vmem:[%s1 + $0x1f0] sm:$0xf]
  %v350 = vld [vmem:[%s1 + $0x1f4] sm:$0xf]
  %v351 = vld [vmem:[%s1 + $0x1f8] sm:$0xf]
  %v352 = vld [vmem:[%s1 + $0x1fc] sm:$0xf]
  %v353 = vld [vmem:[%s1 + $0x200] sm:$0xf]
  %v354 = vld [vmem:[%s1 + $0x204] sm:$0xf]
  %v355 = vld [vmem:[%s1 + $0x208] sm:$0xf]
  %v356 = vld [vmem:[%s1 + $0x20c] sm:$0xf]
  %v357 = vld [vmem:[%s1 + $0x210] sm:$0xf]
  %v358 = vld [vmem:[%s1 + $0x214] sm:$0xf]
  %v359 = vld [vmem:[%s1 + $0x218] sm:$0xf]
  %v360 = vld [vmem:[%s1 + $0x21c] sm:$0xf]
  %v361 = vld [vmem:[%s1 + $0x220] sm:$0xf]
  %v362 = vld [vmem:[%s1 + $0x224] sm:$0xf]
  %v363 = vld [vmem:[%s1 + $0x228] sm:$0xf]
  %v364 = vld [vmem:[%s1 + $0x22c] sm:$0xf]
  %v365 = vld [vmem:[%s1 + $0x230] sm:$0xf]
  %v366 = vld [vmem:[%s1 + $0x234] sm:$0xf]
  %v367 = vld [vmem:[%s1 + $0x238] sm:$0xf]
  %v368 = vld [vmem:[%s1 + $0x23c] sm:$0xf]
  %v369 = vld [vmem:[%s1 + $0x240] sm:$0xf]
  %v370 = vld [vmem:[%s1 + $0x244] sm:$0xf]
  %v371 = vld [vmem:[%s1 + $0x248] sm:$0xf]
  %v372 = vld [vmem:[%s1 + $0x24c] sm:$0xf]
  %v373 = vld [vmem:[%s1 + $0x250] sm:$0xf]
  %v374 = vld [vmem:[%s1 + $0x254] sm:$0xf]
  %v375 = vld [vmem:[%s1 + $0x258] sm:$0xf]
  %v376 = vld [vmem:[%s1 + $0x25c] sm:$0xf]
  %v377 = vld [vmem:[%s1 + $0x260] sm:$0xf]
  %v378 = vld [vmem:[%s1 + $0x264] sm:$0xf]
  %v379 = vld [vmem:[%s1 + $0x268] sm:$0xf]
  %v380 = vld [vmem:[%s1 + $0x26c] sm:$0xf]
  %v381 = vld [vmem:[%s1 + $0x270] sm:$0xf]
  %v382 = vld [vmem:[%s1 + $0x274] sm:$0xf]
  %v383 = vld [vmem:[%s1 + $0x278] sm:$0xf]
  %v384 = vld [vmem:[%s1 + $0x27c] sm:$0xf]
  %v385 = vld [vmem:[%s1 + $0x280] sm:$0xf]
  %v386 = vld [vmem:[%s1 + $0x284] sm:$0xf]
  %v387 = vld [vmem:[%s1 + $0x288] sm:$0xf]
  %v388 = vld [vmem:[%s1 + $0x28c] sm:$0xf]
  %v389 = vld [vmem:[%s1 + $0x290] sm:$0xf]
  %v390 = vld [vmem:[%s1 + $0x294] sm:$0xf]
  %v391 = vld [vmem:[%s1 + $0x298] sm:$0xf]
  %v392 = vld [vmem:[%s1 + $0x29c] sm:$0xf]
  %v393 = vld [vmem:[%s1 + $0x2a0] sm:$0xf]
  %v394 = vld [vmem:[%s1 + $0x2a4] sm:$0xf]
  %v395 = vld [vmem:[%s1 + $0x2a8] sm:$0xf]
  %v396 = vld [vmem:[%s1 + $0x2ac] sm:$0xf]
  %v397 = vld [vmem:[%s1 + $0x2b0] sm:$0xf]
  %v398 = vld [vmem:[%s1 + $0x2b4] sm:$0xf]
  %v399 = vld [vmem:[%s1 + $0x2b8] sm:$0xf]
  %v400 = vld [vmem:[%s1 + $0x2bc] sm:$0xf]
  %v401 = vld [vmem:[%s1 + $0x2c0] sm:$0xf]
  %v402 = vld [vmem:[%s1 + $0x2c4] sm:$0xf]
  %v403 = vld [vmem:[%s1 + $0x2c8] sm:$0xf]
  %v404 = vld [vmem:[%s1 + $0x2cc] sm:$0xf]
  %v405 = vld [vmem:[%s1 + $0x2d0] sm:$0xf]
  %v406 = vld [vmem:[%s1 + $0x2d4] sm:$0xf]
  %v407 = vld [vmem:[%s1 + $0x2d8] sm:$0xf]
  %v408 = vld [vmem:[%s1 + $0x2dc] sm:$0xf]
  %v409 = vld [vmem:[%s1 + $0x2e0] sm:$0xf]
  %v410 = vld [vmem:[%s1 + $0x2e4] sm:$0xf]
  %v411 = vld [vmem:[%s1 + $0x2e8] sm:$0xf]
  %v412 = vld [vmem:[%s1 + $0x2ec] sm:$0xf]
  %v413 = vld [vmem:[%s1 + $0x2f0] sm:$0xf]
  %v414 = vld [vmem:[%s1 + $0x2f4] sm:$0xf]
  %v415 = vld [vmem:[%s1 + $0x2f8] sm:$0xf]
  %v416 = vld [vmem:[%s1 + $0x2fc] sm:$0xf]
  %v417 = vld [vmem:[%s1 + $0x300] sm:$0xf]
  %v418 = vld [vmem:[%s1 + $0x304] sm:$0xf]
  %v419 = vld [vmem:[%s1 + $0x308] sm:$0xf]
  %v420 = vld [vmem:[%s1 + $0x30c] sm:$0xf]
  %v421 = vld [vmem:[%s1 + $0x310] sm:$0xf]
  %v422 = vld [vmem:[%s1 + $0x314] sm:$0xf]
  %v423 = vld [vmem:[%s1 + $0x318] sm:$0xf]
  %v424 = vld [vmem:[%s1 + $0x31c] sm:$0xf]
  %v425 = vld [vmem:[%s1 + $0x320] sm:$0xf]
  %v426 = vld [vmem:[%s1 + $0x324] sm:$0xf]
  %v427 = vld [vmem:[%s1 + $0x328] sm:$0xf]
  %v428 = vld [vmem:[%s1 + $0x32c] sm:$0xf]
  %v429 = vld [vmem:[%s1 + $0x330] sm:$0xf]
  %v430 = vld [vmem:[%s1 + $0x334] sm:$0xf]
  %v431 = vld [vmem:[%s1 + $0x338] sm:$0xf]
  %v432 = vld [vmem:[%s1 + $0x33c] sm:$0xf]
  %v433 = vld [vmem:[%s1 + $0x340] sm:$0xf]
  %v434 = vld [vmem:[%s1 + $0x344] sm:$0xf]
  %v435 = vld [vmem:[%s1 + $0x348] sm:$0xf]
  %v436 = vld [vmem:[%s1 + $0x34c] sm:$0xf]
  %v437 = vld [vmem:[%s1 + $0x350] sm:$0xf]
  %v438 = vld [vmem:[%s1 + $0x354] sm:$0xf]
  %v439 = vld [vmem:[%s1 + $0x358] sm:$0xf]
  %v440 = vld [vmem:[%s1 + $0x35c] sm:$0xf]
  %v441 = vld [vmem:[%s1 + $0x360] sm:$0xf]
  %v442 = vld [vmem:[%s1 + $0x364] sm:$0xf]
  %v443 = vld [vmem:[%s1 + $0x368] sm:$0xf]
  %v444 = vld [vmem:[%s1 + $0x36c] sm:$0xf]
  %v445 = vld [vmem:[%s1 + $0x370] sm:$0xf]
  %v446 = vld [vmem:[%s1 + $0x374] sm:$0xf]
  %v447 = vld [vmem:[%s1 + $0x378] sm:$0xf]
  %v448 = vld [vmem:[%s1 + $0x37c] sm:$0xf]
  %v449 = vld [vmem:[%s1 + $0x380] sm:$0xf]
  %v450 = vld [vmem:[%s1 + $0x384] sm:$0xf]
  %v451 = vld [vmem:[%s1 + $0x388] sm:$0xf]
  %v452 = vld [vmem:[%s1 + $0x38c] sm:$0xf]
  %v453 = vld [vmem:[%s1 + $0x390] sm:$0xf]
  %v454 = vld [vmem:[%s1 + $0x394] sm:$0xf]
  %v455 = vld [vmem:[%s1 + $0x398] sm:$0xf]
  %v456 = vld [vmem:[%s1 + $0x39c] sm:$0xf]
  %v457 = vld [vmem:[%s1 + $0x3a0] sm:$0xf]
  %v458 = vld [vmem:[%s1 + $0x3a4] sm:$0xf]
  %v459 = vld [vmem:[%s1 + $0x3a8] sm:$0xf]
  %v460 = vld [vmem:[%s1 + $0x3ac] sm:$0xf]
  %v461 = vld [vmem:[%s1 + $0x3b0] sm:$0xf]
  %v462 = vld [vmem:[%s1 + $0x3b4] sm:$0xf]
  %v463 = vld [vmem:[%s1 + $0x3b8] sm:$0xf]
  %v464 = vld [vmem:[%s1 + $0x3bc] sm:$0xf]
  %v465 = vld [vmem:[%s1 + $0x3c0] sm:$0xf]
  %v466 = vld [vmem:[%s1 + $0x3c4] sm:$0xf]
  %v467 = vld [vmem:[%s1 + $0x3c8] sm:$0xf]
  %v468 = vld [vmem:[%s1 + $0x3cc] sm:$0xf]
  %v469 = vld [vmem:[%s1 + $0x3d0] sm:$0xf]
  %v470 = vld [vmem:[%s1 + $0x3d4] sm:$0xf]
  %v471 = vld [vmem:[%s1 + $0x3d8] sm:$0xf]
  %v472 = vld [vmem:[%s1 + $0x3dc] sm:$0xf]
  %v473 = vld [vmem:[%s1 + $0x3e0] sm:$0xf]
  %v474 = vld [vmem:[%s1 + $0x3e4] sm:$0xf]
  %v475 = vld [vmem:[%s1 + $0x3e8] sm:$0xf]
  %v476 = vld [vmem:[%s1 + $0x3ec] sm:$0xf]
  %v477 = vld [vmem:[%s1 + $0x3f0] sm:$0xf]
  %v478 = vld [vmem:[%s1 + $0x3f4] sm:$0xf]
  %v479 = vld [vmem:[%s1 + $0x3f8] sm:$0xf]
  %v480 = vld [vmem:[%s1 + $0x3fc] sm:$0xf]
  %v481 = vld [vmem:[%s1 + $0x400] sm:$0xf]
  %v482 = vld [vmem:[%s1 + $0x404] sm:$0xf]
  %v483 = vld [vmem:[%s1 + $0x408] sm:$0xf]
  %v484 = vld [vmem:[%s1 + $0x40c] sm:$0xf]
  %v485 = vld [vmem:[%s1 + $0x410] sm:$0xf]
  %v486 = vld [vmem:[%s1 + $0x414] sm:$0xf]
  %v487 = vld [vmem:[%s1 + $0x418] sm:$0xf]
  %v488 = vld [vmem:[%s1 + $0x41c] sm:$0xf]
  %v489 = vld [vmem:[%s1 + $0x420] sm:$0xf]
  %v490 = vld [vmem:[%s1 + $0x424] sm:$0xf]
  %v491 = vld [vmem:[%s1 + $0x428] sm:$0xf]
  %v492 = vld [vmem:[%s1 + $0x42c] sm:$0xf]
  %v493 = vld [vmem:[%s1 + $0x430] sm:$0xf]
  %v494 = vld [vmem:[%s1 + $0x434] sm:$0xf]
  %v495 = vld [vmem:[%s1 + $0x438] sm:$0xf]
  %v496 = vld [vmem:[%s1 + $0x43c] sm:$0xf]
  %v497 = vld [vmem:[%s1 + $0x440] sm:$0xf]
  %v498 = vld [vmem:[%s1 + $0x444] sm:$0xf]
  %v499 = vld [vmem:[%s1 + $0x448] sm:$0xf]
  %v500 = vld [vmem:[%s1 + $0x44c] sm:$0xf]
  %v501 = vld [vmem:[%s1 + $0x450] sm:$0xf]
  %v502 = vld [vmem:[%s1 + $0x454] sm:$0xf]
  %v503 = vld [vmem:[%s1 + $0x458] sm:$0xf]
  %v504 = vld [vmem:[%s1 + $0x45c] sm:$0xf]
  %v505 = vld [vmem:[%s1 + $0x460] sm:$0xf]
  %v506 = vld [vmem:[%s1 + $0x464] sm:$0xf]
  %v507 = vld [vmem:[%s1 + $0x468] sm:$0xf]
  %v508 = vld [vmem:[%s1 + $0x46c] sm:$0xf]
  %v509 = vld [vmem:[%s1 + $0x470] sm:$0xf]
  %v510 = vld [vmem:[%s1 + $0x474] sm:$0xf]
  %v511 = vld [vmem:[%s1 + $0x478] sm:$0xf]
  %v512 = vld [vmem:[%s1 + $0x47c] sm:$0xf]
  %v513 = vld [vmem:[%s1 + $0x480] sm:$0xf]
  %v514 = vld [vmem:[%s1 + $0x484] sm:$0xf]
  %v515 = vld [vmem:[%s1 + $0x488] sm:$0xf]
  %v516 = vld [vmem:[%s1 + $0x48c] sm:$0xf]
  %v517 = vld [vmem:[%s1 + $0x490] sm:$0xf]
  %v518 = vld [vmem:[%s1 + $0x494] sm:$0xf]
  %v519 = vld [vmem:[%s1 + $0x498] sm:$0xf]
  %v520 = vld [vmem:[%s1 + $0x49c] sm:$0xf]
  %v521 = vld [vmem:[%s1 + $0x4a0] sm:$0xf]
  %v522 = vld [vmem:[%s1 + $0x4a4] sm:$0xf]
  %v523 = vld [vmem:[%s1 + $0x4a8] sm:$0xf]
  %v524 = vld [vmem:[%s1 + $0x4ac] sm:$0xf]
  %v525 = vld [vmem:[%s1 + $0x4b0] sm:$0xf]
  %v526 = vld [vmem:[%s1 + $0x4b4] sm:$0xf]
  %v527 = vld [vmem:[%s1 + $0x4b8] sm:$0xf]
  %v528 = vld [vmem:[%s1 + $0x4bc] sm:$0xf]
  %v529 = vld [vmem:[%s1 + $0x4c0] sm:$0xf]
  %v530 = vld [vmem:[%s1 + $0x4c4] sm:$0xf]
  %v531 = vld [vmem:[%s1 + $0x4c8] sm:$0xf]
  %v532 = vld [vmem:[%s1 + $0x4cc] sm:$0xf]
  %v533 = vld [vmem:[%s1 + $0x4d0] sm:$0xf]
  %v534 = vld [vmem:[%s1 + $0x4d4] sm:$0xf]
  %v535 = vld [vmem:[%s1 + $0x4d8] sm:$0xf]
  %v536 = vld [vmem:[%s1 + $0x4dc] sm:$0xf]
  %v537 = vld [vmem:[%s1 + $0x4e0] sm:$0xf]
  %v538 = vld [vmem:[%s1 + $0x4e4] sm:$0xf]
  %v539 = vld [vmem:[%s1 + $0x4e8] sm:$0xf]
  %v540 = vld [vmem:[%s1 + $0x4ec] sm:$0xf]
  %v541 = vld [vmem:[%s1 + $0x4f0] sm:$0xf]
  %v542 = vld [vmem:[%s1 + $0x4f4] sm:$0xf]
  %v543 = vld [vmem:[%s1 + $0x4f8] sm:$0xf]
  %v544 = vld [vmem:[%s1 + $0x4fc] sm:$0xf]
  %v545 = vld [vmem:[%s1 + $0x500] sm:$0xf]
  %v546 = vld [vmem:[%s1 + $0x504] sm:$0xf]
  %v547 = vld [vmem:[%s1 + $0x508] sm:$0xf]
  %v548 = vld [vmem:[%s1 + $0x50c] sm:$0xf]
  %v549 = vld [vmem:[%s1 + $0x510] sm:$0xf]
  %v550 = vld [vmem:[%s1 + $0x514] sm:$0xf]
  %v551 = vld [vmem:[%s1 + $0x518] sm:$0xf]
  %v552 = vld [vmem:[%s1 + $0x51c] sm:$0xf]
  %v553 = vld [vmem:[%s1 + $0x520] sm:$0xf]
  %v554 = vld [vmem:[%s1 + $0x524] sm:$0xf]
  %v555 = vld [vmem:[%s1 + $0x528] sm:$0xf]
  %v556 = vld [vmem:[%s1 + $0x52c] sm:$0xf]
  %v557 = vld [vmem:[%s1 + $0x530] sm:$0xf]
  %v558 = vld [vmem:[%s1 + $0x534] sm:$0xf]
  %v559 = vld [vmem:[%s1 + $0x538] sm:$0xf]
  %v560 = vld [vmem:[%s1 + $0x53c] sm:$0xf]
  %v561 = vld [vmem:[%s1 + $0x540] sm:$0xf]
  %v562 = vld [vmem:[%s1 + $0x544] sm:$0xf]
  %v563 = vld [vmem:[%s1 + $0x548] sm:$0xf]
  %v564 = vld [vmem:[%s1 + $0x54c] sm:$0xf]
  %v565 = vld [vmem:[%s1 + $0x550] sm:$0xf]
  %v566 = vld [vmem:[%s1 + $0x554] sm:$0xf]
  %v567 = vld [vmem:[%s1 + $0x558] sm:$0xf]
  %v568 = vld [vmem:[%s1 + $0x55c] sm:$0xf]
  %v569 = vld [vmem:[%s1 + $0x560] sm:$0xf]
  %v570 = vld [vmem:[%s1 + $0x564] sm:$0xf]
  %v571 = vld [vmem:[%s1 + $0x568] sm:$0xf]
  %v572 = vld [vmem:[%s1 + $0x56c] sm:$0xf]
  %v573 = vld [vmem:[%s1 + $0x570] sm:$0xf]
  %v574 = vld [vmem:[%s1 + $0x574] sm:$0xf]
  %v575 = vld [vmem:[%s1 + $0x578] sm:$0xf]
  %v576 = vld [vmem:[%s1 + $0x57c] sm:$0xf]
  %v577 = vld [vmem:[%s1 + $0x580] sm:$0xf]
  %v578 = vld [vmem:[%s1 + $0x584] sm:$0xf]
  %v579 = vld [vmem:[%s1 + $0x588] sm:$0xf]
  %v580 = vld [vmem:[%s1 + $0x58c] sm:$0xf]
  %v581 = vld [vmem:[%s1 + $0x590] sm:$0xf]
  %v582 = vld [vmem:[%s1 + $0x594] sm:$0xf]
  %v583 = vld [vmem:[%s1 + $0x598] sm:$0xf]
  %v584 = vld [vmem:[%s1 + $0x59c] sm:$0xf]
  %v585 = vld [vmem:[%s1 + $0x5a0] sm:$0xf]
  %v586 = vld [vmem:[%s1 + $0x5a4] sm:$0xf]
  %v587 = vld [vmem:[%s1 + $0x5a8] sm:$0xf]
  %v588 = vld [vmem:[%s1 + $0x5ac] sm:$0xf]
  %v589 = vld [vmem:[%s1 + $0x5b0] sm:$0xf]
  %v590 = vld [vmem:[%s1 + $0x5b4] sm:$0xf]
  %v591 = vld [vmem:[%s1 + $0x5b8] sm:$0xf]
  %v592 = vld [vmem:[%s1 + $0x5bc] sm:$0xf]
  %v593 = vld [vmem:[%s1 + $0x5c0] sm:$0xf]
  %v594 = vld [vmem:[%s1 + $0x5c4] sm:$0xf]
  %v595 = vld [vmem:[%s1 + $0x5c8] sm:$0xf]
  %v596 = vld [vmem:[%s1 + $0x5cc] sm:$0xf]
  %v597 = vld [vmem:[%s1 + $0x5d0] sm:$0xf]
  %v598 = vld [vmem:[%s1 + $0x5d4] sm:$0xf]
  %v599 = vld [vmem:[%s1 + $0x5d8] sm:$0xf]
  %v600 = vld [vmem:[%s1 + $0x5dc] sm:$0xf]
  %v601 = vld [vmem:[%s1 + $0x5e0] sm:$0xf]
  %v602 = vld [vmem:[%s1 + $0x5e4] sm:$0xf]
  %v603 = vld [vmem:[%s1 + $0x5e8] sm:$0xf]
  %v604 = vld [vmem:[%s1 + $0x5ec] sm:$0xf]
  %v605 = vld [vmem:[%s1 + $0x5f0] sm:$0xf]
  %v606 = vld [vmem:[%s1 + $0x5f4] sm:$0xf]
  %v607 = vld [vmem:[%s1 + $0x5f8] sm:$0xf]
  %v608 = vld [vmem:[%s1 + $0x5fc] sm:$0xf]
  %v609 = vld [vmem:[%s1 + $0x600] sm:$0xf]
  %v610 = vld [vmem:[%s1 + $0x604] sm:$0xf]
  %v611 = vld [vmem:[%s1 + $0x608] sm:$0xf]
  %v612 = vld [vmem:[%s1 + $0x60c] sm:$0xf]
  %v613 = vld [vmem:[%s1 + $0x610] sm:$0xf]
  %v614 = vld [vmem:[%s1 + $0x614] sm:$0xf]
  %v615 = vld [vmem:[%s1 + $0x618] sm:$0xf]
  %v616 = vld [vmem:[%s1 + $0x61c] sm:$0xf]
  %v617 = vld [vmem:[%s1 + $0x620] sm:$0xf]
  %v618 = vld [vmem:[%s1 + $0x624] sm:$0xf]
  %v619 = vld [vmem:[%s1 + $0x628] sm:$0xf]
  %v620 = vld [vmem:[%s1 + $0x62c] sm:$0xf]
  %v621 = vld [vmem:[%s1 + $0x630] sm:$0xf]
  %v622 = vld [vmem:[%s1 + $0x634] sm:$0xf]
  %v623 = vld [vmem:[%s1 + $0x638] sm:$0xf]
  %v624 = vld [vmem:[%s1 + $0x63c] sm:$0xf]
  %v833 = vunpack.c.l.b16 %v17
  %v834 = vunpack.c.h.b16 %v17
  %v835 = vunpack.c.l.b16 %v18
  %v836 = vunpack.c.h.b16 %v18
  %v837 = vunpack.c.l.b16 %v19
  %v838 = vunpack.c.h.b16 %v19
  %v839 = vunpack.c.l.b16 %v20
  %v840 = vunpack.c.h.b16 %v20
  %v841 = vunpack.c.l.b16 %v21
  %v842 = vunpack.c.h.b16 %v21
  %v843 = vunpack.c.l.b16 %v22
  %v844 = vunpack.c.h.b16 %v22
  %v845 = vunpack.c.l.b16 %v23
  %v846 = vunpack.c.h.b16 %v23
  %v847 = vunpack.c.l.b16 %v24
  %v848 = vunpack.c.h.b16 %v24
  %v849 = vunpack.c.l.b16 %v25
  %v850 = vunpack.c.h.b16 %v25
  %v851 = vunpack.c.l.b16 %v26
  %v852 = vunpack.c.h.b16 %v26
  %v853 = vunpack.c.l.b16 %v27
  %v854 = vunpack.c.h.b16 %v27
  %v855 = vunpack.c.l.b16 %v28
  %v856 = vunpack.c.h.b16 %v28
  %v857 = vunpack.c.l.b16 %v29
  %v858 = vunpack.c.l.b16 %v30
  %v859 = vunpack.c.h.b16 %v30
  %v860 = vunpack.c.l.b16 %v31
  %v861 = vunpack.c.h.b16 %v31
  %v862 = vunpack.c.l.b16 %v32
  %v863 = vunpack.c.h.b16 %v32
  %v864 = vunpack.c.l.b16 %v33
  %v865 = vunpack.c.h.b16 %v33
  %v866 = vunpack.c.l.b16 %v34
  %v867 = vunpack.c.h.b16 %v34
  %v868 = vunpack.c.l.b16 %v35
  %v869 = vunpack.c.h.b16 %v35
  %v870 = vunpack.c.l.b16 %v36
  %v871 = vunpack.c.h.b16 %v36
  %v872 = vunpack.c.l.b16 %v37
  %v873 = vunpack.c.h.b16 %v37
  %v874 = vunpack.c.l.b16 %v38
  %v875 = vunpack.c.h.b16 %v38
  %v876 = vunpack.c.l.b16 %v39
  %v877 = vunpack.c.h.b16 %v39
  %v878 = vunpack.c.l.b16 %v40
  %v879 = vunpack.c.h.b16 %v40
  %v880 = vunpack.c.l.b16 %v41
  %v881 = vunpack.c.h.b16 %v41
  %v882 = vunpack.c.l.b16 %v42
  %v883 = vunpack.c.l.b16 %v43
  %v884 = vunpack.c.h.b16 %v43
  %v885 = vunpack.c.l.b16 %v44
  %v886 = vunpack.c.h.b16 %v44
  %v887 = vunpack.c.l.b16 %v45
  %v888 = vunpack.c.h.b16 %v45
  %v889 = vunpack.c.l.b16 %v46
  %v890 = vunpack.c.h.b16 %v46
  %v891 = vunpack.c.l.b16 %v47
  %v892 = vunpack.c.h.b16 %v47
  %v893 = vunpack.c.l.b16 %v48
  %v894 = vunpack.c.h.b16 %v48
  %v895 = vunpack.c.l.b16 %v49
  %v896 = vunpack.c.h.b16 %v49
  %v897 = vunpack.c.l.b16 %v50
  %v898 = vunpack.c.h.b16 %v50
  %v899 = vunpack.c.l.b16 %v51
  %v900 = vunpack.c.h.b16 %v51
  %v901 = vunpack.c.l.b16 %v52
  %v902 = vunpack.c.h.b16 %v52
  %v903 = vunpack.c.l.b16 %v53
  %v904 = vunpack.c.h.b16 %v53
  %v905 = vunpack.c.l.b16 %v54
  %v906 = vunpack.c.h.b16 %v54
  %v907 = vunpack.c.l.b16 %v55
  %v908 = vunpack.c.l.b16 %v56
  %v909 = vunpack.c.h.b16 %v56
  %v910 = vunpack.c.l.b16 %v57
  %v911 = vunpack.c.h.b16 %v57
  %v912 = vunpack.c.l.b16 %v58
  %v913 = vunpack.c.h.b16 %v58
  %v914 = vunpack.c.l.b16 %v59
  %v915 = vunpack.c.h.b16 %v59
  %v916 = vunpack.c.l.b16 %v60
  %v917 = vunpack.c.h.b16 %v60
  %v918 = vunpack.c.l.b16 %v61
  %v919 = vunpack.c.h.b16 %v61
  %v920 = vunpack.c.l.b16 %v62
  %v921 = vunpack.c.h.b16 %v62
  %v922 = vunpack.c.l.b16 %v63
  %v923 = vunpack.c.h.b16 %v63
  %v924 = vunpack.c.l.b16 %v64
  %v925 = vunpack.c.h.b16 %v64
  %v926 = vunpack.c.l.b16 %v65
  %v927 = vunpack.c.h.b16 %v65
  %v928 = vunpack.c.l.b16 %v66
  %v929 = vunpack.c.h.b16 %v66
  %v930 = vunpack.c.l.b16 %v67
  %v931 = vunpack.c.h.b16 %v67
  %v932 = vunpack.c.l.b16 %v68
  %v933 = vunpack.c.l.b16 %v69
  %v934 = vunpack.c.h.b16 %v69
  %v935 = vunpack.c.l.b16 %v70
  %v936 = vunpack.c.h.b16 %v70
  %v937 = vunpack.c.l.b16 %v71
  %v938 = vunpack.c.h.b16 %v71
  %v939 = vunpack.c.l.b16 %v72
  %v940 = vunpack.c.h.b16 %v72
  %v941 = vunpack.c.l.b16 %v73
  %v942 = vunpack.c.h.b16 %v73
  %v943 = vunpack.c.l.b16 %v74
  %v944 = vunpack.c.h.b16 %v74
  %v945 = vunpack.c.l.b16 %v75
  %v946 = vunpack.c.h.b16 %v75
  %v947 = vunpack.c.l.b16 %v76
  %v948 = vunpack.c.h.b16 %v76
  %v949 = vunpack.c.l.b16 %v77
  %v950 = vunpack.c.h.b16 %v77
  %v951 = vunpack.c.l.b16 %v78
  %v952 = vunpack.c.h.b16 %v78
  %v953 = vunpack.c.l.b16 %v79
  %v954 = vunpack.c.h.b16 %v79
  %v955 = vunpack.c.l.b16 %v80
  %v956 = vunpack.c.h.b16 %v80
  %v957 = vunpack.c.l.b16 %v81
  %v958 = vunpack.c.l.b16 %v82
  %v959 = vunpack.c.h.b16 %v82
  %v960 = vunpack.c.l.b16 %v83
  %v961 = vunpack.c.h.b16 %v83
  %v962 = vunpack.c.l.b16 %v84
  %v963 = vunpack.c.h.b16 %v84
  %v964 = vunpack.c.l.b16 %v85
  %v965 = vunpack.c.h.b16 %v85
  %v966 = vunpack.c.l.b16 %v86
  %v967 = vunpack.c.h.b16 %v86
  %v968 = vunpack.c.l.b16 %v87
  %v969 = vunpack.c.h.b16 %v87
  %v970 = vunpack.c.l.b16 %v88
  %v971 = vunpack.c.h.b16 %v88
  %v972 = vunpack.c.l.b16 %v89
  %v973 = vunpack.c.h.b16 %v89
  %v974 = vunpack.c.l.b16 %v90
  %v975 = vunpack.c.h.b16 %v90
  %v976 = vunpack.c.l.b16 %v91
  %v977 = vunpack.c.h.b16 %v91
  %v978 = vunpack.c.l.b16 %v92
  %v979 = vunpack.c.h.b16 %v92
  %v980 = vunpack.c.l.b16 %v93
  %v981 = vunpack.c.h.b16 %v93
  %v982 = vunpack.c.l.b16 %v94
  %v983 = vunpack.c.l.b16 %v95
  %v984 = vunpack.c.h.b16 %v95
  %v985 = vunpack.c.l.b16 %v96
  %v986 = vunpack.c.h.b16 %v96
  %v987 = vunpack.c.l.b16 %v97
  %v988 = vunpack.c.h.b16 %v97
  %v989 = vunpack.c.l.b16 %v98
  %v990 = vunpack.c.h.b16 %v98
  %v991 = vunpack.c.l.b16 %v99
  %v992 = vunpack.c.h.b16 %v99
  %v993 = vunpack.c.l.b16 %v100
  %v994 = vunpack.c.h.b16 %v100
  %v995 = vunpack.c.l.b16 %v101
  %v996 = vunpack.c.h.b16 %v101
  %v997 = vunpack.c.l.b16 %v102
  %v998 = vunpack.c.h.b16 %v102
  %v999 = vunpack.c.l.b16 %v103
  %v1000 = vunpack.c.h.b16 %v103
  %v1001 = vunpack.c.l.b16 %v104
  %v1002 = vunpack.c.h.b16 %v104
  %v1003 = vunpack.c.l.b16 %v105
  %v1004 = vunpack.c.h.b16 %v105
  %v1005 = vunpack.c.l.b16 %v106
  %v1006 = vunpack.c.h.b16 %v106
  %v1007 = vunpack.c.l.b16 %v107
  %v1008 = vunpack.c.l.b16 %v108
  %v1009 = vunpack.c.h.b16 %v108
  %v1010 = vunpack.c.l.b16 %v109
  %v1011 = vunpack.c.h.b16 %v109
  %v1012 = vunpack.c.l.b16 %v110
  %v1013 = vunpack.c.h.b16 %v110
  %v1014 = vunpack.c.l.b16 %v111
  %v1015 = vunpack.c.h.b16 %v111
  %v1016 = vunpack.c.l.b16 %v112
  %v1017 = vunpack.c.h.b16 %v112
  %v1018 = vunpack.c.l.b16 %v113
  %v1019 = vunpack.c.h.b16 %v113
  %v1020 = vunpack.c.l.b16 %v114
  %v1021 = vunpack.c.h.b16 %v114
  %v1022 = vunpack.c.l.b16 %v115
  %v1023 = vunpack.c.h.b16 %v115
  %v1024 = vunpack.c.l.b16 %v116
  %v1025 = vunpack.c.h.b16 %v116
  %v1026 = vunpack.c.l.b16 %v117
  %v1027 = vunpack.c.h.b16 %v117
  %v1028 = vunpack.c.l.b16 %v118
  %v1029 = vunpack.c.h.b16 %v118
  %v1030 = vunpack.c.l.b16 %v119
  %v1031 = vunpack.c.h.b16 %v119
  %v1032 = vunpack.c.l.b16 %v120
  %v1033 = vunpack.c.l.b16 %v121
  %v1034 = vunpack.c.h.b16 %v121
  %v1035 = vunpack.c.l.b16 %v122
  %v1036 = vunpack.c.h.b16 %v122
  %v1037 = vunpack.c.l.b16 %v123
  %v1038 = vunpack.c.h.b16 %v123
  %v1039 = vunpack.c.l.b16 %v124
  %v1040 = vunpack.c.h.b16 %v124
  %v1041 = vunpack.c.l.b16 %v125
  %v1042 = vunpack.c.h.b16 %v125
  %v1043 = vunpack.c.l.b16 %v126
  %v1044 = vunpack.c.h.b16 %v126
  %v1045 = vunpack.c.l.b16 %v127
  %v1046 = vunpack.c.h.b16 %v127
  %v1047 = vunpack.c.l.b16 %v128
  %v1048 = vunpack.c.h.b16 %v128
  %v1049 = vunpack.c.l.b16 %v129
  %v1050 = vunpack.c.h.b16 %v129
  %v1051 = vunpack.c.l.b16 %v130
  %v1052 = vunpack.c.h.b16 %v130
  %v1053 = vunpack.c.l.b16 %v131
  %v1054 = vunpack.c.h.b16 %v131
  %v1055 = vunpack.c.l.b16 %v132
  %v1056 = vunpack.c.h.b16 %v132
  %v1057 = vunpack.c.l.b16 %v133
  %v1058 = vunpack.c.l.b16 %v134
  %v1059 = vunpack.c.h.b16 %v134
  %v1060 = vunpack.c.l.b16 %v135
  %v1061 = vunpack.c.h.b16 %v135
  %v1062 = vunpack.c.l.b16 %v136
  %v1063 = vunpack.c.h.b16 %v136
  %v1064 = vunpack.c.l.b16 %v137
  %v1065 = vunpack.c.h.b16 %v137
  %v1066 = vunpack.c.l.b16 %v138
  %v1067 = vunpack.c.h.b16 %v138
  %v1068 = vunpack.c.l.b16 %v139
  %v1069 = vunpack.c.h.b16 %v139
  %v1070 = vunpack.c.l.b16 %v140
  %v1071 = vunpack.c.h.b16 %v140
  %v1072 = vunpack.c.l.b16 %v141
  %v1073 = vunpack.c.h.b16 %v141
  %v1074 = vunpack.c.l.b16 %v142
  %v1075 = vunpack.c.h.b16 %v142
  %v1076 = vunpack.c.l.b16 %v143
  %v1077 = vunpack.c.h.b16 %v143
  %v1078 = vunpack.c.l.b16 %v144
  %v1079 = vunpack.c.h.b16 %v144
  %v1080 = vunpack.c.l.b16 %v145
  %v1081 = vunpack.c.h.b16 %v145
  %v1082 = vunpack.c.l.b16 %v146
  %v1083 = vunpack.c.l.b16 %v147
  %v1084 = vunpack.c.h.b16 %v147
  %v1085 = vunpack.c.l.b16 %v148
  %v1086 = vunpack.c.h.b16 %v148
  %v1087 = vunpack.c.l.b16 %v149
  %v1088 = vunpack.c.h.b16 %v149
  %v1089 = vunpack.c.l.b16 %v150
  %v1090 = vunpack.c.h.b16 %v150
  %v1091 = vunpack.c.l.b16 %v151
  %v1092 = vunpack.c.h.b16 %v151
  %v1093 = vunpack.c.l.b16 %v152
  %v1094 = vunpack.c.h.b16 %v152
  %v1095 = vunpack.c.l.b16 %v153
  %v1096 = vunpack.c.h.b16 %v153
  %v1097 = vunpack.c.l.b16 %v154
  %v1098 = vunpack.c.h.b16 %v154
  %v1099 = vunpack.c.l.b16 %v155
  %v1100 = vunpack.c.h.b16 %v155
  %v1101 = vunpack.c.l.b16 %v156
  %v1102 = vunpack.c.h.b16 %v156
  %v1103 = vunpack.c.l.b16 %v157
  %v1104 = vunpack.c.h.b16 %v157
  %v1105 = vunpack.c.l.b16 %v158
  %v1106 = vunpack.c.h.b16 %v158
  %v1107 = vunpack.c.l.b16 %v159
  %v1108 = vunpack.c.l.b16 %v160
  %v1109 = vunpack.c.h.b16 %v160
  %v1110 = vunpack.c.l.b16 %v161
  %v1111 = vunpack.c.h.b16 %v161
  %v1112 = vunpack.c.l.b16 %v162
  %v1113 = vunpack.c.h.b16 %v162
  %v1114 = vunpack.c.l.b16 %v163
  %v1115 = vunpack.c.h.b16 %v163
  %v1116 = vunpack.c.l.b16 %v164
  %v1117 = vunpack.c.h.b16 %v164
  %v1118 = vunpack.c.l.b16 %v165
  %v1119 = vunpack.c.h.b16 %v165
  %v1120 = vunpack.c.l.b16 %v166
  %v1121 = vunpack.c.h.b16 %v166
  %v1122 = vunpack.c.l.b16 %v167
  %v1123 = vunpack.c.h.b16 %v167
  %v1124 = vunpack.c.l.b16 %v168
  %v1125 = vunpack.c.h.b16 %v168
  %v1126 = vunpack.c.l.b16 %v169
  %v1127 = vunpack.c.h.b16 %v169
  %v1128 = vunpack.c.l.b16 %v170
  %v1129 = vunpack.c.h.b16 %v170
  %v1130 = vunpack.c.l.b16 %v171
  %v1131 = vunpack.c.h.b16 %v171
  %v1132 = vunpack.c.l.b16 %v172
  %v1133 = vunpack.c.l.b16 %v173
  %v1134 = vunpack.c.h.b16 %v173
  %v1135 = vunpack.c.l.b16 %v174
  %v1136 = vunpack.c.h.b16 %v174
  %v1137 = vunpack.c.l.b16 %v175
  %v1138 = vunpack.c.h.b16 %v175
  %v1139 = vunpack.c.l.b16 %v176
  %v1140 = vunpack.c.h.b16 %v176
  %v1141 = vunpack.c.l.b16 %v177
  %v1142 = vunpack.c.h.b16 %v177
  %v1143 = vunpack.c.l.b16 %v178
  %v1144 = vunpack.c.h.b16 %v178
  %v1145 = vunpack.c.l.b16 %v179
  %v1146 = vunpack.c.h.b16 %v179
  %v1147 = vunpack.c.l.b16 %v180
  %v1148 = vunpack.c.h.b16 %v180
  %v1149 = vunpack.c.l.b16 %v181
  %v1150 = vunpack.c.h.b16 %v181
  %v1151 = vunpack.c.l.b16 %v182
  %v1152 = vunpack.c.h.b16 %v182
  %v1153 = vunpack.c.l.b16 %v183
  %v1154 = vunpack.c.h.b16 %v183
  %v1155 = vunpack.c.l.b16 %v184
  %v1156 = vunpack.c.h.b16 %v184
  %v1157 = vunpack.c.l.b16 %v185
  %v1158 = vunpack.c.l.b16 %v186
  %v1159 = vunpack.c.h.b16 %v186
  %v1160 = vunpack.c.l.b16 %v187
  %v1161 = vunpack.c.h.b16 %v187
  %v1162 = vunpack.c.l.b16 %v188
  %v1163 = vunpack.c.h.b16 %v188
  %v1164 = vunpack.c.l.b16 %v189
  %v1165 = vunpack.c.h.b16 %v189
  %v1166 = vunpack.c.l.b16 %v190
  %v1167 = vunpack.c.h.b16 %v190
  %v1168 = vunpack.c.l.b16 %v191
  %v1169 = vunpack.c.h.b16 %v191
  %v1170 = vunpack.c.l.b16 %v192
  %v1171 = vunpack.c.h.b16 %v192
  %v1172 = vunpack.c.l.b16 %v193
  %v1173 = vunpack.c.h.b16 %v193
  %v1174 = vunpack.c.l.b16 %v194
  %v1175 = vunpack.c.h.b16 %v194
  %v1176 = vunpack.c.l.b16 %v195
  %v1177 = vunpack.c.h.b16 %v195
  %v1178 = vunpack.c.l.b16 %v196
  %v1179 = vunpack.c.h.b16 %v196
  %v1180 = vunpack.c.l.b16 %v197
  %v1181 = vunpack.c.h.b16 %v197
  %v1182 = vunpack.c.l.b16 %v198
  %v1183 = vunpack.c.l.b16 %v199
  %v1184 = vunpack.c.h.b16 %v199
  %v1185 = vunpack.c.l.b16 %v200
  %v1186 = vunpack.c.h.b16 %v200
  %v1187 = vunpack.c.l.b16 %v201
  %v1188 = vunpack.c.h.b16 %v201
  %v1189 = vunpack.c.l.b16 %v202
  %v1190 = vunpack.c.h.b16 %v202
  %v1191 = vunpack.c.l.b16 %v203
  %v1192 = vunpack.c.h.b16 %v203
  %v1193 = vunpack.c.l.b16 %v204
  %v1194 = vunpack.c.h.b16 %v204
  %v1195 = vunpack.c.l.b16 %v205
  %v1196 = vunpack.c.h.b16 %v205
  %v1197 = vunpack.c.l.b16 %v206
  %v1198 = vunpack.c.h.b16 %v206
  %v1199 = vunpack.c.l.b16 %v207
  %v1200 = vunpack.c.h.b16 %v207
  %v1201 = vunpack.c.l.b16 %v208
  %v1202 = vunpack.c.h.b16 %v208
  %v1203 = vunpack.c.l.b16 %v209
  %v1204 = vunpack.c.h.b16 %v209
  %v1205 = vunpack.c.l.b16 %v210
  %v1206 = vunpack.c.h.b16 %v210
  %v1207 = vunpack.c.l.b16 %v211
  %v1208 = vunpack.c.l.b16 %v212
  %v1209 = vunpack.c.h.b16 %v212
  %v1210 = vunpack.c.l.b16 %v213
  %v1211 = vunpack.c.h.b16 %v213
  %v1212 = vunpack.c.l.b16 %v214
  %v1213 = vunpack.c.h.b16 %v214
  %v1214 = vunpack.c.l.b16 %v215
  %v1215 = vunpack.c.h.b16 %v215
  %v1216 = vunpack.c.l.b16 %v216
  %v1217 = vunpack.c.h.b16 %v216
  %v1218 = vunpack.c.l.b16 %v217
  %v1219 = vunpack.c.h.b16 %v217
  %v1220 = vunpack.c.l.b16 %v218
  %v1221 = vunpack.c.h.b16 %v218
  %v1222 = vunpack.c.l.b16 %v219
  %v1223 = vunpack.c.h.b16 %v219
  %v1224 = vunpack.c.l.b16 %v220
  %v1225 = vunpack.c.h.b16 %v220
  %v1226 = vunpack.c.l.b16 %v221
  %v1227 = vunpack.c.h.b16 %v221
  %v1228 = vunpack.c.l.b16 %v222
  %v1229 = vunpack.c.h.b16 %v222
  %v1230 = vunpack.c.l.b16 %v223
  %v1231 = vunpack.c.h.b16 %v223
  %v1232 = vunpack.c.l.b16 %v224
  %v1233 = vpack.c.b16 %v858, %v833
  %v1234 = vpack.c.b16 %v859, %v834
  %v1235 = vpack.c.b16 %v860, %v835
  %v1236 = vpack.c.b16 %v861, %v836
  %v1237 = vpack.c.b16 %v862, %v837
  %v1238 = vpack.c.b16 %v863, %v838
  %v1239 = vpack.c.b16 %v864, %v839
  %v1240 = vpack.c.b16 %v865, %v840
  %v1241 = vpack.c.b16 %v866, %v841
  %v1242 = vpack.c.b16 %v867, %v842
  %v1243 = vpack.c.b16 %v868, %v843
  %v1244 = vpack.c.b16 %v869, %v844
  %v1245 = vpack.c.b16 %v870, %v845
  %v1246 = vpack.c.b16 %v871, %v846
  %v1247 = vpack.c.b16 %v872, %v847
  %v1248 = vpack.c.b16 %v873, %v848
  %v1249 = vpack.c.b16 %v874, %v849
  %v1250 = vpack.c.b16 %v875, %v850
  %v1251 = vpack.c.b16 %v876, %v851
  %v1252 = vpack.c.b16 %v877, %v852
  %v1253 = vpack.c.b16 %v878, %v853
  %v1254 = vpack.c.b16 %v879, %v854
  %v1255 = vpack.c.b16 %v880, %v855
  %v1256 = vpack.c.b16 %v881, %v856
  %v1257 = vpack.c.b16 %v882, %v857
  %v1258 = vpack.c.b16 %v908, %v883
  %v1259 = vpack.c.b16 %v909, %v884
  %v1260 = vpack.c.b16 %v910, %v885
  %v1261 = vpack.c.b16 %v911, %v886
  %v1262 = vpack.c.b16 %v912, %v887
  %v1263 = vpack.c.b16 %v913, %v888
  %v1264 = vpack.c.b16 %v914, %v889
  %v1265 = vpack.c.b16 %v915, %v890
  %v1266 = vpack.c.b16 %v916, %v891
  %v1267 = vpack.c.b16 %v917, %v892
  %v1268 = vpack.c.b16 %v918, %v893
  %v1269 = vpack.c.b16 %v919, %v894
  %v1270 = vpack.c.b16 %v920, %v895
  %v1271 = vpack.c.b16 %v921, %v896
  %v1272 = vpack.c.b16 %v922, %v897
  %v1273 = vpack.c.b16 %v923, %v898
  %v1274 = vpack.c.b16 %v924, %v899
  %v1275 = vpack.c.b16 %v925, %v900
  %v1276 = vpack.c.b16 %v926, %v901
  %v1277 = vpack.c.b16 %v927, %v902
  %v1278 = vpack.c.b16 %v928, %v903
  %v1279 = vpack.c.b16 %v929, %v904
  %v1280 = vpack.c.b16 %v930, %v905
  %v1281 = vpack.c.b16 %v931, %v906
  %v1282 = vpack.c.b16 %v932, %v907
  %v1283 = vpack.c.b16 %v958, %v933
  %v1284 = vpack.c.b16 %v959, %v934
  %v1285 = vpack.c.b16 %v960, %v935
  %v1286 = vpack.c.b16 %v961, %v936
  %v1287 = vpack.c.b16 %v962, %v937
  %v1288 = vpack.c.b16 %v963, %v938
  %v1289 = vpack.c.b16 %v964, %v939
  %v1290 = vpack.c.b16 %v965, %v940
  %v1291 = vpack.c.b16 %v966, %v941
  %v1292 = vpack.c.b16 %v967, %v942
  %v1293 = vpack.c.b16 %v968, %v943
  %v1294 = vpack.c.b16 %v969, %v944
  %v1295 = vpack.c.b16 %v970, %v945
  %v1296 = vpack.c.b16 %v971, %v946
  %v1297 = vpack.c.b16 %v972, %v947
  %v1298 = vpack.c.b16 %v973, %v948
  %v1299 = vpack.c.b16 %v974, %v949
  %v1300 = vpack.c.b16 %v975, %v950
  %v1301 = vpack.c.b16 %v976, %v951
  %v1302 = vpack.c.b16 %v977, %v952
  %v1303 = vpack.c.b16 %v978, %v953
  %v1304 = vpack.c.b16 %v979, %v954
  %v1305 = vpack.c.b16 %v980, %v955
  %v1306 = vpack.c.b16 %v981, %v956
  %v1307 = vpack.c.b16 %v982, %v957
  %v1308 = vpack.c.b16 %v1008, %v983
  %v1309 = vpack.c.b16 %v1009, %v984
  %v1310 = vpack.c.b16 %v1010, %v985
  %v1311 = vpack.c.b16 %v1011, %v986
  %v1312 = vpack.c.b16 %v1012, %v987
  %v1313 = vpack.c.b16 %v1013, %v988
  %v1314 = vpack.c.b16 %v1014, %v989
  %v1315 = vpack.c.b16 %v1015, %v990
  %v1316 = vpack.c.b16 %v1016, %v991
  %v1317 = vpack.c.b16 %v1017, %v992
  %v1318 = vpack.c.b16 %v1018, %v993
  %v1319 = vpack.c.b16 %v1019, %v994
  %v1320 = vpack.c.b16 %v1020, %v995
  %v1321 = vpack.c.b16 %v1021, %v996
  %v1322 = vpack.c.b16 %v1022, %v997
  %v1323 = vpack.c.b16 %v1023, %v998
  %v1324 = vpack.c.b16 %v1024, %v999
  %v1325 = vpack.c.b16 %v1025, %v1000
  %v1326 = vpack.c.b16 %v1026, %v1001
  %v1327 = vpack.c.b16 %v1027, %v1002
  %v1328 = vpack.c.b16 %v1028, %v1003
  %v1329 = vpack.c.b16 %v1029, %v1004
  %v1330 = vpack.c.b16 %v1030, %v1005
  %v1331 = vpack.c.b16 %v1031, %v1006
  %v1332 = vpack.c.b16 %v1032, %v1007
  %v1333 = vpack.c.b16 %v1058, %v1033
  %v1334 = vpack.c.b16 %v1059, %v1034
  %v1335 = vpack.c.b16 %v1060, %v1035
  %v1336 = vpack.c.b16 %v1061, %v1036
  %v1337 = vpack.c.b16 %v1062, %v1037
  %v1338 = vpack.c.b16 %v1063, %v1038
  %v1339 = vpack.c.b16 %v1064, %v1039
  %v1340 = vpack.c.b16 %v1065, %v1040
  %v1341 = vpack.c.b16 %v1066, %v1041
  %v1342 = vpack.c.b16 %v1067, %v1042
  %v1343 = vpack.c.b16 %v1068, %v1043
  %v1344 = vpack.c.b16 %v1069, %v1044
  %v1345 = vpack.c.b16 %v1070, %v1045
  %v1346 = vpack.c.b16 %v1071, %v1046
  %v1347 = vpack.c.b16 %v1072, %v1047
  %v1348 = vpack.c.b16 %v1073, %v1048
  %v1349 = vpack.c.b16 %v1074, %v1049
  %v1350 = vpack.c.b16 %v1075, %v1050
  %v1351 = vpack.c.b16 %v1076, %v1051
  %v1352 = vpack.c.b16 %v1077, %v1052
  %v1353 = vpack.c.b16 %v1078, %v1053
  %v1354 = vpack.c.b16 %v1079, %v1054
  %v1355 = vpack.c.b16 %v1080, %v1055
  %v1356 = vpack.c.b16 %v1081, %v1056
  %v1357 = vpack.c.b16 %v1082, %v1057
  %v1358 = vpack.c.b16 %v1108, %v1083
  %v1359 = vpack.c.b16 %v1109, %v1084
  %v1360 = vpack.c.b16 %v1110, %v1085
  %v1361 = vpack.c.b16 %v1111, %v1086
  %v1362 = vpack.c.b16 %v1112, %v1087
  %v1363 = vpack.c.b16 %v1113, %v1088
  %v1364 = vpack.c.b16 %v1114, %v1089
  %v1365 = vpack.c.b16 %v1115, %v1090
  %v1366 = vpack.c.b16 %v1116, %v1091
  %v1367 = vpack.c.b16 %v1117, %v1092
  %v1368 = vpack.c.b16 %v1118, %v1093
  %v1369 = vpack.c.b16 %v1119, %v1094
  %v1370 = vpack.c.b16 %v1120, %v1095
  %v1371 = vpack.c.b16 %v1121, %v1096
  %v1372 = vpack.c.b16 %v1122, %v1097
  %v1373 = vpack.c.b16 %v1123, %v1098
  %v1374 = vpack.c.b16 %v1124, %v1099
  %v1375 = vpack.c.b16 %v1125, %v1100
  %v1376 = vpack.c.b16 %v1126, %v1101
  %v1377 = vpack.c.b16 %v1127, %v1102
  %v1378 = vpack.c.b16 %v1128, %v1103
  %v1379 = vpack.c.b16 %v1129, %v1104
  %v1380 = vpack.c.b16 %v1130, %v1105
  %v1381 = vpack.c.b16 %v1131, %v1106
  %v1382 = vpack.c.b16 %v1132, %v1107
  %v1383 = vpack.c.b16 %v1158, %v1133
  %v1384 = vpack.c.b16 %v1159, %v1134
  %v1385 = vpack.c.b16 %v1160, %v1135
  %v1386 = vpack.c.b16 %v1161, %v1136
  %v1387 = vpack.c.b16 %v1162, %v1137
  %v1388 = vpack.c.b16 %v1163, %v1138
  %v1389 = vpack.c.b16 %v1164, %v1139
  %v1390 = vpack.c.b16 %v1165, %v1140
  %v1391 = vpack.c.b16 %v1166, %v1141
  %v1392 = vpack.c.b16 %v1167, %v1142
  %v1393 = vpack.c.b16 %v1168, %v1143
  %v1394 = vpack.c.b16 %v1169, %v1144
  %v1395 = vpack.c.b16 %v1170, %v1145
  %v1396 = vpack.c.b16 %v1171, %v1146
  %v1397 = vpack.c.b16 %v1172, %v1147
  %v1398 = vpack.c.b16 %v1173, %v1148
  %v1399 = vpack.c.b16 %v1174, %v1149
  %v1400 = vpack.c.b16 %v1175, %v1150
  %v1401 = vpack.c.b16 %v1176, %v1151
  %v1402 = vpack.c.b16 %v1177, %v1152
  %v1403 = vpack.c.b16 %v1178, %v1153
  %v1404 = vpack.c.b16 %v1179, %v1154
  %v1405 = vpack.c.b16 %v1180, %v1155
  %v1406 = vpack.c.b16 %v1181, %v1156
  %v1407 = vpack.c.b16 %v1182, %v1157
  %v1408 = vpack.c.b16 %v1208, %v1183
  %v1409 = vpack.c.b16 %v1209, %v1184
  %v1410 = vpack.c.b16 %v1210, %v1185
  %v1411 = vpack.c.b16 %v1211, %v1186
  %v1412 = vpack.c.b16 %v1212, %v1187
  %v1413 = vpack.c.b16 %v1213, %v1188
  %v1414 = vpack.c.b16 %v1214, %v1189
  %v1415 = vpack.c.b16 %v1215, %v1190
  %v1416 = vpack.c.b16 %v1216, %v1191
  %v1417 = vpack.c.b16 %v1217, %v1192
  %v1418 = vpack.c.b16 %v1218, %v1193
  %v1419 = vpack.c.b16 %v1219, %v1194
  %v1420 = vpack.c.b16 %v1220, %v1195
  %v1421 = vpack.c.b16 %v1221, %v1196
  %v1422 = vpack.c.b16 %v1222, %v1197
  %v1423 = vpack.c.b16 %v1223, %v1198
  %v1424 = vpack.c.b16 %v1224, %v1199
  %v1425 = vpack.c.b16 %v1225, %v1200
  %v1426 = vpack.c.b16 %v1226, %v1201
  %v1427 = vpack.c.b16 %v1227, %v1202
  %v1428 = vpack.c.b16 %v1228, %v1203
  %v1429 = vpack.c.b16 %v1229, %v1204
  %v1430 = vpack.c.b16 %v1230, %v1205
  %v1431 = vpack.c.b16 %v1231, %v1206
  %v1432 = vpack.c.b16 %v1232, %v1207
  %v2033 = vunpack.c.l.b16 %v225
  %v2034 = vunpack.c.l.b16 %v226
  %v2035 = vunpack.c.l.b16 %v227
  %v2036 = vunpack.c.l.b16 %v228
  %v2037 = vunpack.c.l.b16 %v229
  %v2038 = vunpack.c.l.b16 %v230
  %v2039 = vunpack.c.l.b16 %v231
  %v2040 = vunpack.c.l.b16 %v232
  %v2041 = vunpack.c.l.b16 %v233
  %v2042 = vunpack.c.l.b16 %v234
  %v2043 = vunpack.c.l.b16 %v235
  %v2044 = vunpack.c.l.b16 %v236
  %v2045 = vunpack.c.l.b16 %v237
  %v2046 = vunpack.c.l.b16 %v238
  %v2047 = vunpack.c.l.b16 %v239
  %v2048 = vunpack.c.l.b16 %v240
  %v2049 = vunpack.c.l.b16 %v241
  %v2050 = vunpack.c.l.b16 %v242
  %v2051 = vunpack.c.l.b16 %v243
  %v2052 = vunpack.c.l.b16 %v244
  %v2053 = vunpack.c.l.b16 %v245
  %v2054 = vunpack.c.l.b16 %v246
  %v2055 = vunpack.c.l.b16 %v247
  %v2056 = vunpack.c.l.b16 %v248
  %v2057 = vunpack.c.l.b16 %v249
  %v2058 = vunpack.c.l.b16 %v250
  %v2059 = vunpack.c.l.b16 %v251
  %v2060 = vunpack.c.l.b16 %v252
  %v2061 = vunpack.c.l.b16 %v253
  %v2062 = vunpack.c.l.b16 %v254
  %v2063 = vunpack.c.l.b16 %v255
  %v2064 = vunpack.c.l.b16 %v256
  %v2065 = vunpack.c.l.b16 %v257
  %v2066 = vunpack.c.l.b16 %v258
  %v2067 = vunpack.c.l.b16 %v259
  %v2068 = vunpack.c.l.b16 %v260
  %v2069 = vunpack.c.l.b16 %v261
  %v2070 = vunpack.c.l.b16 %v262
  %v2071 = vunpack.c.l.b16 %v263
  %v2072 = vunpack.c.l.b16 %v264
  %v2073 = vunpack.c.l.b16 %v265
  %v2074 = vunpack.c.l.b16 %v266
  %v2075 = vunpack.c.l.b16 %v267
  %v2076 = vunpack.c.l.b16 %v268
  %v2077 = vunpack.c.l.b16 %v269
  %v2078 = vunpack.c.l.b16 %v270
  %v2079 = vunpack.c.l.b16 %v271
  %v2080 = vunpack.c.l.b16 %v272
  %v2081 = vunpack.c.l.b16 %v273
  %v2082 = vunpack.c.l.b16 %v274
  %v2083 = vunpack.c.l.b16 %v275
  %v2084 = vunpack.c.l.b16 %v276
  %v2085 = vunpack.c.l.b16 %v277
  %v2086 = vunpack.c.l.b16 %v278
  %v2087 = vunpack.c.l.b16 %v279
  %v2088 = vunpack.c.l.b16 %v280
  %v2089 = vunpack.c.l.b16 %v281
  %v2090 = vunpack.c.l.b16 %v282
  %v2091 = vunpack.c.l.b16 %v283
  %v2092 = vunpack.c.l.b16 %v284
  %v2093 = vunpack.c.l.b16 %v285
  %v2094 = vunpack.c.l.b16 %v286
  %v2095 = vunpack.c.l.b16 %v287
  %v2096 = vunpack.c.l.b16 %v288
  %v2097 = vunpack.c.l.b16 %v289
  %v2098 = vunpack.c.l.b16 %v290
  %v2099 = vunpack.c.l.b16 %v291
  %v2100 = vunpack.c.l.b16 %v292
  %v2101 = vunpack.c.l.b16 %v293
  %v2102 = vunpack.c.l.b16 %v294
  %v2103 = vunpack.c.l.b16 %v295
  %v2104 = vunpack.c.l.b16 %v296
  %v2105 = vunpack.c.l.b16 %v297
  %v2106 = vunpack.c.l.b16 %v298
  %v2107 = vunpack.c.l.b16 %v299
  %v2108 = vunpack.c.l.b16 %v300
  %v2109 = vunpack.c.l.b16 %v301
  %v2110 = vunpack.c.l.b16 %v302
  %v2111 = vunpack.c.l.b16 %v303
  %v2112 = vunpack.c.l.b16 %v304
  %v2113 = vunpack.c.l.b16 %v305
  %v2114 = vunpack.c.l.b16 %v306
  %v2115 = vunpack.c.l.b16 %v307
  %v2116 = vunpack.c.l.b16 %v308
  %v2117 = vunpack.c.l.b16 %v309
  %v2118 = vunpack.c.l.b16 %v310
  %v2119 = vunpack.c.l.b16 %v311
  %v2120 = vunpack.c.l.b16 %v312
  %v2121 = vunpack.c.l.b16 %v313
  %v2122 = vunpack.c.l.b16 %v314
  %v2123 = vunpack.c.l.b16 %v315
  %v2124 = vunpack.c.l.b16 %v316
  %v2125 = vunpack.c.l.b16 %v317
  %v2126 = vunpack.c.l.b16 %v318
  %v2127 = vunpack.c.l.b16 %v319
  %v2128 = vunpack.c.l.b16 %v320
  %v2129 = vunpack.c.l.b16 %v321
  %v2130 = vunpack.c.l.b16 %v322
  %v2131 = vunpack.c.l.b16 %v323
  %v2132 = vunpack.c.l.b16 %v324
  %v2133 = vunpack.c.l.b16 %v325
  %v2134 = vunpack.c.l.b16 %v326
  %v2135 = vunpack.c.l.b16 %v327
  %v2136 = vunpack.c.l.b16 %v328
  %v2137 = vunpack.c.l.b16 %v329
  %v2138 = vunpack.c.l.b16 %v330
  %v2139 = vunpack.c.l.b16 %v331
  %v2140 = vunpack.c.l.b16 %v332
  %v2141 = vunpack.c.l.b16 %v333
  %v2142 = vunpack.c.l.b16 %v334
  %v2143 = vunpack.c.l.b16 %v335
  %v2144 = vunpack.c.l.b16 %v336
  %v2145 = vunpack.c.l.b16 %v337
  %v2146 = vunpack.c.l.b16 %v338
  %v2147 = vunpack.c.l.b16 %v339
  %v2148 = vunpack.c.l.b16 %v340
  %v2149 = vunpack.c.l.b16 %v341
  %v2150 = vunpack.c.l.b16 %v342
  %v2151 = vunpack.c.l.b16 %v343
  %v2152 = vunpack.c.l.b16 %v344
  %v2153 = vunpack.c.l.b16 %v345
  %v2154 = vunpack.c.l.b16 %v346
  %v2155 = vunpack.c.l.b16 %v347
  %v2156 = vunpack.c.l.b16 %v348
  %v2157 = vunpack.c.l.b16 %v349
  %v2158 = vunpack.c.l.b16 %v350
  %v2159 = vunpack.c.l.b16 %v351
  %v2160 = vunpack.c.l.b16 %v352
  %v2161 = vunpack.c.l.b16 %v353
  %v2162 = vunpack.c.l.b16 %v354
  %v2163 = vunpack.c.l.b16 %v355
  %v2164 = vunpack.c.l.b16 %v356
  %v2165 = vunpack.c.l.b16 %v357
  %v2166 = vunpack.c.l.b16 %v358
  %v2167 = vunpack.c.l.b16 %v359
  %v2168 = vunpack.c.l.b16 %v360
  %v2169 = vunpack.c.l.b16 %v361
  %v2170 = vunpack.c.l.b16 %v362
  %v2171 = vunpack.c.l.b16 %v363
  %v2172 = vunpack.c.l.b16 %v364
  %v2173 = vunpack.c.l.b16 %v365
  %v2174 = vunpack.c.l.b16 %v366
  %v2175 = vunpack.c.l.b16 %v367
  %v2176 = vunpack.c.l.b16 %v368
  %v2177 = vunpack.c.l.b16 %v369
  %v2178 = vunpack.c.l.b16 %v370
  %v2179 = vunpack.c.l.b16 %v371
  %v2180 = vunpack.c.l.b16 %v372
  %v2181 = vunpack.c.l.b16 %v373
  %v2182 = vunpack.c.l.b16 %v374
  %v2183 = vunpack.c.l.b16 %v375
  %v2184 = vunpack.c.l.b16 %v376
  %v2185 = vunpack.c.l.b16 %v377
  %v2186 = vunpack.c.l.b16 %v378
  %v2187 = vunpack.c.l.b16 %v379
  %v2188 = vunpack.c.l.b16 %v380
  %v2189 = vunpack.c.l.b16 %v381
  %v2190 = vunpack.c.l.b16 %v382
  %v2191 = vunpack.c.l.b16 %v383
  %v2192 = vunpack.c.l.b16 %v384
  %v2193 = vunpack.c.l.b16 %v385
  %v2194 = vunpack.c.l.b16 %v386
  %v2195 = vunpack.c.l.b16 %v387
  %v2196 = vunpack.c.l.b16 %v388
  %v2197 = vunpack.c.l.b16 %v389
  %v2198 = vunpack.c.l.b16 %v390
  %v2199 = vunpack.c.l.b16 %v391
  %v2200 = vunpack.c.l.b16 %v392
  %v2201 = vunpack.c.l.b16 %v393
  %v2202 = vunpack.c.l.b16 %v394
  %v2203 = vunpack.c.l.b16 %v395
  %v2204 = vunpack.c.l.b16 %v396
  %v2205 = vunpack.c.l.b16 %v397
  %v2206 = vunpack.c.l.b16 %v398
  %v2207 = vunpack.c.l.b16 %v399
  %v2208 = vunpack.c.l.b16 %v400
  %v2209 = vunpack.c.l.b16 %v401
  %v2210 = vunpack.c.l.b16 %v402
  %v2211 = vunpack.c.l.b16 %v403
  %v2212 = vunpack.c.l.b16 %v404
  %v2213 = vunpack.c.l.b16 %v405
  %v2214 = vunpack.c.l.b16 %v406
  %v2215 = vunpack.c.l.b16 %v407
  %v2216 = vunpack.c.l.b16 %v408
  %v2217 = vunpack.c.l.b16 %v409
  %v2218 = vunpack.c.l.b16 %v410
  %v2219 = vunpack.c.l.b16 %v411
  %v2220 = vunpack.c.l.b16 %v412
  %v2221 = vunpack.c.l.b16 %v413
  %v2222 = vunpack.c.l.b16 %v414
  %v2223 = vunpack.c.l.b16 %v415
  %v2224 = vunpack.c.l.b16 %v416
  %v2225 = vunpack.c.l.b16 %v417
  %v2226 = vunpack.c.l.b16 %v418
  %v2227 = vunpack.c.l.b16 %v419
  %v2228 = vunpack.c.l.b16 %v420
  %v2229 = vunpack.c.l.b16 %v421
  %v2230 = vunpack.c.l.b16 %v422
  %v2231 = vunpack.c.l.b16 %v423
  %v2232 = vunpack.c.l.b16 %v424
  %v2233 = vunpack.c.l.b16 %v425
  %v2234 = vunpack.c.l.b16 %v426
  %v2235 = vunpack.c.l.b16 %v427
  %v2236 = vunpack.c.l.b16 %v428
  %v2237 = vunpack.c.l.b16 %v429
  %v2238 = vunpack.c.l.b16 %v430
  %v2239 = vunpack.c.l.b16 %v431
  %v2240 = vunpack.c.l.b16 %v432
  %v2241 = vunpack.c.l.b16 %v433
  %v2242 = vunpack.c.l.b16 %v434
  %v2243 = vunpack.c.l.b16 %v435
  %v2244 = vunpack.c.l.b16 %v436
  %v2245 = vunpack.c.l.b16 %v437
  %v2246 = vunpack.c.l.b16 %v438
  %v2247 = vunpack.c.l.b16 %v439
  %v2248 = vunpack.c.l.b16 %v440
  %v2249 = vunpack.c.l.b16 %v441
  %v2250 = vunpack.c.l.b16 %v442
  %v2251 = vunpack.c.l.b16 %v443
  %v2252 = vunpack.c.l.b16 %v444
  %v2253 = vunpack.c.l.b16 %v445
  %v2254 = vunpack.c.l.b16 %v446
  %v2255 = vunpack.c.l.b16 %v447
  %v2256 = vunpack.c.l.b16 %v448
  %v2257 = vunpack.c.l.b16 %v449
  %v2258 = vunpack.c.l.b16 %v450
  %v2259 = vunpack.c.l.b16 %v451
  %v2260 = vunpack.c.l.b16 %v452
  %v2261 = vunpack.c.l.b16 %v453
  %v2262 = vunpack.c.l.b16 %v454
  %v2263 = vunpack.c.l.b16 %v455
  %v2264 = vunpack.c.l.b16 %v456
  %v2265 = vunpack.c.l.b16 %v457
  %v2266 = vunpack.c.l.b16 %v458
  %v2267 = vunpack.c.l.b16 %v459
  %v2268 = vunpack.c.l.b16 %v460
  %v2269 = vunpack.c.l.b16 %v461
  %v2270 = vunpack.c.l.b16 %v462
  %v2271 = vunpack.c.l.b16 %v463
  %v2272 = vunpack.c.l.b16 %v464
  %v2273 = vunpack.c.l.b16 %v465
  %v2274 = vunpack.c.l.b16 %v466
  %v2275 = vunpack.c.l.b16 %v467
  %v2276 = vunpack.c.l.b16 %v468
  %v2277 = vunpack.c.l.b16 %v469
  %v2278 = vunpack.c.l.b16 %v470
  %v2279 = vunpack.c.l.b16 %v471
  %v2280 = vunpack.c.l.b16 %v472
  %v2281 = vunpack.c.l.b16 %v473
  %v2282 = vunpack.c.l.b16 %v474
  %v2283 = vunpack.c.l.b16 %v475
  %v2284 = vunpack.c.l.b16 %v476
  %v2285 = vunpack.c.l.b16 %v477
  %v2286 = vunpack.c.l.b16 %v478
  %v2287 = vunpack.c.l.b16 %v479
  %v2288 = vunpack.c.l.b16 %v480
  %v2289 = vunpack.c.l.b16 %v481
  %v2290 = vunpack.c.l.b16 %v482
  %v2291 = vunpack.c.l.b16 %v483
  %v2292 = vunpack.c.l.b16 %v484
  %v2293 = vunpack.c.l.b16 %v485
  %v2294 = vunpack.c.l.b16 %v486
  %v2295 = vunpack.c.l.b16 %v487
  %v2296 = vunpack.c.l.b16 %v488
  %v2297 = vunpack.c.l.b16 %v489
  %v2298 = vunpack.c.l.b16 %v490
  %v2299 = vunpack.c.l.b16 %v491
  %v2300 = vunpack.c.l.b16 %v492
  %v2301 = vunpack.c.l.b16 %v493
  %v2302 = vunpack.c.l.b16 %v494
  %v2303 = vunpack.c.l.b16 %v495
  %v2304 = vunpack.c.l.b16 %v496
  %v2305 = vunpack.c.l.b16 %v497
  %v2306 = vunpack.c.l.b16 %v498
  %v2307 = vunpack.c.l.b16 %v499
  %v2308 = vunpack.c.l.b16 %v500
  %v2309 = vunpack.c.l.b16 %v501
  %v2310 = vunpack.c.l.b16 %v502
  %v2311 = vunpack.c.l.b16 %v503
  %v2312 = vunpack.c.l.b16 %v504
  %v2313 = vunpack.c.l.b16 %v505
  %v2314 = vunpack.c.l.b16 %v506
  %v2315 = vunpack.c.l.b16 %v507
  %v2316 = vunpack.c.l.b16 %v508
  %v2317 = vunpack.c.l.b16 %v509
  %v2318 = vunpack.c.l.b16 %v510
  %v2319 = vunpack.c.l.b16 %v511
  %v2320 = vunpack.c.l.b16 %v512
  %v2321 = vunpack.c.l.b16 %v513
  %v2322 = vunpack.c.l.b16 %v514
  %v2323 = vunpack.c.l.b16 %v515
  %v2324 = vunpack.c.l.b16 %v516
  %v2325 = vunpack.c.l.b16 %v517
  %v2326 = vunpack.c.l.b16 %v518
  %v2327 = vunpack.c.l.b16 %v519
  %v2328 = vunpack.c.l.b16 %v520
  %v2329 = vunpack.c.l.b16 %v521
  %v2330 = vunpack.c.l.b16 %v522
  %v2331 = vunpack.c.l.b16 %v523
  %v2332 = vunpack.c.l.b16 %v524
  %v2333 = vunpack.c.l.b16 %v525
  %v2334 = vunpack.c.l.b16 %v526
  %v2335 = vunpack.c.l.b16 %v527
  %v2336 = vunpack.c.l.b16 %v528
  %v2337 = vunpack.c.l.b16 %v529
  %v2338 = vunpack.c.l.b16 %v530
  %v2339 = vunpack.c.l.b16 %v531
  %v2340 = vunpack.c.l.b16 %v532
  %v2341 = vunpack.c.l.b16 %v533
  %v2342 = vunpack.c.l.b16 %v534
  %v2343 = vunpack.c.l.b16 %v535
  %v2344 = vunpack.c.l.b16 %v536
  %v2345 = vunpack.c.l.b16 %v537
  %v2346 = vunpack.c.l.b16 %v538
  %v2347 = vunpack.c.l.b16 %v539
  %v2348 = vunpack.c.l.b16 %v540
  %v2349 = vunpack.c.l.b16 %v541
  %v2350 = vunpack.c.l.b16 %v542
  %v2351 = vunpack.c.l.b16 %v543
  %v2352 = vunpack.c.l.b16 %v544
  %v2353 = vunpack.c.l.b16 %v545
  %v2354 = vunpack.c.l.b16 %v546
  %v2355 = vunpack.c.l.b16 %v547
  %v2356 = vunpack.c.l.b16 %v548
  %v2357 = vunpack.c.l.b16 %v549
  %v2358 = vunpack.c.l.b16 %v550
  %v2359 = vunpack.c.l.b16 %v551
  %v2360 = vunpack.c.l.b16 %v552
  %v2361 = vunpack.c.l.b16 %v553
  %v2362 = vunpack.c.l.b16 %v554
  %v2363 = vunpack.c.l.b16 %v555
  %v2364 = vunpack.c.l.b16 %v556
  %v2365 = vunpack.c.l.b16 %v557
  %v2366 = vunpack.c.l.b16 %v558
  %v2367 = vunpack.c.l.b16 %v559
  %v2368 = vunpack.c.l.b16 %v560
  %v2369 = vunpack.c.l.b16 %v561
  %v2370 = vunpack.c.l.b16 %v562
  %v2371 = vunpack.c.l.b16 %v563
  %v2372 = vunpack.c.l.b16 %v564
  %v2373 = vunpack.c.l.b16 %v565
  %v2374 = vunpack.c.l.b16 %v566
  %v2375 = vunpack.c.l.b16 %v567
  %v2376 = vunpack.c.l.b16 %v568
  %v2377 = vunpack.c.l.b16 %v569
  %v2378 = vunpack.c.l.b16 %v570
  %v2379 = vunpack.c.l.b16 %v571
  %v2380 = vunpack.c.l.b16 %v572
  %v2381 = vunpack.c.l.b16 %v573
  %v2382 = vunpack.c.l.b16 %v574
  %v2383 = vunpack.c.l.b16 %v575
  %v2384 = vunpack.c.l.b16 %v576
  %v2385 = vunpack.c.l.b16 %v577
  %v2386 = vunpack.c.l.b16 %v578
  %v2387 = vunpack.c.l.b16 %v579
  %v2388 = vunpack.c.l.b16 %v580
  %v2389 = vunpack.c.l.b16 %v581
  %v2390 = vunpack.c.l.b16 %v582
  %v2391 = vunpack.c.l.b16 %v583
  %v2392 = vunpack.c.l.b16 %v584
  %v2393 = vunpack.c.l.b16 %v585
  %v2394 = vunpack.c.l.b16 %v586
  %v2395 = vunpack.c.l.b16 %v587
  %v2396 = vunpack.c.l.b16 %v588
  %v2397 = vunpack.c.l.b16 %v589
  %v2398 = vunpack.c.l.b16 %v590
  %v2399 = vunpack.c.l.b16 %v591
  %v2400 = vunpack.c.l.b16 %v592
  %v2401 = vunpack.c.l.b16 %v593
  %v2402 = vunpack.c.l.b16 %v594
  %v2403 = vunpack.c.l.b16 %v595
  %v2404 = vunpack.c.l.b16 %v596
  %v2405 = vunpack.c.l.b16 %v597
  %v2406 = vunpack.c.l.b16 %v598
  %v2407 = vunpack.c.l.b16 %v599
  %v2408 = vunpack.c.l.b16 %v600
  %v2409 = vunpack.c.l.b16 %v601
  %v2410 = vunpack.c.l.b16 %v602
  %v2411 = vunpack.c.l.b16 %v603
  %v2412 = vunpack.c.l.b16 %v604
  %v2413 = vunpack.c.l.b16 %v605
  %v2414 = vunpack.c.l.b16 %v606
  %v2415 = vunpack.c.l.b16 %v607
  %v2416 = vunpack.c.l.b16 %v608
  %v2417 = vunpack.c.l.b16 %v609
  %v2418 = vunpack.c.l.b16 %v610
  %v2419 = vunpack.c.l.b16 %v611
  %v2420 = vunpack.c.l.b16 %v612
  %v2421 = vunpack.c.l.b16 %v613
  %v2422 = vunpack.c.l.b16 %v614
  %v2423 = vunpack.c.l.b16 %v615
  %v2424 = vunpack.c.l.b16 %v616
  %v2425 = vunpack.c.l.b16 %v617
  %v2426 = vunpack.c.l.b16 %v618
  %v2427 = vunpack.c.l.b16 %v619
  %v2428 = vunpack.c.l.b16 %v620
  %v2429 = vunpack.c.l.b16 %v621
  %v2430 = vunpack.c.l.b16 %v622
  %v2431 = vunpack.c.l.b16 %v623
  %v2432 = vunpack.c.l.b16 %v624
  %v2433 = vpack.c.b16 %v2034, %v2033
  %v2434 = vpack.c.b16 %v2036, %v2035
  %v2435 = vpack.c.b16 %v2038, %v2037
  %v2436 = vpack.c.b16 %v2040, %v2039
  %v2437 = vpack.c.b16 %v2042, %v2041
  %v2438 = vpack.c.b16 %v2044, %v2043
  %v2439 = vpack.c.b16 %v2046, %v2045
  %v2440 = vpack.c.b16 %v2048, %v2047
  %v2441 = vpack.c.b16 %v2050, %v2049
  %v2442 = vpack.c.b16 %v2052, %v2051
  %v2443 = vpack.c.b16 %v2054, %v2053
  %v2444 = vpack.c.b16 %v2056, %v2055
  %v2445 = vpack.c.b16 %v2058, %v2057
  %v2446 = vpack.c.b16 %v2060, %v2059
  %v2447 = vpack.c.b16 %v2062, %v2061
  %v2448 = vpack.c.b16 %v2064, %v2063
  %v2449 = vpack.c.b16 %v2066, %v2065
  %v2450 = vpack.c.b16 %v2068, %v2067
  %v2451 = vpack.c.b16 %v2070, %v2069
  %v2452 = vpack.c.b16 %v2072, %v2071
  %v2453 = vpack.c.b16 %v2074, %v2073
  %v2454 = vpack.c.b16 %v2076, %v2075
  %v2455 = vpack.c.b16 %v2078, %v2077
  %v2456 = vpack.c.b16 %v2080, %v2079
  %v2457 = vpack.c.b16 %v2082, %v2081
  %v2458 = vpack.c.b16 %v2084, %v2083
  %v2459 = vpack.c.b16 %v2086, %v2085
  %v2460 = vpack.c.b16 %v2088, %v2087
  %v2461 = vpack.c.b16 %v2090, %v2089
  %v2462 = vpack.c.b16 %v2092, %v2091
  %v2463 = vpack.c.b16 %v2094, %v2093
  %v2464 = vpack.c.b16 %v2096, %v2095
  %v2465 = vpack.c.b16 %v2098, %v2097
  %v2466 = vpack.c.b16 %v2100, %v2099
  %v2467 = vpack.c.b16 %v2102, %v2101
  %v2468 = vpack.c.b16 %v2104, %v2103
  %v2469 = vpack.c.b16 %v2106, %v2105
  %v2470 = vpack.c.b16 %v2108, %v2107
  %v2471 = vpack.c.b16 %v2110, %v2109
  %v2472 = vpack.c.b16 %v2112, %v2111
  %v2473 = vpack.c.b16 %v2114, %v2113
  %v2474 = vpack.c.b16 %v2116, %v2115
  %v2475 = vpack.c.b16 %v2118, %v2117
  %v2476 = vpack.c.b16 %v2120, %v2119
  %v2477 = vpack.c.b16 %v2122, %v2121
  %v2478 = vpack.c.b16 %v2124, %v2123
  %v2479 = vpack.c.b16 %v2126, %v2125
  %v2480 = vpack.c.b16 %v2128, %v2127
  %v2481 = vpack.c.b16 %v2130, %v2129
  %v2482 = vpack.c.b16 %v2132, %v2131
  %v2483 = vpack.c.b16 %v2134, %v2133
  %v2484 = vpack.c.b16 %v2136, %v2135
  %v2485 = vpack.c.b16 %v2138, %v2137
  %v2486 = vpack.c.b16 %v2140, %v2139
  %v2487 = vpack.c.b16 %v2142, %v2141
  %v2488 = vpack.c.b16 %v2144, %v2143
  %v2489 = vpack.c.b16 %v2146, %v2145
  %v2490 = vpack.c.b16 %v2148, %v2147
  %v2491 = vpack.c.b16 %v2150, %v2149
  %v2492 = vpack.c.b16 %v2152, %v2151
  %v2493 = vpack.c.b16 %v2154, %v2153
  %v2494 = vpack.c.b16 %v2156, %v2155
  %v2495 = vpack.c.b16 %v2158, %v2157
  %v2496 = vpack.c.b16 %v2160, %v2159
  %v2497 = vpack.c.b16 %v2162, %v2161
  %v2498 = vpack.c.b16 %v2164, %v2163
  %v2499 = vpack.c.b16 %v2166, %v2165
  %v2500 = vpack.c.b16 %v2168, %v2167
  %v2501 = vpack.c.b16 %v2170, %v2169
  %v2502 = vpack.c.b16 %v2172, %v2171
  %v2503 = vpack.c.b16 %v2174, %v2173
  %v2504 = vpack.c.b16 %v2176, %v2175
  %v2505 = vpack.c.b16 %v2178, %v2177
  %v2506 = vpack.c.b16 %v2180, %v2179
  %v2507 = vpack.c.b16 %v2182, %v2181
  %v2508 = vpack.c.b16 %v2184, %v2183
  %v2509 = vpack.c.b16 %v2186, %v2185
  %v2510 = vpack.c.b16 %v2188, %v2187
  %v2511 = vpack.c.b16 %v2190, %v2189
  %v2512 = vpack.c.b16 %v2192, %v2191
  %v2513 = vpack.c.b16 %v2194, %v2193
  %v2514 = vpack.c.b16 %v2196, %v2195
  %v2515 = vpack.c.b16 %v2198, %v2197
  %v2516 = vpack.c.b16 %v2200, %v2199
  %v2517 = vpack.c.b16 %v2202, %v2201
  %v2518 = vpack.c.b16 %v2204, %v2203
  %v2519 = vpack.c.b16 %v2206, %v2205
  %v2520 = vpack.c.b16 %v2208, %v2207
  %v2521 = vpack.c.b16 %v2210, %v2209
  %v2522 = vpack.c.b16 %v2212, %v2211
  %v2523 = vpack.c.b16 %v2214, %v2213
  %v2524 = vpack.c.b16 %v2216, %v2215
  %v2525 = vpack.c.b16 %v2218, %v2217
  %v2526 = vpack.c.b16 %v2220, %v2219
  %v2527 = vpack.c.b16 %v2222, %v2221
  %v2528 = vpack.c.b16 %v2224, %v2223
  %v2529 = vpack.c.b16 %v2226, %v2225
  %v2530 = vpack.c.b16 %v2228, %v2227
  %v2531 = vpack.c.b16 %v2230, %v2229
  %v2532 = vpack.c.b16 %v2232, %v2231
  %v2533 = vpack.c.b16 %v2234, %v2233
  %v2534 = vpack.c.b16 %v2236, %v2235
  %v2535 = vpack.c.b16 %v2238, %v2237
  %v2536 = vpack.c.b16 %v2240, %v2239
  %v2537 = vpack.c.b16 %v2242, %v2241
  %v2538 = vpack.c.b16 %v2244, %v2243
  %v2539 = vpack.c.b16 %v2246, %v2245
  %v2540 = vpack.c.b16 %v2248, %v2247
  %v2541 = vpack.c.b16 %v2250, %v2249
  %v2542 = vpack.c.b16 %v2252, %v2251
  %v2543 = vpack.c.b16 %v2254, %v2253
  %v2544 = vpack.c.b16 %v2256, %v2255
  %v2545 = vpack.c.b16 %v2258, %v2257
  %v2546 = vpack.c.b16 %v2260, %v2259
  %v2547 = vpack.c.b16 %v2262, %v2261
  %v2548 = vpack.c.b16 %v2264, %v2263
  %v2549 = vpack.c.b16 %v2266, %v2265
  %v2550 = vpack.c.b16 %v2268, %v2267
  %v2551 = vpack.c.b16 %v2270, %v2269
  %v2552 = vpack.c.b16 %v2272, %v2271
  %v2553 = vpack.c.b16 %v2274, %v2273
  %v2554 = vpack.c.b16 %v2276, %v2275
  %v2555 = vpack.c.b16 %v2278, %v2277
  %v2556 = vpack.c.b16 %v2280, %v2279
  %v2557 = vpack.c.b16 %v2282, %v2281
  %v2558 = vpack.c.b16 %v2284, %v2283
  %v2559 = vpack.c.b16 %v2286, %v2285
  %v2560 = vpack.c.b16 %v2288, %v2287
  %v2561 = vpack.c.b16 %v2290, %v2289
  %v2562 = vpack.c.b16 %v2292, %v2291
  %v2563 = vpack.c.b16 %v2294, %v2293
  %v2564 = vpack.c.b16 %v2296, %v2295
  %v2565 = vpack.c.b16 %v2298, %v2297
  %v2566 = vpack.c.b16 %v2300, %v2299
  %v2567 = vpack.c.b16 %v2302, %v2301
  %v2568 = vpack.c.b16 %v2304, %v2303
  %v2569 = vpack.c.b16 %v2306, %v2305
  %v2570 = vpack.c.b16 %v2308, %v2307
  %v2571 = vpack.c.b16 %v2310, %v2309
  %v2572 = vpack.c.b16 %v2312, %v2311
  %v2573 = vpack.c.b16 %v2314, %v2313
  %v2574 = vpack.c.b16 %v2316, %v2315
  %v2575 = vpack.c.b16 %v2318, %v2317
  %v2576 = vpack.c.b16 %v2320, %v2319
  %v2577 = vpack.c.b16 %v2322, %v2321
  %v2578 = vpack.c.b16 %v2324, %v2323
  %v2579 = vpack.c.b16 %v2326, %v2325
  %v2580 = vpack.c.b16 %v2328, %v2327
  %v2581 = vpack.c.b16 %v2330, %v2329
  %v2582 = vpack.c.b16 %v2332, %v2331
  %v2583 = vpack.c.b16 %v2334, %v2333
  %v2584 = vpack.c.b16 %v2336, %v2335
  %v2585 = vpack.c.b16 %v2338, %v2337
  %v2586 = vpack.c.b16 %v2340, %v2339
  %v2587 = vpack.c.b16 %v2342, %v2341
  %v2588 = vpack.c.b16 %v2344, %v2343
  %v2589 = vpack.c.b16 %v2346, %v2345
  %v2590 = vpack.c.b16 %v2348, %v2347
  %v2591 = vpack.c.b16 %v2350, %v2349
  %v2592 = vpack.c.b16 %v2352, %v2351
  %v2593 = vpack.c.b16 %v2354, %v2353
  %v2594 = vpack.c.b16 %v2356, %v2355
  %v2595 = vpack.c.b16 %v2358, %v2357
  %v2596 = vpack.c.b16 %v2360, %v2359
  %v2597 = vpack.c.b16 %v2362, %v2361
  %v2598 = vpack.c.b16 %v2364, %v2363
  %v2599 = vpack.c.b16 %v2366, %v2365
  %v2600 = vpack.c.b16 %v2368, %v2367
  %v2601 = vpack.c.b16 %v2370, %v2369
  %v2602 = vpack.c.b16 %v2372, %v2371
  %v2603 = vpack.c.b16 %v2374, %v2373
  %v2604 = vpack.c.b16 %v2376, %v2375
  %v2605 = vpack.c.b16 %v2378, %v2377
  %v2606 = vpack.c.b16 %v2380, %v2379
  %v2607 = vpack.c.b16 %v2382, %v2381
  %v2608 = vpack.c.b16 %v2384, %v2383
  %v2609 = vpack.c.b16 %v2386, %v2385
  %v2610 = vpack.c.b16 %v2388, %v2387
  %v2611 = vpack.c.b16 %v2390, %v2389
  %v2612 = vpack.c.b16 %v2392, %v2391
  %v2613 = vpack.c.b16 %v2394, %v2393
  %v2614 = vpack.c.b16 %v2396, %v2395
  %v2615 = vpack.c.b16 %v2398, %v2397
  %v2616 = vpack.c.b16 %v2400, %v2399
  %v2617 = vpack.c.b16 %v2402, %v2401
  %v2618 = vpack.c.b16 %v2404, %v2403
  %v2619 = vpack.c.b16 %v2406, %v2405
  %v2620 = vpack.c.b16 %v2408, %v2407
  %v2621 = vpack.c.b16 %v2410, %v2409
  %v2622 = vpack.c.b16 %v2412, %v2411
  %v2623 = vpack.c.b16 %v2414, %v2413
  %v2624 = vpack.c.b16 %v2416, %v2415
  %v2625 = vpack.c.b16 %v2418, %v2417
  %v2626 = vpack.c.b16 %v2420, %v2419
  %v2627 = vpack.c.b16 %v2422, %v2421
  %v2628 = vpack.c.b16 %v2424, %v2423
  %v2629 = vpack.c.b16 %v2426, %v2425
  %v2630 = vpack.c.b16 %v2428, %v2427
  %v2631 = vpack.c.b16 %v2430, %v2429
  %v2632 = vpack.c.b16 %v2432, %v2431
  %2833 = vmatpush.bf16.msra.mxu0 %v2440
  %2834 = vmatpush.bf16.msra.mxu0 %v2439
  %2835 = vmatpush.bf16.msra.mxu0 %v2438
  %2836 = vmatpush.bf16.msra.mxu0 %v2437
  %2837 = vmatpush.bf16.msra.mxu0 %v2436
  %2838 = vmatpush.bf16.msra.mxu0 %v2435
  %2839 = vmatpush.bf16.msra.mxu0 %v2434
  %2840 = vmatpush.bf16.msra.mxu0 %v2433
  %2841 = vmatmul.bf16.gmra.mxu0 %v1233
  %v2842 = vpop.f32.mrf.mxu0
  %v2843 = vadd.f32 0.0, %v2842
  %v2844 = vpop.f32.mrf.mxu0
  %v2845 = vadd.f32 0.0, %v2844
  %2846 = vmatmul.bf16.gmra.mxu0 %v1258
  %v2847 = vpop.f32.mrf.mxu0
  %v2848 = vadd.f32 0.0, %v2847
  %v2849 = vpop.f32.mrf.mxu0
  %v2850 = vadd.f32 0.0, %v2849
  %2851 = vmatmul.bf16.gmra.mxu0 %v1283
  %v2852 = vpop.f32.mrf.mxu0
  %v2853 = vadd.f32 0.0, %v2852
  %v2854 = vpop.f32.mrf.mxu0
  %v2855 = vadd.f32 0.0, %v2854
  %2856 = vmatmul.bf16.gmra.mxu0 %v1308
  %v2857 = vpop.f32.mrf.mxu0
  %v2858 = vadd.f32 0.0, %v2857
  %v2859 = vpop.f32.mrf.mxu0
  %v2860 = vadd.f32 0.0, %v2859
  %2861 = vmatmul.bf16.gmra.mxu0 %v1333
  %v2862 = vpop.f32.mrf.mxu0
  %v2863 = vadd.f32 0.0, %v2862
  %v2864 = vpop.f32.mrf.mxu0
  %v2865 = vadd.f32 0.0, %v2864
  %2866 = vmatmul.bf16.gmra.mxu0 %v1358
  %v2867 = vpop.f32.mrf.mxu0
  %v2868 = vadd.f32 0.0, %v2867
  %v2869 = vpop.f32.mrf.mxu0
  %v2870 = vadd.f32 0.0, %v2869
  %2871 = vmatmul.bf16.gmra.mxu0 %v1383
  %v2872 = vpop.f32.mrf.mxu0
  %v2873 = vadd.f32 0.0, %v2872
  %v2874 = vpop.f32.mrf.mxu0
  %v2875 = vadd.f32 0.0, %v2874
  %2876 = vmatmul.bf16.gmra.mxu0 %v1408
  %v2877 = vpop.f32.mrf.mxu0
  %v2878 = vadd.f32 0.0, %v2877
  %v2879 = vpop.f32.mrf.mxu0
  %v2880 = vadd.f32 0.0, %v2879
  %2881 = vdwg.mxu0
  %2882 = vmatpush.bf16.msra.mxu0 %v2448
  %2883 = vmatpush.bf16.msra.mxu0 %v2447
  %2884 = vmatpush.bf16.msra.mxu0 %v2446
  %2885 = vmatpush.bf16.msra.mxu0 %v2445
  %2886 = vmatpush.bf16.msra.mxu0 %v2444
  %2887 = vmatpush.bf16.msra.mxu0 %v2443
  %2888 = vmatpush.bf16.msra.mxu0 %v2442
  %2889 = vmatpush.bf16.msra.mxu0 %v2441
  %2890 = vmatmul.bf16.gmra.mxu0 %v1234
  %v2891 = vpop.f32.mrf.mxu0
  %v2892 = vadd.f32 %v2843, %v2891
  %v2893 = vpop.f32.mrf.mxu0
  %v2894 = vadd.f32 %v2845, %v2893
  %2895 = vmatmul.bf16.gmra.mxu0 %v1259
  %v2896 = vpop.f32.mrf.mxu0
  %v2897 = vadd.f32 %v2848, %v2896
  %v2898 = vpop.f32.mrf.mxu0
  %v2899 = vadd.f32 %v2850, %v2898
  %2900 = vmatmul.bf16.gmra.mxu0 %v1284
  %v2901 = vpop.f32.mrf.mxu0
  %v2902 = vadd.f32 %v2853, %v2901
  %v2903 = vpop.f32.mrf.mxu0
  %v2904 = vadd.f32 %v2855, %v2903
  %2905 = vmatmul.bf16.gmra.mxu0 %v1309
  %v2906 = vpop.f32.mrf.mxu0
  %v2907 = vadd.f32 %v2858, %v2906
  %v2908 = vpop.f32.mrf.mxu0
  %v2909 = vadd.f32 %v2860, %v2908
  %2910 = vmatmul.bf16.gmra.mxu0 %v1334
  %v2911 = vpop.f32.mrf.mxu0
  %v2912 = vadd.f32 %v2863, %v2911
  %v2913 = vpop.f32.mrf.mxu0
  %v2914 = vadd.f32 %v2865, %v2913
  %2915 = vmatmul.bf16.gmra.mxu0 %v1359
  %v2916 = vpop.f32.mrf.mxu0
  %v2917 = vadd.f32 %v2868, %v2916
  %v2918 = vpop.f32.mrf.mxu0
  %v2919 = vadd.f32 %v2870, %v2918
  %2920 = vmatmul.bf16.gmra.mxu0 %v1384
  %v2921 = vpop.f32.mrf.mxu0
  %v2922 = vadd.f32 %v2873, %v2921
  %v2923 = vpop.f32.mrf.mxu0
  %v2924 = vadd.f32 %v2875, %v2923
  %2925 = vmatmul.bf16.gmra.mxu0 %v1409
  %v2926 = vpop.f32.mrf.mxu0
  %v2927 = vadd.f32 %v2878, %v2926
  %v2928 = vpop.f32.mrf.mxu0
  %v2929 = vadd.f32 %v2880, %v2928
  %2930 = vdwg.mxu0
  %2931 = vmatpush.bf16.msra.mxu0 %v2456
  %2932 = vmatpush.bf16.msra.mxu0 %v2455
  %2933 = vmatpush.bf16.msra.mxu0 %v2454
  %2934 = vmatpush.bf16.msra.mxu0 %v2453
  %2935 = vmatpush.bf16.msra.mxu0 %v2452
  %2936 = vmatpush.bf16.msra.mxu0 %v2451
  %2937 = vmatpush.bf16.msra.mxu0 %v2450
  %2938 = vmatpush.bf16.msra.mxu0 %v2449
  %2939 = vmatmul.bf16.gmra.mxu0 %v1235
  %v2940 = vpop.f32.mrf.mxu0
  %v2941 = vadd.f32 %v2892, %v2940
  %v2942 = vpop.f32.mrf.mxu0
  %v2943 = vadd.f32 %v2894, %v2942
  %2944 = vmatmul.bf16.gmra.mxu0 %v1260
  %v2945 = vpop.f32.mrf.mxu0
  %v2946 = vadd.f32 %v2897, %v2945
  %v2947 = vpop.f32.mrf.mxu0
  %v2948 = vadd.f32 %v2899, %v2947
  %2949 = vmatmul.bf16.gmra.mxu0 %v1285
  %v2950 = vpop.f32.mrf.mxu0
  %v2951 = vadd.f32 %v2902, %v2950
  %v2952 = vpop.f32.mrf.mxu0
  %v2953 = vadd.f32 %v2904, %v2952
  %2954 = vmatmul.bf16.gmra.mxu0 %v1310
  %v2955 = vpop.f32.mrf.mxu0
  %v2956 = vadd.f32 %v2907, %v2955
  %v2957 = vpop.f32.mrf.mxu0
  %v2958 = vadd.f32 %v2909, %v2957
  %2959 = vmatmul.bf16.gmra.mxu0 %v1335
  %v2960 = vpop.f32.mrf.mxu0
  %v2961 = vadd.f32 %v2912, %v2960
  %v2962 = vpop.f32.mrf.mxu0
  %v2963 = vadd.f32 %v2914, %v2962
  %2964 = vmatmul.bf16.gmra.mxu0 %v1360
  %v2965 = vpop.f32.mrf.mxu0
  %v2966 = vadd.f32 %v2917, %v2965
  %v2967 = vpop.f32.mrf.mxu0
  %v2968 = vadd.f32 %v2919, %v2967
  %2969 = vmatmul.bf16.gmra.mxu0 %v1385
  %v2970 = vpop.f32.mrf.mxu0
  %v2971 = vadd.f32 %v2922, %v2970
  %v2972 = vpop.f32.mrf.mxu0
  %v2973 = vadd.f32 %v2924, %v2972
  %2974 = vmatmul.bf16.gmra.mxu0 %v1410
  %v2975 = vpop.f32.mrf.mxu0
  %v2976 = vadd.f32 %v2927, %v2975
  %v2977 = vpop.f32.mrf.mxu0
  %v2978 = vadd.f32 %v2929, %v2977
  %2979 = vdwg.mxu0
  %2980 = vmatpush.bf16.msra.mxu0 %v2464
  %2981 = vmatpush.bf16.msra.mxu0 %v2463
  %2982 = vmatpush.bf16.msra.mxu0 %v2462
  %2983 = vmatpush.bf16.msra.mxu0 %v2461
  %2984 = vmatpush.bf16.msra.mxu0 %v2460
  %2985 = vmatpush.bf16.msra.mxu0 %v2459
  %2986 = vmatpush.bf16.msra.mxu0 %v2458
  %2987 = vmatpush.bf16.msra.mxu0 %v2457
  %2988 = vmatmul.bf16.gmra.mxu0 %v1236
  %v2989 = vpop.f32.mrf.mxu0
  %v2990 = vadd.f32 %v2941, %v2989
  %v2991 = vpop.f32.mrf.mxu0
  %v2992 = vadd.f32 %v2943, %v2991
  %2993 = vmatmul.bf16.gmra.mxu0 %v1261
  %v2994 = vpop.f32.mrf.mxu0
  %v2995 = vadd.f32 %v2946, %v2994
  %v2996 = vpop.f32.mrf.mxu0
  %v2997 = vadd.f32 %v2948, %v2996
  %2998 = vmatmul.bf16.gmra.mxu0 %v1286
  %v2999 = vpop.f32.mrf.mxu0
  %v3000 = vadd.f32 %v2951, %v2999
  %v3001 = vpop.f32.mrf.mxu0
  %v3002 = vadd.f32 %v2953, %v3001
  %3003 = vmatmul.bf16.gmra.mxu0 %v1311
  %v3004 = vpop.f32.mrf.mxu0
  %v3005 = vadd.f32 %v2956, %v3004
  %v3006 = vpop.f32.mrf.mxu0
  %v3007 = vadd.f32 %v2958, %v3006
  %3008 = vmatmul.bf16.gmra.mxu0 %v1336
  %v3009 = vpop.f32.mrf.mxu0
  %v3010 = vadd.f32 %v2961, %v3009
  %v3011 = vpop.f32.mrf.mxu0
  %v3012 = vadd.f32 %v2963, %v3011
  %3013 = vmatmul.bf16.gmra.mxu0 %v1361
  %v3014 = vpop.f32.mrf.mxu0
  %v3015 = vadd.f32 %v2966, %v3014
  %v3016 = vpop.f32.mrf.mxu0
  %v3017 = vadd.f32 %v2968, %v3016
  %3018 = vmatmul.bf16.gmra.mxu0 %v1386
  %v3019 = vpop.f32.mrf.mxu0
  %v3020 = vadd.f32 %v2971, %v3019
  %v3021 = vpop.f32.mrf.mxu0
  %v3022 = vadd.f32 %v2973, %v3021
  %3023 = vmatmul.bf16.gmra.mxu0 %v1411
  %v3024 = vpop.f32.mrf.mxu0
  %v3025 = vadd.f32 %v2976, %v3024
  %v3026 = vpop.f32.mrf.mxu0
  %v3027 = vadd.f32 %v2978, %v3026
  %3028 = vdwg.mxu0
  %3029 = vmatpush.bf16.msra.mxu0 %v2472
  %3030 = vmatpush.bf16.msra.mxu0 %v2471
  %3031 = vmatpush.bf16.msra.mxu0 %v2470
  %3032 = vmatpush.bf16.msra.mxu0 %v2469
  %3033 = vmatpush.bf16.msra.mxu0 %v2468
  %3034 = vmatpush.bf16.msra.mxu0 %v2467
  %3035 = vmatpush.bf16.msra.mxu0 %v2466
  %3036 = vmatpush.bf16.msra.mxu0 %v2465
  %3037 = vmatmul.bf16.gmra.mxu0 %v1237
  %v3038 = vpop.f32.mrf.mxu0
  %v3039 = vadd.f32 %v2990, %v3038
  %v3040 = vpop.f32.mrf.mxu0
  %v3041 = vadd.f32 %v2992, %v3040
  %3042 = vmatmul.bf16.gmra.mxu0 %v1262
  %v3043 = vpop.f32.mrf.mxu0
  %v3044 = vadd.f32 %v2995, %v3043
  %v3045 = vpop.f32.mrf.mxu0
  %v3046 = vadd.f32 %v2997, %v3045
  %3047 = vmatmul.bf16.gmra.mxu0 %v1287
  %v3048 = vpop.f32.mrf.mxu0
  %v3049 = vadd.f32 %v3000, %v3048
  %v3050 = vpop.f32.mrf.mxu0
  %v3051 = vadd.f32 %v3002, %v3050
  %3052 = vmatmul.bf16.gmra.mxu0 %v1312
  %v3053 = vpop.f32.mrf.mxu0
  %v3054 = vadd.f32 %v3005, %v3053
  %v3055 = vpop.f32.mrf.mxu0
  %v3056 = vadd.f32 %v3007, %v3055
  %3057 = vmatmul.bf16.gmra.mxu0 %v1337
  %v3058 = vpop.f32.mrf.mxu0
  %v3059 = vadd.f32 %v3010, %v3058
  %v3060 = vpop.f32.mrf.mxu0
  %v3061 = vadd.f32 %v3012, %v3060
  %3062 = vmatmul.bf16.gmra.mxu0 %v1362
  %v3063 = vpop.f32.mrf.mxu0
  %v3064 = vadd.f32 %v3015, %v3063
  %v3065 = vpop.f32.mrf.mxu0
  %v3066 = vadd.f32 %v3017, %v3065
  %3067 = vmatmul.bf16.gmra.mxu0 %v1387
  %v3068 = vpop.f32.mrf.mxu0
  %v3069 = vadd.f32 %v3020, %v3068
  %v3070 = vpop.f32.mrf.mxu0
  %v3071 = vadd.f32 %v3022, %v3070
  %3072 = vmatmul.bf16.gmra.mxu0 %v1412
  %v3073 = vpop.f32.mrf.mxu0
  %v3074 = vadd.f32 %v3025, %v3073
  %v3075 = vpop.f32.mrf.mxu0
  %v3076 = vadd.f32 %v3027, %v3075
  %3077 = vdwg.mxu0
  %3078 = vmatpush.bf16.msra.mxu0 %v2480
  %3079 = vmatpush.bf16.msra.mxu0 %v2479
  %3080 = vmatpush.bf16.msra.mxu0 %v2478
  %3081 = vmatpush.bf16.msra.mxu0 %v2477
  %3082 = vmatpush.bf16.msra.mxu0 %v2476
  %3083 = vmatpush.bf16.msra.mxu0 %v2475
  %3084 = vmatpush.bf16.msra.mxu0 %v2474
  %3085 = vmatpush.bf16.msra.mxu0 %v2473
  %3086 = vmatmul.bf16.gmra.mxu0 %v1238
  %v3087 = vpop.f32.mrf.mxu0
  %v3088 = vadd.f32 %v3039, %v3087
  %v3089 = vpop.f32.mrf.mxu0
  %v3090 = vadd.f32 %v3041, %v3089
  %3091 = vmatmul.bf16.gmra.mxu0 %v1263
  %v3092 = vpop.f32.mrf.mxu0
  %v3093 = vadd.f32 %v3044, %v3092
  %v3094 = vpop.f32.mrf.mxu0
  %v3095 = vadd.f32 %v3046, %v3094
  %3096 = vmatmul.bf16.gmra.mxu0 %v1288
  %v3097 = vpop.f32.mrf.mxu0
  %v3098 = vadd.f32 %v3049, %v3097
  %v3099 = vpop.f32.mrf.mxu0
  %v3100 = vadd.f32 %v3051, %v3099
  %3101 = vmatmul.bf16.gmra.mxu0 %v1313
  %v3102 = vpop.f32.mrf.mxu0
  %v3103 = vadd.f32 %v3054, %v3102
  %v3104 = vpop.f32.mrf.mxu0
  %v3105 = vadd.f32 %v3056, %v3104
  %3106 = vmatmul.bf16.gmra.mxu0 %v1338
  %v3107 = vpop.f32.mrf.mxu0
  %v3108 = vadd.f32 %v3059, %v3107
  %v3109 = vpop.f32.mrf.mxu0
  %v3110 = vadd.f32 %v3061, %v3109
  %3111 = vmatmul.bf16.gmra.mxu0 %v1363
  %v3112 = vpop.f32.mrf.mxu0
  %v3113 = vadd.f32 %v3064, %v3112
  %v3114 = vpop.f32.mrf.mxu0
  %v3115 = vadd.f32 %v3066, %v3114
  %3116 = vmatmul.bf16.gmra.mxu0 %v1388
  %v3117 = vpop.f32.mrf.mxu0
  %v3118 = vadd.f32 %v3069, %v3117
  %v3119 = vpop.f32.mrf.mxu0
  %v3120 = vadd.f32 %v3071, %v3119
  %3121 = vmatmul.bf16.gmra.mxu0 %v1413
  %v3122 = vpop.f32.mrf.mxu0
  %v3123 = vadd.f32 %v3074, %v3122
  %v3124 = vpop.f32.mrf.mxu0
  %v3125 = vadd.f32 %v3076, %v3124
  %3126 = vdwg.mxu0
  %3127 = vmatpush.bf16.msra.mxu0 %v2488
  %3128 = vmatpush.bf16.msra.mxu0 %v2487
  %3129 = vmatpush.bf16.msra.mxu0 %v2486
  %3130 = vmatpush.bf16.msra.mxu0 %v2485
  %3131 = vmatpush.bf16.msra.mxu0 %v2484
  %3132 = vmatpush.bf16.msra.mxu0 %v2483
  %3133 = vmatpush.bf16.msra.mxu0 %v2482
  %3134 = vmatpush.bf16.msra.mxu0 %v2481
  %3135 = vmatmul.bf16.gmra.mxu0 %v1239
  %v3136 = vpop.f32.mrf.mxu0
  %v3137 = vadd.f32 %v3088, %v3136
  %v3138 = vpop.f32.mrf.mxu0
  %v3139 = vadd.f32 %v3090, %v3138
  %3140 = vmatmul.bf16.gmra.mxu0 %v1264
  %v3141 = vpop.f32.mrf.mxu0
  %v3142 = vadd.f32 %v3093, %v3141
  %v3143 = vpop.f32.mrf.mxu0
  %v3144 = vadd.f32 %v3095, %v3143
  %3145 = vmatmul.bf16.gmra.mxu0 %v1289
  %v3146 = vpop.f32.mrf.mxu0
  %v3147 = vadd.f32 %v3098, %v3146
  %v3148 = vpop.f32.mrf.mxu0
  %v3149 = vadd.f32 %v3100, %v3148
  %3150 = vmatmul.bf16.gmra.mxu0 %v1314
  %v3151 = vpop.f32.mrf.mxu0
  %v3152 = vadd.f32 %v3103, %v3151
  %v3153 = vpop.f32.mrf.mxu0
  %v3154 = vadd.f32 %v3105, %v3153
  %3155 = vmatmul.bf16.gmra.mxu0 %v1339
  %v3156 = vpop.f32.mrf.mxu0
  %v3157 = vadd.f32 %v3108, %v3156
  %v3158 = vpop.f32.mrf.mxu0
  %v3159 = vadd.f32 %v3110, %v3158
  %3160 = vmatmul.bf16.gmra.mxu0 %v1364
  %v3161 = vpop.f32.mrf.mxu0
  %v3162 = vadd.f32 %v3113, %v3161
  %v3163 = vpop.f32.mrf.mxu0
  %v3164 = vadd.f32 %v3115, %v3163
  %3165 = vmatmul.bf16.gmra.mxu0 %v1389
  %v3166 = vpop.f32.mrf.mxu0
  %v3167 = vadd.f32 %v3118, %v3166
  %v3168 = vpop.f32.mrf.mxu0
  %v3169 = vadd.f32 %v3120, %v3168
  %3170 = vmatmul.bf16.gmra.mxu0 %v1414
  %v3171 = vpop.f32.mrf.mxu0
  %v3172 = vadd.f32 %v3123, %v3171
  %v3173 = vpop.f32.mrf.mxu0
  %v3174 = vadd.f32 %v3125, %v3173
  %3175 = vdwg.mxu0
  %3176 = vmatpush.bf16.msra.mxu0 %v2496
  %3177 = vmatpush.bf16.msra.mxu0 %v2495
  %3178 = vmatpush.bf16.msra.mxu0 %v2494
  %3179 = vmatpush.bf16.msra.mxu0 %v2493
  %3180 = vmatpush.bf16.msra.mxu0 %v2492
  %3181 = vmatpush.bf16.msra.mxu0 %v2491
  %3182 = vmatpush.bf16.msra.mxu0 %v2490
  %3183 = vmatpush.bf16.msra.mxu0 %v2489
  %3184 = vmatmul.bf16.gmra.mxu0 %v1240
  %v3185 = vpop.f32.mrf.mxu0
  %v3186 = vadd.f32 %v3137, %v3185
  %v3187 = vpop.f32.mrf.mxu0
  %v3188 = vadd.f32 %v3139, %v3187
  %3189 = vmatmul.bf16.gmra.mxu0 %v1265
  %v3190 = vpop.f32.mrf.mxu0
  %v3191 = vadd.f32 %v3142, %v3190
  %v3192 = vpop.f32.mrf.mxu0
  %v3193 = vadd.f32 %v3144, %v3192
  %3194 = vmatmul.bf16.gmra.mxu0 %v1290
  %v3195 = vpop.f32.mrf.mxu0
  %v3196 = vadd.f32 %v3147, %v3195
  %v3197 = vpop.f32.mrf.mxu0
  %v3198 = vadd.f32 %v3149, %v3197
  %3199 = vmatmul.bf16.gmra.mxu0 %v1315
  %v3200 = vpop.f32.mrf.mxu0
  %v3201 = vadd.f32 %v3152, %v3200
  %v3202 = vpop.f32.mrf.mxu0
  %v3203 = vadd.f32 %v3154, %v3202
  %3204 = vmatmul.bf16.gmra.mxu0 %v1340
  %v3205 = vpop.f32.mrf.mxu0
  %v3206 = vadd.f32 %v3157, %v3205
  %v3207 = vpop.f32.mrf.mxu0
  %v3208 = vadd.f32 %v3159, %v3207
  %3209 = vmatmul.bf16.gmra.mxu0 %v1365
  %v3210 = vpop.f32.mrf.mxu0
  %v3211 = vadd.f32 %v3162, %v3210
  %v3212 = vpop.f32.mrf.mxu0
  %v3213 = vadd.f32 %v3164, %v3212
  %3214 = vmatmul.bf16.gmra.mxu0 %v1390
  %v3215 = vpop.f32.mrf.mxu0
  %v3216 = vadd.f32 %v3167, %v3215
  %v3217 = vpop.f32.mrf.mxu0
  %v3218 = vadd.f32 %v3169, %v3217
  %3219 = vmatmul.bf16.gmra.mxu0 %v1415
  %v3220 = vpop.f32.mrf.mxu0
  %v3221 = vadd.f32 %v3172, %v3220
  %v3222 = vpop.f32.mrf.mxu0
  %v3223 = vadd.f32 %v3174, %v3222
  %3224 = vdwg.mxu0
  %3225 = vmatpush.bf16.msra.mxu0 %v2504
  %3226 = vmatpush.bf16.msra.mxu0 %v2503
  %3227 = vmatpush.bf16.msra.mxu0 %v2502
  %3228 = vmatpush.bf16.msra.mxu0 %v2501
  %3229 = vmatpush.bf16.msra.mxu0 %v2500
  %3230 = vmatpush.bf16.msra.mxu0 %v2499
  %3231 = vmatpush.bf16.msra.mxu0 %v2498
  %3232 = vmatpush.bf16.msra.mxu0 %v2497
  %3233 = vmatmul.bf16.gmra.mxu0 %v1241
  %v3234 = vpop.f32.mrf.mxu0
  %v3235 = vadd.f32 %v3186, %v3234
  %v3236 = vpop.f32.mrf.mxu0
  %v3237 = vadd.f32 %v3188, %v3236
  %3238 = vmatmul.bf16.gmra.mxu0 %v1266
  %v3239 = vpop.f32.mrf.mxu0
  %v3240 = vadd.f32 %v3191, %v3239
  %v3241 = vpop.f32.mrf.mxu0
  %v3242 = vadd.f32 %v3193, %v3241
  %3243 = vmatmul.bf16.gmra.mxu0 %v1291
  %v3244 = vpop.f32.mrf.mxu0
  %v3245 = vadd.f32 %v3196, %v3244
  %v3246 = vpop.f32.mrf.mxu0
  %v3247 = vadd.f32 %v3198, %v3246
  %3248 = vmatmul.bf16.gmra.mxu0 %v1316
  %v3249 = vpop.f32.mrf.mxu0
  %v3250 = vadd.f32 %v3201, %v3249
  %v3251 = vpop.f32.mrf.mxu0
  %v3252 = vadd.f32 %v3203, %v3251
  %3253 = vmatmul.bf16.gmra.mxu0 %v1341
  %v3254 = vpop.f32.mrf.mxu0
  %v3255 = vadd.f32 %v3206, %v3254
  %v3256 = vpop.f32.mrf.mxu0
  %v3257 = vadd.f32 %v3208, %v3256
  %3258 = vmatmul.bf16.gmra.mxu0 %v1366
  %v3259 = vpop.f32.mrf.mxu0
  %v3260 = vadd.f32 %v3211, %v3259
  %v3261 = vpop.f32.mrf.mxu0
  %v3262 = vadd.f32 %v3213, %v3261
  %3263 = vmatmul.bf16.gmra.mxu0 %v1391
  %v3264 = vpop.f32.mrf.mxu0
  %v3265 = vadd.f32 %v3216, %v3264
  %v3266 = vpop.f32.mrf.mxu0
  %v3267 = vadd.f32 %v3218, %v3266
  %3268 = vmatmul.bf16.gmra.mxu0 %v1416
  %v3269 = vpop.f32.mrf.mxu0
  %v3270 = vadd.f32 %v3221, %v3269
  %v3271 = vpop.f32.mrf.mxu0
  %v3272 = vadd.f32 %v3223, %v3271
  %3273 = vdwg.mxu0
  %3274 = vmatpush.bf16.msra.mxu0 %v2512
  %3275 = vmatpush.bf16.msra.mxu0 %v2511
  %3276 = vmatpush.bf16.msra.mxu0 %v2510
  %3277 = vmatpush.bf16.msra.mxu0 %v2509
  %3278 = vmatpush.bf16.msra.mxu0 %v2508
  %3279 = vmatpush.bf16.msra.mxu0 %v2507
  %3280 = vmatpush.bf16.msra.mxu0 %v2506
  %3281 = vmatpush.bf16.msra.mxu0 %v2505
  %3282 = vmatmul.bf16.gmra.mxu0 %v1242
  %v3283 = vpop.f32.mrf.mxu0
  %v3284 = vadd.f32 %v3235, %v3283
  %v3285 = vpop.f32.mrf.mxu0
  %v3286 = vadd.f32 %v3237, %v3285
  %3287 = vmatmul.bf16.gmra.mxu0 %v1267
  %v3288 = vpop.f32.mrf.mxu0
  %v3289 = vadd.f32 %v3240, %v3288
  %v3290 = vpop.f32.mrf.mxu0
  %v3291 = vadd.f32 %v3242, %v3290
  %3292 = vmatmul.bf16.gmra.mxu0 %v1292
  %v3293 = vpop.f32.mrf.mxu0
  %v3294 = vadd.f32 %v3245, %v3293
  %v3295 = vpop.f32.mrf.mxu0
  %v3296 = vadd.f32 %v3247, %v3295
  %3297 = vmatmul.bf16.gmra.mxu0 %v1317
  %v3298 = vpop.f32.mrf.mxu0
  %v3299 = vadd.f32 %v3250, %v3298
  %v3300 = vpop.f32.mrf.mxu0
  %v3301 = vadd.f32 %v3252, %v3300
  %3302 = vmatmul.bf16.gmra.mxu0 %v1342
  %v3303 = vpop.f32.mrf.mxu0
  %v3304 = vadd.f32 %v3255, %v3303
  %v3305 = vpop.f32.mrf.mxu0
  %v3306 = vadd.f32 %v3257, %v3305
  %3307 = vmatmul.bf16.gmra.mxu0 %v1367
  %v3308 = vpop.f32.mrf.mxu0
  %v3309 = vadd.f32 %v3260, %v3308
  %v3310 = vpop.f32.mrf.mxu0
  %v3311 = vadd.f32 %v3262, %v3310
  %3312 = vmatmul.bf16.gmra.mxu0 %v1392
  %v3313 = vpop.f32.mrf.mxu0
  %v3314 = vadd.f32 %v3265, %v3313
  %v3315 = vpop.f32.mrf.mxu0
  %v3316 = vadd.f32 %v3267, %v3315
  %3317 = vmatmul.bf16.gmra.mxu0 %v1417
  %v3318 = vpop.f32.mrf.mxu0
  %v3319 = vadd.f32 %v3270, %v3318
  %v3320 = vpop.f32.mrf.mxu0
  %v3321 = vadd.f32 %v3272, %v3320
  %3322 = vdwg.mxu0
  %3323 = vmatpush.bf16.msra.mxu0 %v2520
  %3324 = vmatpush.bf16.msra.mxu0 %v2519
  %3325 = vmatpush.bf16.msra.mxu0 %v2518
  %3326 = vmatpush.bf16.msra.mxu0 %v2517
  %3327 = vmatpush.bf16.msra.mxu0 %v2516
  %3328 = vmatpush.bf16.msra.mxu0 %v2515
  %3329 = vmatpush.bf16.msra.mxu0 %v2514
  %3330 = vmatpush.bf16.msra.mxu0 %v2513
  %3331 = vmatmul.bf16.gmra.mxu0 %v1243
  %v3332 = vpop.f32.mrf.mxu0
  %v3333 = vadd.f32 %v3284, %v3332
  %v3334 = vpop.f32.mrf.mxu0
  %v3335 = vadd.f32 %v3286, %v3334
  %3336 = vmatmul.bf16.gmra.mxu0 %v1268
  %v3337 = vpop.f32.mrf.mxu0
  %v3338 = vadd.f32 %v3289, %v3337
  %v3339 = vpop.f32.mrf.mxu0
  %v3340 = vadd.f32 %v3291, %v3339
  %3341 = vmatmul.bf16.gmra.mxu0 %v1293
  %v3342 = vpop.f32.mrf.mxu0
  %v3343 = vadd.f32 %v3294, %v3342
  %v3344 = vpop.f32.mrf.mxu0
  %v3345 = vadd.f32 %v3296, %v3344
  %3346 = vmatmul.bf16.gmra.mxu0 %v1318
  %v3347 = vpop.f32.mrf.mxu0
  %v3348 = vadd.f32 %v3299, %v3347
  %v3349 = vpop.f32.mrf.mxu0
  %v3350 = vadd.f32 %v3301, %v3349
  %3351 = vmatmul.bf16.gmra.mxu0 %v1343
  %v3352 = vpop.f32.mrf.mxu0
  %v3353 = vadd.f32 %v3304, %v3352
  %v3354 = vpop.f32.mrf.mxu0
  %v3355 = vadd.f32 %v3306, %v3354
  %3356 = vmatmul.bf16.gmra.mxu0 %v1368
  %v3357 = vpop.f32.mrf.mxu0
  %v3358 = vadd.f32 %v3309, %v3357
  %v3359 = vpop.f32.mrf.mxu0
  %v3360 = vadd.f32 %v3311, %v3359
  %3361 = vmatmul.bf16.gmra.mxu0 %v1393
  %v3362 = vpop.f32.mrf.mxu0
  %v3363 = vadd.f32 %v3314, %v3362
  %v3364 = vpop.f32.mrf.mxu0
  %v3365 = vadd.f32 %v3316, %v3364
  %3366 = vmatmul.bf16.gmra.mxu0 %v1418
  %v3367 = vpop.f32.mrf.mxu0
  %v3368 = vadd.f32 %v3319, %v3367
  %v3369 = vpop.f32.mrf.mxu0
  %v3370 = vadd.f32 %v3321, %v3369
  %3371 = vdwg.mxu0
  %3372 = vmatpush.bf16.msra.mxu0 %v2528
  %3373 = vmatpush.bf16.msra.mxu0 %v2527
  %3374 = vmatpush.bf16.msra.mxu0 %v2526
  %3375 = vmatpush.bf16.msra.mxu0 %v2525
  %3376 = vmatpush.bf16.msra.mxu0 %v2524
  %3377 = vmatpush.bf16.msra.mxu0 %v2523
  %3378 = vmatpush.bf16.msra.mxu0 %v2522
  %3379 = vmatpush.bf16.msra.mxu0 %v2521
  %3380 = vmatmul.bf16.gmra.mxu0 %v1244
  %v3381 = vpop.f32.mrf.mxu0
  %v3382 = vadd.f32 %v3333, %v3381
  %v3383 = vpop.f32.mrf.mxu0
  %v3384 = vadd.f32 %v3335, %v3383
  %3385 = vmatmul.bf16.gmra.mxu0 %v1269
  %v3386 = vpop.f32.mrf.mxu0
  %v3387 = vadd.f32 %v3338, %v3386
  %v3388 = vpop.f32.mrf.mxu0
  %v3389 = vadd.f32 %v3340, %v3388
  %3390 = vmatmul.bf16.gmra.mxu0 %v1294
  %v3391 = vpop.f32.mrf.mxu0
  %v3392 = vadd.f32 %v3343, %v3391
  %v3393 = vpop.f32.mrf.mxu0
  %v3394 = vadd.f32 %v3345, %v3393
  %3395 = vmatmul.bf16.gmra.mxu0 %v1319
  %v3396 = vpop.f32.mrf.mxu0
  %v3397 = vadd.f32 %v3348, %v3396
  %v3398 = vpop.f32.mrf.mxu0
  %v3399 = vadd.f32 %v3350, %v3398
  %3400 = vmatmul.bf16.gmra.mxu0 %v1344
  %v3401 = vpop.f32.mrf.mxu0
  %v3402 = vadd.f32 %v3353, %v3401
  %v3403 = vpop.f32.mrf.mxu0
  %v3404 = vadd.f32 %v3355, %v3403
  %3405 = vmatmul.bf16.gmra.mxu0 %v1369
  %v3406 = vpop.f32.mrf.mxu0
  %v3407 = vadd.f32 %v3358, %v3406
  %v3408 = vpop.f32.mrf.mxu0
  %v3409 = vadd.f32 %v3360, %v3408
  %3410 = vmatmul.bf16.gmra.mxu0 %v1394
  %v3411 = vpop.f32.mrf.mxu0
  %v3412 = vadd.f32 %v3363, %v3411
  %v3413 = vpop.f32.mrf.mxu0
  %v3414 = vadd.f32 %v3365, %v3413
  %3415 = vmatmul.bf16.gmra.mxu0 %v1419
  %v3416 = vpop.f32.mrf.mxu0
  %v3417 = vadd.f32 %v3368, %v3416
  %v3418 = vpop.f32.mrf.mxu0
  %v3419 = vadd.f32 %v3370, %v3418
  %3420 = vdwg.mxu0
  %3421 = vmatpush.bf16.msra.mxu0 %v2536
  %3422 = vmatpush.bf16.msra.mxu0 %v2535
  %3423 = vmatpush.bf16.msra.mxu0 %v2534
  %3424 = vmatpush.bf16.msra.mxu0 %v2533
  %3425 = vmatpush.bf16.msra.mxu0 %v2532
  %3426 = vmatpush.bf16.msra.mxu0 %v2531
  %3427 = vmatpush.bf16.msra.mxu0 %v2530
  %3428 = vmatpush.bf16.msra.mxu0 %v2529
  %3429 = vmatmul.bf16.gmra.mxu0 %v1245
  %v3430 = vpop.f32.mrf.mxu0
  %v3431 = vadd.f32 %v3382, %v3430
  %v3432 = vpop.f32.mrf.mxu0
  %v3433 = vadd.f32 %v3384, %v3432
  %3434 = vmatmul.bf16.gmra.mxu0 %v1270
  %v3435 = vpop.f32.mrf.mxu0
  %v3436 = vadd.f32 %v3387, %v3435
  %v3437 = vpop.f32.mrf.mxu0
  %v3438 = vadd.f32 %v3389, %v3437
  %3439 = vmatmul.bf16.gmra.mxu0 %v1295
  %v3440 = vpop.f32.mrf.mxu0
  %v3441 = vadd.f32 %v3392, %v3440
  %v3442 = vpop.f32.mrf.mxu0
  %v3443 = vadd.f32 %v3394, %v3442
  %3444 = vmatmul.bf16.gmra.mxu0 %v1320
  %v3445 = vpop.f32.mrf.mxu0
  %v3446 = vadd.f32 %v3397, %v3445
  %v3447 = vpop.f32.mrf.mxu0
  %v3448 = vadd.f32 %v3399, %v3447
  %3449 = vmatmul.bf16.gmra.mxu0 %v1345
  %v3450 = vpop.f32.mrf.mxu0
  %v3451 = vadd.f32 %v3402, %v3450
  %v3452 = vpop.f32.mrf.mxu0
  %v3453 = vadd.f32 %v3404, %v3452
  %3454 = vmatmul.bf16.gmra.mxu0 %v1370
  %v3455 = vpop.f32.mrf.mxu0
  %v3456 = vadd.f32 %v3407, %v3455
  %v3457 = vpop.f32.mrf.mxu0
  %v3458 = vadd.f32 %v3409, %v3457
  %3459 = vmatmul.bf16.gmra.mxu0 %v1395
  %v3460 = vpop.f32.mrf.mxu0
  %v3461 = vadd.f32 %v3412, %v3460
  %v3462 = vpop.f32.mrf.mxu0
  %v3463 = vadd.f32 %v3414, %v3462
  %3464 = vmatmul.bf16.gmra.mxu0 %v1420
  %v3465 = vpop.f32.mrf.mxu0
  %v3466 = vadd.f32 %v3417, %v3465
  %v3467 = vpop.f32.mrf.mxu0
  %v3468 = vadd.f32 %v3419, %v3467
  %3469 = vdwg.mxu0
  %3470 = vmatpush.bf16.msra.mxu0 %v2544
  %3471 = vmatpush.bf16.msra.mxu0 %v2543
  %3472 = vmatpush.bf16.msra.mxu0 %v2542
  %3473 = vmatpush.bf16.msra.mxu0 %v2541
  %3474 = vmatpush.bf16.msra.mxu0 %v2540
  %3475 = vmatpush.bf16.msra.mxu0 %v2539
  %3476 = vmatpush.bf16.msra.mxu0 %v2538
  %3477 = vmatpush.bf16.msra.mxu0 %v2537
  %3478 = vmatmul.bf16.gmra.mxu0 %v1246
  %v3479 = vpop.f32.mrf.mxu0
  %v3480 = vadd.f32 %v3431, %v3479
  %v3481 = vpop.f32.mrf.mxu0
  %v3482 = vadd.f32 %v3433, %v3481
  %3483 = vmatmul.bf16.gmra.mxu0 %v1271
  %v3484 = vpop.f32.mrf.mxu0
  %v3485 = vadd.f32 %v3436, %v3484
  %v3486 = vpop.f32.mrf.mxu0
  %v3487 = vadd.f32 %v3438, %v3486
  %3488 = vmatmul.bf16.gmra.mxu0 %v1296
  %v3489 = vpop.f32.mrf.mxu0
  %v3490 = vadd.f32 %v3441, %v3489
  %v3491 = vpop.f32.mrf.mxu0
  %v3492 = vadd.f32 %v3443, %v3491
  %3493 = vmatmul.bf16.gmra.mxu0 %v1321
  %v3494 = vpop.f32.mrf.mxu0
  %v3495 = vadd.f32 %v3446, %v3494
  %v3496 = vpop.f32.mrf.mxu0
  %v3497 = vadd.f32 %v3448, %v3496
  %3498 = vmatmul.bf16.gmra.mxu0 %v1346
  %v3499 = vpop.f32.mrf.mxu0
  %v3500 = vadd.f32 %v3451, %v3499
  %v3501 = vpop.f32.mrf.mxu0
  %v3502 = vadd.f32 %v3453, %v3501
  %3503 = vmatmul.bf16.gmra.mxu0 %v1371
  %v3504 = vpop.f32.mrf.mxu0
  %v3505 = vadd.f32 %v3456, %v3504
  %v3506 = vpop.f32.mrf.mxu0
  %v3507 = vadd.f32 %v3458, %v3506
  %3508 = vmatmul.bf16.gmra.mxu0 %v1396
  %v3509 = vpop.f32.mrf.mxu0
  %v3510 = vadd.f32 %v3461, %v3509
  %v3511 = vpop.f32.mrf.mxu0
  %v3512 = vadd.f32 %v3463, %v3511
  %3513 = vmatmul.bf16.gmra.mxu0 %v1421
  %v3514 = vpop.f32.mrf.mxu0
  %v3515 = vadd.f32 %v3466, %v3514
  %v3516 = vpop.f32.mrf.mxu0
  %v3517 = vadd.f32 %v3468, %v3516
  %3518 = vdwg.mxu0
  %3519 = vmatpush.bf16.msra.mxu0 %v2552
  %3520 = vmatpush.bf16.msra.mxu0 %v2551
  %3521 = vmatpush.bf16.msra.mxu0 %v2550
  %3522 = vmatpush.bf16.msra.mxu0 %v2549
  %3523 = vmatpush.bf16.msra.mxu0 %v2548
  %3524 = vmatpush.bf16.msra.mxu0 %v2547
  %3525 = vmatpush.bf16.msra.mxu0 %v2546
  %3526 = vmatpush.bf16.msra.mxu0 %v2545
  %3527 = vmatmul.bf16.gmra.mxu0 %v1247
  %v3528 = vpop.f32.mrf.mxu0
  %v3529 = vadd.f32 %v3480, %v3528
  %v3530 = vpop.f32.mrf.mxu0
  %v3531 = vadd.f32 %v3482, %v3530
  %3532 = vmatmul.bf16.gmra.mxu0 %v1272
  %v3533 = vpop.f32.mrf.mxu0
  %v3534 = vadd.f32 %v3485, %v3533
  %v3535 = vpop.f32.mrf.mxu0
  %v3536 = vadd.f32 %v3487, %v3535
  %3537 = vmatmul.bf16.gmra.mxu0 %v1297
  %v3538 = vpop.f32.mrf.mxu0
  %v3539 = vadd.f32 %v3490, %v3538
  %v3540 = vpop.f32.mrf.mxu0
  %v3541 = vadd.f32 %v3492, %v3540
  %3542 = vmatmul.bf16.gmra.mxu0 %v1322
  %v3543 = vpop.f32.mrf.mxu0
  %v3544 = vadd.f32 %v3495, %v3543
  %v3545 = vpop.f32.mrf.mxu0
  %v3546 = vadd.f32 %v3497, %v3545
  %3547 = vmatmul.bf16.gmra.mxu0 %v1347
  %v3548 = vpop.f32.mrf.mxu0
  %v3549 = vadd.f32 %v3500, %v3548
  %v3550 = vpop.f32.mrf.mxu0
  %v3551 = vadd.f32 %v3502, %v3550
  %3552 = vmatmul.bf16.gmra.mxu0 %v1372
  %v3553 = vpop.f32.mrf.mxu0
  %v3554 = vadd.f32 %v3505, %v3553
  %v3555 = vpop.f32.mrf.mxu0
  %v3556 = vadd.f32 %v3507, %v3555
  %3557 = vmatmul.bf16.gmra.mxu0 %v1397
  %v3558 = vpop.f32.mrf.mxu0
  %v3559 = vadd.f32 %v3510, %v3558
  %v3560 = vpop.f32.mrf.mxu0
  %v3561 = vadd.f32 %v3512, %v3560
  %3562 = vmatmul.bf16.gmra.mxu0 %v1422
  %v3563 = vpop.f32.mrf.mxu0
  %v3564 = vadd.f32 %v3515, %v3563
  %v3565 = vpop.f32.mrf.mxu0
  %v3566 = vadd.f32 %v3517, %v3565
  %3567 = vdwg.mxu0
  %3568 = vmatpush.bf16.msra.mxu0 %v2560
  %3569 = vmatpush.bf16.msra.mxu0 %v2559
  %3570 = vmatpush.bf16.msra.mxu0 %v2558
  %3571 = vmatpush.bf16.msra.mxu0 %v2557
  %3572 = vmatpush.bf16.msra.mxu0 %v2556
  %3573 = vmatpush.bf16.msra.mxu0 %v2555
  %3574 = vmatpush.bf16.msra.mxu0 %v2554
  %3575 = vmatpush.bf16.msra.mxu0 %v2553
  %3576 = vmatmul.bf16.gmra.mxu0 %v1248
  %v3577 = vpop.f32.mrf.mxu0
  %v3578 = vadd.f32 %v3529, %v3577
  %v3579 = vpop.f32.mrf.mxu0
  %v3580 = vadd.f32 %v3531, %v3579
  %3581 = vmatmul.bf16.gmra.mxu0 %v1273
  %v3582 = vpop.f32.mrf.mxu0
  %v3583 = vadd.f32 %v3534, %v3582
  %v3584 = vpop.f32.mrf.mxu0
  %v3585 = vadd.f32 %v3536, %v3584
  %3586 = vmatmul.bf16.gmra.mxu0 %v1298
  %v3587 = vpop.f32.mrf.mxu0
  %v3588 = vadd.f32 %v3539, %v3587
  %v3589 = vpop.f32.mrf.mxu0
  %v3590 = vadd.f32 %v3541, %v3589
  %3591 = vmatmul.bf16.gmra.mxu0 %v1323
  %v3592 = vpop.f32.mrf.mxu0
  %v3593 = vadd.f32 %v3544, %v3592
  %v3594 = vpop.f32.mrf.mxu0
  %v3595 = vadd.f32 %v3546, %v3594
  %3596 = vmatmul.bf16.gmra.mxu0 %v1348
  %v3597 = vpop.f32.mrf.mxu0
  %v3598 = vadd.f32 %v3549, %v3597
  %v3599 = vpop.f32.mrf.mxu0
  %v3600 = vadd.f32 %v3551, %v3599
  %3601 = vmatmul.bf16.gmra.mxu0 %v1373
  %v3602 = vpop.f32.mrf.mxu0
  %v3603 = vadd.f32 %v3554, %v3602
  %v3604 = vpop.f32.mrf.mxu0
  %v3605 = vadd.f32 %v3556, %v3604
  %3606 = vmatmul.bf16.gmra.mxu0 %v1398
  %v3607 = vpop.f32.mrf.mxu0
  %v3608 = vadd.f32 %v3559, %v3607
  %v3609 = vpop.f32.mrf.mxu0
  %v3610 = vadd.f32 %v3561, %v3609
  %3611 = vmatmul.bf16.gmra.mxu0 %v1423
  %v3612 = vpop.f32.mrf.mxu0
  %v3613 = vadd.f32 %v3564, %v3612
  %v3614 = vpop.f32.mrf.mxu0
  %v3615 = vadd.f32 %v3566, %v3614
  %3616 = vdwg.mxu0
  %3617 = vmatpush.bf16.msra.mxu0 %v2568
  %3618 = vmatpush.bf16.msra.mxu0 %v2567
  %3619 = vmatpush.bf16.msra.mxu0 %v2566
  %3620 = vmatpush.bf16.msra.mxu0 %v2565
  %3621 = vmatpush.bf16.msra.mxu0 %v2564
  %3622 = vmatpush.bf16.msra.mxu0 %v2563
  %3623 = vmatpush.bf16.msra.mxu0 %v2562
  %3624 = vmatpush.bf16.msra.mxu0 %v2561
  %3625 = vmatmul.bf16.gmra.mxu0 %v1249
  %v3626 = vpop.f32.mrf.mxu0
  %v3627 = vadd.f32 %v3578, %v3626
  %v3628 = vpop.f32.mrf.mxu0
  %v3629 = vadd.f32 %v3580, %v3628
  %3630 = vmatmul.bf16.gmra.mxu0 %v1274
  %v3631 = vpop.f32.mrf.mxu0
  %v3632 = vadd.f32 %v3583, %v3631
  %v3633 = vpop.f32.mrf.mxu0
  %v3634 = vadd.f32 %v3585, %v3633
  %3635 = vmatmul.bf16.gmra.mxu0 %v1299
  %v3636 = vpop.f32.mrf.mxu0
  %v3637 = vadd.f32 %v3588, %v3636
  %v3638 = vpop.f32.mrf.mxu0
  %v3639 = vadd.f32 %v3590, %v3638
  %3640 = vmatmul.bf16.gmra.mxu0 %v1324
  %v3641 = vpop.f32.mrf.mxu0
  %v3642 = vadd.f32 %v3593, %v3641
  %v3643 = vpop.f32.mrf.mxu0
  %v3644 = vadd.f32 %v3595, %v3643
  %3645 = vmatmul.bf16.gmra.mxu0 %v1349
  %v3646 = vpop.f32.mrf.mxu0
  %v3647 = vadd.f32 %v3598, %v3646
  %v3648 = vpop.f32.mrf.mxu0
  %v3649 = vadd.f32 %v3600, %v3648
  %3650 = vmatmul.bf16.gmra.mxu0 %v1374
  %v3651 = vpop.f32.mrf.mxu0
  %v3652 = vadd.f32 %v3603, %v3651
  %v3653 = vpop.f32.mrf.mxu0
  %v3654 = vadd.f32 %v3605, %v3653
  %3655 = vmatmul.bf16.gmra.mxu0 %v1399
  %v3656 = vpop.f32.mrf.mxu0
  %v3657 = vadd.f32 %v3608, %v3656
  %v3658 = vpop.f32.mrf.mxu0
  %v3659 = vadd.f32 %v3610, %v3658
  %3660 = vmatmul.bf16.gmra.mxu0 %v1424
  %v3661 = vpop.f32.mrf.mxu0
  %v3662 = vadd.f32 %v3613, %v3661
  %v3663 = vpop.f32.mrf.mxu0
  %v3664 = vadd.f32 %v3615, %v3663
  %3665 = vdwg.mxu0
  %3666 = vmatpush.bf16.msra.mxu0 %v2576
  %3667 = vmatpush.bf16.msra.mxu0 %v2575
  %3668 = vmatpush.bf16.msra.mxu0 %v2574
  %3669 = vmatpush.bf16.msra.mxu0 %v2573
  %3670 = vmatpush.bf16.msra.mxu0 %v2572
  %3671 = vmatpush.bf16.msra.mxu0 %v2571
  %3672 = vmatpush.bf16.msra.mxu0 %v2570
  %3673 = vmatpush.bf16.msra.mxu0 %v2569
  %3674 = vmatmul.bf16.gmra.mxu0 %v1250
  %v3675 = vpop.f32.mrf.mxu0
  %v3676 = vadd.f32 %v3627, %v3675
  %v3677 = vpop.f32.mrf.mxu0
  %v3678 = vadd.f32 %v3629, %v3677
  %3679 = vmatmul.bf16.gmra.mxu0 %v1275
  %v3680 = vpop.f32.mrf.mxu0
  %v3681 = vadd.f32 %v3632, %v3680
  %v3682 = vpop.f32.mrf.mxu0
  %v3683 = vadd.f32 %v3634, %v3682
  %3684 = vmatmul.bf16.gmra.mxu0 %v1300
  %v3685 = vpop.f32.mrf.mxu0
  %v3686 = vadd.f32 %v3637, %v3685
  %v3687 = vpop.f32.mrf.mxu0
  %v3688 = vadd.f32 %v3639, %v3687
  %3689 = vmatmul.bf16.gmra.mxu0 %v1325
  %v3690 = vpop.f32.mrf.mxu0
  %v3691 = vadd.f32 %v3642, %v3690
  %v3692 = vpop.f32.mrf.mxu0
  %v3693 = vadd.f32 %v3644, %v3692
  %3694 = vmatmul.bf16.gmra.mxu0 %v1350
  %v3695 = vpop.f32.mrf.mxu0
  %v3696 = vadd.f32 %v3647, %v3695
  %v3697 = vpop.f32.mrf.mxu0
  %v3698 = vadd.f32 %v3649, %v3697
  %3699 = vmatmul.bf16.gmra.mxu0 %v1375
  %v3700 = vpop.f32.mrf.mxu0
  %v3701 = vadd.f32 %v3652, %v3700
  %v3702 = vpop.f32.mrf.mxu0
  %v3703 = vadd.f32 %v3654, %v3702
  %3704 = vmatmul.bf16.gmra.mxu0 %v1400
  %v3705 = vpop.f32.mrf.mxu0
  %v3706 = vadd.f32 %v3657, %v3705
  %v3707 = vpop.f32.mrf.mxu0
  %v3708 = vadd.f32 %v3659, %v3707
  %3709 = vmatmul.bf16.gmra.mxu0 %v1425
  %v3710 = vpop.f32.mrf.mxu0
  %v3711 = vadd.f32 %v3662, %v3710
  %v3712 = vpop.f32.mrf.mxu0
  %v3713 = vadd.f32 %v3664, %v3712
  %3714 = vdwg.mxu0
  %3715 = vmatpush.bf16.msra.mxu0 %v2584
  %3716 = vmatpush.bf16.msra.mxu0 %v2583
  %3717 = vmatpush.bf16.msra.mxu0 %v2582
  %3718 = vmatpush.bf16.msra.mxu0 %v2581
  %3719 = vmatpush.bf16.msra.mxu0 %v2580
  %3720 = vmatpush.bf16.msra.mxu0 %v2579
  %3721 = vmatpush.bf16.msra.mxu0 %v2578
  %3722 = vmatpush.bf16.msra.mxu0 %v2577
  %3723 = vmatmul.bf16.gmra.mxu0 %v1251
  %v3724 = vpop.f32.mrf.mxu0
  %v3725 = vadd.f32 %v3676, %v3724
  %v3726 = vpop.f32.mrf.mxu0
  %v3727 = vadd.f32 %v3678, %v3726
  %3728 = vmatmul.bf16.gmra.mxu0 %v1276
  %v3729 = vpop.f32.mrf.mxu0
  %v3730 = vadd.f32 %v3681, %v3729
  %v3731 = vpop.f32.mrf.mxu0
  %v3732 = vadd.f32 %v3683, %v3731
  %3733 = vmatmul.bf16.gmra.mxu0 %v1301
  %v3734 = vpop.f32.mrf.mxu0
  %v3735 = vadd.f32 %v3686, %v3734
  %v3736 = vpop.f32.mrf.mxu0
  %v3737 = vadd.f32 %v3688, %v3736
  %3738 = vmatmul.bf16.gmra.mxu0 %v1326
  %v3739 = vpop.f32.mrf.mxu0
  %v3740 = vadd.f32 %v3691, %v3739
  %v3741 = vpop.f32.mrf.mxu0
  %v3742 = vadd.f32 %v3693, %v3741
  %3743 = vmatmul.bf16.gmra.mxu0 %v1351
  %v3744 = vpop.f32.mrf.mxu0
  %v3745 = vadd.f32 %v3696, %v3744
  %v3746 = vpop.f32.mrf.mxu0
  %v3747 = vadd.f32 %v3698, %v3746
  %3748 = vmatmul.bf16.gmra.mxu0 %v1376
  %v3749 = vpop.f32.mrf.mxu0
  %v3750 = vadd.f32 %v3701, %v3749
  %v3751 = vpop.f32.mrf.mxu0
  %v3752 = vadd.f32 %v3703, %v3751
  %3753 = vmatmul.bf16.gmra.mxu0 %v1401
  %v3754 = vpop.f32.mrf.mxu0
  %v3755 = vadd.f32 %v3706, %v3754
  %v3756 = vpop.f32.mrf.mxu0
  %v3757 = vadd.f32 %v3708, %v3756
  %3758 = vmatmul.bf16.gmra.mxu0 %v1426
  %v3759 = vpop.f32.mrf.mxu0
  %v3760 = vadd.f32 %v3711, %v3759
  %v3761 = vpop.f32.mrf.mxu0
  %v3762 = vadd.f32 %v3713, %v3761
  %3763 = vdwg.mxu0
  %3764 = vmatpush.bf16.msra.mxu0 %v2592
  %3765 = vmatpush.bf16.msra.mxu0 %v2591
  %3766 = vmatpush.bf16.msra.mxu0 %v2590
  %3767 = vmatpush.bf16.msra.mxu0 %v2589
  %3768 = vmatpush.bf16.msra.mxu0 %v2588
  %3769 = vmatpush.bf16.msra.mxu0 %v2587
  %3770 = vmatpush.bf16.msra.mxu0 %v2586
  %3771 = vmatpush.bf16.msra.mxu0 %v2585
  %3772 = vmatmul.bf16.gmra.mxu0 %v1252
  %v3773 = vpop.f32.mrf.mxu0
  %v3774 = vadd.f32 %v3725, %v3773
  %v3775 = vpop.f32.mrf.mxu0
  %v3776 = vadd.f32 %v3727, %v3775
  %3777 = vmatmul.bf16.gmra.mxu0 %v1277
  %v3778 = vpop.f32.mrf.mxu0
  %v3779 = vadd.f32 %v3730, %v3778
  %v3780 = vpop.f32.mrf.mxu0
  %v3781 = vadd.f32 %v3732, %v3780
  %3782 = vmatmul.bf16.gmra.mxu0 %v1302
  %v3783 = vpop.f32.mrf.mxu0
  %v3784 = vadd.f32 %v3735, %v3783
  %v3785 = vpop.f32.mrf.mxu0
  %v3786 = vadd.f32 %v3737, %v3785
  %3787 = vmatmul.bf16.gmra.mxu0 %v1327
  %v3788 = vpop.f32.mrf.mxu0
  %v3789 = vadd.f32 %v3740, %v3788
  %v3790 = vpop.f32.mrf.mxu0
  %v3791 = vadd.f32 %v3742, %v3790
  %3792 = vmatmul.bf16.gmra.mxu0 %v1352
  %v3793 = vpop.f32.mrf.mxu0
  %v3794 = vadd.f32 %v3745, %v3793
  %v3795 = vpop.f32.mrf.mxu0
  %v3796 = vadd.f32 %v3747, %v3795
  %3797 = vmatmul.bf16.gmra.mxu0 %v1377
  %v3798 = vpop.f32.mrf.mxu0
  %v3799 = vadd.f32 %v3750, %v3798
  %v3800 = vpop.f32.mrf.mxu0
  %v3801 = vadd.f32 %v3752, %v3800
  %3802 = vmatmul.bf16.gmra.mxu0 %v1402
  %v3803 = vpop.f32.mrf.mxu0
  %v3804 = vadd.f32 %v3755, %v3803
  %v3805 = vpop.f32.mrf.mxu0
  %v3806 = vadd.f32 %v3757, %v3805
  %3807 = vmatmul.bf16.gmra.mxu0 %v1427
  %v3808 = vpop.f32.mrf.mxu0
  %v3809 = vadd.f32 %v3760, %v3808
  %v3810 = vpop.f32.mrf.mxu0
  %v3811 = vadd.f32 %v3762, %v3810
  %3812 = vdwg.mxu0
  %3813 = vmatpush.bf16.msra.mxu0 %v2600
  %3814 = vmatpush.bf16.msra.mxu0 %v2599
  %3815 = vmatpush.bf16.msra.mxu0 %v2598
  %3816 = vmatpush.bf16.msra.mxu0 %v2597
  %3817 = vmatpush.bf16.msra.mxu0 %v2596
  %3818 = vmatpush.bf16.msra.mxu0 %v2595
  %3819 = vmatpush.bf16.msra.mxu0 %v2594
  %3820 = vmatpush.bf16.msra.mxu0 %v2593
  %3821 = vmatmul.bf16.gmra.mxu0 %v1253
  %v3822 = vpop.f32.mrf.mxu0
  %v3823 = vadd.f32 %v3774, %v3822
  %v3824 = vpop.f32.mrf.mxu0
  %v3825 = vadd.f32 %v3776, %v3824
  %3826 = vmatmul.bf16.gmra.mxu0 %v1278
  %v3827 = vpop.f32.mrf.mxu0
  %v3828 = vadd.f32 %v3779, %v3827
  %v3829 = vpop.f32.mrf.mxu0
  %v3830 = vadd.f32 %v3781, %v3829
  %3831 = vmatmul.bf16.gmra.mxu0 %v1303
  %v3832 = vpop.f32.mrf.mxu0
  %v3833 = vadd.f32 %v3784, %v3832
  %v3834 = vpop.f32.mrf.mxu0
  %v3835 = vadd.f32 %v3786, %v3834
  %3836 = vmatmul.bf16.gmra.mxu0 %v1328
  %v3837 = vpop.f32.mrf.mxu0
  %v3838 = vadd.f32 %v3789, %v3837
  %v3839 = vpop.f32.mrf.mxu0
  %v3840 = vadd.f32 %v3791, %v3839
  %3841 = vmatmul.bf16.gmra.mxu0 %v1353
  %v3842 = vpop.f32.mrf.mxu0
  %v3843 = vadd.f32 %v3794, %v3842
  %v3844 = vpop.f32.mrf.mxu0
  %v3845 = vadd.f32 %v3796, %v3844
  %3846 = vmatmul.bf16.gmra.mxu0 %v1378
  %v3847 = vpop.f32.mrf.mxu0
  %v3848 = vadd.f32 %v3799, %v3847
  %v3849 = vpop.f32.mrf.mxu0
  %v3850 = vadd.f32 %v3801, %v3849
  %3851 = vmatmul.bf16.gmra.mxu0 %v1403
  %v3852 = vpop.f32.mrf.mxu0
  %v3853 = vadd.f32 %v3804, %v3852
  %v3854 = vpop.f32.mrf.mxu0
  %v3855 = vadd.f32 %v3806, %v3854
  %3856 = vmatmul.bf16.gmra.mxu0 %v1428
  %v3857 = vpop.f32.mrf.mxu0
  %v3858 = vadd.f32 %v3809, %v3857
  %v3859 = vpop.f32.mrf.mxu0
  %v3860 = vadd.f32 %v3811, %v3859
  %3861 = vdwg.mxu0
  %3862 = vmatpush.bf16.msra.mxu0 %v2608
  %3863 = vmatpush.bf16.msra.mxu0 %v2607
  %3864 = vmatpush.bf16.msra.mxu0 %v2606
  %3865 = vmatpush.bf16.msra.mxu0 %v2605
  %3866 = vmatpush.bf16.msra.mxu0 %v2604
  %3867 = vmatpush.bf16.msra.mxu0 %v2603
  %3868 = vmatpush.bf16.msra.mxu0 %v2602
  %3869 = vmatpush.bf16.msra.mxu0 %v2601
  %3870 = vmatmul.bf16.gmra.mxu0 %v1254
  %v3871 = vpop.f32.mrf.mxu0
  %v3872 = vadd.f32 %v3823, %v3871
  %v3873 = vpop.f32.mrf.mxu0
  %v3874 = vadd.f32 %v3825, %v3873
  %3875 = vmatmul.bf16.gmra.mxu0 %v1279
  %v3876 = vpop.f32.mrf.mxu0
  %v3877 = vadd.f32 %v3828, %v3876
  %v3878 = vpop.f32.mrf.mxu0
  %v3879 = vadd.f32 %v3830, %v3878
  %3880 = vmatmul.bf16.gmra.mxu0 %v1304
  %v3881 = vpop.f32.mrf.mxu0
  %v3882 = vadd.f32 %v3833, %v3881
  %v3883 = vpop.f32.mrf.mxu0
  %v3884 = vadd.f32 %v3835, %v3883
  %3885 = vmatmul.bf16.gmra.mxu0 %v1329
  %v3886 = vpop.f32.mrf.mxu0
  %v3887 = vadd.f32 %v3838, %v3886
  %v3888 = vpop.f32.mrf.mxu0
  %v3889 = vadd.f32 %v3840, %v3888
  %3890 = vmatmul.bf16.gmra.mxu0 %v1354
  %v3891 = vpop.f32.mrf.mxu0
  %v3892 = vadd.f32 %v3843, %v3891
  %v3893 = vpop.f32.mrf.mxu0
  %v3894 = vadd.f32 %v3845, %v3893
  %3895 = vmatmul.bf16.gmra.mxu0 %v1379
  %v3896 = vpop.f32.mrf.mxu0
  %v3897 = vadd.f32 %v3848, %v3896
  %v3898 = vpop.f32.mrf.mxu0
  %v3899 = vadd.f32 %v3850, %v3898
  %3900 = vmatmul.bf16.gmra.mxu0 %v1404
  %v3901 = vpop.f32.mrf.mxu0
  %v3902 = vadd.f32 %v3853, %v3901
  %v3903 = vpop.f32.mrf.mxu0
  %v3904 = vadd.f32 %v3855, %v3903
  %3905 = vmatmul.bf16.gmra.mxu0 %v1429
  %v3906 = vpop.f32.mrf.mxu0
  %v3907 = vadd.f32 %v3858, %v3906
  %v3908 = vpop.f32.mrf.mxu0
  %v3909 = vadd.f32 %v3860, %v3908
  %3910 = vdwg.mxu0
  %3911 = vmatpush.bf16.msra.mxu0 %v2616
  %3912 = vmatpush.bf16.msra.mxu0 %v2615
  %3913 = vmatpush.bf16.msra.mxu0 %v2614
  %3914 = vmatpush.bf16.msra.mxu0 %v2613
  %3915 = vmatpush.bf16.msra.mxu0 %v2612
  %3916 = vmatpush.bf16.msra.mxu0 %v2611
  %3917 = vmatpush.bf16.msra.mxu0 %v2610
  %3918 = vmatpush.bf16.msra.mxu0 %v2609
  %3919 = vmatmul.bf16.gmra.mxu0 %v1255
  %v3920 = vpop.f32.mrf.mxu0
  %v3921 = vadd.f32 %v3872, %v3920
  %v3922 = vpop.f32.mrf.mxu0
  %v3923 = vadd.f32 %v3874, %v3922
  %3924 = vmatmul.bf16.gmra.mxu0 %v1280
  %v3925 = vpop.f32.mrf.mxu0
  %v3926 = vadd.f32 %v3877, %v3925
  %v3927 = vpop.f32.mrf.mxu0
  %v3928 = vadd.f32 %v3879, %v3927
  %3929 = vmatmul.bf16.gmra.mxu0 %v1305
  %v3930 = vpop.f32.mrf.mxu0
  %v3931 = vadd.f32 %v3882, %v3930
  %v3932 = vpop.f32.mrf.mxu0
  %v3933 = vadd.f32 %v3884, %v3932
  %3934 = vmatmul.bf16.gmra.mxu0 %v1330
  %v3935 = vpop.f32.mrf.mxu0
  %v3936 = vadd.f32 %v3887, %v3935
  %v3937 = vpop.f32.mrf.mxu0
  %v3938 = vadd.f32 %v3889, %v3937
  %3939 = vmatmul.bf16.gmra.mxu0 %v1355
  %v3940 = vpop.f32.mrf.mxu0
  %v3941 = vadd.f32 %v3892, %v3940
  %v3942 = vpop.f32.mrf.mxu0
  %v3943 = vadd.f32 %v3894, %v3942
  %3944 = vmatmul.bf16.gmra.mxu0 %v1380
  %v3945 = vpop.f32.mrf.mxu0
  %v3946 = vadd.f32 %v3897, %v3945
  %v3947 = vpop.f32.mrf.mxu0
  %v3948 = vadd.f32 %v3899, %v3947
  %3949 = vmatmul.bf16.gmra.mxu0 %v1405
  %v3950 = vpop.f32.mrf.mxu0
  %v3951 = vadd.f32 %v3902, %v3950
  %v3952 = vpop.f32.mrf.mxu0
  %v3953 = vadd.f32 %v3904, %v3952
  %3954 = vmatmul.bf16.gmra.mxu0 %v1430
  %v3955 = vpop.f32.mrf.mxu0
  %v3956 = vadd.f32 %v3907, %v3955
  %v3957 = vpop.f32.mrf.mxu0
  %v3958 = vadd.f32 %v3909, %v3957
  %3959 = vdwg.mxu0
  %3960 = vmatpush.bf16.msra.mxu0 %v2624
  %3961 = vmatpush.bf16.msra.mxu0 %v2623
  %3962 = vmatpush.bf16.msra.mxu0 %v2622
  %3963 = vmatpush.bf16.msra.mxu0 %v2621
  %3964 = vmatpush.bf16.msra.mxu0 %v2620
  %3965 = vmatpush.bf16.msra.mxu0 %v2619
  %3966 = vmatpush.bf16.msra.mxu0 %v2618
  %3967 = vmatpush.bf16.msra.mxu0 %v2617
  %3968 = vmatmul.bf16.gmra.mxu0 %v1256
  %v3969 = vpop.f32.mrf.mxu0
  %v3970 = vadd.f32 %v3921, %v3969
  %v3971 = vpop.f32.mrf.mxu0
  %v3972 = vadd.f32 %v3923, %v3971
  %3973 = vmatmul.bf16.gmra.mxu0 %v1281
  %v3974 = vpop.f32.mrf.mxu0
  %v3975 = vadd.f32 %v3926, %v3974
  %v3976 = vpop.f32.mrf.mxu0
  %v3977 = vadd.f32 %v3928, %v3976
  %3978 = vmatmul.bf16.gmra.mxu0 %v1306
  %v3979 = vpop.f32.mrf.mxu0
  %v3980 = vadd.f32 %v3931, %v3979
  %v3981 = vpop.f32.mrf.mxu0
  %v3982 = vadd.f32 %v3933, %v3981
  %3983 = vmatmul.bf16.gmra.mxu0 %v1331
  %v3984 = vpop.f32.mrf.mxu0
  %v3985 = vadd.f32 %v3936, %v3984
  %v3986 = vpop.f32.mrf.mxu0
  %v3987 = vadd.f32 %v3938, %v3986
  %3988 = vmatmul.bf16.gmra.mxu0 %v1356
  %v3989 = vpop.f32.mrf.mxu0
  %v3990 = vadd.f32 %v3941, %v3989
  %v3991 = vpop.f32.mrf.mxu0
  %v3992 = vadd.f32 %v3943, %v3991
  %3993 = vmatmul.bf16.gmra.mxu0 %v1381
  %v3994 = vpop.f32.mrf.mxu0
  %v3995 = vadd.f32 %v3946, %v3994
  %v3996 = vpop.f32.mrf.mxu0
  %v3997 = vadd.f32 %v3948, %v3996
  %3998 = vmatmul.bf16.gmra.mxu0 %v1406
  %v3999 = vpop.f32.mrf.mxu0
  %v4000 = vadd.f32 %v3951, %v3999
  %v4001 = vpop.f32.mrf.mxu0
  %v4002 = vadd.f32 %v3953, %v4001
  %4003 = vmatmul.bf16.gmra.mxu0 %v1431
  %v4004 = vpop.f32.mrf.mxu0
  %v4005 = vadd.f32 %v3956, %v4004
  %v4006 = vpop.f32.mrf.mxu0
  %v4007 = vadd.f32 %v3958, %v4006
  %4008 = vdwg.mxu0
  %4009 = vmatpush.bf16.msra.mxu0 %v2632
  %4010 = vmatpush.bf16.msra.mxu0 %v2631
  %4011 = vmatpush.bf16.msra.mxu0 %v2630
  %4012 = vmatpush.bf16.msra.mxu0 %v2629
  %4013 = vmatpush.bf16.msra.mxu0 %v2628
  %4014 = vmatpush.bf16.msra.mxu0 %v2627
  %4015 = vmatpush.bf16.msra.mxu0 %v2626
  %4016 = vmatpush.bf16.msra.mxu0 %v2625
  %4017 = vmatmul.bf16.gmra.mxu0 %v1257
  %v4018 = vpop.f32.mrf.mxu0
  %v4019 = vadd.f32 %v3970, %v4018
  %v4020 = vpop.f32.mrf.mxu0
  %v4021 = vadd.f32 %v3972, %v4020
  %4022 = vmatmul.bf16.gmra.mxu0 %v1282
  %v4023 = vpop.f32.mrf.mxu0
  %v4024 = vadd.f32 %v3975, %v4023
  %v4025 = vpop.f32.mrf.mxu0
  %v4026 = vadd.f32 %v3977, %v4025
  %4027 = vmatmul.bf16.gmra.mxu0 %v1307
  %v4028 = vpop.f32.mrf.mxu0
  %v4029 = vadd.f32 %v3980, %v4028
  %v4030 = vpop.f32.mrf.mxu0
  %v4031 = vadd.f32 %v3982, %v4030
  %4032 = vmatmul.bf16.gmra.mxu0 %v1332
  %v4033 = vpop.f32.mrf.mxu0
  %v4034 = vadd.f32 %v3985, %v4033
  %v4035 = vpop.f32.mrf.mxu0
  %v4036 = vadd.f32 %v3987, %v4035
  %4037 = vmatmul.bf16.gmra.mxu0 %v1357
  %v4038 = vpop.f32.mrf.mxu0
  %v4039 = vadd.f32 %v3990, %v4038
  %v4040 = vpop.f32.mrf.mxu0
  %v4041 = vadd.f32 %v3992, %v4040
  %4042 = vmatmul.bf16.gmra.mxu0 %v1382
  %v4043 = vpop.f32.mrf.mxu0
  %v4044 = vadd.f32 %v3995, %v4043
  %v4045 = vpop.f32.mrf.mxu0
  %v4046 = vadd.f32 %v3997, %v4045
  %4047 = vmatmul.bf16.gmra.mxu0 %v1407
  %v4048 = vpop.f32.mrf.mxu0
  %v4049 = vadd.f32 %v4000, %v4048
  %v4050 = vpop.f32.mrf.mxu0
  %v4051 = vadd.f32 %v4002, %v4050
  %4052 = vmatmul.bf16.gmra.mxu0 %v1432
  %v4053 = vpop.f32.mrf.mxu0
  %v4054 = vadd.f32 %v4005, %v4053
  %v4055 = vpop.f32.mrf.mxu0
  %v4056 = vadd.f32 %v4007, %v4055
  %4057 = vdwg.mxu0
  %v4058 = vadd.f32 %v4019, %v4021
  %v4059 = vadd.f32 %v4058, %v4024
  %v4060 = vadd.f32 %v4059, %v4026
  %v4061 = vadd.f32 %v4060, %v4029
  %v4062 = vadd.f32 %v4061, %v4031
  %v4063 = vadd.f32 %v4062, %v4034
  %v4064 = vadd.f32 %v4063, %v4036
  %v4065 = vadd.f32 %v4064, %v4039
  %v4066 = vadd.f32 %v4065, %v4041
  %v4067 = vadd.f32 %v4066, %v4044
  %v4068 = vadd.f32 %v4067, %v4046
  %v4069 = vadd.f32 %v4068, %v4049
  %v4070 = vadd.f32 %v4069, %v4051
  %v4071 = vadd.f32 %v4070, %v4054
  %v4072 = vadd.f32 %v4071, %v4056
  %v4073 = vrot.slane %v4072, 4
  %v4074 = vadd.f32 %v4072, %v4073
  %v4075 = vrot.slane %v4074, 2
  %v4076 = vadd.f32 %v4074, %v4075
  %v4077 = vrot.slane %v4076, 1
  %v4078 = vadd.f32 %v4076, %v4077
  %v4079 = vmul.f32 %v4078, 0.0078125
  %v4080 = vmul.f32 %v4019, %v4019
  %v4081 = vmul.f32 %v4021, %v4021
  %v4082 = vmul.f32 %v4024, %v4024
  %v4083 = vmul.f32 %v4026, %v4026
  %v4084 = vmul.f32 %v4029, %v4029
  %v4085 = vmul.f32 %v4031, %v4031
  %v4086 = vmul.f32 %v4034, %v4034
  %v4087 = vmul.f32 %v4036, %v4036
  %v4088 = vmul.f32 %v4039, %v4039
  %v4089 = vmul.f32 %v4041, %v4041
  %v4090 = vmul.f32 %v4044, %v4044
  %v4091 = vmul.f32 %v4046, %v4046
  %v4092 = vmul.f32 %v4049, %v4049
  %v4093 = vmul.f32 %v4051, %v4051
  %v4094 = vmul.f32 %v4054, %v4054
  %v4095 = vmul.f32 %v4056, %v4056
  %v4096 = vadd.f32 %v4080, %v4081
  %v4097 = vadd.f32 %v4096, %v4082
  %v4098 = vadd.f32 %v4097, %v4083
  %v4099 = vadd.f32 %v4098, %v4084
  %v4100 = vadd.f32 %v4099, %v4085
  %v4101 = vadd.f32 %v4100, %v4086
  %v4102 = vadd.f32 %v4101, %v4087
  %v4103 = vadd.f32 %v4102, %v4088
  %v4104 = vadd.f32 %v4103, %v4089
  %v4105 = vadd.f32 %v4104, %v4090
  %v4106 = vadd.f32 %v4105, %v4091
  %v4107 = vadd.f32 %v4106, %v4092
  %v4108 = vadd.f32 %v4107, %v4093
  %v4109 = vadd.f32 %v4108, %v4094
  %v4110 = vadd.f32 %v4109, %v4095
  %v4111 = vrot.slane %v4110, 4
  %v4112 = vadd.f32 %v4110, %v4111
  %v4113 = vrot.slane %v4112, 2
  %v4114 = vadd.f32 %v4112, %v4113
  %v4115 = vrot.slane %v4114, 1
  %v4116 = vadd.f32 %v4114, %v4115
  %v4117 = vmul.f32 %v4116, 0.0078125
  %v4118 = vmul.f32 %v4079, %v4079
  %v4119 = vsub.f32 %v4117, %v4118
  %v4120 = vadd.f32 %v4119, 1e-05
  %v4121 = vrsqrt.pop %v4120
  %v4122 = vmul.f32 %v4121, %v4120
  %v4123 = vmul.f32 %v4122, %v4121
  %v4124 = vmul.f32 0.5, %v4123
  %v4125 = vsub.f32 1.5, %v4124
  %v4126 = vmul.f32 %v4121, %v4125
  %vm4127 = vweird.f32 %v4120
  %vm4128 = vweird.f32 %v4121
  %vm4129 = vmor %vm4127, %vm4128
  %v4130 = vsel %vm4129, %v4121, %v4126
  %v4131 = vld [vmem:[%s2] sm:$0x1]
  %v4132 = vmul.f32 %v4130, %v4131
  %v4133 = vsub.f32 %v4019, %v4079
  %v4134 = vsub.f32 %v4021, %v4079
  %v4135 = vsub.f32 %v4024, %v4079
  %v4136 = vsub.f32 %v4026, %v4079
  %v4137 = vsub.f32 %v4029, %v4079
  %v4138 = vsub.f32 %v4031, %v4079
  %v4139 = vsub.f32 %v4034, %v4079
  %v4140 = vsub.f32 %v4036, %v4079
  %v4141 = vsub.f32 %v4039, %v4079
  %v4142 = vsub.f32 %v4041, %v4079
  %v4143 = vsub.f32 %v4044, %v4079
  %v4144 = vsub.f32 %v4046, %v4079
  %v4145 = vsub.f32 %v4049, %v4079
  %v4146 = vsub.f32 %v4051, %v4079
  %v4147 = vsub.f32 %v4054, %v4079
  %v4148 = vsub.f32 %v4056, %v4079
  %v4149 = vperm.slane %v4132, 0
  %v4150 = vmul.f32 %v4133, %v4149
  %v4151 = vmul.f32 %v4134, %v4149
  %v4152 = vmul.f32 %v4135, %v4149
  %v4153 = vmul.f32 %v4136, %v4149
  %v4154 = vmul.f32 %v4137, %v4149
  %v4155 = vmul.f32 %v4138, %v4149
  %v4156 = vmul.f32 %v4139, %v4149
  %v4157 = vmul.f32 %v4140, %v4149
  %v4158 = vmul.f32 %v4141, %v4149
  %v4159 = vmul.f32 %v4142, %v4149
  %v4160 = vmul.f32 %v4143, %v4149
  %v4161 = vmul.f32 %v4144, %v4149
  %v4162 = vmul.f32 %v4145, %v4149
  %v4163 = vmul.f32 %v4146, %v4149
  %v4164 = vmul.f32 %v4147, %v4149
  %v4165 = vmul.f32 %v4148, %v4149
  %v4166 = vld [vmem:[%s3] sm:$0x1]
  %v4168 = vperm.slane %v4166, 0
  %v4170 = vadd.f32 %v4150, %v4168
  %v4171 = vadd.f32 %v4151, %v4168
  %v4172 = vadd.f32 %v4152, %v4168
  %v4173 = vadd.f32 %v4153, %v4168
  %v4174 = vadd.f32 %v4154, %v4168
  %v4175 = vadd.f32 %v4155, %v4168
  %v4176 = vadd.f32 %v4156, %v4168
  %v4177 = vadd.f32 %v4157, %v4168
  %v4178 = vadd.f32 %v4158, %v4168
  %v4179 = vadd.f32 %v4159, %v4168
  %v4180 = vadd.f32 %v4160, %v4168
  %v4181 = vadd.f32 %v4161, %v4168
  %v4182 = vadd.f32 %v4162, %v4168
  %v4183 = vadd.f32 %v4163, %v4168
  %v4184 = vadd.f32 %v4164, %v4168
  %v4185 = vadd.f32 %v4165, %v4168
  %v4186 = vmax.f32 %v4170, 0.0
  %v4187 = vmax.f32 %v4171, 0.0
  %v4188 = vmax.f32 %v4172, 0.0
  %v4189 = vmax.f32 %v4173, 0.0
  %v4190 = vmax.f32 %v4174, 0.0
  %v4191 = vmax.f32 %v4175, 0.0
  %v4192 = vmax.f32 %v4176, 0.0
  %v4193 = vmax.f32 %v4177, 0.0
  %v4194 = vmax.f32 %v4178, 0.0
  %v4195 = vmax.f32 %v4179, 0.0
  %v4196 = vmax.f32 %v4180, 0.0
  %v4197 = vmax.f32 %v4181, 0.0
  %v4198 = vmax.f32 %v4182, 0.0
  %v4199 = vmax.f32 %v4183, 0.0
  %v4200 = vmax.f32 %v4184, 0.0
  %v4201 = vmax.f32 %v4185, 0.0
  %v4202 = vpack.c.bf16 %v4186, %v4186
  %v4203 = vpack.c.bf16 %v4187, %v4187
  %v4204 = vpack.c.bf16 %v4188, %v4188
  %v4205 = vpack.c.bf16 %v4189, %v4189
  %v4206 = vpack.c.bf16 %v4190, %v4190
  %v4207 = vpack.c.bf16 %v4191, %v4191
  %v4208 = vpack.c.bf16 %v4192, %v4192
  %v4209 = vpack.c.bf16 %v4193, %v4193
  %v4210 = vpack.c.bf16 %v4194, %v4194
  %v4211 = vpack.c.bf16 %v4195, %v4195
  %v4212 = vpack.c.bf16 %v4196, %v4196
  %v4213 = vpack.c.bf16 %v4197, %v4197
  %v4214 = vpack.c.bf16 %v4198, %v4198
  %v4215 = vpack.c.bf16 %v4199, %v4199
  %v4216 = vpack.c.bf16 %v4200, %v4200
  %v4217 = vpack.c.bf16 %v4201, %v4201
  %4218 = vst [vmem:[%s4] sm:$0xf] %v4202
  %4219 = vst [vmem:[%s4 + $0x4] sm:$0xf] %v4203
  %4220 = vst [vmem:[%s4 + $0x8] sm:$0xf] %v4204
  %4221 = vst [vmem:[%s4 + $0xc] sm:$0xf] %v4205
  %4222 = vst [vmem:[%s4 + $0x10] sm:$0xf] %v4206
  %4223 = vst [vmem:[%s4 + $0x14] sm:$0xf] %v4207
  %4224 = vst [vmem:[%s4 + $0x18] sm:$0xf] %v4208
  %4225 = vst [vmem:[%s4 + $0x1c] sm:$0xf] %v4209
  %4226 = vst [vmem:[%s4 + $0x20] sm:$0xf] %v4210
  %4227 = vst [vmem:[%s4 + $0x24] sm:$0xf] %v4211
  %4228 = vst [vmem:[%s4 + $0x28] sm:$0xf] %v4212
  %4229 = vst [vmem:[%s4 + $0x2c] sm:$0xf] %v4213
  %4230 = vst [vmem:[%s4 + $0x30] sm:$0xf] %v4214
  %4231 = vst [vmem:[%s4 + $0x34] sm:$0xf] %v4215
  %4232 = vst [vmem:[%s4 + $0x38] sm:$0xf] %v4216
  %4233 = vst [vmem:[%s4 + $0x3c] sm:$0xf] %v4217
  // Predicated region
  $region18: #{py_forward.4} parent=0 // pred_check
    _
  $region19: #{py_forward.4} parent=0 // pred_check_branch
    %4235 = sbr.rel (0) target = $region21
  $region20: #{py_forward.4} parent=0 // pred_region
    _
  $region21: #{py_forward.4} parent=0 // pred_fallthru
    _
  // Predicated region
  $region22: #{py_forward.4} parent=0 // pred_check
    _
  $region23: #{py_forward.4} parent=0 // pred_check_branch
    %4237 = sbr.rel (0) target = $region25
  $region24: #{py_forward.4} parent=0 // pred_region
    _
  $region25: #{py_forward.4} parent=0 // pred_fallthru
    _

</llo_original>
